<compile_context>
chip_gen: v7x
topology: tpu7x:2x2x1
jax: 0.10.0
libtpu: 0.0.40
codegen_flags: <defaults>
</compile_context>

<pallas_src>
import functools

import jax
import jax.numpy as jnp
from jax import lax
from jax.experimental import pallas as pl
from jax.experimental.pallas import tpu as pltpu


def _power_iter_kernel(u0_ref, ghi_ref, glo_ref, z_ref, *,
                       max_iter, tol, steps_per_check):
    """Power iteration on G = J^T J, fully VMEM-resident, amortized early exit.

    u0_ref : [B, D] f32   random init (randn_like(x_in), flattened / projected)
    ghi_ref: [D, D] bf16  hi half of the Gram matrix
    glo_ref: [D, D] bf16  lo half (G - bf16(G)), restores ~f32 precision
    z_ref  : [B, 1] f32   output: squared spectral norm estimate per sample
    """
    u0 = u0_ref[...]
    ghi = ghi_ref[...]
    glo = glo_ref[...]
    B = u0.shape[0]

    # Reference init: u = u / (u . u)  (per-batch squared-norm normalization).
    uu0 = jnp.sum(u0 * u0, axis=1, keepdims=True)          # [B, 1]
    u_init = u0 / uu0
    # Carry inv_uu := 1 / (u . u).  For u_init this is exactly uu0.
    inv_uu_init = uu0

    tol2 = jnp.float32(tol * tol)

    def one_step(_, s):
        u, inv_uu, z, _z_old = s
        ub = u.astype(jnp.bfloat16)                         # cast once per step
        # v = J^T J u  ==  u @ G : two bf16 MXU passes, f32 accumulation.
        v = (jnp.dot(ub, ghi, preferred_element_type=jnp.float32) +
             jnp.dot(ub, glo, preferred_element_type=jnp.float32))   # [B, D]
        # Rayleigh quotient z = (u . v) / (u . u) = (u . v) * inv_uu.
        z_new = jnp.sum(u * v, axis=1, keepdims=True) * inv_uu       # [B, 1]
        # u <- v / (v . v); then 1/(u.u) = v.v, so carry vv directly (no div).
        vv = jnp.sum(v * v, axis=1, keepdims=True)                    # [B, 1]
        u_new = v * pl.reciprocal(vv, approx=True)
        return u_new, vv, z_new, z                                    # z -> z_old

    def cond(carry):
        it, _u, _inv_uu, _z, _z_old, diff2 = carry
        return jnp.logical_and(it < max_iter, diff2 >= tol2)

    def body(carry):
        it, u, inv_uu, z, z_old, _ = carry
        # Run K steps between convergence checks (K-1 of K steps never touch
        # the scalar/branch path).  Statically unrolled for LLO scheduling.
        u, inv_uu, z, z_old = lax.fori_loop(
            0, steps_per_check, one_step, (u, inv_uu, z, z_old), unroll=True)
        # torch.norm(z - z_old) < tol  <=>  sum((z - z_old)^2) < tol^2
        d = z - z_old
        diff2 = jnp.sum(d * d)
        # NOTE: if max_iter % steps_per_check != 0 and the loop has not
        # converged, up to steps_per_check-1 extra (harmless) steps run.
        return it + steps_per_check, u, inv_uu, z, z_old, diff2

    init = (jnp.int32(0), u_init, inv_uu_init,
            jnp.zeros((B, 1), jnp.float32),                 # z
            jnp.zeros((B, 1), jnp.float32),                 # z_old
            jnp.float32(jnp.finfo(jnp.float32).max))        # diff2 (force 1st trip)
    _, _, _, z_final, _, _ = lax.while_loop(cond, body, init)
    z_ref[...] = z_final


def jacobian_reg_l2(u0, W, *, max_iter=500, tol=1e-3, steps_per_check=4):
    """Returns z of shape [B]: estimate of ||dy/dx||_2^2 per batch element.

    u0: [B, N] flattened randn_like(x_in) init; W: [N, M] defining the linear
    map x_out = x_in_flat @ W (so J = W^T).
    (eval_mode / verbose only affect gradient tracking / printing in torch,
     not the forward value, so they have no kernel-side equivalent.)
    """
    assert steps_per_check >= 1
    B, N = u0.shape
    Nw, M = W.shape
    assert N == Nw

    # Power-iterate in the smaller of the two spaces: W W^T [N,N] and
    # W^T W [M,M] have the same nonzero spectrum, so the converged value is
    # identical (only the transient of the iteration differs).
    if M < N:
        G = (W.T @ W).astype(jnp.float32)                   # [M, M]
        u = (u0 @ W).astype(jnp.float32)                    # push init through J
        D = M
    else:
        G = (W @ W.T).astype(jnp.float32)                   # [N, N]
        u = u0.astype(jnp.float32)
        D = N

    # Hi/lo bf16 split: G ~= G_hi + G_lo keeps ~16 mantissa bits of G while
    # feeding the MXU native bf16 operands (two matmuls per step).
    G_hi = G.astype(jnp.bfloat16)
    G_lo = (G - G_hi.astype(jnp.float32)).astype(jnp.bfloat16)

    # VMEM sizing: two bf16 copies of G + a handful of [B, D] f32 buffers,
    # capped well below the physical VMEM of the current generation.
    approx_bytes = 2 * D * D * 2 + 8 * B * D * 4 + (4 << 20)
    vmem_limit = max(32 << 20, min(2 * approx_bytes, 96 << 20))
    try:
        cap = int(pltpu.get_tpu_info().vmem_capacity_bytes)  # 64 MiB v7x, 128 MiB v5e/v6e
        vmem_limit = min(vmem_limit, cap * 7 // 8)
    except Exception:
        vmem_limit = min(vmem_limit, 48 << 20)               # safe on every generation

    kernel = functools.partial(_power_iter_kernel, max_iter=max_iter, tol=tol,
                               steps_per_check=steps_per_check)
    z = pl.pallas_call(
        kernel,
        out_shape=jax.ShapeDtypeStruct((B, 1), jnp.float32),
        # No grid -> single invocation, whole arrays resident in VMEM with no
        # pipelining double-buffers (the weights are loop-invariant anyway).
        in_specs=[
            pl.BlockSpec(memory_space=pltpu.MemorySpace.VMEM),   # u     [B, D]
            pl.BlockSpec(memory_space=pltpu.MemorySpace.VMEM),   # G_hi  [D, D]
            pl.BlockSpec(memory_space=pltpu.MemorySpace.VMEM),   # G_lo  [D, D]
        ],
        out_specs=pl.BlockSpec(memory_space=pltpu.MemorySpace.VMEM),
        compiler_params=pltpu.CompilerParams(vmem_limit_bytes=vmem_limit),
    )(u, G_hi, G_lo)
    return z.reshape(-1)


def _reference_power_iter(u0, W, max_iter=500, tol=1e-3):
    """Pure-JAX f32 replica of the PyTorch loop (checks every iteration)."""
    G = W @ W.T
    u = u0 / jnp.sum(u0 * u0, axis=1, keepdims=True)
    z_old = jnp.zeros((u0.shape[0],), jnp.float32)
    z = z_old
    for it in range(max_iter):
        v = u @ G
        z = jnp.sum(u * v, axis=1) / jnp.sum(u * u, axis=1)
        if it > 0 and float(jnp.linalg.norm(z - z_old)) < tol:
            break
        z_old = z
        u = v / jnp.sum(v * v, axis=1, keepdims=True)
    return z


if __name__ == "__main__":
    key = jax.random.PRNGKey(0)
    B, C, H, Wsp = 2, 4, 16, 16           # small NCHW input
    N = C * H * Wsp                       # flattened feature size = 1024
    k1, k2, k3 = jax.random.split(key, 3)

    # Deterministic synthetic inputs / parameters.
    x_in = jax.random.normal(k1, (B, C, H, Wsp), jnp.float32)          # NCHW
    W = jax.random.normal(k2, (N, N), jnp.float32) / jnp.sqrt(N)       # map
    # x_out = f(x_in); f is linear so the Jacobian does not depend on x_in,
    # and only W (via its Gram matrix) enters the power-iteration kernel.
    x_out = (x_in.reshape(B, N) @ W).reshape(B, C, H, Wsp)
    # u = torch.randn_like(x_in), flattened.
    u0 = jax.random.normal(k3, (B, N), jnp.float32)

    # TODO(synk): verbose iteration printing and eval_mode gradient detaching
    # have no forward-value effect and are not reproduced in the kernel.
    z = jacobian_reg_l2(u0, W, max_iter=500, tol=1e-3)
    jax.block_until_ready(z)

    z_ref = _reference_power_iter(u0, W, max_iter=500, tol=1e-3)

    assert z.shape == (B,)
    assert bool(jnp.all(jnp.isfinite(z))) and bool(jnp.all(z > 0))
    assert bool(jnp.allclose(z, z_ref, rtol=2e-2, atol=1e-3)), (z, z_ref)
    print("KERNEL_OK")
</pallas_src>

<mosaic_0001>
module attributes {stable_mosaic.version = 11 : i64} {
  func.func @_power_iter_kernel(%arg0: memref<2x1024xf32, #tpu.memory_space<vmem>>, %arg1: memref<1024x1024xbf16, #tpu.memory_space<vmem>>, %arg2: memref<1024x1024xbf16, #tpu.memory_space<vmem>>, %arg3: memref<2x1xf32, #tpu.memory_space<vmem>>) attributes {dimension_semantics = [], scalar_prefetch = 0 : i64, scratch_operands = 0 : i64, tpu.core_type = #tpu.core_type<tc>} {
    %c0 = arith.constant 0 : index
    %c0_0 = arith.constant 0 : index
    %0 = vector.load %arg0[%c0, %c0_0] : memref<2x1024xf32, #tpu.memory_space<vmem>>, vector<2x1024xf32>
    %c0_1 = arith.constant 0 : index
    %c0_2 = arith.constant 0 : index
    %1 = vector.load %arg1[%c0_1, %c0_2] : memref<1024x1024xbf16, #tpu.memory_space<vmem>>, vector<1024x1024xbf16>
    %c0_3 = arith.constant 0 : index
    %c0_4 = arith.constant 0 : index
    %2 = vector.load %arg2[%c0_3, %c0_4] : memref<1024x1024xbf16, #tpu.memory_space<vmem>>, vector<1024x1024xbf16>
    %3 = arith.mulf %0, %0 : vector<2x1024xf32>
    %cst = arith.constant dense<0.000000e+00> : vector<2xf32>
    %4 = vector.multi_reduction <add>, %3, %cst [1] : vector<2x1024xf32> to vector<2xf32>
    %5 = vector.shape_cast %4 : vector<2xf32> to vector<2x1xf32>
    %6 = vector.broadcast %5 : vector<2x1xf32> to vector<2x1024xf32>
    %7 = arith.divf %0, %6 : vector<2x1024xf32>
    %cst_5 = arith.constant 0.000000e+00 : f32
    %8 = vector.broadcast %cst_5 : f32 to vector<2x1xf32>
    %cst_6 = arith.constant 0.000000e+00 : f32
    %9 = vector.broadcast %cst_6 : f32 to vector<2x1xf32>
    %cst_7 = arith.constant 9.99999997E-7 : f32
    %c0_i32 = arith.constant 0 : i32
    %cst_8 = arith.constant 3.40282347E+38 : f32
    %10:6 = scf.while (%arg4 = %c0_i32, %arg5 = %7, %arg6 = %5, %arg7 = %8, %arg8 = %9, %arg9 = %cst_8) : (i32, vector<2x1024xf32>, vector<2x1xf32>, vector<2x1xf32>, vector<2x1xf32>, f32) -> (i32, vector<2x1024xf32>, vector<2x1xf32>, vector<2x1xf32>, vector<2x1xf32>, f32) {
      %c500_i32 = arith.constant 500 : i32
      %12 = arith.cmpi slt, %arg4, %c500_i32 : i32
      %13 = arith.cmpf oge, %arg9, %cst_7 : f32
      %14 = arith.andi %12, %13 : i1
      scf.condition(%14) %arg4, %arg5, %arg6, %arg7, %arg8, %arg9 : i32, vector<2x1024xf32>, vector<2x1xf32>, vector<2x1xf32>, vector<2x1xf32>, f32
    } do {
    ^bb0(%arg4: i32, %arg5: vector<2x1024xf32>, %arg6: vector<2x1xf32>, %arg7: vector<2x1xf32>, %arg8: vector<2x1xf32>, %arg9: f32):
      %c0_i32_11 = arith.constant 0 : i32
      %12 = arith.truncf %arg5 : vector<2x1024xf32> to vector<2x1024xbf16>
      %cst_12 = arith.constant dense<0.000000e+00> : vector<2x1024xf32>
      %13 = tpu.matmul %12, %1, %cst_12 {dimension_numbers = #tpu.dot_dimension_numbers<[1], [0], [0], [1], [0, 0, 1, 1], [], []>} : vector<2x1024xbf16>, vector<1024x1024xbf16>, vector<2x1024xf32> -> vector<2x1024xf32>
      %cst_13 = arith.constant dense<0.000000e+00> : vector<2x1024xf32>
      %14 = tpu.matmul %12, %2, %cst_13 {dimension_numbers = #tpu.dot_dimension_numbers<[1], [0], [0], [1], [0, 0, 1, 1], [], []>} : vector<2x1024xbf16>, vector<1024x1024xbf16>, vector<2x1024xf32> -> vector<2x1024xf32>
      %15 = arith.addf %13, %14 : vector<2x1024xf32>
      %16 = arith.mulf %arg5, %15 : vector<2x1024xf32>
      %cst_14 = arith.constant dense<0.000000e+00> : vector<2xf32>
      %17 = vector.multi_reduction <add>, %16, %cst_14 [1] : vector<2x1024xf32> to vector<2xf32>
      %18 = vector.shape_cast %17 : vector<2xf32> to vector<2x1xf32>
      %19 = arith.mulf %18, %arg6 : vector<2x1xf32>
      %20 = arith.mulf %15, %15 : vector<2x1024xf32>
      %cst_15 = arith.constant dense<0.000000e+00> : vector<2xf32>
      %21 = vector.multi_reduction <add>, %20, %cst_15 [1] : vector<2x1024xf32> to vector<2xf32>
      %22 = vector.shape_cast %21 : vector<2xf32> to vector<2x1xf32>
      %23 = tpu.reciprocal %22 {approx = true} : vector<2x1xf32> -> vector<2x1xf32>
      %24 = vector.broadcast %23 : vector<2x1xf32> to vector<2x1024xf32>
      %25 = arith.mulf %15, %24 : vector<2x1024xf32>
      %c1_i32 = arith.constant 1 : i32
      %26 = arith.truncf %25 : vector<2x1024xf32> to vector<2x1024xbf16>
      %cst_16 = arith.constant dense<0.000000e+00> : vector<2x1024xf32>
      %27 = tpu.matmul %26, %1, %cst_16 {dimension_numbers = #tpu.dot_dimension_numbers<[1], [0], [0], [1], [0, 0, 1, 1], [], []>} : vector<2x1024xbf16>, vector<1024x1024xbf16>, vector<2x1024xf32> -> vector<2x1024xf32>
      %cst_17 = arith.constant dense<0.000000e+00> : vector<2x1024xf32>
      %28 = tpu.matmul %26, %2, %cst_17 {dimension_numbers = #tpu.dot_dimension_numbers<[1], [0], [0], [1], [0, 0, 1, 1], [], []>} : vector<2x1024xbf16>, vector<1024x1024xbf16>, vector<2x1024xf32> -> vector<2x1024xf32>
      %29 = arith.addf %27, %28 : vector<2x1024xf32>
      %30 = arith.mulf %25, %29 : vector<2x1024xf32>
      %cst_18 = arith.constant dense<0.000000e+00> : vector<2xf32>
      %31 = vector.multi_reduction <add>, %30, %cst_18 [1] : vector<2x1024xf32> to vector<2xf32>
      %32 = vector.shape_cast %31 : vector<2xf32> to vector<2x1xf32>
      %33 = arith.mulf %32, %22 : vector<2x1xf32>
      %34 = arith.mulf %29, %29 : vector<2x1024xf32>
      %cst_19 = arith.constant dense<0.000000e+00> : vector<2xf32>
      %35 = vector.multi_reduction <add>, %34, %cst_19 [1] : vector<2x1024xf32> to vector<2xf32>
      %36 = vector.shape_cast %35 : vector<2xf32> to vector<2x1xf32>
      %37 = tpu.reciprocal %36 {approx = true} : vector<2x1xf32> -> vector<2x1xf32>
      %38 = vector.broadcast %37 : vector<2x1xf32> to vector<2x1024xf32>
      %39 = arith.mulf %29, %38 : vector<2x1024xf32>
      %c2_i32 = arith.constant 2 : i32
      %40 = arith.truncf %39 : vector<2x1024xf32> to vector<2x1024xbf16>
      %cst_20 = arith.constant dense<0.000000e+00> : vector<2x1024xf32>
      %41 = tpu.matmul %40, %1, %cst_20 {dimension_numbers = #tpu.dot_dimension_numbers<[1], [0], [0], [1], [0, 0, 1, 1], [], []>} : vector<2x1024xbf16>, vector<1024x1024xbf16>, vector<2x1024xf32> -> vector<2x1024xf32>
      %cst_21 = arith.constant dense<0.000000e+00> : vector<2x1024xf32>
      %42 = tpu.matmul %40, %2, %cst_21 {dimension_numbers = #tpu.dot_dimension_numbers<[1], [0], [0], [1], [0, 0, 1, 1], [], []>} : vector<2x1024xbf16>, vector<1024x1024xbf16>, vector<2x1024xf32> -> vector<2x1024xf32>
      %43 = arith.addf %41, %42 : vector<2x1024xf32>
      %44 = arith.mulf %39, %43 : vector<2x1024xf32>
      %cst_22 = arith.constant dense<0.000000e+00> : vector<2xf32>
      %45 = vector.multi_reduction <add>, %44, %cst_22 [1] : vector<2x1024xf32> to vector<2xf32>
      %46 = vector.shape_cast %45 : vector<2xf32> to vector<2x1xf32>
      %47 = arith.mulf %46, %36 : vector<2x1xf32>
      %48 = arith.mulf %43, %43 : vector<2x1024xf32>
      %cst_23 = arith.constant dense<0.000000e+00> : vector<2xf32>
      %49 = vector.multi_reduction <add>, %48, %cst_23 [1] : vector<2x1024xf32> to vector<2xf32>
      %50 = vector.shape_cast %49 : vector<2xf32> to vector<2x1xf32>
      %51 = tpu.reciprocal %50 {approx = true} : vector<2x1xf32> -> vector<2x1xf32>
      %52 = vector.broadcast %51 : vector<2x1xf32> to vector<2x1024xf32>
      %53 = arith.mulf %43, %52 : vector<2x1024xf32>
      %c3_i32 = arith.constant 3 : i32
      %54 = arith.truncf %53 : vector<2x1024xf32> to vector<2x1024xbf16>
      %cst_24 = arith.constant dense<0.000000e+00> : vector<2x1024xf32>
      %55 = tpu.matmul %54, %1, %cst_24 {dimension_numbers = #tpu.dot_dimension_numbers<[1], [0], [0], [1], [0, 0, 1, 1], [], []>} : vector<2x1024xbf16>, vector<1024x1024xbf16>, vector<2x1024xf32> -> vector<2x1024xf32>
      %cst_25 = arith.constant dense<0.000000e+00> : vector<2x1024xf32>
      %56 = tpu.matmul %54, %2, %cst_25 {dimension_numbers = #tpu.dot_dimension_numbers<[1], [0], [0], [1], [0, 0, 1, 1], [], []>} : vector<2x1024xbf16>, vector<1024x1024xbf16>, vector<2x1024xf32> -> vector<2x1024xf32>
      %57 = arith.addf %55, %56 : vector<2x1024xf32>
      %58 = arith.mulf %53, %57 : vector<2x1024xf32>
      %cst_26 = arith.constant dense<0.000000e+00> : vector<2xf32>
      %59 = vector.multi_reduction <add>, %58, %cst_26 [1] : vector<2x1024xf32> to vector<2xf32>
      %60 = vector.shape_cast %59 : vector<2xf32> to vector<2x1xf32>
      %61 = arith.mulf %60, %50 : vector<2x1xf32>
      %62 = arith.mulf %57, %57 : vector<2x1024xf32>
      %cst_27 = arith.constant dense<0.000000e+00> : vector<2xf32>
      %63 = vector.multi_reduction <add>, %62, %cst_27 [1] : vector<2x1024xf32> to vector<2xf32>
      %64 = vector.shape_cast %63 : vector<2xf32> to vector<2x1xf32>
      %65 = tpu.reciprocal %64 {approx = true} : vector<2x1xf32> -> vector<2x1xf32>
      %66 = vector.broadcast %65 : vector<2x1xf32> to vector<2x1024xf32>
      %67 = arith.mulf %57, %66 : vector<2x1024xf32>
      %c4_i32 = arith.constant 4 : i32
      %68 = arith.subf %61, %47 : vector<2x1xf32>
      %69 = arith.mulf %68, %68 : vector<2x1xf32>
      %70 = vector.shape_cast %69 : vector<2x1xf32> to vector<1x2x1xf32>
      %cst_28 = arith.constant dense<0.000000e+00> : vector<1xf32>
      %71 = vector.multi_reduction <add>, %70, %cst_28 [1, 2] : vector<1x2x1xf32> to vector<1xf32>
      %72 = vector.shape_cast %71 : vector<1xf32> to vector<1x1x1xf32>
      %73 = vector.extract %72[0, 0, 0] : f32 from vector<1x1x1xf32>
      %c4_i32_29 = arith.constant 4 : i32
      %74 = arith.addi %arg4, %c4_i32_29 : i32
      scf.yield %74, %67, %64, %61, %47, %73 : i32, vector<2x1024xf32>, vector<2x1xf32>, vector<2x1xf32>, vector<2x1xf32>, f32
    }
    %c0_9 = arith.constant 0 : index
    %c0_10 = arith.constant 0 : index
    %11 = vector.load %arg3[%c0_9, %c0_10] : memref<2x1xf32, #tpu.memory_space<vmem>>, vector<2x1xf32>
    tpu.vector_store %arg3[%c0_9, %c0_10], %10#3 {strides = array<i32>} : memref<2x1xf32, #tpu.memory_space<vmem>>, vector<2x1xf32>,
    return
  }
}

</mosaic_0001>

<llo_original>
// kernel: tpu_custom_call.1
$region0: #{tpu_custom_call.1}
  #allocation0 [shape = 'u32[]', space=smem, size = 0x4, offset = 0x4, fixed_abs, tag = 'smem constant byte address 0x4 - core index']
  #allocation1 [shape = 'u32[144,128]{1,0:T(1,128)}', space=vmem, size = 0x12000, scoped, tag = 'internal scratch']
  %s0 = inlined_call_operand.hbm [shape: f32[2,1024], index: 0, kind: input, shape index: {}]
  %s1 = inlined_call_operand.hbm [shape: bf16[1024,1024], index: 1, kind: input, shape index: {}]
  %s2 = inlined_call_operand.hbm [shape: bf16[1024,1024], index: 2, kind: input, shape index: {}]
  %s3 = inlined_call_operand.vmem [shape: f32[2,1], index: 3, kind: output, shape index: {}]
  %s4 = sld [smem:[#allocation0]]
  $region41: #{tpu_custom_call.1} parent=0
    _
  %s6 = ssub.s32 1, %s4
  %s7 = scalar_select 0, %s6, %s4
  $region1: #{tpu_custom_call.1} parent=0
    #allocation2 [shape = 'u8[8192]{0}', space=vmem, size = 0x2000, scoped, tag = 'input window, operand 0, single buffered']
    #allocation3 [shape = 's32[1]{0}', space=sflag, size = 0x4, scoped, tag = 'scoped memory for tpu_custom_call.1']
    #allocation4 [shape = 'u8[2097152]{0}', space=vmem, size = 0x200000, scoped, tag = 'input window, operand 1, single buffered']
    #allocation5 [shape = 's32[1]{0}', space=sflag, size = 0x4, scoped, tag = 'scoped memory for tpu_custom_call.1']
    #allocation6 [shape = 'u8[2097152]{0}', space=vmem, size = 0x200000, scoped, tag = 'input window, operand 2, single buffered']
    %8 = vsyncpa [#allocation3], 0
    %9 = vsyncpa [#allocation5], 0
    // Predicated region
    $region2: #{tpu_custom_call.1} parent=1 // pred_check
      _
    $region3: #{tpu_custom_call.1} parent=1 // pred_check_branch
      %11 = sbr.rel (0) target = $region5
    $region4: #{tpu_custom_call.1} parent=1 // pred_region
      %s13 = ssub.s32 256, 256
      %14 = vsyncadd [#allocation3], %s13
      %s16 = sshll.u32 [#allocation2], 4
      %s17 = int_to_ptr.vmem [resolvable:$true] %s16
      %19 = dma.hbm_to_vmem [thread:$0]  %s0, 256, %s17, [#allocation3]
    $region5: #{tpu_custom_call.1} parent=1 // pred_fallthru
      _
    // Predicated region
    $region6: #{tpu_custom_call.1} parent=1 // pred_check
      _
    $region7: #{tpu_custom_call.1} parent=1 // pred_check_branch
      %21 = sbr.rel (0) target = $region9
    $region8: #{tpu_custom_call.1} parent=1 // pred_region
      %s23 = ssub.s32 65536, 65536
      %24 = vsyncadd [#allocation5], %s23
      %s25 = sshll.u32 [#allocation4], 4
      %s26 = int_to_ptr.vmem [resolvable:$true] %s25
      %31 = dma.hbm_to_vmem [thread:$0]  %s1, 65536, %s26, [#allocation5], 512, 512, 32
    $region9: #{tpu_custom_call.1} parent=1 // pred_fallthru
      _
    // Predicated region
    $region10: #{tpu_custom_call.1} parent=1 // pred_check
      _
    $region11: #{tpu_custom_call.1} parent=1 // pred_check_branch
      %33 = sbr.rel (0) target = $region13
    $region12: #{tpu_custom_call.1} parent=1 // pred_region
      %s35 = ssub.s32 65536, 65536
      %36 = vsyncadd [#allocation5], %s35
      %s37 = sshll.u32 [#allocation6], 4
      %s38 = int_to_ptr.vmem [resolvable:$true] %s37
      %43 = dma.hbm_to_vmem [thread:$0]  %s2, 65536, %s38, [#allocation5], 512, 512, 32
    $region13: #{tpu_custom_call.1} parent=1 // pred_fallthru
      _
    // Predicated region
    $region14: #{tpu_custom_call.1} parent=1 // pred_check
      _
    $region15: #{tpu_custom_call.1} parent=1 // pred_check_branch
      %45 = sbr.rel (0) target = $region17
    $region16: #{tpu_custom_call.1} parent=1 // pred_region
      %46 = dma.done [#allocation3], 256
    $region17: #{tpu_custom_call.1} parent=1 // pred_fallthru
      _
    // Predicated region
    $region18: #{tpu_custom_call.1} parent=1 // pred_check
      _
    $region19: #{tpu_custom_call.1} parent=1 // pred_check_branch
      %48 = sbr.rel (0) target = $region21
    $region20: #{tpu_custom_call.1} parent=1 // pred_region
      %49 = dma.done [#allocation5], 65536
    $region21: #{tpu_custom_call.1} parent=1 // pred_fallthru
      _
    // Predicated region
    $region22: #{tpu_custom_call.1} parent=1 // pred_check
      _
    $region23: #{tpu_custom_call.1} parent=1 // pred_check_branch
      %51 = sbr.rel (0) target = $region25
    $region24: #{tpu_custom_call.1} parent=1 // pred_region
      %52 = dma.done [#allocation5], 65536
    $region25: #{tpu_custom_call.1} parent=1 // pred_fallthru
      _
    %v53 = vld [vmem:[#allocation2] sm:$0xff]
    %v54 = vld [vmem:[#allocation2 + $0x8] sm:$0xff]
    %v55 = vld [vmem:[#allocation4] sm:$0xff]
    %v56 = vld [vmem:[#allocation4 + $0x8] sm:$0xff]
    %v57 = vld [vmem:[#allocation4 + $0x10] sm:$0xff]
    %v58 = vld [vmem:[#allocation4 + $0x18] sm:$0xff]
    %v59 = vld [vmem:[#allocation4 + $0x20] sm:$0xff]
    %v60 = vld [vmem:[#allocation4 + $0x28] sm:$0xff]
    %v61 = vld [vmem:[#allocation4 + $0x30] sm:$0xff]
    %v62 = vld [vmem:[#allocation4 + $0x38] sm:$0xff]
    %v63 = vld [vmem:[#allocation4 + $0x40] sm:$0xff]
    %v64 = vld [vmem:[#allocation4 + $0x48] sm:$0xff]
    %v65 = vld [vmem:[#allocation4 + $0x50] sm:$0xff]
    %v66 = vld [vmem:[#allocation4 + $0x58] sm:$0xff]
    %v67 = vld [vmem:[#allocation4 + $0x60] sm:$0xff]
    %v68 = vld [vmem:[#allocation4 + $0x68] sm:$0xff]
    %v69 = vld [vmem:[#allocation4 + $0x70] sm:$0xff]
    %v70 = vld [vmem:[#allocation4 + $0x78] sm:$0xff]
    %v71 = vld [vmem:[#allocation4 + $0x80] sm:$0xff]
    %v72 = vld [vmem:[#allocation4 + $0x88] sm:$0xff]
    %v73 = vld [vmem:[#allocation4 + $0x90] sm:$0xff]
    %v74 = vld [vmem:[#allocation4 + $0x98] sm:$0xff]
    %v75 = vld [vmem:[#allocation4 + $0xa0] sm:$0xff]
    %v76 = vld [vmem:[#allocation4 + $0xa8] sm:$0xff]
    %v77 = vld [vmem:[#allocation4 + $0xb0] sm:$0xff]
    %v78 = vld [vmem:[#allocation4 + $0xb8] sm:$0xff]
    %v79 = vld [vmem:[#allocation4 + $0xc0] sm:$0xff]
    %v80 = vld [vmem:[#allocation4 + $0xc8] sm:$0xff]
    %v81 = vld [vmem:[#allocation4 + $0xd0] sm:$0xff]
    %v82 = vld [vmem:[#allocation4 + $0xd8] sm:$0xff]
    %v83 = vld [vmem:[#allocation4 + $0xe0] sm:$0xff]
    %v84 = vld [vmem:[#allocation4 + $0xe8] sm:$0xff]
    %v85 = vld [vmem:[#allocation4 + $0xf0] sm:$0xff]
    %v86 = vld [vmem:[#allocation4 + $0xf8] sm:$0xff]
    %v87 = vld [vmem:[#allocation4 + $0x100] sm:$0xff]
    %v88 = vld [vmem:[#allocation4 + $0x108] sm:$0xff]
    %v89 = vld [vmem:[#allocation4 + $0x110] sm:$0xff]
    %v90 = vld [vmem:[#allocation4 + $0x118] sm:$0xff]
    %v91 = vld [vmem:[#allocation4 + $0x120] sm:$0xff]
    %v92 = vld [vmem:[#allocation4 + $0x128] sm:$0xff]
    %v93 = vld [vmem:[#allocation4 + $0x130] sm:$0xff]
    %v94 = vld [vmem:[#allocation4 + $0x138] sm:$0xff]
    %v95 = vld [vmem:[#allocation4 + $0x140] sm:$0xff]
    %v96 = vld [vmem:[#allocation4 + $0x148] sm:$0xff]
    %v97 = vld [vmem:[#allocation4 + $0x150] sm:$0xff]
    %v98 = vld [vmem:[#allocation4 + $0x158] sm:$0xff]
    %v99 = vld [vmem:[#allocation4 + $0x160] sm:$0xff]
    %v100 = vld [vmem:[#allocation4 + $0x168] sm:$0xff]
    %v101 = vld [vmem:[#allocation4 + $0x170] sm:$0xff]
    %v102 = vld [vmem:[#allocation4 + $0x178] sm:$0xff]
    %v103 = vld [vmem:[#allocation4 + $0x180] sm:$0xff]
    %v104 = vld [vmem:[#allocation4 + $0x188] sm:$0xff]
    %v105 = vld [vmem:[#allocation4 + $0x190] sm:$0xff]
    %v106 = vld [vmem:[#allocation4 + $0x198] sm:$0xff]
    %v107 = vld [vmem:[#allocation4 + $0x1a0] sm:$0xff]
    %v108 = vld [vmem:[#allocation4 + $0x1a8] sm:$0xff]
    %v109 = vld [vmem:[#allocation4 + $0x1b0] sm:$0xff]
    %v110 = vld [vmem:[#allocation4 + $0x1b8] sm:$0xff]
    %v111 = vld [vmem:[#allocation4 + $0x1c0] sm:$0xff]
    %v112 = vld [vmem:[#allocation4 + $0x1c8] sm:$0xff]
    %v113 = vld [vmem:[#allocation4 + $0x1d0] sm:$0xff]
    %v114 = vld [vmem:[#allocation4 + $0x1d8] sm:$0xff]
    %v115 = vld [vmem:[#allocation4 + $0x1e0] sm:$0xff]
    %v116 = vld [vmem:[#allocation4 + $0x1e8] sm:$0xff]
    %v117 = vld [vmem:[#allocation4 + $0x1f0] sm:$0xff]
    %v118 = vld [vmem:[#allocation4 + $0x1f8] sm:$0xff]
    %v119 = vld [vmem:[#allocation4 + $0x200] sm:$0xff]
    %v120 = vld [vmem:[#allocation4 + $0x208] sm:$0xff]
    %v121 = vld [vmem:[#allocation4 + $0x210] sm:$0xff]
    %v122 = vld [vmem:[#allocation4 + $0x218] sm:$0xff]
    %v123 = vld [vmem:[#allocation4 + $0x220] sm:$0xff]
    %v124 = vld [vmem:[#allocation4 + $0x228] sm:$0xff]
    %v125 = vld [vmem:[#allocation4 + $0x230] sm:$0xff]
    %v126 = vld [vmem:[#allocation4 + $0x238] sm:$0xff]
    %v127 = vld [vmem:[#allocation4 + $0x240] sm:$0xff]
    %v128 = vld [vmem:[#allocation4 + $0x248] sm:$0xff]
    %v129 = vld [vmem:[#allocation4 + $0x250] sm:$0xff]
    %v130 = vld [vmem:[#allocation4 + $0x258] sm:$0xff]
    %v131 = vld [vmem:[#allocation4 + $0x260] sm:$0xff]
    %v132 = vld [vmem:[#allocation4 + $0x268] sm:$0xff]
    %v133 = vld [vmem:[#allocation4 + $0x270] sm:$0xff]
    %v134 = vld [vmem:[#allocation4 + $0x278] sm:$0xff]
    %v135 = vld [vmem:[#allocation4 + $0x280] sm:$0xff]
    %v136 = vld [vmem:[#allocation4 + $0x288] sm:$0xff]
    %v137 = vld [vmem:[#allocation4 + $0x290] sm:$0xff]
    %v138 = vld [vmem:[#allocation4 + $0x298] sm:$0xff]
    %v139 = vld [vmem:[#allocation4 + $0x2a0] sm:$0xff]
    %v140 = vld [vmem:[#allocation4 + $0x2a8] sm:$0xff]
    %v141 = vld [vmem:[#allocation4 + $0x2b0] sm:$0xff]
    %v142 = vld [vmem:[#allocation4 + $0x2b8] sm:$0xff]
    %v143 = vld [vmem:[#allocation4 + $0x2c0] sm:$0xff]
    %v144 = vld [vmem:[#allocation4 + $0x2c8] sm:$0xff]
    %v145 = vld [vmem:[#allocation4 + $0x2d0] sm:$0xff]
    %v146 = vld [vmem:[#allocation4 + $0x2d8] sm:$0xff]
    %v147 = vld [vmem:[#allocation4 + $0x2e0] sm:$0xff]
    %v148 = vld [vmem:[#allocation4 + $0x2e8] sm:$0xff]
    %v149 = vld [vmem:[#allocation4 + $0x2f0] sm:$0xff]
    %v150 = vld [vmem:[#allocation4 + $0x2f8] sm:$0xff]
    %v151 = vld [vmem:[#allocation4 + $0x300] sm:$0xff]
    %v152 = vld [vmem:[#allocation4 + $0x308] sm:$0xff]
    %v153 = vld [vmem:[#allocation4 + $0x310] sm:$0xff]
    %v154 = vld [vmem:[#allocation4 + $0x318] sm:$0xff]
    %v155 = vld [vmem:[#allocation4 + $0x320] sm:$0xff]
    %v156 = vld [vmem:[#allocation4 + $0x328] sm:$0xff]
    %v157 = vld [vmem:[#allocation4 + $0x330] sm:$0xff]
    %v158 = vld [vmem:[#allocation4 + $0x338] sm:$0xff]
    %v159 = vld [vmem:[#allocation4 + $0x340] sm:$0xff]
    %v160 = vld [vmem:[#allocation4 + $0x348] sm:$0xff]
    %v161 = vld [vmem:[#allocation4 + $0x350] sm:$0xff]
    %v162 = vld [vmem:[#allocation4 + $0x358] sm:$0xff]
    %v163 = vld [vmem:[#allocation4 + $0x360] sm:$0xff]
    %v164 = vld [vmem:[#allocation4 + $0x368] sm:$0xff]
    %v165 = vld [vmem:[#allocation4 + $0x370] sm:$0xff]
    %v166 = vld [vmem:[#allocation4 + $0x378] sm:$0xff]
    %v167 = vld [vmem:[#allocation4 + $0x380] sm:$0xff]
    %v168 = vld [vmem:[#allocation4 + $0x388] sm:$0xff]
    %v169 = vld [vmem:[#allocation4 + $0x390] sm:$0xff]
    %v170 = vld [vmem:[#allocation4 + $0x398] sm:$0xff]
    %v171 = vld [vmem:[#allocation4 + $0x3a0] sm:$0xff]
    %v172 = vld [vmem:[#allocation4 + $0x3a8] sm:$0xff]
    %v173 = vld [vmem:[#allocation4 + $0x3b0] sm:$0xff]
    %v174 = vld [vmem:[#allocation4 + $0x3b8] sm:$0xff]
    %v175 = vld [vmem:[#allocation4 + $0x3c0] sm:$0xff]
    %v176 = vld [vmem:[#allocation4 + $0x3c8] sm:$0xff]
    %v177 = vld [vmem:[#allocation4 + $0x3d0] sm:$0xff]
    %v178 = vld [vmem:[#allocation4 + $0x3d8] sm:$0xff]
    %v179 = vld [vmem:[#allocation4 + $0x3e0] sm:$0xff]
    %v180 = vld [vmem:[#allocation4 + $0x3e8] sm:$0xff]
    %v181 = vld [vmem:[#allocation4 + $0x3f0] sm:$0xff]
    %v182 = vld [vmem:[#allocation4 + $0x3f8] sm:$0xff]
    %v183 = vld [vmem:[#allocation4 + $0x400] sm:$0xff]
    %v184 = vld [vmem:[#allocation4 + $0x408] sm:$0xff]
    %v185 = vld [vmem:[#allocation4 + $0x410] sm:$0xff]
    %v186 = vld [vmem:[#allocation4 + $0x418] sm:$0xff]
    %v187 = vld [vmem:[#allocation4 + $0x420] sm:$0xff]
    %v188 = vld [vmem:[#allocation4 + $0x428] sm:$0xff]
    %v189 = vld [vmem:[#allocation4 + $0x430] sm:$0xff]
    %v190 = vld [vmem:[#allocation4 + $0x438] sm:$0xff]
    %v191 = vld [vmem:[#allocation4 + $0x440] sm:$0xff]
    %v192 = vld [vmem:[#allocation4 + $0x448] sm:$0xff]
    %v193 = vld [vmem:[#allocation4 + $0x450] sm:$0xff]
    %v194 = vld [vmem:[#allocation4 + $0x458] sm:$0xff]
    %v195 = vld [vmem:[#allocation4 + $0x460] sm:$0xff]
    %v196 = vld [vmem:[#allocation4 + $0x468] sm:$0xff]
    %v197 = vld [vmem:[#allocation4 + $0x470] sm:$0xff]
    %v198 = vld [vmem:[#allocation4 + $0x478] sm:$0xff]
    %v199 = vld [vmem:[#allocation4 + $0x480] sm:$0xff]
    %v200 = vld [vmem:[#allocation4 + $0x488] sm:$0xff]
    %v201 = vld [vmem:[#allocation4 + $0x490] sm:$0xff]
    %v202 = vld [vmem:[#allocation4 + $0x498] sm:$0xff]
    %v203 = vld [vmem:[#allocation4 + $0x4a0] sm:$0xff]
    %v204 = vld [vmem:[#allocation4 + $0x4a8] sm:$0xff]
    %v205 = vld [vmem:[#allocation4 + $0x4b0] sm:$0xff]
    %v206 = vld [vmem:[#allocation4 + $0x4b8] sm:$0xff]
    %v207 = vld [vmem:[#allocation4 + $0x4c0] sm:$0xff]
    %v208 = vld [vmem:[#allocation4 + $0x4c8] sm:$0xff]
    %v209 = vld [vmem:[#allocation4 + $0x4d0] sm:$0xff]
    %v210 = vld [vmem:[#allocation4 + $0x4d8] sm:$0xff]
    %v211 = vld [vmem:[#allocation4 + $0x4e0] sm:$0xff]
    %v212 = vld [vmem:[#allocation4 + $0x4e8] sm:$0xff]
    %v213 = vld [vmem:[#allocation4 + $0x4f0] sm:$0xff]
    %v214 = vld [vmem:[#allocation4 + $0x4f8] sm:$0xff]
    %v215 = vld [vmem:[#allocation4 + $0x500] sm:$0xff]
    %v216 = vld [vmem:[#allocation4 + $0x508] sm:$0xff]
    %v217 = vld [vmem:[#allocation4 + $0x510] sm:$0xff]
    %v218 = vld [vmem:[#allocation4 + $0x518] sm:$0xff]
    %v219 = vld [vmem:[#allocation4 + $0x520] sm:$0xff]
    %v220 = vld [vmem:[#allocation4 + $0x528] sm:$0xff]
    %v221 = vld [vmem:[#allocation4 + $0x530] sm:$0xff]
    %v222 = vld [vmem:[#allocation4 + $0x538] sm:$0xff]
    %v223 = vld [vmem:[#allocation4 + $0x540] sm:$0xff]
    %v224 = vld [vmem:[#allocation4 + $0x548] sm:$0xff]
    %v225 = vld [vmem:[#allocation4 + $0x550] sm:$0xff]
    %v226 = vld [vmem:[#allocation4 + $0x558] sm:$0xff]
    %v227 = vld [vmem:[#allocation4 + $0x560] sm:$0xff]
    %v228 = vld [vmem:[#allocation4 + $0x568] sm:$0xff]
    %v229 = vld [vmem:[#allocation4 + $0x570] sm:$0xff]
    %v230 = vld [vmem:[#allocation4 + $0x578] sm:$0xff]
    %v231 = vld [vmem:[#allocation4 + $0x580] sm:$0xff]
    %v232 = vld [vmem:[#allocation4 + $0x588] sm:$0xff]
    %v233 = vld [vmem:[#allocation4 + $0x590] sm:$0xff]
    %v234 = vld [vmem:[#allocation4 + $0x598] sm:$0xff]
    %v235 = vld [vmem:[#allocation4 + $0x5a0] sm:$0xff]
    %v236 = vld [vmem:[#allocation4 + $0x5a8] sm:$0xff]
    %v237 = vld [vmem:[#allocation4 + $0x5b0] sm:$0xff]
    %v238 = vld [vmem:[#allocation4 + $0x5b8] sm:$0xff]
    %v239 = vld [vmem:[#allocation4 + $0x5c0] sm:$0xff]
    %v240 = vld [vmem:[#allocation4 + $0x5c8] sm:$0xff]
    %v241 = vld [vmem:[#allocation4 + $0x5d0] sm:$0xff]
    %v242 = vld [vmem:[#allocation4 + $0x5d8] sm:$0xff]
    %v243 = vld [vmem:[#allocation4 + $0x5e0] sm:$0xff]
    %v244 = vld [vmem:[#allocation4 + $0x5e8] sm:$0xff]
    %v245 = vld [vmem:[#allocation4 + $0x5f0] sm:$0xff]
    %v246 = vld [vmem:[#allocation4 + $0x5f8] sm:$0xff]
    %v247 = vld [vmem:[#allocation4 + $0x600] sm:$0xff]
    %v248 = vld [vmem:[#allocation4 + $0x608] sm:$0xff]
    %v249 = vld [vmem:[#allocation4 + $0x610] sm:$0xff]
    %v250 = vld [vmem:[#allocation4 + $0x618] sm:$0xff]
    %v251 = vld [vmem:[#allocation4 + $0x620] sm:$0xff]
    %v252 = vld [vmem:[#allocation4 + $0x628] sm:$0xff]
    %v253 = vld [vmem:[#allocation4 + $0x630] sm:$0xff]
    %v254 = vld [vmem:[#allocation4 + $0x638] sm:$0xff]
    %v255 = vld [vmem:[#allocation4 + $0x640] sm:$0xff]
    %v256 = vld [vmem:[#allocation4 + $0x648] sm:$0xff]
    %v257 = vld [vmem:[#allocation4 + $0x650] sm:$0xff]
    %v258 = vld [vmem:[#allocation4 + $0x658] sm:$0xff]
    %v259 = vld [vmem:[#allocation4 + $0x660] sm:$0xff]
    %v260 = vld [vmem:[#allocation4 + $0x668] sm:$0xff]
    %v261 = vld [vmem:[#allocation4 + $0x670] sm:$0xff]
    %v262 = vld [vmem:[#allocation4 + $0x678] sm:$0xff]
    %v263 = vld [vmem:[#allocation4 + $0x680] sm:$0xff]
    %v264 = vld [vmem:[#allocation4 + $0x688] sm:$0xff]
    %v265 = vld [vmem:[#allocation4 + $0x690] sm:$0xff]
    %v266 = vld [vmem:[#allocation4 + $0x698] sm:$0xff]
    %v267 = vld [vmem:[#allocation4 + $0x6a0] sm:$0xff]
    %v268 = vld [vmem:[#allocation4 + $0x6a8] sm:$0xff]
    %v269 = vld [vmem:[#allocation4 + $0x6b0] sm:$0xff]
    %v270 = vld [vmem:[#allocation4 + $0x6b8] sm:$0xff]
    %v271 = vld [vmem:[#allocation4 + $0x6c0] sm:$0xff]
    %v272 = vld [vmem:[#allocation4 + $0x6c8] sm:$0xff]
    %v273 = vld [vmem:[#allocation4 + $0x6d0] sm:$0xff]
    %v274 = vld [vmem:[#allocation4 + $0x6d8] sm:$0xff]
    %v275 = vld [vmem:[#allocation4 + $0x6e0] sm:$0xff]
    %v276 = vld [vmem:[#allocation4 + $0x6e8] sm:$0xff]
    %v277 = vld [vmem:[#allocation4 + $0x6f0] sm:$0xff]
    %v278 = vld [vmem:[#allocation4 + $0x6f8] sm:$0xff]
    %v279 = vld [vmem:[#allocation4 + $0x700] sm:$0xff]
    %v280 = vld [vmem:[#allocation4 + $0x708] sm:$0xff]
    %v281 = vld [vmem:[#allocation4 + $0x710] sm:$0xff]
    %v282 = vld [vmem:[#allocation4 + $0x718] sm:$0xff]
    %v283 = vld [vmem:[#allocation4 + $0x720] sm:$0xff]
    %v284 = vld [vmem:[#allocation4 + $0x728] sm:$0xff]
    %v285 = vld [vmem:[#allocation4 + $0x730] sm:$0xff]
    %v286 = vld [vmem:[#allocation4 + $0x738] sm:$0xff]
    %v287 = vld [vmem:[#allocation4 + $0x740] sm:$0xff]
    %v288 = vld [vmem:[#allocation4 + $0x748] sm:$0xff]
    %v289 = vld [vmem:[#allocation4 + $0x750] sm:$0xff]
    %v290 = vld [vmem:[#allocation4 + $0x758] sm:$0xff]
    %v291 = vld [vmem:[#allocation4 + $0x760] sm:$0xff]
    %v292 = vld [vmem:[#allocation4 + $0x768] sm:$0xff]
    %v293 = vld [vmem:[#allocation4 + $0x770] sm:$0xff]
    %v294 = vld [vmem:[#allocation4 + $0x778] sm:$0xff]
    %v295 = vld [vmem:[#allocation4 + $0x780] sm:$0xff]
    %v296 = vld [vmem:[#allocation4 + $0x788] sm:$0xff]
    %v297 = vld [vmem:[#allocation4 + $0x790] sm:$0xff]
    %v298 = vld [vmem:[#allocation4 + $0x798] sm:$0xff]
    %v299 = vld [vmem:[#allocation4 + $0x7a0] sm:$0xff]
    %v300 = vld [vmem:[#allocation4 + $0x7a8] sm:$0xff]
    %v301 = vld [vmem:[#allocation4 + $0x7b0] sm:$0xff]
    %v302 = vld [vmem:[#allocation4 + $0x7b8] sm:$0xff]
    %v303 = vld [vmem:[#allocation4 + $0x7c0] sm:$0xff]
    %v304 = vld [vmem:[#allocation4 + $0x7c8] sm:$0xff]
    %v305 = vld [vmem:[#allocation4 + $0x7d0] sm:$0xff]
    %v306 = vld [vmem:[#allocation4 + $0x7d8] sm:$0xff]
    %v307 = vld [vmem:[#allocation4 + $0x7e0] sm:$0xff]
    %v308 = vld [vmem:[#allocation4 + $0x7e8] sm:$0xff]
    %v309 = vld [vmem:[#allocation4 + $0x7f0] sm:$0xff]
    %v310 = vld [vmem:[#allocation4 + $0x7f8] sm:$0xff]
    %v311 = vld [vmem:[#allocation4 + $0x800] sm:$0xff]
    %v312 = vld [vmem:[#allocation4 + $0x808] sm:$0xff]
    %v313 = vld [vmem:[#allocation4 + $0x810] sm:$0xff]
    %v314 = vld [vmem:[#allocation4 + $0x818] sm:$0xff]
    %v315 = vld [vmem:[#allocation4 + $0x820] sm:$0xff]
    %v316 = vld [vmem:[#allocation4 + $0x828] sm:$0xff]
    %v317 = vld [vmem:[#allocation4 + $0x830] sm:$0xff]
    %v318 = vld [vmem:[#allocation4 + $0x838] sm:$0xff]
    %v319 = vld [vmem:[#allocation4 + $0x840] sm:$0xff]
    %v320 = vld [vmem:[#allocation4 + $0x848] sm:$0xff]
    %v321 = vld [vmem:[#allocation4 + $0x850] sm:$0xff]
    %v322 = vld [vmem:[#allocation4 + $0x858] sm:$0xff]
    %v323 = vld [vmem:[#allocation4 + $0x860] sm:$0xff]
    %v324 = vld [vmem:[#allocation4 + $0x868] sm:$0xff]
    %v325 = vld [vmem:[#allocation4 + $0x870] sm:$0xff]
    %v326 = vld [vmem:[#allocation4 + $0x878] sm:$0xff]
    %v327 = vld [vmem:[#allocation4 + $0x880] sm:$0xff]
    %v328 = vld [vmem:[#allocation4 + $0x888] sm:$0xff]
    %v329 = vld [vmem:[#allocation4 + $0x890] sm:$0xff]
    %v330 = vld [vmem:[#allocation4 + $0x898] sm:$0xff]
    %v331 = vld [vmem:[#allocation4 + $0x8a0] sm:$0xff]
    %v332 = vld [vmem:[#allocation4 + $0x8a8] sm:$0xff]
    %v333 = vld [vmem:[#allocation4 + $0x8b0] sm:$0xff]
    %v334 = vld [vmem:[#allocation4 + $0x8b8] sm:$0xff]
    %v335 = vld [vmem:[#allocation4 + $0x8c0] sm:$0xff]
    %v336 = vld [vmem:[#allocation4 + $0x8c8] sm:$0xff]
    %v337 = vld [vmem:[#allocation4 + $0x8d0] sm:$0xff]
    %v338 = vld [vmem:[#allocation4 + $0x8d8] sm:$0xff]
    %v339 = vld [vmem:[#allocation4 + $0x8e0] sm:$0xff]
    %v340 = vld [vmem:[#allocation4 + $0x8e8] sm:$0xff]
    %v341 = vld [vmem:[#allocation4 + $0x8f0] sm:$0xff]
    %v342 = vld [vmem:[#allocation4 + $0x8f8] sm:$0xff]
    %v343 = vld [vmem:[#allocation4 + $0x900] sm:$0xff]
    %v344 = vld [vmem:[#allocation4 + $0x908] sm:$0xff]
    %v345 = vld [vmem:[#allocation4 + $0x910] sm:$0xff]
    %v346 = vld [vmem:[#allocation4 + $0x918] sm:$0xff]
    %v347 = vld [vmem:[#allocation4 + $0x920] sm:$0xff]
    %v348 = vld [vmem:[#allocation4 + $0x928] sm:$0xff]
    %v349 = vld [vmem:[#allocation4 + $0x930] sm:$0xff]
    %v350 = vld [vmem:[#allocation4 + $0x938] sm:$0xff]
    %v351 = vld [vmem:[#allocation4 + $0x940] sm:$0xff]
    %v352 = vld [vmem:[#allocation4 + $0x948] sm:$0xff]
    %v353 = vld [vmem:[#allocation4 + $0x950] sm:$0xff]
    %v354 = vld [vmem:[#allocation4 + $0x958] sm:$0xff]
    %v355 = vld [vmem:[#allocation4 + $0x960] sm:$0xff]
    %v356 = vld [vmem:[#allocation4 + $0x968] sm:$0xff]
    %v357 = vld [vmem:[#allocation4 + $0x970] sm:$0xff]
    %v358 = vld [vmem:[#allocation4 + $0x978] sm:$0xff]
    %v359 = vld [vmem:[#allocation4 + $0x980] sm:$0xff]
    %v360 = vld [vmem:[#allocation4 + $0x988] sm:$0xff]
    %v361 = vld [vmem:[#allocation4 + $0x990] sm:$0xff]
    %v362 = vld [vmem:[#allocation4 + $0x998] sm:$0xff]
    %v363 = vld [vmem:[#allocation4 + $0x9a0] sm:$0xff]
    %v364 = vld [vmem:[#allocation4 + $0x9a8] sm:$0xff]
    %v365 = vld [vmem:[#allocation4 + $0x9b0] sm:$0xff]
    %v366 = vld [vmem:[#allocation4 + $0x9b8] sm:$0xff]
    %v367 = vld [vmem:[#allocation4 + $0x9c0] sm:$0xff]
    %v368 = vld [vmem:[#allocation4 + $0x9c8] sm:$0xff]
    %v369 = vld [vmem:[#allocation4 + $0x9d0] sm:$0xff]
    %v370 = vld [vmem:[#allocation4 + $0x9d8] sm:$0xff]
    %v371 = vld [vmem:[#allocation4 + $0x9e0] sm:$0xff]
    %v372 = vld [vmem:[#allocation4 + $0x9e8] sm:$0xff]
    %v373 = vld [vmem:[#allocation4 + $0x9f0] sm:$0xff]
    %v374 = vld [vmem:[#allocation4 + $0x9f8] sm:$0xff]
    %v375 = vld [vmem:[#allocation4 + $0xa00] sm:$0xff]
    %v376 = vld [vmem:[#allocation4 + $0xa08] sm:$0xff]
    %v377 = vld [vmem:[#allocation4 + $0xa10] sm:$0xff]
    %v378 = vld [vmem:[#allocation4 + $0xa18] sm:$0xff]
    %v379 = vld [vmem:[#allocation4 + $0xa20] sm:$0xff]
    %v380 = vld [vmem:[#allocation4 + $0xa28] sm:$0xff]
    %v381 = vld [vmem:[#allocation4 + $0xa30] sm:$0xff]
    %v382 = vld [vmem:[#allocation4 + $0xa38] sm:$0xff]
    %v383 = vld [vmem:[#allocation4 + $0xa40] sm:$0xff]
    %v384 = vld [vmem:[#allocation4 + $0xa48] sm:$0xff]
    %v385 = vld [vmem:[#allocation4 + $0xa50] sm:$0xff]
    %v386 = vld [vmem:[#allocation4 + $0xa58] sm:$0xff]
    %v387 = vld [vmem:[#allocation4 + $0xa60] sm:$0xff]
    %v388 = vld [vmem:[#allocation4 + $0xa68] sm:$0xff]
    %v389 = vld [vmem:[#allocation4 + $0xa70] sm:$0xff]
    %v390 = vld [vmem:[#allocation4 + $0xa78] sm:$0xff]
    %v391 = vld [vmem:[#allocation4 + $0xa80] sm:$0xff]
    %v392 = vld [vmem:[#allocation4 + $0xa88] sm:$0xff]
    %v393 = vld [vmem:[#allocation4 + $0xa90] sm:$0xff]
    %v394 = vld [vmem:[#allocation4 + $0xa98] sm:$0xff]
    %v395 = vld [vmem:[#allocation4 + $0xaa0] sm:$0xff]
    %v396 = vld [vmem:[#allocation4 + $0xaa8] sm:$0xff]
    %v397 = vld [vmem:[#allocation4 + $0xab0] sm:$0xff]
    %v398 = vld [vmem:[#allocation4 + $0xab8] sm:$0xff]
    %v399 = vld [vmem:[#allocation4 + $0xac0] sm:$0xff]
    %v400 = vld [vmem:[#allocation4 + $0xac8] sm:$0xff]
    %v401 = vld [vmem:[#allocation4 + $0xad0] sm:$0xff]
    %v402 = vld [vmem:[#allocation4 + $0xad8] sm:$0xff]
    %v403 = vld [vmem:[#allocation4 + $0xae0] sm:$0xff]
    %v404 = vld [vmem:[#allocation4 + $0xae8] sm:$0xff]
    %v405 = vld [vmem:[#allocation4 + $0xaf0] sm:$0xff]
    %v406 = vld [vmem:[#allocation4 + $0xaf8] sm:$0xff]
    %v407 = vld [vmem:[#allocation4 + $0xb00] sm:$0xff]
    %v408 = vld [vmem:[#allocation4 + $0xb08] sm:$0xff]
    %v409 = vld [vmem:[#allocation4 + $0xb10] sm:$0xff]
    %v410 = vld [vmem:[#allocation4 + $0xb18] sm:$0xff]
    %v411 = vld [vmem:[#allocation4 + $0xb20] sm:$0xff]
    %v412 = vld [vmem:[#allocation4 + $0xb28] sm:$0xff]
    %v413 = vld [vmem:[#allocation4 + $0xb30] sm:$0xff]
    %v414 = vld [vmem:[#allocation4 + $0xb38] sm:$0xff]
    %v415 = vld [vmem:[#allocation4 + $0xb40] sm:$0xff]
    %v416 = vld [vmem:[#allocation4 + $0xb48] sm:$0xff]
    %v417 = vld [vmem:[#allocation4 + $0xb50] sm:$0xff]
    %v418 = vld [vmem:[#allocation4 + $0xb58] sm:$0xff]
    %v419 = vld [vmem:[#allocation4 + $0xb60] sm:$0xff]
    %v420 = vld [vmem:[#allocation4 + $0xb68] sm:$0xff]
    %v421 = vld [vmem:[#allocation4 + $0xb70] sm:$0xff]
    %v422 = vld [vmem:[#allocation4 + $0xb78] sm:$0xff]
    %v423 = vld [vmem:[#allocation4 + $0xb80] sm:$0xff]
    %v424 = vld [vmem:[#allocation4 + $0xb88] sm:$0xff]
    %v425 = vld [vmem:[#allocation4 + $0xb90] sm:$0xff]
    %v426 = vld [vmem:[#allocation4 + $0xb98] sm:$0xff]
    %v427 = vld [vmem:[#allocation4 + $0xba0] sm:$0xff]
    %v428 = vld [vmem:[#allocation4 + $0xba8] sm:$0xff]
    %v429 = vld [vmem:[#allocation4 + $0xbb0] sm:$0xff]
    %v430 = vld [vmem:[#allocation4 + $0xbb8] sm:$0xff]
    %v431 = vld [vmem:[#allocation4 + $0xbc0] sm:$0xff]
    %v432 = vld [vmem:[#allocation4 + $0xbc8] sm:$0xff]
    %v433 = vld [vmem:[#allocation4 + $0xbd0] sm:$0xff]
    %v434 = vld [vmem:[#allocation4 + $0xbd8] sm:$0xff]
    %v435 = vld [vmem:[#allocation4 + $0xbe0] sm:$0xff]
    %v436 = vld [vmem:[#allocation4 + $0xbe8] sm:$0xff]
    %v437 = vld [vmem:[#allocation4 + $0xbf0] sm:$0xff]
    %v438 = vld [vmem:[#allocation4 + $0xbf8] sm:$0xff]
    %v439 = vld [vmem:[#allocation4 + $0xc00] sm:$0xff]
    %v440 = vld [vmem:[#allocation4 + $0xc08] sm:$0xff]
    %v441 = vld [vmem:[#allocation4 + $0xc10] sm:$0xff]
    %v442 = vld [vmem:[#allocation4 + $0xc18] sm:$0xff]
    %v443 = vld [vmem:[#allocation4 + $0xc20] sm:$0xff]
    %v444 = vld [vmem:[#allocation4 + $0xc28] sm:$0xff]
    %v445 = vld [vmem:[#allocation4 + $0xc30] sm:$0xff]
    %v446 = vld [vmem:[#allocation4 + $0xc38] sm:$0xff]
    %v447 = vld [vmem:[#allocation4 + $0xc40] sm:$0xff]
    %v448 = vld [vmem:[#allocation4 + $0xc48] sm:$0xff]
    %v449 = vld [vmem:[#allocation4 + $0xc50] sm:$0xff]
    %v450 = vld [vmem:[#allocation4 + $0xc58] sm:$0xff]
    %v451 = vld [vmem:[#allocation4 + $0xc60] sm:$0xff]
    %v452 = vld [vmem:[#allocation4 + $0xc68] sm:$0xff]
    %v453 = vld [vmem:[#allocation4 + $0xc70] sm:$0xff]
    %v454 = vld [vmem:[#allocation4 + $0xc78] sm:$0xff]
    %v455 = vld [vmem:[#allocation4 + $0xc80] sm:$0xff]
    %v456 = vld [vmem:[#allocation4 + $0xc88] sm:$0xff]
    %v457 = vld [vmem:[#allocation4 + $0xc90] sm:$0xff]
    %v458 = vld [vmem:[#allocation4 + $0xc98] sm:$0xff]
    %v459 = vld [vmem:[#allocation4 + $0xca0] sm:$0xff]
    %v460 = vld [vmem:[#allocation4 + $0xca8] sm:$0xff]
    %v461 = vld [vmem:[#allocation4 + $0xcb0] sm:$0xff]
    %v462 = vld [vmem:[#allocation4 + $0xcb8] sm:$0xff]
    %v463 = vld [vmem:[#allocation4 + $0xcc0] sm:$0xff]
    %v464 = vld [vmem:[#allocation4 + $0xcc8] sm:$0xff]
    %v465 = vld [vmem:[#allocation4 + $0xcd0] sm:$0xff]
    %v466 = vld [vmem:[#allocation4 + $0xcd8] sm:$0xff]
    %v467 = vld [vmem:[#allocation4 + $0xce0] sm:$0xff]
    %v468 = vld [vmem:[#allocation4 + $0xce8] sm:$0xff]
    %v469 = vld [vmem:[#allocation4 + $0xcf0] sm:$0xff]
    %v470 = vld [vmem:[#allocation4 + $0xcf8] sm:$0xff]
    %v471 = vld [vmem:[#allocation4 + $0xd00] sm:$0xff]
    %v472 = vld [vmem:[#allocation4 + $0xd08] sm:$0xff]
    %v473 = vld [vmem:[#allocation4 + $0xd10] sm:$0xff]
    %v474 = vld [vmem:[#allocation4 + $0xd18] sm:$0xff]
    %v475 = vld [vmem:[#allocation4 + $0xd20] sm:$0xff]
    %v476 = vld [vmem:[#allocation4 + $0xd28] sm:$0xff]
    %v477 = vld [vmem:[#allocation4 + $0xd30] sm:$0xff]
    %v478 = vld [vmem:[#allocation4 + $0xd38] sm:$0xff]
    %v479 = vld [vmem:[#allocation4 + $0xd40] sm:$0xff]
    %v480 = vld [vmem:[#allocation4 + $0xd48] sm:$0xff]
    %v481 = vld [vmem:[#allocation4 + $0xd50] sm:$0xff]
    %v482 = vld [vmem:[#allocation4 + $0xd58] sm:$0xff]
    %v483 = vld [vmem:[#allocation4 + $0xd60] sm:$0xff]
    %v484 = vld [vmem:[#allocation4 + $0xd68] sm:$0xff]
    %v485 = vld [vmem:[#allocation4 + $0xd70] sm:$0xff]
    %v486 = vld [vmem:[#allocation4 + $0xd78] sm:$0xff]
    %v487 = vld [vmem:[#allocation4 + $0xd80] sm:$0xff]
    %v488 = vld [vmem:[#allocation4 + $0xd88] sm:$0xff]
    %v489 = vld [vmem:[#allocation4 + $0xd90] sm:$0xff]
    %v490 = vld [vmem:[#allocation4 + $0xd98] sm:$0xff]
    %v491 = vld [vmem:[#allocation4 + $0xda0] sm:$0xff]
    %v492 = vld [vmem:[#allocation4 + $0xda8] sm:$0xff]
    %v493 = vld [vmem:[#allocation4 + $0xdb0] sm:$0xff]
    %v494 = vld [vmem:[#allocation4 + $0xdb8] sm:$0xff]
    %v495 = vld [vmem:[#allocation4 + $0xdc0] sm:$0xff]
    %v496 = vld [vmem:[#allocation4 + $0xdc8] sm:$0xff]
    %v497 = vld [vmem:[#allocation4 + $0xdd0] sm:$0xff]
    %v498 = vld [vmem:[#allocation4 + $0xdd8] sm:$0xff]
    %v499 = vld [vmem:[#allocation4 + $0xde0] sm:$0xff]
    %v500 = vld [vmem:[#allocation4 + $0xde8] sm:$0xff]
    %v501 = vld [vmem:[#allocation4 + $0xdf0] sm:$0xff]
    %v502 = vld [vmem:[#allocation4 + $0xdf8] sm:$0xff]
    %v503 = vld [vmem:[#allocation4 + $0xe00] sm:$0xff]
    %v504 = vld [vmem:[#allocation4 + $0xe08] sm:$0xff]
    %v505 = vld [vmem:[#allocation4 + $0xe10] sm:$0xff]
    %v506 = vld [vmem:[#allocation4 + $0xe18] sm:$0xff]
    %v507 = vld [vmem:[#allocation4 + $0xe20] sm:$0xff]
    %v508 = vld [vmem:[#allocation4 + $0xe28] sm:$0xff]
    %v509 = vld [vmem:[#allocation4 + $0xe30] sm:$0xff]
    %v510 = vld [vmem:[#allocation4 + $0xe38] sm:$0xff]
    %v511 = vld [vmem:[#allocation4 + $0xe40] sm:$0xff]
    %v512 = vld [vmem:[#allocation4 + $0xe48] sm:$0xff]
    %v513 = vld [vmem:[#allocation4 + $0xe50] sm:$0xff]
    %v514 = vld [vmem:[#allocation4 + $0xe58] sm:$0xff]
    %v515 = vld [vmem:[#allocation4 + $0xe60] sm:$0xff]
    %v516 = vld [vmem:[#allocation4 + $0xe68] sm:$0xff]
    %v517 = vld [vmem:[#allocation4 + $0xe70] sm:$0xff]
    %v518 = vld [vmem:[#allocation4 + $0xe78] sm:$0xff]
    %v519 = vld [vmem:[#allocation4 + $0xe80] sm:$0xff]
    %v520 = vld [vmem:[#allocation4 + $0xe88] sm:$0xff]
    %v521 = vld [vmem:[#allocation4 + $0xe90] sm:$0xff]
    %v522 = vld [vmem:[#allocation4 + $0xe98] sm:$0xff]
    %v523 = vld [vmem:[#allocation4 + $0xea0] sm:$0xff]
    %v524 = vld [vmem:[#allocation4 + $0xea8] sm:$0xff]
    %v525 = vld [vmem:[#allocation4 + $0xeb0] sm:$0xff]
    %v526 = vld [vmem:[#allocation4 + $0xeb8] sm:$0xff]
    %v527 = vld [vmem:[#allocation4 + $0xec0] sm:$0xff]
    %v528 = vld [vmem:[#allocation4 + $0xec8] sm:$0xff]
    %v529 = vld [vmem:[#allocation4 + $0xed0] sm:$0xff]
    %v530 = vld [vmem:[#allocation4 + $0xed8] sm:$0xff]
    %v531 = vld [vmem:[#allocation4 + $0xee0] sm:$0xff]
    %v532 = vld [vmem:[#allocation4 + $0xee8] sm:$0xff]
    %v533 = vld [vmem:[#allocation4 + $0xef0] sm:$0xff]
    %v534 = vld [vmem:[#allocation4 + $0xef8] sm:$0xff]
    %v535 = vld [vmem:[#allocation4 + $0xf00] sm:$0xff]
    %v536 = vld [vmem:[#allocation4 + $0xf08] sm:$0xff]
    %v537 = vld [vmem:[#allocation4 + $0xf10] sm:$0xff]
    %v538 = vld [vmem:[#allocation4 + $0xf18] sm:$0xff]
    %v539 = vld [vmem:[#allocation4 + $0xf20] sm:$0xff]
    %v540 = vld [vmem:[#allocation4 + $0xf28] sm:$0xff]
    %v541 = vld [vmem:[#allocation4 + $0xf30] sm:$0xff]
    %v542 = vld [vmem:[#allocation4 + $0xf38] sm:$0xff]
    %v543 = vld [vmem:[#allocation4 + $0xf40] sm:$0xff]
    %v544 = vld [vmem:[#allocation4 + $0xf48] sm:$0xff]
    %v545 = vld [vmem:[#allocation4 + $0xf50] sm:$0xff]
    %v546 = vld [vmem:[#allocation4 + $0xf58] sm:$0xff]
    %v547 = vld [vmem:[#allocation4 + $0xf60] sm:$0xff]
    %v548 = vld [vmem:[#allocation4 + $0xf68] sm:$0xff]
    %v549 = vld [vmem:[#allocation4 + $0xf70] sm:$0xff]
    %v550 = vld [vmem:[#allocation4 + $0xf78] sm:$0xff]
    %v551 = vld [vmem:[#allocation4 + $0xf80] sm:$0xff]
    %v552 = vld [vmem:[#allocation4 + $0xf88] sm:$0xff]
    %v553 = vld [vmem:[#allocation4 + $0xf90] sm:$0xff]
    %v554 = vld [vmem:[#allocation4 + $0xf98] sm:$0xff]
    %v555 = vld [vmem:[#allocation4 + $0xfa0] sm:$0xff]
    %v556 = vld [vmem:[#allocation4 + $0xfa8] sm:$0xff]
    %v557 = vld [vmem:[#allocation4 + $0xfb0] sm:$0xff]
    %v558 = vld [vmem:[#allocation4 + $0xfb8] sm:$0xff]
    %v559 = vld [vmem:[#allocation4 + $0xfc0] sm:$0xff]
    %v560 = vld [vmem:[#allocation4 + $0xfc8] sm:$0xff]
    %v561 = vld [vmem:[#allocation4 + $0xfd0] sm:$0xff]
    %v562 = vld [vmem:[#allocation4 + $0xfd8] sm:$0xff]
    %v563 = vld [vmem:[#allocation4 + $0xfe0] sm:$0xff]
    %v564 = vld [vmem:[#allocation4 + $0xfe8] sm:$0xff]
    %v565 = vld [vmem:[#allocation4 + $0xff0] sm:$0xff]
    %v566 = vld [vmem:[#allocation4 + $0xff8] sm:$0xff]
    %v567 = vld [vmem:[#allocation6] sm:$0xff]
    %v568 = vld [vmem:[#allocation6 + $0x8] sm:$0xff]
    %v569 = vld [vmem:[#allocation6 + $0x10] sm:$0xff]
    %v570 = vld [vmem:[#allocation6 + $0x18] sm:$0xff]
    %v571 = vld [vmem:[#allocation6 + $0x20] sm:$0xff]
    %v572 = vld [vmem:[#allocation6 + $0x28] sm:$0xff]
    %v573 = vld [vmem:[#allocation6 + $0x30] sm:$0xff]
    %v574 = vld [vmem:[#allocation6 + $0x38] sm:$0xff]
    %v575 = vld [vmem:[#allocation6 + $0x40] sm:$0xff]
    %v576 = vld [vmem:[#allocation6 + $0x48] sm:$0xff]
    %v577 = vld [vmem:[#allocation6 + $0x50] sm:$0xff]
    %v578 = vld [vmem:[#allocation6 + $0x58] sm:$0xff]
    %v579 = vld [vmem:[#allocation6 + $0x60] sm:$0xff]
    %v580 = vld [vmem:[#allocation6 + $0x68] sm:$0xff]
    %v581 = vld [vmem:[#allocation6 + $0x70] sm:$0xff]
    %v582 = vld [vmem:[#allocation6 + $0x78] sm:$0xff]
    %v583 = vld [vmem:[#allocation6 + $0x80] sm:$0xff]
    %v584 = vld [vmem:[#allocation6 + $0x88] sm:$0xff]
    %v585 = vld [vmem:[#allocation6 + $0x90] sm:$0xff]
    %v586 = vld [vmem:[#allocation6 + $0x98] sm:$0xff]
    %v587 = vld [vmem:[#allocation6 + $0xa0] sm:$0xff]
    %v588 = vld [vmem:[#allocation6 + $0xa8] sm:$0xff]
    %v589 = vld [vmem:[#allocation6 + $0xb0] sm:$0xff]
    %v590 = vld [vmem:[#allocation6 + $0xb8] sm:$0xff]
    %v591 = vld [vmem:[#allocation6 + $0xc0] sm:$0xff]
    %v592 = vld [vmem:[#allocation6 + $0xc8] sm:$0xff]
    %v593 = vld [vmem:[#allocation6 + $0xd0] sm:$0xff]
    %v594 = vld [vmem:[#allocation6 + $0xd8] sm:$0xff]
    %v595 = vld [vmem:[#allocation6 + $0xe0] sm:$0xff]
    %v596 = vld [vmem:[#allocation6 + $0xe8] sm:$0xff]
    %v597 = vld [vmem:[#allocation6 + $0xf0] sm:$0xff]
    %v598 = vld [vmem:[#allocation6 + $0xf8] sm:$0xff]
    %v599 = vld [vmem:[#allocation6 + $0x100] sm:$0xff]
    %v600 = vld [vmem:[#allocation6 + $0x108] sm:$0xff]
    %v601 = vld [vmem:[#allocation6 + $0x110] sm:$0xff]
    %v602 = vld [vmem:[#allocation6 + $0x118] sm:$0xff]
    %v603 = vld [vmem:[#allocation6 + $0x120] sm:$0xff]
    %v604 = vld [vmem:[#allocation6 + $0x128] sm:$0xff]
    %v605 = vld [vmem:[#allocation6 + $0x130] sm:$0xff]
    %v606 = vld [vmem:[#allocation6 + $0x138] sm:$0xff]
    %v607 = vld [vmem:[#allocation6 + $0x140] sm:$0xff]
    %v608 = vld [vmem:[#allocation6 + $0x148] sm:$0xff]
    %v609 = vld [vmem:[#allocation6 + $0x150] sm:$0xff]
    %v610 = vld [vmem:[#allocation6 + $0x158] sm:$0xff]
    %v611 = vld [vmem:[#allocation6 + $0x160] sm:$0xff]
    %v612 = vld [vmem:[#allocation6 + $0x168] sm:$0xff]
    %v613 = vld [vmem:[#allocation6 + $0x170] sm:$0xff]
    %v614 = vld [vmem:[#allocation6 + $0x178] sm:$0xff]
    %v615 = vld [vmem:[#allocation6 + $0x180] sm:$0xff]
    %v616 = vld [vmem:[#allocation6 + $0x188] sm:$0xff]
    %v617 = vld [vmem:[#allocation6 + $0x190] sm:$0xff]
    %v618 = vld [vmem:[#allocation6 + $0x198] sm:$0xff]
    %v619 = vld [vmem:[#allocation6 + $0x1a0] sm:$0xff]
    %v620 = vld [vmem:[#allocation6 + $0x1a8] sm:$0xff]
    %v621 = vld [vmem:[#allocation6 + $0x1b0] sm:$0xff]
    %v622 = vld [vmem:[#allocation6 + $0x1b8] sm:$0xff]
    %v623 = vld [vmem:[#allocation6 + $0x1c0] sm:$0xff]
    %v624 = vld [vmem:[#allocation6 + $0x1c8] sm:$0xff]
    %v625 = vld [vmem:[#allocation6 + $0x1d0] sm:$0xff]
    %v626 = vld [vmem:[#allocation6 + $0x1d8] sm:$0xff]
    %v627 = vld [vmem:[#allocation6 + $0x1e0] sm:$0xff]
    %v628 = vld [vmem:[#allocation6 + $0x1e8] sm:$0xff]
    %v629 = vld [vmem:[#allocation6 + $0x1f0] sm:$0xff]
    %v630 = vld [vmem:[#allocation6 + $0x1f8] sm:$0xff]
    %v631 = vld [vmem:[#allocation6 + $0x200] sm:$0xff]
    %v632 = vld [vmem:[#allocation6 + $0x208] sm:$0xff]
    %v633 = vld [vmem:[#allocation6 + $0x210] sm:$0xff]
    %v634 = vld [vmem:[#allocation6 + $0x218] sm:$0xff]
    %v635 = vld [vmem:[#allocation6 + $0x220] sm:$0xff]
    %v636 = vld [vmem:[#allocation6 + $0x228] sm:$0xff]
    %v637 = vld [vmem:[#allocation6 + $0x230] sm:$0xff]
    %v638 = vld [vmem:[#allocation6 + $0x238] sm:$0xff]
    %v639 = vld [vmem:[#allocation6 + $0x240] sm:$0xff]
    %v640 = vld [vmem:[#allocation6 + $0x248] sm:$0xff]
    %v641 = vld [vmem:[#allocation6 + $0x250] sm:$0xff]
    %v642 = vld [vmem:[#allocation6 + $0x258] sm:$0xff]
    %v643 = vld [vmem:[#allocation6 + $0x260] sm:$0xff]
    %v644 = vld [vmem:[#allocation6 + $0x268] sm:$0xff]
    %v645 = vld [vmem:[#allocation6 + $0x270] sm:$0xff]
    %v646 = vld [vmem:[#allocation6 + $0x278] sm:$0xff]
    %v647 = vld [vmem:[#allocation6 + $0x280] sm:$0xff]
    %v648 = vld [vmem:[#allocation6 + $0x288] sm:$0xff]
    %v649 = vld [vmem:[#allocation6 + $0x290] sm:$0xff]
    %v650 = vld [vmem:[#allocation6 + $0x298] sm:$0xff]
    %v651 = vld [vmem:[#allocation6 + $0x2a0] sm:$0xff]
    %v652 = vld [vmem:[#allocation6 + $0x2a8] sm:$0xff]
    %v653 = vld [vmem:[#allocation6 + $0x2b0] sm:$0xff]
    %v654 = vld [vmem:[#allocation6 + $0x2b8] sm:$0xff]
    %v655 = vld [vmem:[#allocation6 + $0x2c0] sm:$0xff]
    %v656 = vld [vmem:[#allocation6 + $0x2c8] sm:$0xff]
    %v657 = vld [vmem:[#allocation6 + $0x2d0] sm:$0xff]
    %v658 = vld [vmem:[#allocation6 + $0x2d8] sm:$0xff]
    %v659 = vld [vmem:[#allocation6 + $0x2e0] sm:$0xff]
    %v660 = vld [vmem:[#allocation6 + $0x2e8] sm:$0xff]
    %v661 = vld [vmem:[#allocation6 + $0x2f0] sm:$0xff]
    %v662 = vld [vmem:[#allocation6 + $0x2f8] sm:$0xff]
    %v663 = vld [vmem:[#allocation6 + $0x300] sm:$0xff]
    %v664 = vld [vmem:[#allocation6 + $0x308] sm:$0xff]
    %v665 = vld [vmem:[#allocation6 + $0x310] sm:$0xff]
    %v666 = vld [vmem:[#allocation6 + $0x318] sm:$0xff]
    %v667 = vld [vmem:[#allocation6 + $0x320] sm:$0xff]
    %v668 = vld [vmem:[#allocation6 + $0x328] sm:$0xff]
    %v669 = vld [vmem:[#allocation6 + $0x330] sm:$0xff]
    %v670 = vld [vmem:[#allocation6 + $0x338] sm:$0xff]
    %v671 = vld [vmem:[#allocation6 + $0x340] sm:$0xff]
    %v672 = vld [vmem:[#allocation6 + $0x348] sm:$0xff]
    %v673 = vld [vmem:[#allocation6 + $0x350] sm:$0xff]
    %v674 = vld [vmem:[#allocation6 + $0x358] sm:$0xff]
    %v675 = vld [vmem:[#allocation6 + $0x360] sm:$0xff]
    %v676 = vld [vmem:[#allocation6 + $0x368] sm:$0xff]
    %v677 = vld [vmem:[#allocation6 + $0x370] sm:$0xff]
    %v678 = vld [vmem:[#allocation6 + $0x378] sm:$0xff]
    %v679 = vld [vmem:[#allocation6 + $0x380] sm:$0xff]
    %v680 = vld [vmem:[#allocation6 + $0x388] sm:$0xff]
    %v681 = vld [vmem:[#allocation6 + $0x390] sm:$0xff]
    %v682 = vld [vmem:[#allocation6 + $0x398] sm:$0xff]
    %v683 = vld [vmem:[#allocation6 + $0x3a0] sm:$0xff]
    %v684 = vld [vmem:[#allocation6 + $0x3a8] sm:$0xff]
    %v685 = vld [vmem:[#allocation6 + $0x3b0] sm:$0xff]
    %v686 = vld [vmem:[#allocation6 + $0x3b8] sm:$0xff]
    %v687 = vld [vmem:[#allocation6 + $0x3c0] sm:$0xff]
    %v688 = vld [vmem:[#allocation6 + $0x3c8] sm:$0xff]
    %v689 = vld [vmem:[#allocation6 + $0x3d0] sm:$0xff]
    %v690 = vld [vmem:[#allocation6 + $0x3d8] sm:$0xff]
    %v691 = vld [vmem:[#allocation6 + $0x3e0] sm:$0xff]
    %v692 = vld [vmem:[#allocation6 + $0x3e8] sm:$0xff]
    %v693 = vld [vmem:[#allocation6 + $0x3f0] sm:$0xff]
    %v694 = vld [vmem:[#allocation6 + $0x3f8] sm:$0xff]
    %v695 = vld [vmem:[#allocation6 + $0x400] sm:$0xff]
    %v696 = vld [vmem:[#allocation6 + $0x408] sm:$0xff]
    %v697 = vld [vmem:[#allocation6 + $0x410] sm:$0xff]
    %v698 = vld [vmem:[#allocation6 + $0x418] sm:$0xff]
    %v699 = vld [vmem:[#allocation6 + $0x420] sm:$0xff]
    %v700 = vld [vmem:[#allocation6 + $0x428] sm:$0xff]
    %v701 = vld [vmem:[#allocation6 + $0x430] sm:$0xff]
    %v702 = vld [vmem:[#allocation6 + $0x438] sm:$0xff]
    %v703 = vld [vmem:[#allocation6 + $0x440] sm:$0xff]
    %v704 = vld [vmem:[#allocation6 + $0x448] sm:$0xff]
    %v705 = vld [vmem:[#allocation6 + $0x450] sm:$0xff]
    %v706 = vld [vmem:[#allocation6 + $0x458] sm:$0xff]
    %v707 = vld [vmem:[#allocation6 + $0x460] sm:$0xff]
    %v708 = vld [vmem:[#allocation6 + $0x468] sm:$0xff]
    %v709 = vld [vmem:[#allocation6 + $0x470] sm:$0xff]
    %v710 = vld [vmem:[#allocation6 + $0x478] sm:$0xff]
    %v711 = vld [vmem:[#allocation6 + $0x480] sm:$0xff]
    %v712 = vld [vmem:[#allocation6 + $0x488] sm:$0xff]
    %v713 = vld [vmem:[#allocation6 + $0x490] sm:$0xff]
    %v714 = vld [vmem:[#allocation6 + $0x498] sm:$0xff]
    %v715 = vld [vmem:[#allocation6 + $0x4a0] sm:$0xff]
    %v716 = vld [vmem:[#allocation6 + $0x4a8] sm:$0xff]
    %v717 = vld [vmem:[#allocation6 + $0x4b0] sm:$0xff]
    %v718 = vld [vmem:[#allocation6 + $0x4b8] sm:$0xff]
    %v719 = vld [vmem:[#allocation6 + $0x4c0] sm:$0xff]
    %v720 = vld [vmem:[#allocation6 + $0x4c8] sm:$0xff]
    %v721 = vld [vmem:[#allocation6 + $0x4d0] sm:$0xff]
    %v722 = vld [vmem:[#allocation6 + $0x4d8] sm:$0xff]
    %v723 = vld [vmem:[#allocation6 + $0x4e0] sm:$0xff]
    %v724 = vld [vmem:[#allocation6 + $0x4e8] sm:$0xff]
    %v725 = vld [vmem:[#allocation6 + $0x4f0] sm:$0xff]
    %v726 = vld [vmem:[#allocation6 + $0x4f8] sm:$0xff]
    %v727 = vld [vmem:[#allocation6 + $0x500] sm:$0xff]
    %v728 = vld [vmem:[#allocation6 + $0x508] sm:$0xff]
    %v729 = vld [vmem:[#allocation6 + $0x510] sm:$0xff]
    %v730 = vld [vmem:[#allocation6 + $0x518] sm:$0xff]
    %v731 = vld [vmem:[#allocation6 + $0x520] sm:$0xff]
    %v732 = vld [vmem:[#allocation6 + $0x528] sm:$0xff]
    %v733 = vld [vmem:[#allocation6 + $0x530] sm:$0xff]
    %v734 = vld [vmem:[#allocation6 + $0x538] sm:$0xff]
    %v735 = vld [vmem:[#allocation6 + $0x540] sm:$0xff]
    %v736 = vld [vmem:[#allocation6 + $0x548] sm:$0xff]
    %v737 = vld [vmem:[#allocation6 + $0x550] sm:$0xff]
    %v738 = vld [vmem:[#allocation6 + $0x558] sm:$0xff]
    %v739 = vld [vmem:[#allocation6 + $0x560] sm:$0xff]
    %v740 = vld [vmem:[#allocation6 + $0x568] sm:$0xff]
    %v741 = vld [vmem:[#allocation6 + $0x570] sm:$0xff]
    %v742 = vld [vmem:[#allocation6 + $0x578] sm:$0xff]
    %v743 = vld [vmem:[#allocation6 + $0x580] sm:$0xff]
    %v744 = vld [vmem:[#allocation6 + $0x588] sm:$0xff]
    %v745 = vld [vmem:[#allocation6 + $0x590] sm:$0xff]
    %v746 = vld [vmem:[#allocation6 + $0x598] sm:$0xff]
    %v747 = vld [vmem:[#allocation6 + $0x5a0] sm:$0xff]
    %v748 = vld [vmem:[#allocation6 + $0x5a8] sm:$0xff]
    %v749 = vld [vmem:[#allocation6 + $0x5b0] sm:$0xff]
    %v750 = vld [vmem:[#allocation6 + $0x5b8] sm:$0xff]
    %v751 = vld [vmem:[#allocation6 + $0x5c0] sm:$0xff]
    %v752 = vld [vmem:[#allocation6 + $0x5c8] sm:$0xff]
    %v753 = vld [vmem:[#allocation6 + $0x5d0] sm:$0xff]
    %v754 = vld [vmem:[#allocation6 + $0x5d8] sm:$0xff]
    %v755 = vld [vmem:[#allocation6 + $0x5e0] sm:$0xff]
    %v756 = vld [vmem:[#allocation6 + $0x5e8] sm:$0xff]
    %v757 = vld [vmem:[#allocation6 + $0x5f0] sm:$0xff]
    %v758 = vld [vmem:[#allocation6 + $0x5f8] sm:$0xff]
    %v759 = vld [vmem:[#allocation6 + $0x600] sm:$0xff]
    %v760 = vld [vmem:[#allocation6 + $0x608] sm:$0xff]
    %v761 = vld [vmem:[#allocation6 + $0x610] sm:$0xff]
    %v762 = vld [vmem:[#allocation6 + $0x618] sm:$0xff]
    %v763 = vld [vmem:[#allocation6 + $0x620] sm:$0xff]
    %v764 = vld [vmem:[#allocation6 + $0x628] sm:$0xff]
    %v765 = vld [vmem:[#allocation6 + $0x630] sm:$0xff]
    %v766 = vld [vmem:[#allocation6 + $0x638] sm:$0xff]
    %v767 = vld [vmem:[#allocation6 + $0x640] sm:$0xff]
    %v768 = vld [vmem:[#allocation6 + $0x648] sm:$0xff]
    %v769 = vld [vmem:[#allocation6 + $0x650] sm:$0xff]
    %v770 = vld [vmem:[#allocation6 + $0x658] sm:$0xff]
    %v771 = vld [vmem:[#allocation6 + $0x660] sm:$0xff]
    %v772 = vld [vmem:[#allocation6 + $0x668] sm:$0xff]
    %v773 = vld [vmem:[#allocation6 + $0x670] sm:$0xff]
    %v774 = vld [vmem:[#allocation6 + $0x678] sm:$0xff]
    %v775 = vld [vmem:[#allocation6 + $0x680] sm:$0xff]
    %v776 = vld [vmem:[#allocation6 + $0x688] sm:$0xff]
    %v777 = vld [vmem:[#allocation6 + $0x690] sm:$0xff]
    %v778 = vld [vmem:[#allocation6 + $0x698] sm:$0xff]
    %v779 = vld [vmem:[#allocation6 + $0x6a0] sm:$0xff]
    %v780 = vld [vmem:[#allocation6 + $0x6a8] sm:$0xff]
    %v781 = vld [vmem:[#allocation6 + $0x6b0] sm:$0xff]
    %v782 = vld [vmem:[#allocation6 + $0x6b8] sm:$0xff]
    %v783 = vld [vmem:[#allocation6 + $0x6c0] sm:$0xff]
    %v784 = vld [vmem:[#allocation6 + $0x6c8] sm:$0xff]
    %v785 = vld [vmem:[#allocation6 + $0x6d0] sm:$0xff]
    %v786 = vld [vmem:[#allocation6 + $0x6d8] sm:$0xff]
    %v787 = vld [vmem:[#allocation6 + $0x6e0] sm:$0xff]
    %v788 = vld [vmem:[#allocation6 + $0x6e8] sm:$0xff]
    %v789 = vld [vmem:[#allocation6 + $0x6f0] sm:$0xff]
    %v790 = vld [vmem:[#allocation6 + $0x6f8] sm:$0xff]
    %v791 = vld [vmem:[#allocation6 + $0x700] sm:$0xff]
    %v792 = vld [vmem:[#allocation6 + $0x708] sm:$0xff]
    %v793 = vld [vmem:[#allocation6 + $0x710] sm:$0xff]
    %v794 = vld [vmem:[#allocation6 + $0x718] sm:$0xff]
    %v795 = vld [vmem:[#allocation6 + $0x720] sm:$0xff]
    %v796 = vld [vmem:[#allocation6 + $0x728] sm:$0xff]
    %v797 = vld [vmem:[#allocation6 + $0x730] sm:$0xff]
    %v798 = vld [vmem:[#allocation6 + $0x738] sm:$0xff]
    %v799 = vld [vmem:[#allocation6 + $0x740] sm:$0xff]
    %v800 = vld [vmem:[#allocation6 + $0x748] sm:$0xff]
    %v801 = vld [vmem:[#allocation6 + $0x750] sm:$0xff]
    %v802 = vld [vmem:[#allocation6 + $0x758] sm:$0xff]
    %v803 = vld [vmem:[#allocation6 + $0x760] sm:$0xff]
    %v804 = vld [vmem:[#allocation6 + $0x768] sm:$0xff]
    %v805 = vld [vmem:[#allocation6 + $0x770] sm:$0xff]
    %v806 = vld [vmem:[#allocation6 + $0x778] sm:$0xff]
    %v807 = vld [vmem:[#allocation6 + $0x780] sm:$0xff]
    %v808 = vld [vmem:[#allocation6 + $0x788] sm:$0xff]
    %v809 = vld [vmem:[#allocation6 + $0x790] sm:$0xff]
    %v810 = vld [vmem:[#allocation6 + $0x798] sm:$0xff]
    %v811 = vld [vmem:[#allocation6 + $0x7a0] sm:$0xff]
    %v812 = vld [vmem:[#allocation6 + $0x7a8] sm:$0xff]
    %v813 = vld [vmem:[#allocation6 + $0x7b0] sm:$0xff]
    %v814 = vld [vmem:[#allocation6 + $0x7b8] sm:$0xff]
    %v815 = vld [vmem:[#allocation6 + $0x7c0] sm:$0xff]
    %v816 = vld [vmem:[#allocation6 + $0x7c8] sm:$0xff]
    %v817 = vld [vmem:[#allocation6 + $0x7d0] sm:$0xff]
    %v818 = vld [vmem:[#allocation6 + $0x7d8] sm:$0xff]
    %v819 = vld [vmem:[#allocation6 + $0x7e0] sm:$0xff]
    %v820 = vld [vmem:[#allocation6 + $0x7e8] sm:$0xff]
    %v821 = vld [vmem:[#allocation6 + $0x7f0] sm:$0xff]
    %v822 = vld [vmem:[#allocation6 + $0x7f8] sm:$0xff]
    %v823 = vld [vmem:[#allocation6 + $0x800] sm:$0xff]
    %v824 = vld [vmem:[#allocation6 + $0x808] sm:$0xff]
    %v825 = vld [vmem:[#allocation6 + $0x810] sm:$0xff]
    %v826 = vld [vmem:[#allocation6 + $0x818] sm:$0xff]
    %v827 = vld [vmem:[#allocation6 + $0x820] sm:$0xff]
    %v828 = vld [vmem:[#allocation6 + $0x828] sm:$0xff]
    %v829 = vld [vmem:[#allocation6 + $0x830] sm:$0xff]
    %v830 = vld [vmem:[#allocation6 + $0x838] sm:$0xff]
    %v831 = vld [vmem:[#allocation6 + $0x840] sm:$0xff]
    %v832 = vld [vmem:[#allocation6 + $0x848] sm:$0xff]
    %v833 = vld [vmem:[#allocation6 + $0x850] sm:$0xff]
    %v834 = vld [vmem:[#allocation6 + $0x858] sm:$0xff]
    %v835 = vld [vmem:[#allocation6 + $0x860] sm:$0xff]
    %v836 = vld [vmem:[#allocation6 + $0x868] sm:$0xff]
    %v837 = vld [vmem:[#allocation6 + $0x870] sm:$0xff]
    %v838 = vld [vmem:[#allocation6 + $0x878] sm:$0xff]
    %v839 = vld [vmem:[#allocation6 + $0x880] sm:$0xff]
    %v840 = vld [vmem:[#allocation6 + $0x888] sm:$0xff]
    %v841 = vld [vmem:[#allocation6 + $0x890] sm:$0xff]
    %v842 = vld [vmem:[#allocation6 + $0x898] sm:$0xff]
    %v843 = vld [vmem:[#allocation6 + $0x8a0] sm:$0xff]
    %v844 = vld [vmem:[#allocation6 + $0x8a8] sm:$0xff]
    %v845 = vld [vmem:[#allocation6 + $0x8b0] sm:$0xff]
    %v846 = vld [vmem:[#allocation6 + $0x8b8] sm:$0xff]
    %v847 = vld [vmem:[#allocation6 + $0x8c0] sm:$0xff]
    %v848 = vld [vmem:[#allocation6 + $0x8c8] sm:$0xff]
    %v849 = vld [vmem:[#allocation6 + $0x8d0] sm:$0xff]
    %v850 = vld [vmem:[#allocation6 + $0x8d8] sm:$0xff]
    %v851 = vld [vmem:[#allocation6 + $0x8e0] sm:$0xff]
    %v852 = vld [vmem:[#allocation6 + $0x8e8] sm:$0xff]
    %v853 = vld [vmem:[#allocation6 + $0x8f0] sm:$0xff]
    %v854 = vld [vmem:[#allocation6 + $0x8f8] sm:$0xff]
    %v855 = vld [vmem:[#allocation6 + $0x900] sm:$0xff]
    %v856 = vld [vmem:[#allocation6 + $0x908] sm:$0xff]
    %v857 = vld [vmem:[#allocation6 + $0x910] sm:$0xff]
    %v858 = vld [vmem:[#allocation6 + $0x918] sm:$0xff]
    %v859 = vld [vmem:[#allocation6 + $0x920] sm:$0xff]
    %v860 = vld [vmem:[#allocation6 + $0x928] sm:$0xff]
    %v861 = vld [vmem:[#allocation6 + $0x930] sm:$0xff]
    %v862 = vld [vmem:[#allocation6 + $0x938] sm:$0xff]
    %v863 = vld [vmem:[#allocation6 + $0x940] sm:$0xff]
    %v864 = vld [vmem:[#allocation6 + $0x948] sm:$0xff]
    %v865 = vld [vmem:[#allocation6 + $0x950] sm:$0xff]
    %v866 = vld [vmem:[#allocation6 + $0x958] sm:$0xff]
    %v867 = vld [vmem:[#allocation6 + $0x960] sm:$0xff]
    %v868 = vld [vmem:[#allocation6 + $0x968] sm:$0xff]
    %v869 = vld [vmem:[#allocation6 + $0x970] sm:$0xff]
    %v870 = vld [vmem:[#allocation6 + $0x978] sm:$0xff]
    %v871 = vld [vmem:[#allocation6 + $0x980] sm:$0xff]
    %v872 = vld [vmem:[#allocation6 + $0x988] sm:$0xff]
    %v873 = vld [vmem:[#allocation6 + $0x990] sm:$0xff]
    %v874 = vld [vmem:[#allocation6 + $0x998] sm:$0xff]
    %v875 = vld [vmem:[#allocation6 + $0x9a0] sm:$0xff]
    %v876 = vld [vmem:[#allocation6 + $0x9a8] sm:$0xff]
    %v877 = vld [vmem:[#allocation6 + $0x9b0] sm:$0xff]
    %v878 = vld [vmem:[#allocation6 + $0x9b8] sm:$0xff]
    %v879 = vld [vmem:[#allocation6 + $0x9c0] sm:$0xff]
    %v880 = vld [vmem:[#allocation6 + $0x9c8] sm:$0xff]
    %v881 = vld [vmem:[#allocation6 + $0x9d0] sm:$0xff]
    %v882 = vld [vmem:[#allocation6 + $0x9d8] sm:$0xff]
    %v883 = vld [vmem:[#allocation6 + $0x9e0] sm:$0xff]
    %v884 = vld [vmem:[#allocation6 + $0x9e8] sm:$0xff]
    %v885 = vld [vmem:[#allocation6 + $0x9f0] sm:$0xff]
    %v886 = vld [vmem:[#allocation6 + $0x9f8] sm:$0xff]
    %v887 = vld [vmem:[#allocation6 + $0xa00] sm:$0xff]
    %v888 = vld [vmem:[#allocation6 + $0xa08] sm:$0xff]
    %v889 = vld [vmem:[#allocation6 + $0xa10] sm:$0xff]
    %v890 = vld [vmem:[#allocation6 + $0xa18] sm:$0xff]
    %v891 = vld [vmem:[#allocation6 + $0xa20] sm:$0xff]
    %v892 = vld [vmem:[#allocation6 + $0xa28] sm:$0xff]
    %v893 = vld [vmem:[#allocation6 + $0xa30] sm:$0xff]
    %v894 = vld [vmem:[#allocation6 + $0xa38] sm:$0xff]
    %v895 = vld [vmem:[#allocation6 + $0xa40] sm:$0xff]
    %v896 = vld [vmem:[#allocation6 + $0xa48] sm:$0xff]
    %v897 = vld [vmem:[#allocation6 + $0xa50] sm:$0xff]
    %v898 = vld [vmem:[#allocation6 + $0xa58] sm:$0xff]
    %v899 = vld [vmem:[#allocation6 + $0xa60] sm:$0xff]
    %v900 = vld [vmem:[#allocation6 + $0xa68] sm:$0xff]
    %v901 = vld [vmem:[#allocation6 + $0xa70] sm:$0xff]
    %v902 = vld [vmem:[#allocation6 + $0xa78] sm:$0xff]
    %v903 = vld [vmem:[#allocation6 + $0xa80] sm:$0xff]
    %v904 = vld [vmem:[#allocation6 + $0xa88] sm:$0xff]
    %v905 = vld [vmem:[#allocation6 + $0xa90] sm:$0xff]
    %v906 = vld [vmem:[#allocation6 + $0xa98] sm:$0xff]
    %v907 = vld [vmem:[#allocation6 + $0xaa0] sm:$0xff]
    %v908 = vld [vmem:[#allocation6 + $0xaa8] sm:$0xff]
    %v909 = vld [vmem:[#allocation6 + $0xab0] sm:$0xff]
    %v910 = vld [vmem:[#allocation6 + $0xab8] sm:$0xff]
    %v911 = vld [vmem:[#allocation6 + $0xac0] sm:$0xff]
    %v912 = vld [vmem:[#allocation6 + $0xac8] sm:$0xff]
    %v913 = vld [vmem:[#allocation6 + $0xad0] sm:$0xff]
    %v914 = vld [vmem:[#allocation6 + $0xad8] sm:$0xff]
    %v915 = vld [vmem:[#allocation6 + $0xae0] sm:$0xff]
    %v916 = vld [vmem:[#allocation6 + $0xae8] sm:$0xff]
    %v917 = vld [vmem:[#allocation6 + $0xaf0] sm:$0xff]
    %v918 = vld [vmem:[#allocation6 + $0xaf8] sm:$0xff]
    %v919 = vld [vmem:[#allocation6 + $0xb00] sm:$0xff]
    %v920 = vld [vmem:[#allocation6 + $0xb08] sm:$0xff]
    %v921 = vld [vmem:[#allocation6 + $0xb10] sm:$0xff]
    %v922 = vld [vmem:[#allocation6 + $0xb18] sm:$0xff]
    %v923 = vld [vmem:[#allocation6 + $0xb20] sm:$0xff]
    %v924 = vld [vmem:[#allocation6 + $0xb28] sm:$0xff]
    %v925 = vld [vmem:[#allocation6 + $0xb30] sm:$0xff]
    %v926 = vld [vmem:[#allocation6 + $0xb38] sm:$0xff]
    %v927 = vld [vmem:[#allocation6 + $0xb40] sm:$0xff]
    %v928 = vld [vmem:[#allocation6 + $0xb48] sm:$0xff]
    %v929 = vld [vmem:[#allocation6 + $0xb50] sm:$0xff]
    %v930 = vld [vmem:[#allocation6 + $0xb58] sm:$0xff]
    %v931 = vld [vmem:[#allocation6 + $0xb60] sm:$0xff]
    %v932 = vld [vmem:[#allocation6 + $0xb68] sm:$0xff]
    %v933 = vld [vmem:[#allocation6 + $0xb70] sm:$0xff]
    %v934 = vld [vmem:[#allocation6 + $0xb78] sm:$0xff]
    %v935 = vld [vmem:[#allocation6 + $0xb80] sm:$0xff]
    %v936 = vld [vmem:[#allocation6 + $0xb88] sm:$0xff]
    %v937 = vld [vmem:[#allocation6 + $0xb90] sm:$0xff]
    %v938 = vld [vmem:[#allocation6 + $0xb98] sm:$0xff]
    %v939 = vld [vmem:[#allocation6 + $0xba0] sm:$0xff]
    %v940 = vld [vmem:[#allocation6 + $0xba8] sm:$0xff]
    %v941 = vld [vmem:[#allocation6 + $0xbb0] sm:$0xff]
    %v942 = vld [vmem:[#allocation6 + $0xbb8] sm:$0xff]
    %v943 = vld [vmem:[#allocation6 + $0xbc0] sm:$0xff]
    %v944 = vld [vmem:[#allocation6 + $0xbc8] sm:$0xff]
    %v945 = vld [vmem:[#allocation6 + $0xbd0] sm:$0xff]
    %v946 = vld [vmem:[#allocation6 + $0xbd8] sm:$0xff]
    %v947 = vld [vmem:[#allocation6 + $0xbe0] sm:$0xff]
    %v948 = vld [vmem:[#allocation6 + $0xbe8] sm:$0xff]
    %v949 = vld [vmem:[#allocation6 + $0xbf0] sm:$0xff]
    %v950 = vld [vmem:[#allocation6 + $0xbf8] sm:$0xff]
    %v951 = vld [vmem:[#allocation6 + $0xc00] sm:$0xff]
    %v952 = vld [vmem:[#allocation6 + $0xc08] sm:$0xff]
    %v953 = vld [vmem:[#allocation6 + $0xc10] sm:$0xff]
    %v954 = vld [vmem:[#allocation6 + $0xc18] sm:$0xff]
    %v955 = vld [vmem:[#allocation6 + $0xc20] sm:$0xff]
    %v956 = vld [vmem:[#allocation6 + $0xc28] sm:$0xff]
    %v957 = vld [vmem:[#allocation6 + $0xc30] sm:$0xff]
    %v958 = vld [vmem:[#allocation6 + $0xc38] sm:$0xff]
    %v959 = vld [vmem:[#allocation6 + $0xc40] sm:$0xff]
    %v960 = vld [vmem:[#allocation6 + $0xc48] sm:$0xff]
    %v961 = vld [vmem:[#allocation6 + $0xc50] sm:$0xff]
    %v962 = vld [vmem:[#allocation6 + $0xc58] sm:$0xff]
    %v963 = vld [vmem:[#allocation6 + $0xc60] sm:$0xff]
    %v964 = vld [vmem:[#allocation6 + $0xc68] sm:$0xff]
    %v965 = vld [vmem:[#allocation6 + $0xc70] sm:$0xff]
    %v966 = vld [vmem:[#allocation6 + $0xc78] sm:$0xff]
    %v967 = vld [vmem:[#allocation6 + $0xc80] sm:$0xff]
    %v968 = vld [vmem:[#allocation6 + $0xc88] sm:$0xff]
    %v969 = vld [vmem:[#allocation6 + $0xc90] sm:$0xff]
    %v970 = vld [vmem:[#allocation6 + $0xc98] sm:$0xff]
    %v971 = vld [vmem:[#allocation6 + $0xca0] sm:$0xff]
    %v972 = vld [vmem:[#allocation6 + $0xca8] sm:$0xff]
    %v973 = vld [vmem:[#allocation6 + $0xcb0] sm:$0xff]
    %v974 = vld [vmem:[#allocation6 + $0xcb8] sm:$0xff]
    %v975 = vld [vmem:[#allocation6 + $0xcc0] sm:$0xff]
    %v976 = vld [vmem:[#allocation6 + $0xcc8] sm:$0xff]
    %v977 = vld [vmem:[#allocation6 + $0xcd0] sm:$0xff]
    %v978 = vld [vmem:[#allocation6 + $0xcd8] sm:$0xff]
    %v979 = vld [vmem:[#allocation6 + $0xce0] sm:$0xff]
    %v980 = vld [vmem:[#allocation6 + $0xce8] sm:$0xff]
    %v981 = vld [vmem:[#allocation6 + $0xcf0] sm:$0xff]
    %v982 = vld [vmem:[#allocation6 + $0xcf8] sm:$0xff]
    %v983 = vld [vmem:[#allocation6 + $0xd00] sm:$0xff]
    %v984 = vld [vmem:[#allocation6 + $0xd08] sm:$0xff]
    %v985 = vld [vmem:[#allocation6 + $0xd10] sm:$0xff]
    %v986 = vld [vmem:[#allocation6 + $0xd18] sm:$0xff]
    %v987 = vld [vmem:[#allocation6 + $0xd20] sm:$0xff]
    %v988 = vld [vmem:[#allocation6 + $0xd28] sm:$0xff]
    %v989 = vld [vmem:[#allocation6 + $0xd30] sm:$0xff]
    %v990 = vld [vmem:[#allocation6 + $0xd38] sm:$0xff]
    %v991 = vld [vmem:[#allocation6 + $0xd40] sm:$0xff]
    %v992 = vld [vmem:[#allocation6 + $0xd48] sm:$0xff]
    %v993 = vld [vmem:[#allocation6 + $0xd50] sm:$0xff]
    %v994 = vld [vmem:[#allocation6 + $0xd58] sm:$0xff]
    %v995 = vld [vmem:[#allocation6 + $0xd60] sm:$0xff]
    %v996 = vld [vmem:[#allocation6 + $0xd68] sm:$0xff]
    %v997 = vld [vmem:[#allocation6 + $0xd70] sm:$0xff]
    %v998 = vld [vmem:[#allocation6 + $0xd78] sm:$0xff]
    %v999 = vld [vmem:[#allocation6 + $0xd80] sm:$0xff]
    %v1000 = vld [vmem:[#allocation6 + $0xd88] sm:$0xff]
    %v1001 = vld [vmem:[#allocation6 + $0xd90] sm:$0xff]
    %v1002 = vld [vmem:[#allocation6 + $0xd98] sm:$0xff]
    %v1003 = vld [vmem:[#allocation6 + $0xda0] sm:$0xff]
    %v1004 = vld [vmem:[#allocation6 + $0xda8] sm:$0xff]
    %v1005 = vld [vmem:[#allocation6 + $0xdb0] sm:$0xff]
    %v1006 = vld [vmem:[#allocation6 + $0xdb8] sm:$0xff]
    %v1007 = vld [vmem:[#allocation6 + $0xdc0] sm:$0xff]
    %v1008 = vld [vmem:[#allocation6 + $0xdc8] sm:$0xff]
    %v1009 = vld [vmem:[#allocation6 + $0xdd0] sm:$0xff]
    %v1010 = vld [vmem:[#allocation6 + $0xdd8] sm:$0xff]
    %v1011 = vld [vmem:[#allocation6 + $0xde0] sm:$0xff]
    %v1012 = vld [vmem:[#allocation6 + $0xde8] sm:$0xff]
    %v1013 = vld [vmem:[#allocation6 + $0xdf0] sm:$0xff]
    %v1014 = vld [vmem:[#allocation6 + $0xdf8] sm:$0xff]
    %v1015 = vld [vmem:[#allocation6 + $0xe00] sm:$0xff]
    %v1016 = vld [vmem:[#allocation6 + $0xe08] sm:$0xff]
    %v1017 = vld [vmem:[#allocation6 + $0xe10] sm:$0xff]
    %v1018 = vld [vmem:[#allocation6 + $0xe18] sm:$0xff]
    %v1019 = vld [vmem:[#allocation6 + $0xe20] sm:$0xff]
    %v1020 = vld [vmem:[#allocation6 + $0xe28] sm:$0xff]
    %v1021 = vld [vmem:[#allocation6 + $0xe30] sm:$0xff]
    %v1022 = vld [vmem:[#allocation6 + $0xe38] sm:$0xff]
    %v1023 = vld [vmem:[#allocation6 + $0xe40] sm:$0xff]
    %v1024 = vld [vmem:[#allocation6 + $0xe48] sm:$0xff]
    %v1025 = vld [vmem:[#allocation6 + $0xe50] sm:$0xff]
    %v1026 = vld [vmem:[#allocation6 + $0xe58] sm:$0xff]
    %v1027 = vld [vmem:[#allocation6 + $0xe60] sm:$0xff]
    %v1028 = vld [vmem:[#allocation6 + $0xe68] sm:$0xff]
    %v1029 = vld [vmem:[#allocation6 + $0xe70] sm:$0xff]
    %v1030 = vld [vmem:[#allocation6 + $0xe78] sm:$0xff]
    %v1031 = vld [vmem:[#allocation6 + $0xe80] sm:$0xff]
    %v1032 = vld [vmem:[#allocation6 + $0xe88] sm:$0xff]
    %v1033 = vld [vmem:[#allocation6 + $0xe90] sm:$0xff]
    %v1034 = vld [vmem:[#allocation6 + $0xe98] sm:$0xff]
    %v1035 = vld [vmem:[#allocation6 + $0xea0] sm:$0xff]
    %v1036 = vld [vmem:[#allocation6 + $0xea8] sm:$0xff]
    %v1037 = vld [vmem:[#allocation6 + $0xeb0] sm:$0xff]
    %v1038 = vld [vmem:[#allocation6 + $0xeb8] sm:$0xff]
    %v1039 = vld [vmem:[#allocation6 + $0xec0] sm:$0xff]
    %v1040 = vld [vmem:[#allocation6 + $0xec8] sm:$0xff]
    %v1041 = vld [vmem:[#allocation6 + $0xed0] sm:$0xff]
    %v1042 = vld [vmem:[#allocation6 + $0xed8] sm:$0xff]
    %v1043 = vld [vmem:[#allocation6 + $0xee0] sm:$0xff]
    %v1044 = vld [vmem:[#allocation6 + $0xee8] sm:$0xff]
    %v1045 = vld [vmem:[#allocation6 + $0xef0] sm:$0xff]
    %v1046 = vld [vmem:[#allocation6 + $0xef8] sm:$0xff]
    %v1047 = vld [vmem:[#allocation6 + $0xf00] sm:$0xff]
    %v1048 = vld [vmem:[#allocation6 + $0xf08] sm:$0xff]
    %v1049 = vld [vmem:[#allocation6 + $0xf10] sm:$0xff]
    %v1050 = vld [vmem:[#allocation6 + $0xf18] sm:$0xff]
    %v1051 = vld [vmem:[#allocation6 + $0xf20] sm:$0xff]
    %v1052 = vld [vmem:[#allocation6 + $0xf28] sm:$0xff]
    %v1053 = vld [vmem:[#allocation6 + $0xf30] sm:$0xff]
    %v1054 = vld [vmem:[#allocation6 + $0xf38] sm:$0xff]
    %v1055 = vld [vmem:[#allocation6 + $0xf40] sm:$0xff]
    %v1056 = vld [vmem:[#allocation6 + $0xf48] sm:$0xff]
    %v1057 = vld [vmem:[#allocation6 + $0xf50] sm:$0xff]
    %v1058 = vld [vmem:[#allocation6 + $0xf58] sm:$0xff]
    %v1059 = vld [vmem:[#allocation6 + $0xf60] sm:$0xff]
    %v1060 = vld [vmem:[#allocation6 + $0xf68] sm:$0xff]
    %v1061 = vld [vmem:[#allocation6 + $0xf70] sm:$0xff]
    %v1062 = vld [vmem:[#allocation6 + $0xf78] sm:$0xff]
    %v1063 = vld [vmem:[#allocation6 + $0xf80] sm:$0xff]
    %v1064 = vld [vmem:[#allocation6 + $0xf88] sm:$0xff]
    %v1065 = vld [vmem:[#allocation6 + $0xf90] sm:$0xff]
    %v1066 = vld [vmem:[#allocation6 + $0xf98] sm:$0xff]
    %v1067 = vld [vmem:[#allocation6 + $0xfa0] sm:$0xff]
    %v1068 = vld [vmem:[#allocation6 + $0xfa8] sm:$0xff]
    %v1069 = vld [vmem:[#allocation6 + $0xfb0] sm:$0xff]
    %v1070 = vld [vmem:[#allocation6 + $0xfb8] sm:$0xff]
    %v1071 = vld [vmem:[#allocation6 + $0xfc0] sm:$0xff]
    %v1072 = vld [vmem:[#allocation6 + $0xfc8] sm:$0xff]
    %v1073 = vld [vmem:[#allocation6 + $0xfd0] sm:$0xff]
    %v1074 = vld [vmem:[#allocation6 + $0xfd8] sm:$0xff]
    %v1075 = vld [vmem:[#allocation6 + $0xfe0] sm:$0xff]
    %v1076 = vld [vmem:[#allocation6 + $0xfe8] sm:$0xff]
    %v1077 = vld [vmem:[#allocation6 + $0xff0] sm:$0xff]
    %v1078 = vld [vmem:[#allocation6 + $0xff8] sm:$0xff]
    %v1079 = vmul.f32 %v53, %v53
    %v1080 = vmul.f32 %v54, %v54
    %v1083 = vcombine.high %v1079, %v1079
    %v1085 = vunpack.c.l.s4 1983009808
    %v1086 = vunpack.c.0.s8 %v1085
    %v1087 = vlaneseq
    %v1088 = vshrl.u32 %v1087, 7
    %v1089 = vsub.s32 %v1086, %v1088
    %v1090 = vrot.slane %v1079, %v1089
    %v1092 = vunpack.c.l.s4 1983009808
    %v1093 = vunpack.c.0.s8 %v1092
    %v1094 = vlaneseq
    %v1095 = vshrl.u32 %v1094, 7
    %v1096 = vsub.s32 %v1093, %v1095
    %v1097 = vrot.slane %v1083, %v1096
    %v1098 = vcombine.high %v1090, %v1090
    %v1099 = vcombine.high %v1097, %v1097
    %v1100 = vcombine.high %v1080, %v1080
    %v1102 = vunpack.c.l.s4 1983009808
    %v1103 = vunpack.c.0.s8 %v1102
    %v1104 = vlaneseq
    %v1105 = vshrl.u32 %v1104, 7
    %v1106 = vsub.s32 %v1103, %v1105
    %v1107 = vrot.slane %v1080, %v1106
    %v1109 = vunpack.c.l.s4 1983009808
    %v1110 = vunpack.c.0.s8 %v1109
    %v1111 = vlaneseq
    %v1112 = vshrl.u32 %v1111, 7
    %v1113 = vsub.s32 %v1110, %v1112
    %v1114 = vrot.slane %v1100, %v1113
    %v1115 = vcombine.high %v1107, %v1107
    %v1116 = vcombine.high %v1114, %v1114
    %vm1125 = vcmask 1041408
    %v1126 = vsel %vm1125, %v1090, 0.0
    %v1127 = vsel %vm1125, %v1098, 0.0
    %v1128 = vadd.f32 %v1126, %v1127
    %v1129 = vsel %vm1125, %v1097, 0.0
    %v1130 = vadd.f32 %v1128, %v1129
    %v1131 = vsel %vm1125, %v1099, 0.0
    %v1132 = vadd.f32 %v1130, %v1131
    %v1133 = vsel %vm1125, %v1107, 0.0
    %v1134 = vadd.f32 %v1132, %v1133
    %v1135 = vsel %vm1125, %v1115, 0.0
    %v1136 = vadd.f32 %v1134, %v1135
    %v1137 = vsel %vm1125, %v1114, 0.0
    %v1138 = vadd.f32 %v1136, %v1137
    %v1139 = vsel %vm1125, %v1116, 0.0
    %v1140 = vadd.f32 %v1138, %v1139
    %1141 = vadd.xlane.f32.xlu0 %v1140
    %v1142 = vpop.xlane.xlu0 %1141
    %v1145 = vunpack.c.l.s4 269488144
    %v1146 = vunpack.c.0.s8 %v1145
    %v1147 = vlaneseq
    %v1148 = vshrl.u32 %v1147, 7
    %v1149 = vsub.s32 %v1146, %v1148
    %v1150 = vrot.slane %v1142, %v1149
    %v1152 = vrcp.pop %v1150
    %v1153 = vmul.f32 %v53, %v1152
    %v1154 = vmul.f32 %v54, %v1152
    %v1157 = vcombine.high %v1153, %v1153
    %v1159 = vunpack.c.l.s4 1983009808
    %v1160 = vunpack.c.0.s8 %v1159
    %v1161 = vlaneseq
    %v1162 = vshrl.u32 %v1161, 7
    %v1163 = vsub.s32 %v1160, %v1162
    %v1164 = vrot.slane %v1153, %v1163
    %v1166 = vunpack.c.l.s4 1983009808
    %v1167 = vunpack.c.0.s8 %v1166
    %v1168 = vlaneseq
    %v1169 = vshrl.u32 %v1168, 7
    %v1170 = vsub.s32 %v1167, %v1169
    %v1171 = vrot.slane %v1157, %v1170
    %v1172 = vcombine.high %v1164, %v1164
    %v1173 = vcombine.high %v1171, %v1171
    %v1174 = vcombine.high %v1154, %v1154
    %v1176 = vunpack.c.l.s4 1983009808
    %v1177 = vunpack.c.0.s8 %v1176
    %v1178 = vlaneseq
    %v1179 = vshrl.u32 %v1178, 7
    %v1180 = vsub.s32 %v1177, %v1179
    %v1181 = vrot.slane %v1154, %v1180
    %v1183 = vunpack.c.l.s4 1983009808
    %v1184 = vunpack.c.0.s8 %v1183
    %v1185 = vlaneseq
    %v1186 = vshrl.u32 %v1185, 7
    %v1187 = vsub.s32 %v1184, %v1186
    %v1188 = vrot.slane %v1174, %v1187
    %v1189 = vcombine.high %v1181, %v1181
    %v1190 = vcombine.high %v1188, %v1188
    // While loop
    $region26: #{tpu_custom_call.1} parent=1 // loop_pre_header
      _
    $region27: #{tpu_custom_call.1} parent=1 // loop_header
      %s1200 = sphi 0, %s11818
      %v1201 = vphi %v1164, %v11797
      %v1202 = vphi %v1172, %v11798
      %v1203 = vphi %v1171, %v11799
      %v1204 = vphi %v1173, %v11800
      %v1205 = vphi %v1181, %v11801
      %v1206 = vphi %v1189, %v11802
      %v1207 = vphi %v1188, %v11803
      %v1208 = vphi %v1190, %v11804
      %v1209 = vphi 0.0, %v11770
      %s1210 = sphi 3.4028235e+38, %s11817
      %p1211 = scmp.lt.s32.totalorder %s1200, 500
      %p1212 = scmp.ge.f32.partialorder %s1210, 1e-06
      %p1213 = pnand %p1211, %p1212
      %p1214 = pneg %p1213
    $region28: #{tpu_custom_call.1} parent=1 // loop_header_branch
      %1216 = sbr.rel (%p1213) target = $region32
    $region29: #{tpu_custom_call.1} parent=1 // loop_body
      %v1217 = vpack.c.bf16 %v1201, %v1201
      %v1218 = vpack.c.bf16 %v1202, %v1202
      %v1219 = vpack.c.bf16 %v1203, %v1203
      %v1220 = vpack.c.bf16 %v1204, %v1204
      %v1221 = vpack.c.bf16 %v1205, %v1205
      %v1222 = vpack.c.bf16 %v1206, %v1206
      %v1223 = vpack.c.bf16 %v1207, %v1207
      %v1224 = vpack.c.bf16 %v1208, %v1208
      %v1737 = vunpack.c.l.b16 %v567
      %v1738 = vunpack.c.h.b16 %v567
      %v1739 = vunpack.c.l.b16 %v568
      %v1740 = vunpack.c.h.b16 %v568
      %v1741 = vunpack.c.l.b16 %v569
      %v1742 = vunpack.c.h.b16 %v569
      %v1743 = vunpack.c.l.b16 %v570
      %v1744 = vunpack.c.h.b16 %v570
      %v1745 = vunpack.c.l.b16 %v571
      %v1746 = vunpack.c.h.b16 %v571
      %v1747 = vunpack.c.l.b16 %v572
      %v1748 = vunpack.c.h.b16 %v572
      %v1749 = vunpack.c.l.b16 %v573
      %v1750 = vunpack.c.h.b16 %v573
      %v1751 = vunpack.c.l.b16 %v574
      %v1752 = vunpack.c.h.b16 %v574
      %v1753 = vunpack.c.l.b16 %v575
      %v1754 = vunpack.c.h.b16 %v575
      %v1755 = vunpack.c.l.b16 %v576
      %v1756 = vunpack.c.h.b16 %v576
      %v1757 = vunpack.c.l.b16 %v577
      %v1758 = vunpack.c.h.b16 %v577
      %v1759 = vunpack.c.l.b16 %v578
      %v1760 = vunpack.c.h.b16 %v578
      %v1761 = vunpack.c.l.b16 %v579
      %v1762 = vunpack.c.h.b16 %v579
      %v1763 = vunpack.c.l.b16 %v580
      %v1764 = vunpack.c.h.b16 %v580
      %v1765 = vunpack.c.l.b16 %v581
      %v1766 = vunpack.c.h.b16 %v581
      %v1767 = vunpack.c.l.b16 %v582
      %v1768 = vunpack.c.h.b16 %v582
      %v1769 = vunpack.c.l.b16 %v583
      %v1770 = vunpack.c.h.b16 %v583
      %v1771 = vunpack.c.l.b16 %v584
      %v1772 = vunpack.c.h.b16 %v584
      %v1773 = vunpack.c.l.b16 %v585
      %v1774 = vunpack.c.h.b16 %v585
      %v1775 = vunpack.c.l.b16 %v586
      %v1776 = vunpack.c.h.b16 %v586
      %v1777 = vunpack.c.l.b16 %v587
      %v1778 = vunpack.c.h.b16 %v587
      %v1779 = vunpack.c.l.b16 %v588
      %v1780 = vunpack.c.h.b16 %v588
      %v1781 = vunpack.c.l.b16 %v589
      %v1782 = vunpack.c.h.b16 %v589
      %v1783 = vunpack.c.l.b16 %v590
      %v1784 = vunpack.c.h.b16 %v590
      %v1785 = vunpack.c.l.b16 %v591
      %v1786 = vunpack.c.h.b16 %v591
      %v1787 = vunpack.c.l.b16 %v592
      %v1788 = vunpack.c.h.b16 %v592
      %v1789 = vunpack.c.l.b16 %v593
      %v1790 = vunpack.c.h.b16 %v593
      %v1791 = vunpack.c.l.b16 %v594
      %v1792 = vunpack.c.h.b16 %v594
      %v1793 = vunpack.c.l.b16 %v595
      %v1794 = vunpack.c.h.b16 %v595
      %v1795 = vunpack.c.l.b16 %v596
      %v1796 = vunpack.c.h.b16 %v596
      %v1797 = vunpack.c.l.b16 %v597
      %v1798 = vunpack.c.h.b16 %v597
      %v1799 = vunpack.c.l.b16 %v598
      %v1800 = vunpack.c.h.b16 %v598
      %v1801 = vunpack.c.l.b16 %v599
      %v1802 = vunpack.c.h.b16 %v599
      %v1803 = vunpack.c.l.b16 %v600
      %v1804 = vunpack.c.h.b16 %v600
      %v1805 = vunpack.c.l.b16 %v601
      %v1806 = vunpack.c.h.b16 %v601
      %v1807 = vunpack.c.l.b16 %v602
      %v1808 = vunpack.c.h.b16 %v602
      %v1809 = vunpack.c.l.b16 %v603
      %v1810 = vunpack.c.h.b16 %v603
      %v1811 = vunpack.c.l.b16 %v604
      %v1812 = vunpack.c.h.b16 %v604
      %v1813 = vunpack.c.l.b16 %v605
      %v1814 = vunpack.c.h.b16 %v605
      %v1815 = vunpack.c.l.b16 %v606
      %v1816 = vunpack.c.h.b16 %v606
      %v1817 = vunpack.c.l.b16 %v607
      %v1818 = vunpack.c.h.b16 %v607
      %v1819 = vunpack.c.l.b16 %v608
      %v1820 = vunpack.c.h.b16 %v608
      %v1821 = vunpack.c.l.b16 %v609
      %v1822 = vunpack.c.h.b16 %v609
      %v1823 = vunpack.c.l.b16 %v610
      %v1824 = vunpack.c.h.b16 %v610
      %v1825 = vunpack.c.l.b16 %v611
      %v1826 = vunpack.c.h.b16 %v611
      %v1827 = vunpack.c.l.b16 %v612
      %v1828 = vunpack.c.h.b16 %v612
      %v1829 = vunpack.c.l.b16 %v613
      %v1830 = vunpack.c.h.b16 %v613
      %v1831 = vunpack.c.l.b16 %v614
      %v1832 = vunpack.c.h.b16 %v614
      %v1833 = vunpack.c.l.b16 %v615
      %v1834 = vunpack.c.h.b16 %v615
      %v1835 = vunpack.c.l.b16 %v616
      %v1836 = vunpack.c.h.b16 %v616
      %v1837 = vunpack.c.l.b16 %v617
      %v1838 = vunpack.c.h.b16 %v617
      %v1839 = vunpack.c.l.b16 %v618
      %v1840 = vunpack.c.h.b16 %v618
      %v1841 = vunpack.c.l.b16 %v619
      %v1842 = vunpack.c.h.b16 %v619
      %v1843 = vunpack.c.l.b16 %v620
      %v1844 = vunpack.c.h.b16 %v620
      %v1845 = vunpack.c.l.b16 %v621
      %v1846 = vunpack.c.h.b16 %v621
      %v1847 = vunpack.c.l.b16 %v622
      %v1848 = vunpack.c.h.b16 %v622
      %v1849 = vunpack.c.l.b16 %v623
      %v1850 = vunpack.c.h.b16 %v623
      %v1851 = vunpack.c.l.b16 %v624
      %v1852 = vunpack.c.h.b16 %v624
      %v1853 = vunpack.c.l.b16 %v625
      %v1854 = vunpack.c.h.b16 %v625
      %v1855 = vunpack.c.l.b16 %v626
      %v1856 = vunpack.c.h.b16 %v626
      %v1857 = vunpack.c.l.b16 %v627
      %v1858 = vunpack.c.h.b16 %v627
      %v1859 = vunpack.c.l.b16 %v628
      %v1860 = vunpack.c.h.b16 %v628
      %v1861 = vunpack.c.l.b16 %v629
      %v1862 = vunpack.c.h.b16 %v629
      %v1863 = vunpack.c.l.b16 %v630
      %v1864 = vunpack.c.h.b16 %v630
      %v1865 = vunpack.c.l.b16 %v631
      %v1866 = vunpack.c.h.b16 %v631
      %v1867 = vunpack.c.l.b16 %v632
      %v1868 = vunpack.c.h.b16 %v632
      %v1869 = vunpack.c.l.b16 %v633
      %v1870 = vunpack.c.h.b16 %v633
      %v1871 = vunpack.c.l.b16 %v634
      %v1872 = vunpack.c.h.b16 %v634
      %v1873 = vunpack.c.l.b16 %v635
      %v1874 = vunpack.c.h.b16 %v635
      %v1875 = vunpack.c.l.b16 %v636
      %v1876 = vunpack.c.h.b16 %v636
      %v1877 = vunpack.c.l.b16 %v637
      %v1878 = vunpack.c.h.b16 %v637
      %v1879 = vunpack.c.l.b16 %v638
      %v1880 = vunpack.c.h.b16 %v638
      %v1881 = vunpack.c.l.b16 %v639
      %v1882 = vunpack.c.h.b16 %v639
      %v1883 = vunpack.c.l.b16 %v640
      %v1884 = vunpack.c.h.b16 %v640
      %v1885 = vunpack.c.l.b16 %v641
      %v1886 = vunpack.c.h.b16 %v641
      %v1887 = vunpack.c.l.b16 %v642
      %v1888 = vunpack.c.h.b16 %v642
      %v1889 = vunpack.c.l.b16 %v643
      %v1890 = vunpack.c.h.b16 %v643
      %v1891 = vunpack.c.l.b16 %v644
      %v1892 = vunpack.c.h.b16 %v644
      %v1893 = vunpack.c.l.b16 %v645
      %v1894 = vunpack.c.h.b16 %v645
      %v1895 = vunpack.c.l.b16 %v646
      %v1896 = vunpack.c.h.b16 %v646
      %v1897 = vunpack.c.l.b16 %v647
      %v1898 = vunpack.c.h.b16 %v647
      %v1899 = vunpack.c.l.b16 %v648
      %v1900 = vunpack.c.h.b16 %v648
      %v1901 = vunpack.c.l.b16 %v649
      %v1902 = vunpack.c.h.b16 %v649
      %v1903 = vunpack.c.l.b16 %v650
      %v1904 = vunpack.c.h.b16 %v650
      %v1905 = vunpack.c.l.b16 %v651
      %v1906 = vunpack.c.h.b16 %v651
      %v1907 = vunpack.c.l.b16 %v652
      %v1908 = vunpack.c.h.b16 %v652
      %v1909 = vunpack.c.l.b16 %v653
      %v1910 = vunpack.c.h.b16 %v653
      %v1911 = vunpack.c.l.b16 %v654
      %v1912 = vunpack.c.h.b16 %v654
      %v1913 = vunpack.c.l.b16 %v655
      %v1914 = vunpack.c.h.b16 %v655
      %v1915 = vunpack.c.l.b16 %v656
      %v1916 = vunpack.c.h.b16 %v656
      %v1917 = vunpack.c.l.b16 %v657
      %v1918 = vunpack.c.h.b16 %v657
      %v1919 = vunpack.c.l.b16 %v658
      %v1920 = vunpack.c.h.b16 %v658
      %v1921 = vunpack.c.l.b16 %v659
      %v1922 = vunpack.c.h.b16 %v659
      %v1923 = vunpack.c.l.b16 %v660
      %v1924 = vunpack.c.h.b16 %v660
      %v1925 = vunpack.c.l.b16 %v661
      %v1926 = vunpack.c.h.b16 %v661
      %v1927 = vunpack.c.l.b16 %v662
      %v1928 = vunpack.c.h.b16 %v662
      %v1929 = vunpack.c.l.b16 %v663
      %v1930 = vunpack.c.h.b16 %v663
      %v1931 = vunpack.c.l.b16 %v664
      %v1932 = vunpack.c.h.b16 %v664
      %v1933 = vunpack.c.l.b16 %v665
      %v1934 = vunpack.c.h.b16 %v665
      %v1935 = vunpack.c.l.b16 %v666
      %v1936 = vunpack.c.h.b16 %v666
      %v1937 = vunpack.c.l.b16 %v667
      %v1938 = vunpack.c.h.b16 %v667
      %v1939 = vunpack.c.l.b16 %v668
      %v1940 = vunpack.c.h.b16 %v668
      %v1941 = vunpack.c.l.b16 %v669
      %v1942 = vunpack.c.h.b16 %v669
      %v1943 = vunpack.c.l.b16 %v670
      %v1944 = vunpack.c.h.b16 %v670
      %v1945 = vunpack.c.l.b16 %v671
      %v1946 = vunpack.c.h.b16 %v671
      %v1947 = vunpack.c.l.b16 %v672
      %v1948 = vunpack.c.h.b16 %v672
      %v1949 = vunpack.c.l.b16 %v673
      %v1950 = vunpack.c.h.b16 %v673
      %v1951 = vunpack.c.l.b16 %v674
      %v1952 = vunpack.c.h.b16 %v674
      %v1953 = vunpack.c.l.b16 %v675
      %v1954 = vunpack.c.h.b16 %v675
      %v1955 = vunpack.c.l.b16 %v676
      %v1956 = vunpack.c.h.b16 %v676
      %v1957 = vunpack.c.l.b16 %v677
      %v1958 = vunpack.c.h.b16 %v677
      %v1959 = vunpack.c.l.b16 %v678
      %v1960 = vunpack.c.h.b16 %v678
      %v1961 = vunpack.c.l.b16 %v679
      %v1962 = vunpack.c.h.b16 %v679
      %v1963 = vunpack.c.l.b16 %v680
      %v1964 = vunpack.c.h.b16 %v680
      %v1965 = vunpack.c.l.b16 %v681
      %v1966 = vunpack.c.h.b16 %v681
      %v1967 = vunpack.c.l.b16 %v682
      %v1968 = vunpack.c.h.b16 %v682
      %v1969 = vunpack.c.l.b16 %v683
      %v1970 = vunpack.c.h.b16 %v683
      %v1971 = vunpack.c.l.b16 %v684
      %v1972 = vunpack.c.h.b16 %v684
      %v1973 = vunpack.c.l.b16 %v685
      %v1974 = vunpack.c.h.b16 %v685
      %v1975 = vunpack.c.l.b16 %v686
      %v1976 = vunpack.c.h.b16 %v686
      %v1977 = vunpack.c.l.b16 %v687
      %v1978 = vunpack.c.h.b16 %v687
      %v1979 = vunpack.c.l.b16 %v688
      %v1980 = vunpack.c.h.b16 %v688
      %v1981 = vunpack.c.l.b16 %v689
      %v1982 = vunpack.c.h.b16 %v689
      %v1983 = vunpack.c.l.b16 %v690
      %v1984 = vunpack.c.h.b16 %v690
      %v1985 = vunpack.c.l.b16 %v691
      %v1986 = vunpack.c.h.b16 %v691
      %v1987 = vunpack.c.l.b16 %v692
      %v1988 = vunpack.c.h.b16 %v692
      %v1989 = vunpack.c.l.b16 %v693
      %v1990 = vunpack.c.h.b16 %v693
      %v1991 = vunpack.c.l.b16 %v694
      %v1992 = vunpack.c.h.b16 %v694
      %v1993 = vunpack.c.l.b16 %v695
      %v1994 = vunpack.c.h.b16 %v695
      %v1995 = vunpack.c.l.b16 %v696
      %v1996 = vunpack.c.h.b16 %v696
      %v1997 = vunpack.c.l.b16 %v697
      %v1998 = vunpack.c.h.b16 %v697
      %v1999 = vunpack.c.l.b16 %v698
      %v2000 = vunpack.c.h.b16 %v698
      %v2001 = vunpack.c.l.b16 %v699
      %v2002 = vunpack.c.h.b16 %v699
      %v2003 = vunpack.c.l.b16 %v700
      %v2004 = vunpack.c.h.b16 %v700
      %v2005 = vunpack.c.l.b16 %v701
      %v2006 = vunpack.c.h.b16 %v701
      %v2007 = vunpack.c.l.b16 %v702
      %v2008 = vunpack.c.h.b16 %v702
      %v2009 = vunpack.c.l.b16 %v703
      %v2010 = vunpack.c.h.b16 %v703
      %v2011 = vunpack.c.l.b16 %v704
      %v2012 = vunpack.c.h.b16 %v704
      %v2013 = vunpack.c.l.b16 %v705
      %v2014 = vunpack.c.h.b16 %v705
      %v2015 = vunpack.c.l.b16 %v706
      %v2016 = vunpack.c.h.b16 %v706
      %v2017 = vunpack.c.l.b16 %v707
      %v2018 = vunpack.c.h.b16 %v707
      %v2019 = vunpack.c.l.b16 %v708
      %v2020 = vunpack.c.h.b16 %v708
      %v2021 = vunpack.c.l.b16 %v709
      %v2022 = vunpack.c.h.b16 %v709
      %v2023 = vunpack.c.l.b16 %v710
      %v2024 = vunpack.c.h.b16 %v710
      %v2025 = vunpack.c.l.b16 %v711
      %v2026 = vunpack.c.h.b16 %v711
      %v2027 = vunpack.c.l.b16 %v712
      %v2028 = vunpack.c.h.b16 %v712
      %v2029 = vunpack.c.l.b16 %v713
      %v2030 = vunpack.c.h.b16 %v713
      %v2031 = vunpack.c.l.b16 %v714
      %v2032 = vunpack.c.h.b16 %v714
      %v2033 = vunpack.c.l.b16 %v715
      %v2034 = vunpack.c.h.b16 %v715
      %v2035 = vunpack.c.l.b16 %v716
      %v2036 = vunpack.c.h.b16 %v716
      %v2037 = vunpack.c.l.b16 %v717
      %v2038 = vunpack.c.h.b16 %v717
      %v2039 = vunpack.c.l.b16 %v718
      %v2040 = vunpack.c.h.b16 %v718
      %v2041 = vunpack.c.l.b16 %v719
      %v2042 = vunpack.c.h.b16 %v719
      %v2043 = vunpack.c.l.b16 %v720
      %v2044 = vunpack.c.h.b16 %v720
      %v2045 = vunpack.c.l.b16 %v721
      %v2046 = vunpack.c.h.b16 %v721
      %v2047 = vunpack.c.l.b16 %v722
      %v2048 = vunpack.c.h.b16 %v722
      %v2049 = vunpack.c.l.b16 %v723
      %v2050 = vunpack.c.h.b16 %v723
      %v2051 = vunpack.c.l.b16 %v724
      %v2052 = vunpack.c.h.b16 %v724
      %v2053 = vunpack.c.l.b16 %v725
      %v2054 = vunpack.c.h.b16 %v725
      %v2055 = vunpack.c.l.b16 %v726
      %v2056 = vunpack.c.h.b16 %v726
      %v2057 = vunpack.c.l.b16 %v727
      %v2058 = vunpack.c.h.b16 %v727
      %v2059 = vunpack.c.l.b16 %v728
      %v2060 = vunpack.c.h.b16 %v728
      %v2061 = vunpack.c.l.b16 %v729
      %v2062 = vunpack.c.h.b16 %v729
      %v2063 = vunpack.c.l.b16 %v730
      %v2064 = vunpack.c.h.b16 %v730
      %v2065 = vunpack.c.l.b16 %v731
      %v2066 = vunpack.c.h.b16 %v731
      %v2067 = vunpack.c.l.b16 %v732
      %v2068 = vunpack.c.h.b16 %v732
      %v2069 = vunpack.c.l.b16 %v733
      %v2070 = vunpack.c.h.b16 %v733
      %v2071 = vunpack.c.l.b16 %v734
      %v2072 = vunpack.c.h.b16 %v734
      %v2073 = vunpack.c.l.b16 %v735
      %v2074 = vunpack.c.h.b16 %v735
      %v2075 = vunpack.c.l.b16 %v736
      %v2076 = vunpack.c.h.b16 %v736
      %v2077 = vunpack.c.l.b16 %v737
      %v2078 = vunpack.c.h.b16 %v737
      %v2079 = vunpack.c.l.b16 %v738
      %v2080 = vunpack.c.h.b16 %v738
      %v2081 = vunpack.c.l.b16 %v739
      %v2082 = vunpack.c.h.b16 %v739
      %v2083 = vunpack.c.l.b16 %v740
      %v2084 = vunpack.c.h.b16 %v740
      %v2085 = vunpack.c.l.b16 %v741
      %v2086 = vunpack.c.h.b16 %v741
      %v2087 = vunpack.c.l.b16 %v742
      %v2088 = vunpack.c.h.b16 %v742
      %v2089 = vunpack.c.l.b16 %v743
      %v2090 = vunpack.c.h.b16 %v743
      %v2091 = vunpack.c.l.b16 %v744
      %v2092 = vunpack.c.h.b16 %v744
      %v2093 = vunpack.c.l.b16 %v745
      %v2094 = vunpack.c.h.b16 %v745
      %v2095 = vunpack.c.l.b16 %v746
      %v2096 = vunpack.c.h.b16 %v746
      %v2097 = vunpack.c.l.b16 %v747
      %v2098 = vunpack.c.h.b16 %v747
      %v2099 = vunpack.c.l.b16 %v748
      %v2100 = vunpack.c.h.b16 %v748
      %v2101 = vunpack.c.l.b16 %v749
      %v2102 = vunpack.c.h.b16 %v749
      %v2103 = vunpack.c.l.b16 %v750
      %v2104 = vunpack.c.h.b16 %v750
      %v2105 = vunpack.c.l.b16 %v751
      %v2106 = vunpack.c.h.b16 %v751
      %v2107 = vunpack.c.l.b16 %v752
      %v2108 = vunpack.c.h.b16 %v752
      %v2109 = vunpack.c.l.b16 %v753
      %v2110 = vunpack.c.h.b16 %v753
      %v2111 = vunpack.c.l.b16 %v754
      %v2112 = vunpack.c.h.b16 %v754
      %v2113 = vunpack.c.l.b16 %v755
      %v2114 = vunpack.c.h.b16 %v755
      %v2115 = vunpack.c.l.b16 %v756
      %v2116 = vunpack.c.h.b16 %v756
      %v2117 = vunpack.c.l.b16 %v757
      %v2118 = vunpack.c.h.b16 %v757
      %v2119 = vunpack.c.l.b16 %v758
      %v2120 = vunpack.c.h.b16 %v758
      %v2121 = vunpack.c.l.b16 %v759
      %v2122 = vunpack.c.h.b16 %v759
      %v2123 = vunpack.c.l.b16 %v760
      %v2124 = vunpack.c.h.b16 %v760
      %v2125 = vunpack.c.l.b16 %v761
      %v2126 = vunpack.c.h.b16 %v761
      %v2127 = vunpack.c.l.b16 %v762
      %v2128 = vunpack.c.h.b16 %v762
      %v2129 = vunpack.c.l.b16 %v763
      %v2130 = vunpack.c.h.b16 %v763
      %v2131 = vunpack.c.l.b16 %v764
      %v2132 = vunpack.c.h.b16 %v764
      %v2133 = vunpack.c.l.b16 %v765
      %v2134 = vunpack.c.h.b16 %v765
      %v2135 = vunpack.c.l.b16 %v766
      %v2136 = vunpack.c.h.b16 %v766
      %v2137 = vunpack.c.l.b16 %v767
      %v2138 = vunpack.c.h.b16 %v767
      %v2139 = vunpack.c.l.b16 %v768
      %v2140 = vunpack.c.h.b16 %v768
      %v2141 = vunpack.c.l.b16 %v769
      %v2142 = vunpack.c.h.b16 %v769
      %v2143 = vunpack.c.l.b16 %v770
      %v2144 = vunpack.c.h.b16 %v770
      %v2145 = vunpack.c.l.b16 %v771
      %v2146 = vunpack.c.h.b16 %v771
      %v2147 = vunpack.c.l.b16 %v772
      %v2148 = vunpack.c.h.b16 %v772
      %v2149 = vunpack.c.l.b16 %v773
      %v2150 = vunpack.c.h.b16 %v773
      %v2151 = vunpack.c.l.b16 %v774
      %v2152 = vunpack.c.h.b16 %v774
      %v2153 = vunpack.c.l.b16 %v775
      %v2154 = vunpack.c.h.b16 %v775
      %v2155 = vunpack.c.l.b16 %v776
      %v2156 = vunpack.c.h.b16 %v776
      %v2157 = vunpack.c.l.b16 %v777
      %v2158 = vunpack.c.h.b16 %v777
      %v2159 = vunpack.c.l.b16 %v778
      %v2160 = vunpack.c.h.b16 %v778
      %v2161 = vunpack.c.l.b16 %v779
      %v2162 = vunpack.c.h.b16 %v779
      %v2163 = vunpack.c.l.b16 %v780
      %v2164 = vunpack.c.h.b16 %v780
      %v2165 = vunpack.c.l.b16 %v781
      %v2166 = vunpack.c.h.b16 %v781
      %v2167 = vunpack.c.l.b16 %v782
      %v2168 = vunpack.c.h.b16 %v782
      %v2169 = vunpack.c.l.b16 %v783
      %v2170 = vunpack.c.h.b16 %v783
      %v2171 = vunpack.c.l.b16 %v784
      %v2172 = vunpack.c.h.b16 %v784
      %v2173 = vunpack.c.l.b16 %v785
      %v2174 = vunpack.c.h.b16 %v785
      %v2175 = vunpack.c.l.b16 %v786
      %v2176 = vunpack.c.h.b16 %v786
      %v2177 = vunpack.c.l.b16 %v787
      %v2178 = vunpack.c.h.b16 %v787
      %v2179 = vunpack.c.l.b16 %v788
      %v2180 = vunpack.c.h.b16 %v788
      %v2181 = vunpack.c.l.b16 %v789
      %v2182 = vunpack.c.h.b16 %v789
      %v2183 = vunpack.c.l.b16 %v790
      %v2184 = vunpack.c.h.b16 %v790
      %v2185 = vunpack.c.l.b16 %v791
      %v2186 = vunpack.c.h.b16 %v791
      %v2187 = vunpack.c.l.b16 %v792
      %v2188 = vunpack.c.h.b16 %v792
      %v2189 = vunpack.c.l.b16 %v793
      %v2190 = vunpack.c.h.b16 %v793
      %v2191 = vunpack.c.l.b16 %v794
      %v2192 = vunpack.c.h.b16 %v794
      %v2193 = vunpack.c.l.b16 %v795
      %v2194 = vunpack.c.h.b16 %v795
      %v2195 = vunpack.c.l.b16 %v796
      %v2196 = vunpack.c.h.b16 %v796
      %v2197 = vunpack.c.l.b16 %v797
      %v2198 = vunpack.c.h.b16 %v797
      %v2199 = vunpack.c.l.b16 %v798
      %v2200 = vunpack.c.h.b16 %v798
      %v2201 = vunpack.c.l.b16 %v799
      %v2202 = vunpack.c.h.b16 %v799
      %v2203 = vunpack.c.l.b16 %v800
      %v2204 = vunpack.c.h.b16 %v800
      %v2205 = vunpack.c.l.b16 %v801
      %v2206 = vunpack.c.h.b16 %v801
      %v2207 = vunpack.c.l.b16 %v802
      %v2208 = vunpack.c.h.b16 %v802
      %v2209 = vunpack.c.l.b16 %v803
      %v2210 = vunpack.c.h.b16 %v803
      %v2211 = vunpack.c.l.b16 %v804
      %v2212 = vunpack.c.h.b16 %v804
      %v2213 = vunpack.c.l.b16 %v805
      %v2214 = vunpack.c.h.b16 %v805
      %v2215 = vunpack.c.l.b16 %v806
      %v2216 = vunpack.c.h.b16 %v806
      %v2217 = vunpack.c.l.b16 %v807
      %v2218 = vunpack.c.h.b16 %v807
      %v2219 = vunpack.c.l.b16 %v808
      %v2220 = vunpack.c.h.b16 %v808
      %v2221 = vunpack.c.l.b16 %v809
      %v2222 = vunpack.c.h.b16 %v809
      %v2223 = vunpack.c.l.b16 %v810
      %v2224 = vunpack.c.h.b16 %v810
      %v2225 = vunpack.c.l.b16 %v811
      %v2226 = vunpack.c.h.b16 %v811
      %v2227 = vunpack.c.l.b16 %v812
      %v2228 = vunpack.c.h.b16 %v812
      %v2229 = vunpack.c.l.b16 %v813
      %v2230 = vunpack.c.h.b16 %v813
      %v2231 = vunpack.c.l.b16 %v814
      %v2232 = vunpack.c.h.b16 %v814
      %v2233 = vunpack.c.l.b16 %v815
      %v2234 = vunpack.c.h.b16 %v815
      %v2235 = vunpack.c.l.b16 %v816
      %v2236 = vunpack.c.h.b16 %v816
      %v2237 = vunpack.c.l.b16 %v817
      %v2238 = vunpack.c.h.b16 %v817
      %v2239 = vunpack.c.l.b16 %v818
      %v2240 = vunpack.c.h.b16 %v818
      %v2241 = vunpack.c.l.b16 %v819
      %v2242 = vunpack.c.h.b16 %v819
      %v2243 = vunpack.c.l.b16 %v820
      %v2244 = vunpack.c.h.b16 %v820
      %v2245 = vunpack.c.l.b16 %v821
      %v2246 = vunpack.c.h.b16 %v821
      %v2247 = vunpack.c.l.b16 %v822
      %v2248 = vunpack.c.h.b16 %v822
      %v2249 = vunpack.c.l.b16 %v823
      %v2250 = vunpack.c.h.b16 %v823
      %v2251 = vunpack.c.l.b16 %v824
      %v2252 = vunpack.c.h.b16 %v824
      %v2253 = vunpack.c.l.b16 %v825
      %v2254 = vunpack.c.h.b16 %v825
      %v2255 = vunpack.c.l.b16 %v826
      %v2256 = vunpack.c.h.b16 %v826
      %v2257 = vunpack.c.l.b16 %v827
      %v2258 = vunpack.c.h.b16 %v827
      %v2259 = vunpack.c.l.b16 %v828
      %v2260 = vunpack.c.h.b16 %v828
      %v2261 = vunpack.c.l.b16 %v829
      %v2262 = vunpack.c.h.b16 %v829
      %v2263 = vunpack.c.l.b16 %v830
      %v2264 = vunpack.c.h.b16 %v830
      %v2265 = vunpack.c.l.b16 %v831
      %v2266 = vunpack.c.h.b16 %v831
      %v2267 = vunpack.c.l.b16 %v832
      %v2268 = vunpack.c.h.b16 %v832
      %v2269 = vunpack.c.l.b16 %v833
      %v2270 = vunpack.c.h.b16 %v833
      %v2271 = vunpack.c.l.b16 %v834
      %v2272 = vunpack.c.h.b16 %v834
      %v2273 = vunpack.c.l.b16 %v835
      %v2274 = vunpack.c.h.b16 %v835
      %v2275 = vunpack.c.l.b16 %v836
      %v2276 = vunpack.c.h.b16 %v836
      %v2277 = vunpack.c.l.b16 %v837
      %v2278 = vunpack.c.h.b16 %v837
      %v2279 = vunpack.c.l.b16 %v838
      %v2280 = vunpack.c.h.b16 %v838
      %v2281 = vunpack.c.l.b16 %v839
      %v2282 = vunpack.c.h.b16 %v839
      %v2283 = vunpack.c.l.b16 %v840
      %v2284 = vunpack.c.h.b16 %v840
      %v2285 = vunpack.c.l.b16 %v841
      %v2286 = vunpack.c.h.b16 %v841
      %v2287 = vunpack.c.l.b16 %v842
      %v2288 = vunpack.c.h.b16 %v842
      %v2289 = vunpack.c.l.b16 %v843
      %v2290 = vunpack.c.h.b16 %v843
      %v2291 = vunpack.c.l.b16 %v844
      %v2292 = vunpack.c.h.b16 %v844
      %v2293 = vunpack.c.l.b16 %v845
      %v2294 = vunpack.c.h.b16 %v845
      %v2295 = vunpack.c.l.b16 %v846
      %v2296 = vunpack.c.h.b16 %v846
      %v2297 = vunpack.c.l.b16 %v847
      %v2298 = vunpack.c.h.b16 %v847
      %v2299 = vunpack.c.l.b16 %v848
      %v2300 = vunpack.c.h.b16 %v848
      %v2301 = vunpack.c.l.b16 %v849
      %v2302 = vunpack.c.h.b16 %v849
      %v2303 = vunpack.c.l.b16 %v850
      %v2304 = vunpack.c.h.b16 %v850
      %v2305 = vunpack.c.l.b16 %v851
      %v2306 = vunpack.c.h.b16 %v851
      %v2307 = vunpack.c.l.b16 %v852
      %v2308 = vunpack.c.h.b16 %v852
      %v2309 = vunpack.c.l.b16 %v853
      %v2310 = vunpack.c.h.b16 %v853
      %v2311 = vunpack.c.l.b16 %v854
      %v2312 = vunpack.c.h.b16 %v854
      %v2313 = vunpack.c.l.b16 %v855
      %v2314 = vunpack.c.h.b16 %v855
      %v2315 = vunpack.c.l.b16 %v856
      %v2316 = vunpack.c.h.b16 %v856
      %v2317 = vunpack.c.l.b16 %v857
      %v2318 = vunpack.c.h.b16 %v857
      %v2319 = vunpack.c.l.b16 %v858
      %v2320 = vunpack.c.h.b16 %v858
      %v2321 = vunpack.c.l.b16 %v859
      %v2322 = vunpack.c.h.b16 %v859
      %v2323 = vunpack.c.l.b16 %v860
      %v2324 = vunpack.c.h.b16 %v860
      %v2325 = vunpack.c.l.b16 %v861
      %v2326 = vunpack.c.h.b16 %v861
      %v2327 = vunpack.c.l.b16 %v862
      %v2328 = vunpack.c.h.b16 %v862
      %v2329 = vunpack.c.l.b16 %v863
      %v2330 = vunpack.c.h.b16 %v863
      %v2331 = vunpack.c.l.b16 %v864
      %v2332 = vunpack.c.h.b16 %v864
      %v2333 = vunpack.c.l.b16 %v865
      %v2334 = vunpack.c.h.b16 %v865
      %v2335 = vunpack.c.l.b16 %v866
      %v2336 = vunpack.c.h.b16 %v866
      %v2337 = vunpack.c.l.b16 %v867
      %v2338 = vunpack.c.h.b16 %v867
      %v2339 = vunpack.c.l.b16 %v868
      %v2340 = vunpack.c.h.b16 %v868
      %v2341 = vunpack.c.l.b16 %v869
      %v2342 = vunpack.c.h.b16 %v869
      %v2343 = vunpack.c.l.b16 %v870
      %v2344 = vunpack.c.h.b16 %v870
      %v2345 = vunpack.c.l.b16 %v871
      %v2346 = vunpack.c.h.b16 %v871
      %v2347 = vunpack.c.l.b16 %v872
      %v2348 = vunpack.c.h.b16 %v872
      %v2349 = vunpack.c.l.b16 %v873
      %v2350 = vunpack.c.h.b16 %v873
      %v2351 = vunpack.c.l.b16 %v874
      %v2352 = vunpack.c.h.b16 %v874
      %v2353 = vunpack.c.l.b16 %v875
      %v2354 = vunpack.c.h.b16 %v875
      %v2355 = vunpack.c.l.b16 %v876
      %v2356 = vunpack.c.h.b16 %v876
      %v2357 = vunpack.c.l.b16 %v877
      %v2358 = vunpack.c.h.b16 %v877
      %v2359 = vunpack.c.l.b16 %v878
      %v2360 = vunpack.c.h.b16 %v878
      %v2361 = vunpack.c.l.b16 %v879
      %v2362 = vunpack.c.h.b16 %v879
      %v2363 = vunpack.c.l.b16 %v880
      %v2364 = vunpack.c.h.b16 %v880
      %v2365 = vunpack.c.l.b16 %v881
      %v2366 = vunpack.c.h.b16 %v881
      %v2367 = vunpack.c.l.b16 %v882
      %v2368 = vunpack.c.h.b16 %v882
      %v2369 = vunpack.c.l.b16 %v883
      %v2370 = vunpack.c.h.b16 %v883
      %v2371 = vunpack.c.l.b16 %v884
      %v2372 = vunpack.c.h.b16 %v884
      %v2373 = vunpack.c.l.b16 %v885
      %v2374 = vunpack.c.h.b16 %v885
      %v2375 = vunpack.c.l.b16 %v886
      %v2376 = vunpack.c.h.b16 %v886
      %v2377 = vunpack.c.l.b16 %v887
      %v2378 = vunpack.c.h.b16 %v887
      %v2379 = vunpack.c.l.b16 %v888
      %v2380 = vunpack.c.h.b16 %v888
      %v2381 = vunpack.c.l.b16 %v889
      %v2382 = vunpack.c.h.b16 %v889
      %v2383 = vunpack.c.l.b16 %v890
      %v2384 = vunpack.c.h.b16 %v890
      %v2385 = vunpack.c.l.b16 %v891
      %v2386 = vunpack.c.h.b16 %v891
      %v2387 = vunpack.c.l.b16 %v892
      %v2388 = vunpack.c.h.b16 %v892
      %v2389 = vunpack.c.l.b16 %v893
      %v2390 = vunpack.c.h.b16 %v893
      %v2391 = vunpack.c.l.b16 %v894
      %v2392 = vunpack.c.h.b16 %v894
      %v2393 = vunpack.c.l.b16 %v895
      %v2394 = vunpack.c.h.b16 %v895
      %v2395 = vunpack.c.l.b16 %v896
      %v2396 = vunpack.c.h.b16 %v896
      %v2397 = vunpack.c.l.b16 %v897
      %v2398 = vunpack.c.h.b16 %v897
      %v2399 = vunpack.c.l.b16 %v898
      %v2400 = vunpack.c.h.b16 %v898
      %v2401 = vunpack.c.l.b16 %v899
      %v2402 = vunpack.c.h.b16 %v899
      %v2403 = vunpack.c.l.b16 %v900
      %v2404 = vunpack.c.h.b16 %v900
      %v2405 = vunpack.c.l.b16 %v901
      %v2406 = vunpack.c.h.b16 %v901
      %v2407 = vunpack.c.l.b16 %v902
      %v2408 = vunpack.c.h.b16 %v902
      %v2409 = vunpack.c.l.b16 %v903
      %v2410 = vunpack.c.h.b16 %v903
      %v2411 = vunpack.c.l.b16 %v904
      %v2412 = vunpack.c.h.b16 %v904
      %v2413 = vunpack.c.l.b16 %v905
      %v2414 = vunpack.c.h.b16 %v905
      %v2415 = vunpack.c.l.b16 %v906
      %v2416 = vunpack.c.h.b16 %v906
      %v2417 = vunpack.c.l.b16 %v907
      %v2418 = vunpack.c.h.b16 %v907
      %v2419 = vunpack.c.l.b16 %v908
      %v2420 = vunpack.c.h.b16 %v908
      %v2421 = vunpack.c.l.b16 %v909
      %v2422 = vunpack.c.h.b16 %v909
      %v2423 = vunpack.c.l.b16 %v910
      %v2424 = vunpack.c.h.b16 %v910
      %v2425 = vunpack.c.l.b16 %v911
      %v2426 = vunpack.c.h.b16 %v911
      %v2427 = vunpack.c.l.b16 %v912
      %v2428 = vunpack.c.h.b16 %v912
      %v2429 = vunpack.c.l.b16 %v913
      %v2430 = vunpack.c.h.b16 %v913
      %v2431 = vunpack.c.l.b16 %v914
      %v2432 = vunpack.c.h.b16 %v914
      %v2433 = vunpack.c.l.b16 %v915
      %v2434 = vunpack.c.h.b16 %v915
      %v2435 = vunpack.c.l.b16 %v916
      %v2436 = vunpack.c.h.b16 %v916
      %v2437 = vunpack.c.l.b16 %v917
      %v2438 = vunpack.c.h.b16 %v917
      %v2439 = vunpack.c.l.b16 %v918
      %v2440 = vunpack.c.h.b16 %v918
      %v2441 = vunpack.c.l.b16 %v919
      %v2442 = vunpack.c.h.b16 %v919
      %v2443 = vunpack.c.l.b16 %v920
      %v2444 = vunpack.c.h.b16 %v920
      %v2445 = vunpack.c.l.b16 %v921
      %v2446 = vunpack.c.h.b16 %v921
      %v2447 = vunpack.c.l.b16 %v922
      %v2448 = vunpack.c.h.b16 %v922
      %v2449 = vunpack.c.l.b16 %v923
      %v2450 = vunpack.c.h.b16 %v923
      %v2451 = vunpack.c.l.b16 %v924
      %v2452 = vunpack.c.h.b16 %v924
      %v2453 = vunpack.c.l.b16 %v925
      %v2454 = vunpack.c.h.b16 %v925
      %v2455 = vunpack.c.l.b16 %v926
      %v2456 = vunpack.c.h.b16 %v926
      %v2457 = vunpack.c.l.b16 %v927
      %v2458 = vunpack.c.h.b16 %v927
      %v2459 = vunpack.c.l.b16 %v928
      %v2460 = vunpack.c.h.b16 %v928
      %v2461 = vunpack.c.l.b16 %v929
      %v2462 = vunpack.c.h.b16 %v929
      %v2463 = vunpack.c.l.b16 %v930
      %v2464 = vunpack.c.h.b16 %v930
      %v2465 = vunpack.c.l.b16 %v931
      %v2466 = vunpack.c.h.b16 %v931
      %v2467 = vunpack.c.l.b16 %v932
      %v2468 = vunpack.c.h.b16 %v932
      %v2469 = vunpack.c.l.b16 %v933
      %v2470 = vunpack.c.h.b16 %v933
      %v2471 = vunpack.c.l.b16 %v934
      %v2472 = vunpack.c.h.b16 %v934
      %v2473 = vunpack.c.l.b16 %v935
      %v2474 = vunpack.c.h.b16 %v935
      %v2475 = vunpack.c.l.b16 %v936
      %v2476 = vunpack.c.h.b16 %v936
      %v2477 = vunpack.c.l.b16 %v937
      %v2478 = vunpack.c.h.b16 %v937
      %v2479 = vunpack.c.l.b16 %v938
      %v2480 = vunpack.c.h.b16 %v938
      %v2481 = vunpack.c.l.b16 %v939
      %v2482 = vunpack.c.h.b16 %v939
      %v2483 = vunpack.c.l.b16 %v940
      %v2484 = vunpack.c.h.b16 %v940
      %v2485 = vunpack.c.l.b16 %v941
      %v2486 = vunpack.c.h.b16 %v941
      %v2487 = vunpack.c.l.b16 %v942
      %v2488 = vunpack.c.h.b16 %v942
      %v2489 = vunpack.c.l.b16 %v943
      %v2490 = vunpack.c.h.b16 %v943
      %v2491 = vunpack.c.l.b16 %v944
      %v2492 = vunpack.c.h.b16 %v944
      %v2493 = vunpack.c.l.b16 %v945
      %v2494 = vunpack.c.h.b16 %v945
      %v2495 = vunpack.c.l.b16 %v946
      %v2496 = vunpack.c.h.b16 %v946
      %v2497 = vunpack.c.l.b16 %v947
      %v2498 = vunpack.c.h.b16 %v947
      %v2499 = vunpack.c.l.b16 %v948
      %v2500 = vunpack.c.h.b16 %v948
      %v2501 = vunpack.c.l.b16 %v949
      %v2502 = vunpack.c.h.b16 %v949
      %v2503 = vunpack.c.l.b16 %v950
      %v2504 = vunpack.c.h.b16 %v950
      %v2505 = vunpack.c.l.b16 %v951
      %v2506 = vunpack.c.h.b16 %v951
      %v2507 = vunpack.c.l.b16 %v952
      %v2508 = vunpack.c.h.b16 %v952
      %v2509 = vunpack.c.l.b16 %v953
      %v2510 = vunpack.c.h.b16 %v953
      %v2511 = vunpack.c.l.b16 %v954
      %v2512 = vunpack.c.h.b16 %v954
      %v2513 = vunpack.c.l.b16 %v955
      %v2514 = vunpack.c.h.b16 %v955
      %v2515 = vunpack.c.l.b16 %v956
      %v2516 = vunpack.c.h.b16 %v956
      %v2517 = vunpack.c.l.b16 %v957
      %v2518 = vunpack.c.h.b16 %v957
      %v2519 = vunpack.c.l.b16 %v958
      %v2520 = vunpack.c.h.b16 %v958
      %v2521 = vunpack.c.l.b16 %v959
      %v2522 = vunpack.c.h.b16 %v959
      %v2523 = vunpack.c.l.b16 %v960
      %v2524 = vunpack.c.h.b16 %v960
      %v2525 = vunpack.c.l.b16 %v961
      %v2526 = vunpack.c.h.b16 %v961
      %v2527 = vunpack.c.l.b16 %v962
      %v2528 = vunpack.c.h.b16 %v962
      %v2529 = vunpack.c.l.b16 %v963
      %v2530 = vunpack.c.h.b16 %v963
      %v2531 = vunpack.c.l.b16 %v964
      %v2532 = vunpack.c.h.b16 %v964
      %v2533 = vunpack.c.l.b16 %v965
      %v2534 = vunpack.c.h.b16 %v965
      %v2535 = vunpack.c.l.b16 %v966
      %v2536 = vunpack.c.h.b16 %v966
      %v2537 = vunpack.c.l.b16 %v967
      %v2538 = vunpack.c.h.b16 %v967
      %v2539 = vunpack.c.l.b16 %v968
      %v2540 = vunpack.c.h.b16 %v968
      %v2541 = vunpack.c.l.b16 %v969
      %v2542 = vunpack.c.h.b16 %v969
      %v2543 = vunpack.c.l.b16 %v970
      %v2544 = vunpack.c.h.b16 %v970
      %v2545 = vunpack.c.l.b16 %v971
      %v2546 = vunpack.c.h.b16 %v971
      %v2547 = vunpack.c.l.b16 %v972
      %v2548 = vunpack.c.h.b16 %v972
      %v2549 = vunpack.c.l.b16 %v973
      %v2550 = vunpack.c.h.b16 %v973
      %v2551 = vunpack.c.l.b16 %v974
      %v2552 = vunpack.c.h.b16 %v974
      %v2553 = vunpack.c.l.b16 %v975
      %v2554 = vunpack.c.h.b16 %v975
      %v2555 = vunpack.c.l.b16 %v976
      %v2556 = vunpack.c.h.b16 %v976
      %v2557 = vunpack.c.l.b16 %v977
      %v2558 = vunpack.c.h.b16 %v977
      %v2559 = vunpack.c.l.b16 %v978
      %v2560 = vunpack.c.h.b16 %v978
      %v2561 = vunpack.c.l.b16 %v979
      %v2562 = vunpack.c.h.b16 %v979
      %v2563 = vunpack.c.l.b16 %v980
      %v2564 = vunpack.c.h.b16 %v980
      %v2565 = vunpack.c.l.b16 %v981
      %v2566 = vunpack.c.h.b16 %v981
      %v2567 = vunpack.c.l.b16 %v982
      %v2568 = vunpack.c.h.b16 %v982
      %v2569 = vunpack.c.l.b16 %v983
      %v2570 = vunpack.c.h.b16 %v983
      %v2571 = vunpack.c.l.b16 %v984
      %v2572 = vunpack.c.h.b16 %v984
      %v2573 = vunpack.c.l.b16 %v985
      %v2574 = vunpack.c.h.b16 %v985
      %v2575 = vunpack.c.l.b16 %v986
      %v2576 = vunpack.c.h.b16 %v986
      %v2577 = vunpack.c.l.b16 %v987
      %v2578 = vunpack.c.h.b16 %v987
      %v2579 = vunpack.c.l.b16 %v988
      %v2580 = vunpack.c.h.b16 %v988
      %v2581 = vunpack.c.l.b16 %v989
      %v2582 = vunpack.c.h.b16 %v989
      %v2583 = vunpack.c.l.b16 %v990
      %v2584 = vunpack.c.h.b16 %v990
      %v2585 = vunpack.c.l.b16 %v991
      %v2586 = vunpack.c.h.b16 %v991
      %v2587 = vunpack.c.l.b16 %v992
      %v2588 = vunpack.c.h.b16 %v992
      %v2589 = vunpack.c.l.b16 %v993
      %v2590 = vunpack.c.h.b16 %v993
      %v2591 = vunpack.c.l.b16 %v994
      %v2592 = vunpack.c.h.b16 %v994
      %v2593 = vunpack.c.l.b16 %v995
      %v2594 = vunpack.c.h.b16 %v995
      %v2595 = vunpack.c.l.b16 %v996
      %v2596 = vunpack.c.h.b16 %v996
      %v2597 = vunpack.c.l.b16 %v997
      %v2598 = vunpack.c.h.b16 %v997
      %v2599 = vunpack.c.l.b16 %v998
      %v2600 = vunpack.c.h.b16 %v998
      %v2601 = vunpack.c.l.b16 %v999
      %v2602 = vunpack.c.h.b16 %v999
      %v2603 = vunpack.c.l.b16 %v1000
      %v2604 = vunpack.c.h.b16 %v1000
      %v2605 = vunpack.c.l.b16 %v1001
      %v2606 = vunpack.c.h.b16 %v1001
      %v2607 = vunpack.c.l.b16 %v1002
      %v2608 = vunpack.c.h.b16 %v1002
      %v2609 = vunpack.c.l.b16 %v1003
      %v2610 = vunpack.c.h.b16 %v1003
      %v2611 = vunpack.c.l.b16 %v1004
      %v2612 = vunpack.c.h.b16 %v1004
      %v2613 = vunpack.c.l.b16 %v1005
      %v2614 = vunpack.c.h.b16 %v1005
      %v2615 = vunpack.c.l.b16 %v1006
      %v2616 = vunpack.c.h.b16 %v1006
      %v2617 = vunpack.c.l.b16 %v1007
      %v2618 = vunpack.c.h.b16 %v1007
      %v2619 = vunpack.c.l.b16 %v1008
      %v2620 = vunpack.c.h.b16 %v1008
      %v2621 = vunpack.c.l.b16 %v1009
      %v2622 = vunpack.c.h.b16 %v1009
      %v2623 = vunpack.c.l.b16 %v1010
      %v2624 = vunpack.c.h.b16 %v1010
      %v2625 = vunpack.c.l.b16 %v1011
      %v2626 = vunpack.c.h.b16 %v1011
      %v2627 = vunpack.c.l.b16 %v1012
      %v2628 = vunpack.c.h.b16 %v1012
      %v2629 = vunpack.c.l.b16 %v1013
      %v2630 = vunpack.c.h.b16 %v1013
      %v2631 = vunpack.c.l.b16 %v1014
      %v2632 = vunpack.c.h.b16 %v1014
      %v2633 = vunpack.c.l.b16 %v1015
      %v2634 = vunpack.c.h.b16 %v1015
      %v2635 = vunpack.c.l.b16 %v1016
      %v2636 = vunpack.c.h.b16 %v1016
      %v2637 = vunpack.c.l.b16 %v1017
      %v2638 = vunpack.c.h.b16 %v1017
      %v2639 = vunpack.c.l.b16 %v1018
      %v2640 = vunpack.c.h.b16 %v1018
      %v2641 = vunpack.c.l.b16 %v1019
      %v2642 = vunpack.c.h.b16 %v1019
      %v2643 = vunpack.c.l.b16 %v1020
      %v2644 = vunpack.c.h.b16 %v1020
      %v2645 = vunpack.c.l.b16 %v1021
      %v2646 = vunpack.c.h.b16 %v1021
      %v2647 = vunpack.c.l.b16 %v1022
      %v2648 = vunpack.c.h.b16 %v1022
      %v2649 = vunpack.c.l.b16 %v1023
      %v2650 = vunpack.c.h.b16 %v1023
      %v2651 = vunpack.c.l.b16 %v1024
      %v2652 = vunpack.c.h.b16 %v1024
      %v2653 = vunpack.c.l.b16 %v1025
      %v2654 = vunpack.c.h.b16 %v1025
      %v2655 = vunpack.c.l.b16 %v1026
      %v2656 = vunpack.c.h.b16 %v1026
      %v2657 = vunpack.c.l.b16 %v1027
      %v2658 = vunpack.c.h.b16 %v1027
      %v2659 = vunpack.c.l.b16 %v1028
      %v2660 = vunpack.c.h.b16 %v1028
      %v2661 = vunpack.c.l.b16 %v1029
      %v2662 = vunpack.c.h.b16 %v1029
      %v2663 = vunpack.c.l.b16 %v1030
      %v2664 = vunpack.c.h.b16 %v1030
      %v2665 = vunpack.c.l.b16 %v1031
      %v2666 = vunpack.c.h.b16 %v1031
      %v2667 = vunpack.c.l.b16 %v1032
      %v2668 = vunpack.c.h.b16 %v1032
      %v2669 = vunpack.c.l.b16 %v1033
      %v2670 = vunpack.c.h.b16 %v1033
      %v2671 = vunpack.c.l.b16 %v1034
      %v2672 = vunpack.c.h.b16 %v1034
      %v2673 = vunpack.c.l.b16 %v1035
      %v2674 = vunpack.c.h.b16 %v1035
      %v2675 = vunpack.c.l.b16 %v1036
      %v2676 = vunpack.c.h.b16 %v1036
      %v2677 = vunpack.c.l.b16 %v1037
      %v2678 = vunpack.c.h.b16 %v1037
      %v2679 = vunpack.c.l.b16 %v1038
      %v2680 = vunpack.c.h.b16 %v1038
      %v2681 = vunpack.c.l.b16 %v1039
      %v2682 = vunpack.c.h.b16 %v1039
      %v2683 = vunpack.c.l.b16 %v1040
      %v2684 = vunpack.c.h.b16 %v1040
      %v2685 = vunpack.c.l.b16 %v1041
      %v2686 = vunpack.c.h.b16 %v1041
      %v2687 = vunpack.c.l.b16 %v1042
      %v2688 = vunpack.c.h.b16 %v1042
      %v2689 = vunpack.c.l.b16 %v1043
      %v2690 = vunpack.c.h.b16 %v1043
      %v2691 = vunpack.c.l.b16 %v1044
      %v2692 = vunpack.c.h.b16 %v1044
      %v2693 = vunpack.c.l.b16 %v1045
      %v2694 = vunpack.c.h.b16 %v1045
      %v2695 = vunpack.c.l.b16 %v1046
      %v2696 = vunpack.c.h.b16 %v1046
      %v2697 = vunpack.c.l.b16 %v1047
      %v2698 = vunpack.c.h.b16 %v1047
      %v2699 = vunpack.c.l.b16 %v1048
      %v2700 = vunpack.c.h.b16 %v1048
      %v2701 = vunpack.c.l.b16 %v1049
      %v2702 = vunpack.c.h.b16 %v1049
      %v2703 = vunpack.c.l.b16 %v1050
      %v2704 = vunpack.c.h.b16 %v1050
      %v2705 = vunpack.c.l.b16 %v1051
      %v2706 = vunpack.c.h.b16 %v1051
      %v2707 = vunpack.c.l.b16 %v1052
      %v2708 = vunpack.c.h.b16 %v1052
      %v2709 = vunpack.c.l.b16 %v1053
      %v2710 = vunpack.c.h.b16 %v1053
      %v2711 = vunpack.c.l.b16 %v1054
      %v2712 = vunpack.c.h.b16 %v1054
      %v2713 = vunpack.c.l.b16 %v1055
      %v2714 = vunpack.c.h.b16 %v1055
      %v2715 = vunpack.c.l.b16 %v1056
      %v2716 = vunpack.c.h.b16 %v1056
      %v2717 = vunpack.c.l.b16 %v1057
      %v2718 = vunpack.c.h.b16 %v1057
      %v2719 = vunpack.c.l.b16 %v1058
      %v2720 = vunpack.c.h.b16 %v1058
      %v2721 = vunpack.c.l.b16 %v1059
      %v2722 = vunpack.c.h.b16 %v1059
      %v2723 = vunpack.c.l.b16 %v1060
      %v2724 = vunpack.c.h.b16 %v1060
      %v2725 = vunpack.c.l.b16 %v1061
      %v2726 = vunpack.c.h.b16 %v1061
      %v2727 = vunpack.c.l.b16 %v1062
      %v2728 = vunpack.c.h.b16 %v1062
      %v2729 = vunpack.c.l.b16 %v1063
      %v2730 = vunpack.c.h.b16 %v1063
      %v2731 = vunpack.c.l.b16 %v1064
      %v2732 = vunpack.c.h.b16 %v1064
      %v2733 = vunpack.c.l.b16 %v1065
      %v2734 = vunpack.c.h.b16 %v1065
      %v2735 = vunpack.c.l.b16 %v1066
      %v2736 = vunpack.c.h.b16 %v1066
      %v2737 = vunpack.c.l.b16 %v1067
      %v2738 = vunpack.c.h.b16 %v1067
      %v2739 = vunpack.c.l.b16 %v1068
      %v2740 = vunpack.c.h.b16 %v1068
      %v2741 = vunpack.c.l.b16 %v1069
      %v2742 = vunpack.c.h.b16 %v1069
      %v2743 = vunpack.c.l.b16 %v1070
      %v2744 = vunpack.c.h.b16 %v1070
      %v2745 = vunpack.c.l.b16 %v1071
      %v2746 = vunpack.c.h.b16 %v1071
      %v2747 = vunpack.c.l.b16 %v1072
      %v2748 = vunpack.c.h.b16 %v1072
      %v2749 = vunpack.c.l.b16 %v1073
      %v2750 = vunpack.c.h.b16 %v1073
      %v2751 = vunpack.c.l.b16 %v1074
      %v2752 = vunpack.c.h.b16 %v1074
      %v2753 = vunpack.c.l.b16 %v1075
      %v2754 = vunpack.c.h.b16 %v1075
      %v2755 = vunpack.c.l.b16 %v1076
      %v2756 = vunpack.c.h.b16 %v1076
      %v2757 = vunpack.c.l.b16 %v1077
      %v2758 = vunpack.c.h.b16 %v1077
      %v2759 = vunpack.c.l.b16 %v1078
      %v2760 = vunpack.c.h.b16 %v1078
      %v2761 = vpack.c.b16 %v1745, %v1737
      %v2762 = vpack.c.b16 %v1746, %v1738
      %v2763 = vpack.c.b16 %v1747, %v1739
      %v2764 = vpack.c.b16 %v1748, %v1740
      %v2765 = vpack.c.b16 %v1749, %v1741
      %v2766 = vpack.c.b16 %v1750, %v1742
      %v2767 = vpack.c.b16 %v1751, %v1743
      %v2768 = vpack.c.b16 %v1752, %v1744
      %v2769 = vpack.c.b16 %v1761, %v1753
      %v2770 = vpack.c.b16 %v1762, %v1754
      %v2771 = vpack.c.b16 %v1763, %v1755
      %v2772 = vpack.c.b16 %v1764, %v1756
      %v2773 = vpack.c.b16 %v1765, %v1757
      %v2774 = vpack.c.b16 %v1766, %v1758
      %v2775 = vpack.c.b16 %v1767, %v1759
      %v2776 = vpack.c.b16 %v1768, %v1760
      %v2777 = vpack.c.b16 %v1777, %v1769
      %v2778 = vpack.c.b16 %v1778, %v1770
      %v2779 = vpack.c.b16 %v1779, %v1771
      %v2780 = vpack.c.b16 %v1780, %v1772
      %v2781 = vpack.c.b16 %v1781, %v1773
      %v2782 = vpack.c.b16 %v1782, %v1774
      %v2783 = vpack.c.b16 %v1783, %v1775
      %v2784 = vpack.c.b16 %v1784, %v1776
      %v2785 = vpack.c.b16 %v1793, %v1785
      %v2786 = vpack.c.b16 %v1794, %v1786
      %v2787 = vpack.c.b16 %v1795, %v1787
      %v2788 = vpack.c.b16 %v1796, %v1788
      %v2789 = vpack.c.b16 %v1797, %v1789
      %v2790 = vpack.c.b16 %v1798, %v1790
      %v2791 = vpack.c.b16 %v1799, %v1791
      %v2792 = vpack.c.b16 %v1800, %v1792
      %v2793 = vpack.c.b16 %v1809, %v1801
      %v2794 = vpack.c.b16 %v1810, %v1802
      %v2795 = vpack.c.b16 %v1811, %v1803
      %v2796 = vpack.c.b16 %v1812, %v1804
      %v2797 = vpack.c.b16 %v1813, %v1805
      %v2798 = vpack.c.b16 %v1814, %v1806
      %v2799 = vpack.c.b16 %v1815, %v1807
      %v2800 = vpack.c.b16 %v1816, %v1808
      %v2801 = vpack.c.b16 %v1825, %v1817
      %v2802 = vpack.c.b16 %v1826, %v1818
      %v2803 = vpack.c.b16 %v1827, %v1819
      %v2804 = vpack.c.b16 %v1828, %v1820
      %v2805 = vpack.c.b16 %v1829, %v1821
      %v2806 = vpack.c.b16 %v1830, %v1822
      %v2807 = vpack.c.b16 %v1831, %v1823
      %v2808 = vpack.c.b16 %v1832, %v1824
      %v2809 = vpack.c.b16 %v1841, %v1833
      %v2810 = vpack.c.b16 %v1842, %v1834
      %v2811 = vpack.c.b16 %v1843, %v1835
      %v2812 = vpack.c.b16 %v1844, %v1836
      %v2813 = vpack.c.b16 %v1845, %v1837
      %v2814 = vpack.c.b16 %v1846, %v1838
      %v2815 = vpack.c.b16 %v1847, %v1839
      %v2816 = vpack.c.b16 %v1848, %v1840
      %v2817 = vpack.c.b16 %v1857, %v1849
      %v2818 = vpack.c.b16 %v1858, %v1850
      %v2819 = vpack.c.b16 %v1859, %v1851
      %v2820 = vpack.c.b16 %v1860, %v1852
      %v2821 = vpack.c.b16 %v1861, %v1853
      %v2822 = vpack.c.b16 %v1862, %v1854
      %v2823 = vpack.c.b16 %v1863, %v1855
      %v2824 = vpack.c.b16 %v1864, %v1856
      %v2825 = vpack.c.b16 %v1873, %v1865
      %v2826 = vpack.c.b16 %v1874, %v1866
      %v2827 = vpack.c.b16 %v1875, %v1867
      %v2828 = vpack.c.b16 %v1876, %v1868
      %v2829 = vpack.c.b16 %v1877, %v1869
      %v2830 = vpack.c.b16 %v1878, %v1870
      %v2831 = vpack.c.b16 %v1879, %v1871
      %v2832 = vpack.c.b16 %v1880, %v1872
      %v2833 = vpack.c.b16 %v1889, %v1881
      %v2834 = vpack.c.b16 %v1890, %v1882
      %v2835 = vpack.c.b16 %v1891, %v1883
      %v2836 = vpack.c.b16 %v1892, %v1884
      %v2837 = vpack.c.b16 %v1893, %v1885
      %v2838 = vpack.c.b16 %v1894, %v1886
      %v2839 = vpack.c.b16 %v1895, %v1887
      %v2840 = vpack.c.b16 %v1896, %v1888
      %v2841 = vpack.c.b16 %v1905, %v1897
      %v2842 = vpack.c.b16 %v1906, %v1898
      %v2843 = vpack.c.b16 %v1907, %v1899
      %v2844 = vpack.c.b16 %v1908, %v1900
      %v2845 = vpack.c.b16 %v1909, %v1901
      %v2846 = vpack.c.b16 %v1910, %v1902
      %v2847 = vpack.c.b16 %v1911, %v1903
      %v2848 = vpack.c.b16 %v1912, %v1904
      %v2849 = vpack.c.b16 %v1921, %v1913
      %v2850 = vpack.c.b16 %v1922, %v1914
      %v2851 = vpack.c.b16 %v1923, %v1915
      %v2852 = vpack.c.b16 %v1924, %v1916
      %v2853 = vpack.c.b16 %v1925, %v1917
      %v2854 = vpack.c.b16 %v1926, %v1918
      %v2855 = vpack.c.b16 %v1927, %v1919
      %v2856 = vpack.c.b16 %v1928, %v1920
      %v2857 = vpack.c.b16 %v1937, %v1929
      %v2858 = vpack.c.b16 %v1938, %v1930
      %v2859 = vpack.c.b16 %v1939, %v1931
      %v2860 = vpack.c.b16 %v1940, %v1932
      %v2861 = vpack.c.b16 %v1941, %v1933
      %v2862 = vpack.c.b16 %v1942, %v1934
      %v2863 = vpack.c.b16 %v1943, %v1935
      %v2864 = vpack.c.b16 %v1944, %v1936
      %v2865 = vpack.c.b16 %v1953, %v1945
      %v2866 = vpack.c.b16 %v1954, %v1946
      %v2867 = vpack.c.b16 %v1955, %v1947
      %v2868 = vpack.c.b16 %v1956, %v1948
      %v2869 = vpack.c.b16 %v1957, %v1949
      %v2870 = vpack.c.b16 %v1958, %v1950
      %v2871 = vpack.c.b16 %v1959, %v1951
      %v2872 = vpack.c.b16 %v1960, %v1952
      %v2873 = vpack.c.b16 %v1969, %v1961
      %v2874 = vpack.c.b16 %v1970, %v1962
      %v2875 = vpack.c.b16 %v1971, %v1963
      %v2876 = vpack.c.b16 %v1972, %v1964
      %v2877 = vpack.c.b16 %v1973, %v1965
      %v2878 = vpack.c.b16 %v1974, %v1966
      %v2879 = vpack.c.b16 %v1975, %v1967
      %v2880 = vpack.c.b16 %v1976, %v1968
      %v2881 = vpack.c.b16 %v1985, %v1977
      %v2882 = vpack.c.b16 %v1986, %v1978
      %v2883 = vpack.c.b16 %v1987, %v1979
      %v2884 = vpack.c.b16 %v1988, %v1980
      %v2885 = vpack.c.b16 %v1989, %v1981
      %v2886 = vpack.c.b16 %v1990, %v1982
      %v2887 = vpack.c.b16 %v1991, %v1983
      %v2888 = vpack.c.b16 %v1992, %v1984
      %v2889 = vpack.c.b16 %v2001, %v1993
      %v2890 = vpack.c.b16 %v2002, %v1994
      %v2891 = vpack.c.b16 %v2003, %v1995
      %v2892 = vpack.c.b16 %v2004, %v1996
      %v2893 = vpack.c.b16 %v2005, %v1997
      %v2894 = vpack.c.b16 %v2006, %v1998
      %v2895 = vpack.c.b16 %v2007, %v1999
      %v2896 = vpack.c.b16 %v2008, %v2000
      %v2897 = vpack.c.b16 %v2017, %v2009
      %v2898 = vpack.c.b16 %v2018, %v2010
      %v2899 = vpack.c.b16 %v2019, %v2011
      %v2900 = vpack.c.b16 %v2020, %v2012
      %v2901 = vpack.c.b16 %v2021, %v2013
      %v2902 = vpack.c.b16 %v2022, %v2014
      %v2903 = vpack.c.b16 %v2023, %v2015
      %v2904 = vpack.c.b16 %v2024, %v2016
      %v2905 = vpack.c.b16 %v2033, %v2025
      %v2906 = vpack.c.b16 %v2034, %v2026
      %v2907 = vpack.c.b16 %v2035, %v2027
      %v2908 = vpack.c.b16 %v2036, %v2028
      %v2909 = vpack.c.b16 %v2037, %v2029
      %v2910 = vpack.c.b16 %v2038, %v2030
      %v2911 = vpack.c.b16 %v2039, %v2031
      %v2912 = vpack.c.b16 %v2040, %v2032
      %v2913 = vpack.c.b16 %v2049, %v2041
      %v2914 = vpack.c.b16 %v2050, %v2042
      %v2915 = vpack.c.b16 %v2051, %v2043
      %v2916 = vpack.c.b16 %v2052, %v2044
      %v2917 = vpack.c.b16 %v2053, %v2045
      %v2918 = vpack.c.b16 %v2054, %v2046
      %v2919 = vpack.c.b16 %v2055, %v2047
      %v2920 = vpack.c.b16 %v2056, %v2048
      %v2921 = vpack.c.b16 %v2065, %v2057
      %v2922 = vpack.c.b16 %v2066, %v2058
      %v2923 = vpack.c.b16 %v2067, %v2059
      %v2924 = vpack.c.b16 %v2068, %v2060
      %v2925 = vpack.c.b16 %v2069, %v2061
      %v2926 = vpack.c.b16 %v2070, %v2062
      %v2927 = vpack.c.b16 %v2071, %v2063
      %v2928 = vpack.c.b16 %v2072, %v2064
      %v2929 = vpack.c.b16 %v2081, %v2073
      %v2930 = vpack.c.b16 %v2082, %v2074
      %v2931 = vpack.c.b16 %v2083, %v2075
      %v2932 = vpack.c.b16 %v2084, %v2076
      %v2933 = vpack.c.b16 %v2085, %v2077
      %v2934 = vpack.c.b16 %v2086, %v2078
      %v2935 = vpack.c.b16 %v2087, %v2079
      %v2936 = vpack.c.b16 %v2088, %v2080
      %v2937 = vpack.c.b16 %v2097, %v2089
      %v2938 = vpack.c.b16 %v2098, %v2090
      %v2939 = vpack.c.b16 %v2099, %v2091
      %v2940 = vpack.c.b16 %v2100, %v2092
      %v2941 = vpack.c.b16 %v2101, %v2093
      %v2942 = vpack.c.b16 %v2102, %v2094
      %v2943 = vpack.c.b16 %v2103, %v2095
      %v2944 = vpack.c.b16 %v2104, %v2096
      %v2945 = vpack.c.b16 %v2113, %v2105
      %v2946 = vpack.c.b16 %v2114, %v2106
      %v2947 = vpack.c.b16 %v2115, %v2107
      %v2948 = vpack.c.b16 %v2116, %v2108
      %v2949 = vpack.c.b16 %v2117, %v2109
      %v2950 = vpack.c.b16 %v2118, %v2110
      %v2951 = vpack.c.b16 %v2119, %v2111
      %v2952 = vpack.c.b16 %v2120, %v2112
      %v2953 = vpack.c.b16 %v2129, %v2121
      %v2954 = vpack.c.b16 %v2130, %v2122
      %v2955 = vpack.c.b16 %v2131, %v2123
      %v2956 = vpack.c.b16 %v2132, %v2124
      %v2957 = vpack.c.b16 %v2133, %v2125
      %v2958 = vpack.c.b16 %v2134, %v2126
      %v2959 = vpack.c.b16 %v2135, %v2127
      %v2960 = vpack.c.b16 %v2136, %v2128
      %v2961 = vpack.c.b16 %v2145, %v2137
      %v2962 = vpack.c.b16 %v2146, %v2138
      %v2963 = vpack.c.b16 %v2147, %v2139
      %v2964 = vpack.c.b16 %v2148, %v2140
      %v2965 = vpack.c.b16 %v2149, %v2141
      %v2966 = vpack.c.b16 %v2150, %v2142
      %v2967 = vpack.c.b16 %v2151, %v2143
      %v2968 = vpack.c.b16 %v2152, %v2144
      %v2969 = vpack.c.b16 %v2161, %v2153
      %v2970 = vpack.c.b16 %v2162, %v2154
      %v2971 = vpack.c.b16 %v2163, %v2155
      %v2972 = vpack.c.b16 %v2164, %v2156
      %v2973 = vpack.c.b16 %v2165, %v2157
      %v2974 = vpack.c.b16 %v2166, %v2158
      %v2975 = vpack.c.b16 %v2167, %v2159
      %v2976 = vpack.c.b16 %v2168, %v2160
      %v2977 = vpack.c.b16 %v2177, %v2169
      %v2978 = vpack.c.b16 %v2178, %v2170
      %v2979 = vpack.c.b16 %v2179, %v2171
      %v2980 = vpack.c.b16 %v2180, %v2172
      %v2981 = vpack.c.b16 %v2181, %v2173
      %v2982 = vpack.c.b16 %v2182, %v2174
      %v2983 = vpack.c.b16 %v2183, %v2175
      %v2984 = vpack.c.b16 %v2184, %v2176
      %v2985 = vpack.c.b16 %v2193, %v2185
      %v2986 = vpack.c.b16 %v2194, %v2186
      %v2987 = vpack.c.b16 %v2195, %v2187
      %v2988 = vpack.c.b16 %v2196, %v2188
      %v2989 = vpack.c.b16 %v2197, %v2189
      %v2990 = vpack.c.b16 %v2198, %v2190
      %v2991 = vpack.c.b16 %v2199, %v2191
      %v2992 = vpack.c.b16 %v2200, %v2192
      %v2993 = vpack.c.b16 %v2209, %v2201
      %v2994 = vpack.c.b16 %v2210, %v2202
      %v2995 = vpack.c.b16 %v2211, %v2203
      %v2996 = vpack.c.b16 %v2212, %v2204
      %v2997 = vpack.c.b16 %v2213, %v2205
      %v2998 = vpack.c.b16 %v2214, %v2206
      %v2999 = vpack.c.b16 %v2215, %v2207
      %v3000 = vpack.c.b16 %v2216, %v2208
      %v3001 = vpack.c.b16 %v2225, %v2217
      %v3002 = vpack.c.b16 %v2226, %v2218
      %v3003 = vpack.c.b16 %v2227, %v2219
      %v3004 = vpack.c.b16 %v2228, %v2220
      %v3005 = vpack.c.b16 %v2229, %v2221
      %v3006 = vpack.c.b16 %v2230, %v2222
      %v3007 = vpack.c.b16 %v2231, %v2223
      %v3008 = vpack.c.b16 %v2232, %v2224
      %v3009 = vpack.c.b16 %v2241, %v2233
      %v3010 = vpack.c.b16 %v2242, %v2234
      %v3011 = vpack.c.b16 %v2243, %v2235
      %v3012 = vpack.c.b16 %v2244, %v2236
      %v3013 = vpack.c.b16 %v2245, %v2237
      %v3014 = vpack.c.b16 %v2246, %v2238
      %v3015 = vpack.c.b16 %v2247, %v2239
      %v3016 = vpack.c.b16 %v2248, %v2240
      %v3017 = vpack.c.b16 %v2257, %v2249
      %v3018 = vpack.c.b16 %v2258, %v2250
      %v3019 = vpack.c.b16 %v2259, %v2251
      %v3020 = vpack.c.b16 %v2260, %v2252
      %v3021 = vpack.c.b16 %v2261, %v2253
      %v3022 = vpack.c.b16 %v2262, %v2254
      %v3023 = vpack.c.b16 %v2263, %v2255
      %v3024 = vpack.c.b16 %v2264, %v2256
      %v3025 = vpack.c.b16 %v2273, %v2265
      %v3026 = vpack.c.b16 %v2274, %v2266
      %v3027 = vpack.c.b16 %v2275, %v2267
      %v3028 = vpack.c.b16 %v2276, %v2268
      %v3029 = vpack.c.b16 %v2277, %v2269
      %v3030 = vpack.c.b16 %v2278, %v2270
      %v3031 = vpack.c.b16 %v2279, %v2271
      %v3032 = vpack.c.b16 %v2280, %v2272
      %v3033 = vpack.c.b16 %v2289, %v2281
      %v3034 = vpack.c.b16 %v2290, %v2282
      %v3035 = vpack.c.b16 %v2291, %v2283
      %v3036 = vpack.c.b16 %v2292, %v2284
      %v3037 = vpack.c.b16 %v2293, %v2285
      %v3038 = vpack.c.b16 %v2294, %v2286
      %v3039 = vpack.c.b16 %v2295, %v2287
      %v3040 = vpack.c.b16 %v2296, %v2288
      %v3041 = vpack.c.b16 %v2305, %v2297
      %v3042 = vpack.c.b16 %v2306, %v2298
      %v3043 = vpack.c.b16 %v2307, %v2299
      %v3044 = vpack.c.b16 %v2308, %v2300
      %v3045 = vpack.c.b16 %v2309, %v2301
      %v3046 = vpack.c.b16 %v2310, %v2302
      %v3047 = vpack.c.b16 %v2311, %v2303
      %v3048 = vpack.c.b16 %v2312, %v2304
      %v3049 = vpack.c.b16 %v2321, %v2313
      %v3050 = vpack.c.b16 %v2322, %v2314
      %v3051 = vpack.c.b16 %v2323, %v2315
      %v3052 = vpack.c.b16 %v2324, %v2316
      %v3053 = vpack.c.b16 %v2325, %v2317
      %v3054 = vpack.c.b16 %v2326, %v2318
      %v3055 = vpack.c.b16 %v2327, %v2319
      %v3056 = vpack.c.b16 %v2328, %v2320
      %v3057 = vpack.c.b16 %v2337, %v2329
      %v3058 = vpack.c.b16 %v2338, %v2330
      %v3059 = vpack.c.b16 %v2339, %v2331
      %v3060 = vpack.c.b16 %v2340, %v2332
      %v3061 = vpack.c.b16 %v2341, %v2333
      %v3062 = vpack.c.b16 %v2342, %v2334
      %v3063 = vpack.c.b16 %v2343, %v2335
      %v3064 = vpack.c.b16 %v2344, %v2336
      %v3065 = vpack.c.b16 %v2353, %v2345
      %v3066 = vpack.c.b16 %v2354, %v2346
      %v3067 = vpack.c.b16 %v2355, %v2347
      %v3068 = vpack.c.b16 %v2356, %v2348
      %v3069 = vpack.c.b16 %v2357, %v2349
      %v3070 = vpack.c.b16 %v2358, %v2350
      %v3071 = vpack.c.b16 %v2359, %v2351
      %v3072 = vpack.c.b16 %v2360, %v2352
      %v3073 = vpack.c.b16 %v2369, %v2361
      %v3074 = vpack.c.b16 %v2370, %v2362
      %v3075 = vpack.c.b16 %v2371, %v2363
      %v3076 = vpack.c.b16 %v2372, %v2364
      %v3077 = vpack.c.b16 %v2373, %v2365
      %v3078 = vpack.c.b16 %v2374, %v2366
      %v3079 = vpack.c.b16 %v2375, %v2367
      %v3080 = vpack.c.b16 %v2376, %v2368
      %v3081 = vpack.c.b16 %v2385, %v2377
      %v3082 = vpack.c.b16 %v2386, %v2378
      %v3083 = vpack.c.b16 %v2387, %v2379
      %v3084 = vpack.c.b16 %v2388, %v2380
      %v3085 = vpack.c.b16 %v2389, %v2381
      %v3086 = vpack.c.b16 %v2390, %v2382
      %v3087 = vpack.c.b16 %v2391, %v2383
      %v3088 = vpack.c.b16 %v2392, %v2384
      %v3089 = vpack.c.b16 %v2401, %v2393
      %v3090 = vpack.c.b16 %v2402, %v2394
      %v3091 = vpack.c.b16 %v2403, %v2395
      %v3092 = vpack.c.b16 %v2404, %v2396
      %v3093 = vpack.c.b16 %v2405, %v2397
      %v3094 = vpack.c.b16 %v2406, %v2398
      %v3095 = vpack.c.b16 %v2407, %v2399
      %v3096 = vpack.c.b16 %v2408, %v2400
      %v3097 = vpack.c.b16 %v2417, %v2409
      %v3098 = vpack.c.b16 %v2418, %v2410
      %v3099 = vpack.c.b16 %v2419, %v2411
      %v3100 = vpack.c.b16 %v2420, %v2412
      %v3101 = vpack.c.b16 %v2421, %v2413
      %v3102 = vpack.c.b16 %v2422, %v2414
      %v3103 = vpack.c.b16 %v2423, %v2415
      %v3104 = vpack.c.b16 %v2424, %v2416
      %v3105 = vpack.c.b16 %v2433, %v2425
      %v3106 = vpack.c.b16 %v2434, %v2426
      %v3107 = vpack.c.b16 %v2435, %v2427
      %v3108 = vpack.c.b16 %v2436, %v2428
      %v3109 = vpack.c.b16 %v2437, %v2429
      %v3110 = vpack.c.b16 %v2438, %v2430
      %v3111 = vpack.c.b16 %v2439, %v2431
      %v3112 = vpack.c.b16 %v2440, %v2432
      %v3113 = vpack.c.b16 %v2449, %v2441
      %v3114 = vpack.c.b16 %v2450, %v2442
      %v3115 = vpack.c.b16 %v2451, %v2443
      %v3116 = vpack.c.b16 %v2452, %v2444
      %v3117 = vpack.c.b16 %v2453, %v2445
      %v3118 = vpack.c.b16 %v2454, %v2446
      %v3119 = vpack.c.b16 %v2455, %v2447
      %v3120 = vpack.c.b16 %v2456, %v2448
      %v3121 = vpack.c.b16 %v2465, %v2457
      %v3122 = vpack.c.b16 %v2466, %v2458
      %v3123 = vpack.c.b16 %v2467, %v2459
      %v3124 = vpack.c.b16 %v2468, %v2460
      %v3125 = vpack.c.b16 %v2469, %v2461
      %v3126 = vpack.c.b16 %v2470, %v2462
      %v3127 = vpack.c.b16 %v2471, %v2463
      %v3128 = vpack.c.b16 %v2472, %v2464
      %v3129 = vpack.c.b16 %v2481, %v2473
      %v3130 = vpack.c.b16 %v2482, %v2474
      %v3131 = vpack.c.b16 %v2483, %v2475
      %v3132 = vpack.c.b16 %v2484, %v2476
      %v3133 = vpack.c.b16 %v2485, %v2477
      %v3134 = vpack.c.b16 %v2486, %v2478
      %v3135 = vpack.c.b16 %v2487, %v2479
      %v3136 = vpack.c.b16 %v2488, %v2480
      %v3137 = vpack.c.b16 %v2497, %v2489
      %v3138 = vpack.c.b16 %v2498, %v2490
      %v3139 = vpack.c.b16 %v2499, %v2491
      %v3140 = vpack.c.b16 %v2500, %v2492
      %v3141 = vpack.c.b16 %v2501, %v2493
      %v3142 = vpack.c.b16 %v2502, %v2494
      %v3143 = vpack.c.b16 %v2503, %v2495
      %v3144 = vpack.c.b16 %v2504, %v2496
      %v3145 = vpack.c.b16 %v2513, %v2505
      %v3146 = vpack.c.b16 %v2514, %v2506
      %v3147 = vpack.c.b16 %v2515, %v2507
      %v3148 = vpack.c.b16 %v2516, %v2508
      %v3149 = vpack.c.b16 %v2517, %v2509
      %v3150 = vpack.c.b16 %v2518, %v2510
      %v3151 = vpack.c.b16 %v2519, %v2511
      %v3152 = vpack.c.b16 %v2520, %v2512
      %v3153 = vpack.c.b16 %v2529, %v2521
      %v3154 = vpack.c.b16 %v2530, %v2522
      %v3155 = vpack.c.b16 %v2531, %v2523
      %v3156 = vpack.c.b16 %v2532, %v2524
      %v3157 = vpack.c.b16 %v2533, %v2525
      %v3158 = vpack.c.b16 %v2534, %v2526
      %v3159 = vpack.c.b16 %v2535, %v2527
      %v3160 = vpack.c.b16 %v2536, %v2528
      %v3161 = vpack.c.b16 %v2545, %v2537
      %v3162 = vpack.c.b16 %v2546, %v2538
      %v3163 = vpack.c.b16 %v2547, %v2539
      %v3164 = vpack.c.b16 %v2548, %v2540
      %v3165 = vpack.c.b16 %v2549, %v2541
      %v3166 = vpack.c.b16 %v2550, %v2542
      %v3167 = vpack.c.b16 %v2551, %v2543
      %v3168 = vpack.c.b16 %v2552, %v2544
      %v3169 = vpack.c.b16 %v2561, %v2553
      %v3170 = vpack.c.b16 %v2562, %v2554
      %v3171 = vpack.c.b16 %v2563, %v2555
      %v3172 = vpack.c.b16 %v2564, %v2556
      %v3173 = vpack.c.b16 %v2565, %v2557
      %v3174 = vpack.c.b16 %v2566, %v2558
      %v3175 = vpack.c.b16 %v2567, %v2559
      %v3176 = vpack.c.b16 %v2568, %v2560
      %v3177 = vpack.c.b16 %v2577, %v2569
      %v3178 = vpack.c.b16 %v2578, %v2570
      %v3179 = vpack.c.b16 %v2579, %v2571
      %v3180 = vpack.c.b16 %v2580, %v2572
      %v3181 = vpack.c.b16 %v2581, %v2573
      %v3182 = vpack.c.b16 %v2582, %v2574
      %v3183 = vpack.c.b16 %v2583, %v2575
      %v3184 = vpack.c.b16 %v2584, %v2576
      %v3185 = vpack.c.b16 %v2593, %v2585
      %v3186 = vpack.c.b16 %v2594, %v2586
      %v3187 = vpack.c.b16 %v2595, %v2587
      %v3188 = vpack.c.b16 %v2596, %v2588
      %v3189 = vpack.c.b16 %v2597, %v2589
      %v3190 = vpack.c.b16 %v2598, %v2590
      %v3191 = vpack.c.b16 %v2599, %v2591
      %v3192 = vpack.c.b16 %v2600, %v2592
      %v3193 = vpack.c.b16 %v2609, %v2601
      %v3194 = vpack.c.b16 %v2610, %v2602
      %v3195 = vpack.c.b16 %v2611, %v2603
      %v3196 = vpack.c.b16 %v2612, %v2604
      %v3197 = vpack.c.b16 %v2613, %v2605
      %v3198 = vpack.c.b16 %v2614, %v2606
      %v3199 = vpack.c.b16 %v2615, %v2607
      %v3200 = vpack.c.b16 %v2616, %v2608
      %v3201 = vpack.c.b16 %v2625, %v2617
      %v3202 = vpack.c.b16 %v2626, %v2618
      %v3203 = vpack.c.b16 %v2627, %v2619
      %v3204 = vpack.c.b16 %v2628, %v2620
      %v3205 = vpack.c.b16 %v2629, %v2621
      %v3206 = vpack.c.b16 %v2630, %v2622
      %v3207 = vpack.c.b16 %v2631, %v2623
      %v3208 = vpack.c.b16 %v2632, %v2624
      %v3209 = vpack.c.b16 %v2641, %v2633
      %v3210 = vpack.c.b16 %v2642, %v2634
      %v3211 = vpack.c.b16 %v2643, %v2635
      %v3212 = vpack.c.b16 %v2644, %v2636
      %v3213 = vpack.c.b16 %v2645, %v2637
      %v3214 = vpack.c.b16 %v2646, %v2638
      %v3215 = vpack.c.b16 %v2647, %v2639
      %v3216 = vpack.c.b16 %v2648, %v2640
      %v3217 = vpack.c.b16 %v2657, %v2649
      %v3218 = vpack.c.b16 %v2658, %v2650
      %v3219 = vpack.c.b16 %v2659, %v2651
      %v3220 = vpack.c.b16 %v2660, %v2652
      %v3221 = vpack.c.b16 %v2661, %v2653
      %v3222 = vpack.c.b16 %v2662, %v2654
      %v3223 = vpack.c.b16 %v2663, %v2655
      %v3224 = vpack.c.b16 %v2664, %v2656
      %v3225 = vpack.c.b16 %v2673, %v2665
      %v3226 = vpack.c.b16 %v2674, %v2666
      %v3227 = vpack.c.b16 %v2675, %v2667
      %v3228 = vpack.c.b16 %v2676, %v2668
      %v3229 = vpack.c.b16 %v2677, %v2669
      %v3230 = vpack.c.b16 %v2678, %v2670
      %v3231 = vpack.c.b16 %v2679, %v2671
      %v3232 = vpack.c.b16 %v2680, %v2672
      %v3233 = vpack.c.b16 %v2689, %v2681
      %v3234 = vpack.c.b16 %v2690, %v2682
      %v3235 = vpack.c.b16 %v2691, %v2683
      %v3236 = vpack.c.b16 %v2692, %v2684
      %v3237 = vpack.c.b16 %v2693, %v2685
      %v3238 = vpack.c.b16 %v2694, %v2686
      %v3239 = vpack.c.b16 %v2695, %v2687
      %v3240 = vpack.c.b16 %v2696, %v2688
      %v3241 = vpack.c.b16 %v2705, %v2697
      %v3242 = vpack.c.b16 %v2706, %v2698
      %v3243 = vpack.c.b16 %v2707, %v2699
      %v3244 = vpack.c.b16 %v2708, %v2700
      %v3245 = vpack.c.b16 %v2709, %v2701
      %v3246 = vpack.c.b16 %v2710, %v2702
      %v3247 = vpack.c.b16 %v2711, %v2703
      %v3248 = vpack.c.b16 %v2712, %v2704
      %v3249 = vpack.c.b16 %v2721, %v2713
      %v3250 = vpack.c.b16 %v2722, %v2714
      %v3251 = vpack.c.b16 %v2723, %v2715
      %v3252 = vpack.c.b16 %v2724, %v2716
      %v3253 = vpack.c.b16 %v2725, %v2717
      %v3254 = vpack.c.b16 %v2726, %v2718
      %v3255 = vpack.c.b16 %v2727, %v2719
      %v3256 = vpack.c.b16 %v2728, %v2720
      %v3257 = vpack.c.b16 %v2737, %v2729
      %v3258 = vpack.c.b16 %v2738, %v2730
      %v3259 = vpack.c.b16 %v2739, %v2731
      %v3260 = vpack.c.b16 %v2740, %v2732
      %v3261 = vpack.c.b16 %v2741, %v2733
      %v3262 = vpack.c.b16 %v2742, %v2734
      %v3263 = vpack.c.b16 %v2743, %v2735
      %v3264 = vpack.c.b16 %v2744, %v2736
      %v3265 = vpack.c.b16 %v2753, %v2745
      %v3266 = vpack.c.b16 %v2754, %v2746
      %v3267 = vpack.c.b16 %v2755, %v2747
      %v3268 = vpack.c.b16 %v2756, %v2748
      %v3269 = vpack.c.b16 %v2757, %v2749
      %v3270 = vpack.c.b16 %v2758, %v2750
      %v3271 = vpack.c.b16 %v2759, %v2751
      %v3272 = vpack.c.b16 %v2760, %v2752
      %3785 = vmatprep.subr.bf16.mxu0 %v2762
      %3786 = vmatpush1.bf16.msra.mxu0 %v2761
      %3787 = vmatprep.subr.bf16.mxu0 %v2770
      %3788 = vmatpush1.bf16.msra.mxu0 %v2769
      %3789 = vmatprep.subr.bf16.mxu0 %v2778
      %3790 = vmatpush1.bf16.msra.mxu0 %v2777
      %3791 = vmatprep.subr.bf16.mxu0 %v2786
      %3792 = vmatpush1.bf16.msra.mxu0 %v2785
      %3793 = vmatprep.subr.bf16.mxu0 %v2794
      %3794 = vmatpush1.bf16.msra.mxu0 %v2793
      %3795 = vmatprep.subr.bf16.mxu0 %v2802
      %3796 = vmatpush1.bf16.msra.mxu0 %v2801
      %3797 = vmatprep.subr.bf16.mxu0 %v2810
      %3798 = vmatpush1.bf16.msra.mxu0 %v2809
      %3799 = vmatprep.subr.bf16.mxu0 %v2818
      %3800 = vmatpush1.bf16.msra.mxu0 %v2817
      %3801 = vmatprep.subr.bf16.mxu0 %v2826
      %3802 = vmatpush1.bf16.msra.mxu0 %v2825
      %3803 = vmatprep.subr.bf16.mxu0 %v2834
      %3804 = vmatpush1.bf16.msra.mxu0 %v2833
      %3805 = vmatprep.subr.bf16.mxu0 %v2842
      %3806 = vmatpush1.bf16.msra.mxu0 %v2841
      %3807 = vmatprep.subr.bf16.mxu0 %v2850
      %3808 = vmatpush1.bf16.msra.mxu0 %v2849
      %3809 = vmatprep.subr.bf16.mxu0 %v2858
      %3810 = vmatpush1.bf16.msra.mxu0 %v2857
      %3811 = vmatprep.subr.bf16.mxu0 %v2866
      %3812 = vmatpush1.bf16.msra.mxu0 %v2865
      %3813 = vmatprep.subr.bf16.mxu0 %v2874
      %3814 = vmatpush1.bf16.msra.mxu0 %v2873
      %3815 = vmatprep.subr.bf16.mxu0 %v2882
      %3816 = vmatpush1.bf16.msra.mxu0 %v2881
      %3817 = vmatprep.mubr.bf16.mxu0 %v1218
      %3818 = vmatmul.mubr.bf16.gmra.mrb[0].mxu0 %v1217
      %v3819 = vpop.f32.mrb[0].mxu0
      %v3820 = vadd.f32 0.0, %v3819
      %v3821 = vpop.f32.mrb[0].mxu0
      %v3822 = vadd.f32 0.0, %v3821
      %v3823 = vpop.f32.mrb[0].mxu0
      %v3824 = vpop.f32.mrb[0].mxu0
      %3825 = vdwg.mxu0
      %3826 = vmatprep.subr.bf16.mxu0 %v2890
      %3827 = vmatpush1.bf16.msra.mxu0 %v2889
      %3828 = vmatprep.subr.bf16.mxu0 %v2898
      %3829 = vmatpush1.bf16.msra.mxu0 %v2897
      %3830 = vmatprep.subr.bf16.mxu0 %v2906
      %3831 = vmatpush1.bf16.msra.mxu0 %v2905
      %3832 = vmatprep.subr.bf16.mxu0 %v2914
      %3833 = vmatpush1.bf16.msra.mxu0 %v2913
      %3834 = vmatprep.subr.bf16.mxu0 %v2922
      %3835 = vmatpush1.bf16.msra.mxu0 %v2921
      %3836 = vmatprep.subr.bf16.mxu0 %v2930
      %3837 = vmatpush1.bf16.msra.mxu0 %v2929
      %3838 = vmatprep.subr.bf16.mxu0 %v2938
      %3839 = vmatpush1.bf16.msra.mxu0 %v2937
      %3840 = vmatprep.subr.bf16.mxu0 %v2946
      %3841 = vmatpush1.bf16.msra.mxu0 %v2945
      %3842 = vmatprep.subr.bf16.mxu0 %v2954
      %3843 = vmatpush1.bf16.msra.mxu0 %v2953
      %3844 = vmatprep.subr.bf16.mxu0 %v2962
      %3845 = vmatpush1.bf16.msra.mxu0 %v2961
      %3846 = vmatprep.subr.bf16.mxu0 %v2970
      %3847 = vmatpush1.bf16.msra.mxu0 %v2969
      %3848 = vmatprep.subr.bf16.mxu0 %v2978
      %3849 = vmatpush1.bf16.msra.mxu0 %v2977
      %3850 = vmatprep.subr.bf16.mxu0 %v2986
      %3851 = vmatpush1.bf16.msra.mxu0 %v2985
      %3852 = vmatprep.subr.bf16.mxu0 %v2994
      %3853 = vmatpush1.bf16.msra.mxu0 %v2993
      %3854 = vmatprep.subr.bf16.mxu0 %v3002
      %3855 = vmatpush1.bf16.msra.mxu0 %v3001
      %3856 = vmatprep.subr.bf16.mxu0 %v3010
      %3857 = vmatpush1.bf16.msra.mxu0 %v3009
      %3858 = vmatprep.mubr.bf16.mxu0 %v1220
      %3859 = vmatmul.mubr.bf16.gmra.mrb[0].mxu0 %v1219
      %v3860 = vpop.f32.mrb[0].mxu0
      %v3861 = vadd.f32 %v3820, %v3860
      %v3862 = vpop.f32.mrb[0].mxu0
      %v3863 = vadd.f32 %v3822, %v3862
      %v3864 = vpop.f32.mrb[0].mxu0
      %v3865 = vpop.f32.mrb[0].mxu0
      %3866 = vdwg.mxu0
      %3867 = vmatprep.subr.bf16.mxu0 %v3018
      %3868 = vmatpush1.bf16.msra.mxu0 %v3017
      %3869 = vmatprep.subr.bf16.mxu0 %v3026
      %3870 = vmatpush1.bf16.msra.mxu0 %v3025
      %3871 = vmatprep.subr.bf16.mxu0 %v3034
      %3872 = vmatpush1.bf16.msra.mxu0 %v3033
      %3873 = vmatprep.subr.bf16.mxu0 %v3042
      %3874 = vmatpush1.bf16.msra.mxu0 %v3041
      %3875 = vmatprep.subr.bf16.mxu0 %v3050
      %3876 = vmatpush1.bf16.msra.mxu0 %v3049
      %3877 = vmatprep.subr.bf16.mxu0 %v3058
      %3878 = vmatpush1.bf16.msra.mxu0 %v3057
      %3879 = vmatprep.subr.bf16.mxu0 %v3066
      %3880 = vmatpush1.bf16.msra.mxu0 %v3065
      %3881 = vmatprep.subr.bf16.mxu0 %v3074
      %3882 = vmatpush1.bf16.msra.mxu0 %v3073
      %3883 = vmatprep.subr.bf16.mxu0 %v3082
      %3884 = vmatpush1.bf16.msra.mxu0 %v3081
      %3885 = vmatprep.subr.bf16.mxu0 %v3090
      %3886 = vmatpush1.bf16.msra.mxu0 %v3089
      %3887 = vmatprep.subr.bf16.mxu0 %v3098
      %3888 = vmatpush1.bf16.msra.mxu0 %v3097
      %3889 = vmatprep.subr.bf16.mxu0 %v3106
      %3890 = vmatpush1.bf16.msra.mxu0 %v3105
      %3891 = vmatprep.subr.bf16.mxu0 %v3114
      %3892 = vmatpush1.bf16.msra.mxu0 %v3113
      %3893 = vmatprep.subr.bf16.mxu0 %v3122
      %3894 = vmatpush1.bf16.msra.mxu0 %v3121
      %3895 = vmatprep.subr.bf16.mxu0 %v3130
      %3896 = vmatpush1.bf16.msra.mxu0 %v3129
      %3897 = vmatprep.subr.bf16.mxu0 %v3138
      %3898 = vmatpush1.bf16.msra.mxu0 %v3137
      %3899 = vmatprep.mubr.bf16.mxu0 %v1222
      %3900 = vmatmul.mubr.bf16.gmra.mrb[0].mxu0 %v1221
      %v3901 = vpop.f32.mrb[0].mxu0
      %v3902 = vadd.f32 %v3861, %v3901
      %v3903 = vpop.f32.mrb[0].mxu0
      %v3904 = vadd.f32 %v3863, %v3903
      %v3905 = vpop.f32.mrb[0].mxu0
      %v3906 = vpop.f32.mrb[0].mxu0
      %3907 = vdwg.mxu0
      %3908 = vmatprep.subr.bf16.mxu0 %v3146
      %3909 = vmatpush1.bf16.msra.mxu0 %v3145
      %3910 = vmatprep.subr.bf16.mxu0 %v3154
      %3911 = vmatpush1.bf16.msra.mxu0 %v3153
      %3912 = vmatprep.subr.bf16.mxu0 %v3162
      %3913 = vmatpush1.bf16.msra.mxu0 %v3161
      %3914 = vmatprep.subr.bf16.mxu0 %v3170
      %3915 = vmatpush1.bf16.msra.mxu0 %v3169
      %3916 = vmatprep.subr.bf16.mxu0 %v3178
      %3917 = vmatpush1.bf16.msra.mxu0 %v3177
      %3918 = vmatprep.subr.bf16.mxu0 %v3186
      %3919 = vmatpush1.bf16.msra.mxu0 %v3185
      %3920 = vmatprep.subr.bf16.mxu0 %v3194
      %3921 = vmatpush1.bf16.msra.mxu0 %v3193
      %3922 = vmatprep.subr.bf16.mxu0 %v3202
      %3923 = vmatpush1.bf16.msra.mxu0 %v3201
      %3924 = vmatprep.subr.bf16.mxu0 %v3210
      %3925 = vmatpush1.bf16.msra.mxu0 %v3209
      %3926 = vmatprep.subr.bf16.mxu0 %v3218
      %3927 = vmatpush1.bf16.msra.mxu0 %v3217
      %3928 = vmatprep.subr.bf16.mxu0 %v3226
      %3929 = vmatpush1.bf16.msra.mxu0 %v3225
      %3930 = vmatprep.subr.bf16.mxu0 %v3234
      %3931 = vmatpush1.bf16.msra.mxu0 %v3233
      %3932 = vmatprep.subr.bf16.mxu0 %v3242
      %3933 = vmatpush1.bf16.msra.mxu0 %v3241
      %3934 = vmatprep.subr.bf16.mxu0 %v3250
      %3935 = vmatpush1.bf16.msra.mxu0 %v3249
      %3936 = vmatprep.subr.bf16.mxu0 %v3258
      %3937 = vmatpush1.bf16.msra.mxu0 %v3257
      %3938 = vmatprep.subr.bf16.mxu0 %v3266
      %3939 = vmatpush1.bf16.msra.mxu0 %v3265
      %3940 = vmatprep.mubr.bf16.mxu0 %v1224
      %3941 = vmatmul.mubr.bf16.gmra.mrb[0].mxu0 %v1223
      %v3942 = vpop.f32.mrb[0].mxu0
      %v3943 = vadd.f32 %v3902, %v3942
      %v3944 = vpop.f32.mrb[0].mxu0
      %v3945 = vadd.f32 %v3904, %v3944
      %v3946 = vpop.f32.mrb[0].mxu0
      %v3947 = vpop.f32.mrb[0].mxu0
      %3948 = vdwg.mxu0
      %3949 = vmatprep.subr.bf16.mxu0 %v2764
      %3950 = vmatpush1.bf16.msra.mxu0 %v2763
      %3951 = vmatprep.subr.bf16.mxu0 %v2772
      %3952 = vmatpush1.bf16.msra.mxu0 %v2771
      %3953 = vmatprep.subr.bf16.mxu0 %v2780
      %3954 = vmatpush1.bf16.msra.mxu0 %v2779
      %3955 = vmatprep.subr.bf16.mxu0 %v2788
      %3956 = vmatpush1.bf16.msra.mxu0 %v2787
      %3957 = vmatprep.subr.bf16.mxu0 %v2796
      %3958 = vmatpush1.bf16.msra.mxu0 %v2795
      %3959 = vmatprep.subr.bf16.mxu0 %v2804
      %3960 = vmatpush1.bf16.msra.mxu0 %v2803
      %3961 = vmatprep.subr.bf16.mxu0 %v2812
      %3962 = vmatpush1.bf16.msra.mxu0 %v2811
      %3963 = vmatprep.subr.bf16.mxu0 %v2820
      %3964 = vmatpush1.bf16.msra.mxu0 %v2819
      %3965 = vmatprep.subr.bf16.mxu0 %v2828
      %3966 = vmatpush1.bf16.msra.mxu0 %v2827
      %3967 = vmatprep.subr.bf16.mxu0 %v2836
      %3968 = vmatpush1.bf16.msra.mxu0 %v2835
      %3969 = vmatprep.subr.bf16.mxu0 %v2844
      %3970 = vmatpush1.bf16.msra.mxu0 %v2843
      %3971 = vmatprep.subr.bf16.mxu0 %v2852
      %3972 = vmatpush1.bf16.msra.mxu0 %v2851
      %3973 = vmatprep.subr.bf16.mxu0 %v2860
      %3974 = vmatpush1.bf16.msra.mxu0 %v2859
      %3975 = vmatprep.subr.bf16.mxu0 %v2868
      %3976 = vmatpush1.bf16.msra.mxu0 %v2867
      %3977 = vmatprep.subr.bf16.mxu0 %v2876
      %3978 = vmatpush1.bf16.msra.mxu0 %v2875
      %3979 = vmatprep.subr.bf16.mxu0 %v2884
      %3980 = vmatpush1.bf16.msra.mxu0 %v2883
      %3981 = vmatprep.mubr.bf16.mxu0 %v1218
      %3982 = vmatmul.mubr.bf16.gmra.mrb[0].mxu0 %v1217
      %v3983 = vpop.f32.mrb[0].mxu0
      %v3984 = vadd.f32 0.0, %v3983
      %v3985 = vpop.f32.mrb[0].mxu0
      %v3986 = vadd.f32 0.0, %v3985
      %v3987 = vpop.f32.mrb[0].mxu0
      %v3988 = vpop.f32.mrb[0].mxu0
      %3989 = vdwg.mxu0
      %3990 = vmatprep.subr.bf16.mxu0 %v2892
      %3991 = vmatpush1.bf16.msra.mxu0 %v2891
      %3992 = vmatprep.subr.bf16.mxu0 %v2900
      %3993 = vmatpush1.bf16.msra.mxu0 %v2899
      %3994 = vmatprep.subr.bf16.mxu0 %v2908
      %3995 = vmatpush1.bf16.msra.mxu0 %v2907
      %3996 = vmatprep.subr.bf16.mxu0 %v2916
      %3997 = vmatpush1.bf16.msra.mxu0 %v2915
      %3998 = vmatprep.subr.bf16.mxu0 %v2924
      %3999 = vmatpush1.bf16.msra.mxu0 %v2923
      %4000 = vmatprep.subr.bf16.mxu0 %v2932
      %4001 = vmatpush1.bf16.msra.mxu0 %v2931
      %4002 = vmatprep.subr.bf16.mxu0 %v2940
      %4003 = vmatpush1.bf16.msra.mxu0 %v2939
      %4004 = vmatprep.subr.bf16.mxu0 %v2948
      %4005 = vmatpush1.bf16.msra.mxu0 %v2947
      %4006 = vmatprep.subr.bf16.mxu0 %v2956
      %4007 = vmatpush1.bf16.msra.mxu0 %v2955
      %4008 = vmatprep.subr.bf16.mxu0 %v2964
      %4009 = vmatpush1.bf16.msra.mxu0 %v2963
      %4010 = vmatprep.subr.bf16.mxu0 %v2972
      %4011 = vmatpush1.bf16.msra.mxu0 %v2971
      %4012 = vmatprep.subr.bf16.mxu0 %v2980
      %4013 = vmatpush1.bf16.msra.mxu0 %v2979
      %4014 = vmatprep.subr.bf16.mxu0 %v2988
      %4015 = vmatpush1.bf16.msra.mxu0 %v2987
      %4016 = vmatprep.subr.bf16.mxu0 %v2996
      %4017 = vmatpush1.bf16.msra.mxu0 %v2995
      %4018 = vmatprep.subr.bf16.mxu0 %v3004
      %4019 = vmatpush1.bf16.msra.mxu0 %v3003
      %4020 = vmatprep.subr.bf16.mxu0 %v3012
      %4021 = vmatpush1.bf16.msra.mxu0 %v3011
      %4022 = vmatprep.mubr.bf16.mxu0 %v1220
      %4023 = vmatmul.mubr.bf16.gmra.mrb[0].mxu0 %v1219
      %v4024 = vpop.f32.mrb[0].mxu0
      %v4025 = vadd.f32 %v3984, %v4024
      %v4026 = vpop.f32.mrb[0].mxu0
      %v4027 = vadd.f32 %v3986, %v4026
      %v4028 = vpop.f32.mrb[0].mxu0
      %v4029 = vpop.f32.mrb[0].mxu0
      %4030 = vdwg.mxu0
      %4031 = vmatprep.subr.bf16.mxu0 %v3020
      %4032 = vmatpush1.bf16.msra.mxu0 %v3019
      %4033 = vmatprep.subr.bf16.mxu0 %v3028
      %4034 = vmatpush1.bf16.msra.mxu0 %v3027
      %4035 = vmatprep.subr.bf16.mxu0 %v3036
      %4036 = vmatpush1.bf16.msra.mxu0 %v3035
      %4037 = vmatprep.subr.bf16.mxu0 %v3044
      %4038 = vmatpush1.bf16.msra.mxu0 %v3043
      %4039 = vmatprep.subr.bf16.mxu0 %v3052
      %4040 = vmatpush1.bf16.msra.mxu0 %v3051
      %4041 = vmatprep.subr.bf16.mxu0 %v3060
      %4042 = vmatpush1.bf16.msra.mxu0 %v3059
      %4043 = vmatprep.subr.bf16.mxu0 %v3068
      %4044 = vmatpush1.bf16.msra.mxu0 %v3067
      %4045 = vmatprep.subr.bf16.mxu0 %v3076
      %4046 = vmatpush1.bf16.msra.mxu0 %v3075
      %4047 = vmatprep.subr.bf16.mxu0 %v3084
      %4048 = vmatpush1.bf16.msra.mxu0 %v3083
      %4049 = vmatprep.subr.bf16.mxu0 %v3092
      %4050 = vmatpush1.bf16.msra.mxu0 %v3091
      %4051 = vmatprep.subr.bf16.mxu0 %v3100
      %4052 = vmatpush1.bf16.msra.mxu0 %v3099
      %4053 = vmatprep.subr.bf16.mxu0 %v3108
      %4054 = vmatpush1.bf16.msra.mxu0 %v3107
      %4055 = vmatprep.subr.bf16.mxu0 %v3116
      %4056 = vmatpush1.bf16.msra.mxu0 %v3115
      %4057 = vmatprep.subr.bf16.mxu0 %v3124
      %4058 = vmatpush1.bf16.msra.mxu0 %v3123
      %4059 = vmatprep.subr.bf16.mxu0 %v3132
      %4060 = vmatpush1.bf16.msra.mxu0 %v3131
      %4061 = vmatprep.subr.bf16.mxu0 %v3140
      %4062 = vmatpush1.bf16.msra.mxu0 %v3139
      %4063 = vmatprep.mubr.bf16.mxu0 %v1222
      %4064 = vmatmul.mubr.bf16.gmra.mrb[0].mxu0 %v1221
      %v4065 = vpop.f32.mrb[0].mxu0
      %v4066 = vadd.f32 %v4025, %v4065
      %v4067 = vpop.f32.mrb[0].mxu0
      %v4068 = vadd.f32 %v4027, %v4067
      %v4069 = vpop.f32.mrb[0].mxu0
      %v4070 = vpop.f32.mrb[0].mxu0
      %4071 = vdwg.mxu0
      %4072 = vmatprep.subr.bf16.mxu0 %v3148
      %4073 = vmatpush1.bf16.msra.mxu0 %v3147
      %4074 = vmatprep.subr.bf16.mxu0 %v3156
      %4075 = vmatpush1.bf16.msra.mxu0 %v3155
      %4076 = vmatprep.subr.bf16.mxu0 %v3164
      %4077 = vmatpush1.bf16.msra.mxu0 %v3163
      %4078 = vmatprep.subr.bf16.mxu0 %v3172
      %4079 = vmatpush1.bf16.msra.mxu0 %v3171
      %4080 = vmatprep.subr.bf16.mxu0 %v3180
      %4081 = vmatpush1.bf16.msra.mxu0 %v3179
      %4082 = vmatprep.subr.bf16.mxu0 %v3188
      %4083 = vmatpush1.bf16.msra.mxu0 %v3187
      %4084 = vmatprep.subr.bf16.mxu0 %v3196
      %4085 = vmatpush1.bf16.msra.mxu0 %v3195
      %4086 = vmatprep.subr.bf16.mxu0 %v3204
      %4087 = vmatpush1.bf16.msra.mxu0 %v3203
      %4088 = vmatprep.subr.bf16.mxu0 %v3212
      %4089 = vmatpush1.bf16.msra.mxu0 %v3211
      %4090 = vmatprep.subr.bf16.mxu0 %v3220
      %4091 = vmatpush1.bf16.msra.mxu0 %v3219
      %4092 = vmatprep.subr.bf16.mxu0 %v3228
      %4093 = vmatpush1.bf16.msra.mxu0 %v3227
      %4094 = vmatprep.subr.bf16.mxu0 %v3236
      %4095 = vmatpush1.bf16.msra.mxu0 %v3235
      %4096 = vmatprep.subr.bf16.mxu0 %v3244
      %4097 = vmatpush1.bf16.msra.mxu0 %v3243
      %4098 = vmatprep.subr.bf16.mxu0 %v3252
      %4099 = vmatpush1.bf16.msra.mxu0 %v3251
      %4100 = vmatprep.subr.bf16.mxu0 %v3260
      %4101 = vmatpush1.bf16.msra.mxu0 %v3259
      %4102 = vmatprep.subr.bf16.mxu0 %v3268
      %4103 = vmatpush1.bf16.msra.mxu0 %v3267
      %4104 = vmatprep.mubr.bf16.mxu0 %v1224
      %4105 = vmatmul.mubr.bf16.gmra.mrb[0].mxu0 %v1223
      %v4106 = vpop.f32.mrb[0].mxu0
      %v4107 = vadd.f32 %v4066, %v4106
      %v4108 = vpop.f32.mrb[0].mxu0
      %v4109 = vadd.f32 %v4068, %v4108
      %v4110 = vpop.f32.mrb[0].mxu0
      %v4111 = vpop.f32.mrb[0].mxu0
      %4112 = vdwg.mxu0
      %4113 = vmatprep.subr.bf16.mxu0 %v2766
      %4114 = vmatpush1.bf16.msra.mxu0 %v2765
      %4115 = vmatprep.subr.bf16.mxu0 %v2774
      %4116 = vmatpush1.bf16.msra.mxu0 %v2773
      %4117 = vmatprep.subr.bf16.mxu0 %v2782
      %4118 = vmatpush1.bf16.msra.mxu0 %v2781
      %4119 = vmatprep.subr.bf16.mxu0 %v2790
      %4120 = vmatpush1.bf16.msra.mxu0 %v2789
      %4121 = vmatprep.subr.bf16.mxu0 %v2798
      %4122 = vmatpush1.bf16.msra.mxu0 %v2797
      %4123 = vmatprep.subr.bf16.mxu0 %v2806
      %4124 = vmatpush1.bf16.msra.mxu0 %v2805
      %4125 = vmatprep.subr.bf16.mxu0 %v2814
      %4126 = vmatpush1.bf16.msra.mxu0 %v2813
      %4127 = vmatprep.subr.bf16.mxu0 %v2822
      %4128 = vmatpush1.bf16.msra.mxu0 %v2821
      %4129 = vmatprep.subr.bf16.mxu0 %v2830
      %4130 = vmatpush1.bf16.msra.mxu0 %v2829
      %4131 = vmatprep.subr.bf16.mxu0 %v2838
      %4132 = vmatpush1.bf16.msra.mxu0 %v2837
      %4133 = vmatprep.subr.bf16.mxu0 %v2846
      %4134 = vmatpush1.bf16.msra.mxu0 %v2845
      %4135 = vmatprep.subr.bf16.mxu0 %v2854
      %4136 = vmatpush1.bf16.msra.mxu0 %v2853
      %4137 = vmatprep.subr.bf16.mxu0 %v2862
      %4138 = vmatpush1.bf16.msra.mxu0 %v2861
      %4139 = vmatprep.subr.bf16.mxu0 %v2870
      %4140 = vmatpush1.bf16.msra.mxu0 %v2869
      %4141 = vmatprep.subr.bf16.mxu0 %v2878
      %4142 = vmatpush1.bf16.msra.mxu0 %v2877
      %4143 = vmatprep.subr.bf16.mxu0 %v2886
      %4144 = vmatpush1.bf16.msra.mxu0 %v2885
      %4145 = vmatprep.mubr.bf16.mxu0 %v1218
      %4146 = vmatmul.mubr.bf16.gmra.mrb[0].mxu0 %v1217
      %v4147 = vpop.f32.mrb[0].mxu0
      %v4148 = vadd.f32 0.0, %v4147
      %v4149 = vpop.f32.mrb[0].mxu0
      %v4150 = vadd.f32 0.0, %v4149
      %v4151 = vpop.f32.mrb[0].mxu0
      %v4152 = vpop.f32.mrb[0].mxu0
      %4153 = vdwg.mxu0
      %4154 = vmatprep.subr.bf16.mxu0 %v2894
      %4155 = vmatpush1.bf16.msra.mxu0 %v2893
      %4156 = vmatprep.subr.bf16.mxu0 %v2902
      %4157 = vmatpush1.bf16.msra.mxu0 %v2901
      %4158 = vmatprep.subr.bf16.mxu0 %v2910
      %4159 = vmatpush1.bf16.msra.mxu0 %v2909
      %4160 = vmatprep.subr.bf16.mxu0 %v2918
      %4161 = vmatpush1.bf16.msra.mxu0 %v2917
      %4162 = vmatprep.subr.bf16.mxu0 %v2926
      %4163 = vmatpush1.bf16.msra.mxu0 %v2925
      %4164 = vmatprep.subr.bf16.mxu0 %v2934
      %4165 = vmatpush1.bf16.msra.mxu0 %v2933
      %4166 = vmatprep.subr.bf16.mxu0 %v2942
      %4167 = vmatpush1.bf16.msra.mxu0 %v2941
      %4168 = vmatprep.subr.bf16.mxu0 %v2950
      %4169 = vmatpush1.bf16.msra.mxu0 %v2949
      %4170 = vmatprep.subr.bf16.mxu0 %v2958
      %4171 = vmatpush1.bf16.msra.mxu0 %v2957
      %4172 = vmatprep.subr.bf16.mxu0 %v2966
      %4173 = vmatpush1.bf16.msra.mxu0 %v2965
      %4174 = vmatprep.subr.bf16.mxu0 %v2974
      %4175 = vmatpush1.bf16.msra.mxu0 %v2973
      %4176 = vmatprep.subr.bf16.mxu0 %v2982
      %4177 = vmatpush1.bf16.msra.mxu0 %v2981
      %4178 = vmatprep.subr.bf16.mxu0 %v2990
      %4179 = vmatpush1.bf16.msra.mxu0 %v2989
      %4180 = vmatprep.subr.bf16.mxu0 %v2998
      %4181 = vmatpush1.bf16.msra.mxu0 %v2997
      %4182 = vmatprep.subr.bf16.mxu0 %v3006
      %4183 = vmatpush1.bf16.msra.mxu0 %v3005
      %4184 = vmatprep.subr.bf16.mxu0 %v3014
      %4185 = vmatpush1.bf16.msra.mxu0 %v3013
      %4186 = vmatprep.mubr.bf16.mxu0 %v1220
      %4187 = vmatmul.mubr.bf16.gmra.mrb[0].mxu0 %v1219
      %v4188 = vpop.f32.mrb[0].mxu0
      %v4189 = vadd.f32 %v4148, %v4188
      %v4190 = vpop.f32.mrb[0].mxu0
      %v4191 = vadd.f32 %v4150, %v4190
      %v4192 = vpop.f32.mrb[0].mxu0
      %v4193 = vpop.f32.mrb[0].mxu0
      %4194 = vdwg.mxu0
      %4195 = vmatprep.subr.bf16.mxu0 %v3022
      %4196 = vmatpush1.bf16.msra.mxu0 %v3021
      %4197 = vmatprep.subr.bf16.mxu0 %v3030
      %4198 = vmatpush1.bf16.msra.mxu0 %v3029
      %4199 = vmatprep.subr.bf16.mxu0 %v3038
      %4200 = vmatpush1.bf16.msra.mxu0 %v3037
      %4201 = vmatprep.subr.bf16.mxu0 %v3046
      %4202 = vmatpush1.bf16.msra.mxu0 %v3045
      %4203 = vmatprep.subr.bf16.mxu0 %v3054
      %4204 = vmatpush1.bf16.msra.mxu0 %v3053
      %4205 = vmatprep.subr.bf16.mxu0 %v3062
      %4206 = vmatpush1.bf16.msra.mxu0 %v3061
      %4207 = vmatprep.subr.bf16.mxu0 %v3070
      %4208 = vmatpush1.bf16.msra.mxu0 %v3069
      %4209 = vmatprep.subr.bf16.mxu0 %v3078
      %4210 = vmatpush1.bf16.msra.mxu0 %v3077
      %4211 = vmatprep.subr.bf16.mxu0 %v3086
      %4212 = vmatpush1.bf16.msra.mxu0 %v3085
      %4213 = vmatprep.subr.bf16.mxu0 %v3094
      %4214 = vmatpush1.bf16.msra.mxu0 %v3093
      %4215 = vmatprep.subr.bf16.mxu0 %v3102
      %4216 = vmatpush1.bf16.msra.mxu0 %v3101
      %4217 = vmatprep.subr.bf16.mxu0 %v3110
      %4218 = vmatpush1.bf16.msra.mxu0 %v3109
      %4219 = vmatprep.subr.bf16.mxu0 %v3118
      %4220 = vmatpush1.bf16.msra.mxu0 %v3117
      %4221 = vmatprep.subr.bf16.mxu0 %v3126
      %4222 = vmatpush1.bf16.msra.mxu0 %v3125
      %4223 = vmatprep.subr.bf16.mxu0 %v3134
      %4224 = vmatpush1.bf16.msra.mxu0 %v3133
      %4225 = vmatprep.subr.bf16.mxu0 %v3142
      %4226 = vmatpush1.bf16.msra.mxu0 %v3141
      %4227 = vmatprep.mubr.bf16.mxu0 %v1222
      %4228 = vmatmul.mubr.bf16.gmra.mrb[0].mxu0 %v1221
      %v4229 = vpop.f32.mrb[0].mxu0
      %v4230 = vadd.f32 %v4189, %v4229
      %v4231 = vpop.f32.mrb[0].mxu0
      %v4232 = vadd.f32 %v4191, %v4231
      %v4233 = vpop.f32.mrb[0].mxu0
      %v4234 = vpop.f32.mrb[0].mxu0
      %4235 = vdwg.mxu0
      %4236 = vmatprep.subr.bf16.mxu0 %v3150
      %4237 = vmatpush1.bf16.msra.mxu0 %v3149
      %4238 = vmatprep.subr.bf16.mxu0 %v3158
      %4239 = vmatpush1.bf16.msra.mxu0 %v3157
      %4240 = vmatprep.subr.bf16.mxu0 %v3166
      %4241 = vmatpush1.bf16.msra.mxu0 %v3165
      %4242 = vmatprep.subr.bf16.mxu0 %v3174
      %4243 = vmatpush1.bf16.msra.mxu0 %v3173
      %4244 = vmatprep.subr.bf16.mxu0 %v3182
      %4245 = vmatpush1.bf16.msra.mxu0 %v3181
      %4246 = vmatprep.subr.bf16.mxu0 %v3190
      %4247 = vmatpush1.bf16.msra.mxu0 %v3189
      %4248 = vmatprep.subr.bf16.mxu0 %v3198
      %4249 = vmatpush1.bf16.msra.mxu0 %v3197
      %4250 = vmatprep.subr.bf16.mxu0 %v3206
      %4251 = vmatpush1.bf16.msra.mxu0 %v3205
      %4252 = vmatprep.subr.bf16.mxu0 %v3214
      %4253 = vmatpush1.bf16.msra.mxu0 %v3213
      %4254 = vmatprep.subr.bf16.mxu0 %v3222
      %4255 = vmatpush1.bf16.msra.mxu0 %v3221
      %4256 = vmatprep.subr.bf16.mxu0 %v3230
      %4257 = vmatpush1.bf16.msra.mxu0 %v3229
      %4258 = vmatprep.subr.bf16.mxu0 %v3238
      %4259 = vmatpush1.bf16.msra.mxu0 %v3237
      %4260 = vmatprep.subr.bf16.mxu0 %v3246
      %4261 = vmatpush1.bf16.msra.mxu0 %v3245
      %4262 = vmatprep.subr.bf16.mxu0 %v3254
      %4263 = vmatpush1.bf16.msra.mxu0 %v3253
      %4264 = vmatprep.subr.bf16.mxu0 %v3262
      %4265 = vmatpush1.bf16.msra.mxu0 %v3261
      %4266 = vmatprep.subr.bf16.mxu0 %v3270
      %4267 = vmatpush1.bf16.msra.mxu0 %v3269
      %4268 = vmatprep.mubr.bf16.mxu0 %v1224
      %4269 = vmatmul.mubr.bf16.gmra.mrb[0].mxu0 %v1223
      %v4270 = vpop.f32.mrb[0].mxu0
      %v4271 = vadd.f32 %v4230, %v4270
      %v4272 = vpop.f32.mrb[0].mxu0
      %v4273 = vadd.f32 %v4232, %v4272
      %v4274 = vpop.f32.mrb[0].mxu0
      %v4275 = vpop.f32.mrb[0].mxu0
      %4276 = vdwg.mxu0
      %4277 = vmatprep.subr.bf16.mxu0 %v2768
      %4278 = vmatpush1.bf16.msra.mxu0 %v2767
      %4279 = vmatprep.subr.bf16.mxu0 %v2776
      %4280 = vmatpush1.bf16.msra.mxu0 %v2775
      %4281 = vmatprep.subr.bf16.mxu0 %v2784
      %4282 = vmatpush1.bf16.msra.mxu0 %v2783
      %4283 = vmatprep.subr.bf16.mxu0 %v2792
      %4284 = vmatpush1.bf16.msra.mxu0 %v2791
      %4285 = vmatprep.subr.bf16.mxu0 %v2800
      %4286 = vmatpush1.bf16.msra.mxu0 %v2799
      %4287 = vmatprep.subr.bf16.mxu0 %v2808
      %4288 = vmatpush1.bf16.msra.mxu0 %v2807
      %4289 = vmatprep.subr.bf16.mxu0 %v2816
      %4290 = vmatpush1.bf16.msra.mxu0 %v2815
      %4291 = vmatprep.subr.bf16.mxu0 %v2824
      %4292 = vmatpush1.bf16.msra.mxu0 %v2823
      %4293 = vmatprep.subr.bf16.mxu0 %v2832
      %4294 = vmatpush1.bf16.msra.mxu0 %v2831
      %4295 = vmatprep.subr.bf16.mxu0 %v2840
      %4296 = vmatpush1.bf16.msra.mxu0 %v2839
      %4297 = vmatprep.subr.bf16.mxu0 %v2848
      %4298 = vmatpush1.bf16.msra.mxu0 %v2847
      %4299 = vmatprep.subr.bf16.mxu0 %v2856
      %4300 = vmatpush1.bf16.msra.mxu0 %v2855
      %4301 = vmatprep.subr.bf16.mxu0 %v2864
      %4302 = vmatpush1.bf16.msra.mxu0 %v2863
      %4303 = vmatprep.subr.bf16.mxu0 %v2872
      %4304 = vmatpush1.bf16.msra.mxu0 %v2871
      %4305 = vmatprep.subr.bf16.mxu0 %v2880
      %4306 = vmatpush1.bf16.msra.mxu0 %v2879
      %4307 = vmatprep.subr.bf16.mxu0 %v2888
      %4308 = vmatpush1.bf16.msra.mxu0 %v2887
      %4309 = vmatprep.mubr.bf16.mxu0 %v1218
      %4310 = vmatmul.mubr.bf16.gmra.mrb[0].mxu0 %v1217
      %v4311 = vpop.f32.mrb[0].mxu0
      %v4312 = vadd.f32 0.0, %v4311
      %v4313 = vpop.f32.mrb[0].mxu0
      %v4314 = vadd.f32 0.0, %v4313
      %v4315 = vpop.f32.mrb[0].mxu0
      %v4316 = vpop.f32.mrb[0].mxu0
      %4317 = vdwg.mxu0
      %4318 = vmatprep.subr.bf16.mxu0 %v2896
      %4319 = vmatpush1.bf16.msra.mxu0 %v2895
      %4320 = vmatprep.subr.bf16.mxu0 %v2904
      %4321 = vmatpush1.bf16.msra.mxu0 %v2903
      %4322 = vmatprep.subr.bf16.mxu0 %v2912
      %4323 = vmatpush1.bf16.msra.mxu0 %v2911
      %4324 = vmatprep.subr.bf16.mxu0 %v2920
      %4325 = vmatpush1.bf16.msra.mxu0 %v2919
      %4326 = vmatprep.subr.bf16.mxu0 %v2928
      %4327 = vmatpush1.bf16.msra.mxu0 %v2927
      %4328 = vmatprep.subr.bf16.mxu0 %v2936
      %4329 = vmatpush1.bf16.msra.mxu0 %v2935
      %4330 = vmatprep.subr.bf16.mxu0 %v2944
      %4331 = vmatpush1.bf16.msra.mxu0 %v2943
      %4332 = vmatprep.subr.bf16.mxu0 %v2952
      %4333 = vmatpush1.bf16.msra.mxu0 %v2951
      %4334 = vmatprep.subr.bf16.mxu0 %v2960
      %4335 = vmatpush1.bf16.msra.mxu0 %v2959
      %4336 = vmatprep.subr.bf16.mxu0 %v2968
      %4337 = vmatpush1.bf16.msra.mxu0 %v2967
      %4338 = vmatprep.subr.bf16.mxu0 %v2976
      %4339 = vmatpush1.bf16.msra.mxu0 %v2975
      %4340 = vmatprep.subr.bf16.mxu0 %v2984
      %4341 = vmatpush1.bf16.msra.mxu0 %v2983
      %4342 = vmatprep.subr.bf16.mxu0 %v2992
      %4343 = vmatpush1.bf16.msra.mxu0 %v2991
      %4344 = vmatprep.subr.bf16.mxu0 %v3000
      %4345 = vmatpush1.bf16.msra.mxu0 %v2999
      %4346 = vmatprep.subr.bf16.mxu0 %v3008
      %4347 = vmatpush1.bf16.msra.mxu0 %v3007
      %4348 = vmatprep.subr.bf16.mxu0 %v3016
      %4349 = vmatpush1.bf16.msra.mxu0 %v3015
      %4350 = vmatprep.mubr.bf16.mxu0 %v1220
      %4351 = vmatmul.mubr.bf16.gmra.mrb[0].mxu0 %v1219
      %v4352 = vpop.f32.mrb[0].mxu0
      %v4353 = vadd.f32 %v4312, %v4352
      %v4354 = vpop.f32.mrb[0].mxu0
      %v4355 = vadd.f32 %v4314, %v4354
      %v4356 = vpop.f32.mrb[0].mxu0
      %v4357 = vpop.f32.mrb[0].mxu0
      %4358 = vdwg.mxu0
      %4359 = vmatprep.subr.bf16.mxu0 %v3024
      %4360 = vmatpush1.bf16.msra.mxu0 %v3023
      %4361 = vmatprep.subr.bf16.mxu0 %v3032
      %4362 = vmatpush1.bf16.msra.mxu0 %v3031
      %4363 = vmatprep.subr.bf16.mxu0 %v3040
      %4364 = vmatpush1.bf16.msra.mxu0 %v3039
      %4365 = vmatprep.subr.bf16.mxu0 %v3048
      %4366 = vmatpush1.bf16.msra.mxu0 %v3047
      %4367 = vmatprep.subr.bf16.mxu0 %v3056
      %4368 = vmatpush1.bf16.msra.mxu0 %v3055
      %4369 = vmatprep.subr.bf16.mxu0 %v3064
      %4370 = vmatpush1.bf16.msra.mxu0 %v3063
      %4371 = vmatprep.subr.bf16.mxu0 %v3072
      %4372 = vmatpush1.bf16.msra.mxu0 %v3071
      %4373 = vmatprep.subr.bf16.mxu0 %v3080
      %4374 = vmatpush1.bf16.msra.mxu0 %v3079
      %4375 = vmatprep.subr.bf16.mxu0 %v3088
      %4376 = vmatpush1.bf16.msra.mxu0 %v3087
      %4377 = vmatprep.subr.bf16.mxu0 %v3096
      %4378 = vmatpush1.bf16.msra.mxu0 %v3095
      %4379 = vmatprep.subr.bf16.mxu0 %v3104
      %4380 = vmatpush1.bf16.msra.mxu0 %v3103
      %4381 = vmatprep.subr.bf16.mxu0 %v3112
      %4382 = vmatpush1.bf16.msra.mxu0 %v3111
      %4383 = vmatprep.subr.bf16.mxu0 %v3120
      %4384 = vmatpush1.bf16.msra.mxu0 %v3119
      %4385 = vmatprep.subr.bf16.mxu0 %v3128
      %4386 = vmatpush1.bf16.msra.mxu0 %v3127
      %4387 = vmatprep.subr.bf16.mxu0 %v3136
      %4388 = vmatpush1.bf16.msra.mxu0 %v3135
      %4389 = vmatprep.subr.bf16.mxu0 %v3144
      %4390 = vmatpush1.bf16.msra.mxu0 %v3143
      %4391 = vmatprep.mubr.bf16.mxu0 %v1222
      %4392 = vmatmul.mubr.bf16.gmra.mrb[0].mxu0 %v1221
      %v4393 = vpop.f32.mrb[0].mxu0
      %v4394 = vadd.f32 %v4353, %v4393
      %v4395 = vpop.f32.mrb[0].mxu0
      %v4396 = vadd.f32 %v4355, %v4395
      %v4397 = vpop.f32.mrb[0].mxu0
      %v4398 = vpop.f32.mrb[0].mxu0
      %4399 = vdwg.mxu0
      %4400 = vmatprep.subr.bf16.mxu0 %v3152
      %4401 = vmatpush1.bf16.msra.mxu0 %v3151
      %4402 = vmatprep.subr.bf16.mxu0 %v3160
      %4403 = vmatpush1.bf16.msra.mxu0 %v3159
      %4404 = vmatprep.subr.bf16.mxu0 %v3168
      %4405 = vmatpush1.bf16.msra.mxu0 %v3167
      %4406 = vmatprep.subr.bf16.mxu0 %v3176
      %4407 = vmatpush1.bf16.msra.mxu0 %v3175
      %4408 = vmatprep.subr.bf16.mxu0 %v3184
      %4409 = vmatpush1.bf16.msra.mxu0 %v3183
      %4410 = vmatprep.subr.bf16.mxu0 %v3192
      %4411 = vmatpush1.bf16.msra.mxu0 %v3191
      %4412 = vmatprep.subr.bf16.mxu0 %v3200
      %4413 = vmatpush1.bf16.msra.mxu0 %v3199
      %4414 = vmatprep.subr.bf16.mxu0 %v3208
      %4415 = vmatpush1.bf16.msra.mxu0 %v3207
      %4416 = vmatprep.subr.bf16.mxu0 %v3216
      %4417 = vmatpush1.bf16.msra.mxu0 %v3215
      %4418 = vmatprep.subr.bf16.mxu0 %v3224
      %4419 = vmatpush1.bf16.msra.mxu0 %v3223
      %4420 = vmatprep.subr.bf16.mxu0 %v3232
      %4421 = vmatpush1.bf16.msra.mxu0 %v3231
      %4422 = vmatprep.subr.bf16.mxu0 %v3240
      %4423 = vmatpush1.bf16.msra.mxu0 %v3239
      %4424 = vmatprep.subr.bf16.mxu0 %v3248
      %4425 = vmatpush1.bf16.msra.mxu0 %v3247
      %4426 = vmatprep.subr.bf16.mxu0 %v3256
      %4427 = vmatpush1.bf16.msra.mxu0 %v3255
      %4428 = vmatprep.subr.bf16.mxu0 %v3264
      %4429 = vmatpush1.bf16.msra.mxu0 %v3263
      %4430 = vmatprep.subr.bf16.mxu0 %v3272
      %4431 = vmatpush1.bf16.msra.mxu0 %v3271
      %4432 = vmatprep.mubr.bf16.mxu0 %v1224
      %4433 = vmatmul.mubr.bf16.gmra.mrb[0].mxu0 %v1223
      %v4434 = vpop.f32.mrb[0].mxu0
      %v4435 = vadd.f32 %v4394, %v4434
      %v4436 = vpop.f32.mrb[0].mxu0
      %v4437 = vadd.f32 %v4396, %v4436
      %v4438 = vpop.f32.mrb[0].mxu0
      %v4439 = vpop.f32.mrb[0].mxu0
      %4440 = vdwg.mxu0
      %v4953 = vunpack.c.l.b16 %v55
      %v4954 = vunpack.c.h.b16 %v55
      %v4955 = vunpack.c.l.b16 %v56
      %v4956 = vunpack.c.h.b16 %v56
      %v4957 = vunpack.c.l.b16 %v57
      %v4958 = vunpack.c.h.b16 %v57
      %v4959 = vunpack.c.l.b16 %v58
      %v4960 = vunpack.c.h.b16 %v58
      %v4961 = vunpack.c.l.b16 %v59
      %v4962 = vunpack.c.h.b16 %v59
      %v4963 = vunpack.c.l.b16 %v60
      %v4964 = vunpack.c.h.b16 %v60
      %v4965 = vunpack.c.l.b16 %v61
      %v4966 = vunpack.c.h.b16 %v61
      %v4967 = vunpack.c.l.b16 %v62
      %v4968 = vunpack.c.h.b16 %v62
      %v4969 = vunpack.c.l.b16 %v63
      %v4970 = vunpack.c.h.b16 %v63
      %v4971 = vunpack.c.l.b16 %v64
      %v4972 = vunpack.c.h.b16 %v64
      %v4973 = vunpack.c.l.b16 %v65
      %v4974 = vunpack.c.h.b16 %v65
      %v4975 = vunpack.c.l.b16 %v66
      %v4976 = vunpack.c.h.b16 %v66
      %v4977 = vunpack.c.l.b16 %v67
      %v4978 = vunpack.c.h.b16 %v67
      %v4979 = vunpack.c.l.b16 %v68
      %v4980 = vunpack.c.h.b16 %v68
      %v4981 = vunpack.c.l.b16 %v69
      %v4982 = vunpack.c.h.b16 %v69
      %v4983 = vunpack.c.l.b16 %v70
      %v4984 = vunpack.c.h.b16 %v70
      %v4985 = vunpack.c.l.b16 %v71
      %v4986 = vunpack.c.h.b16 %v71
      %v4987 = vunpack.c.l.b16 %v72
      %v4988 = vunpack.c.h.b16 %v72
      %v4989 = vunpack.c.l.b16 %v73
      %v4990 = vunpack.c.h.b16 %v73
      %v4991 = vunpack.c.l.b16 %v74
      %v4992 = vunpack.c.h.b16 %v74
      %v4993 = vunpack.c.l.b16 %v75
      %v4994 = vunpack.c.h.b16 %v75
      %v4995 = vunpack.c.l.b16 %v76
      %v4996 = vunpack.c.h.b16 %v76
      %v4997 = vunpack.c.l.b16 %v77
      %v4998 = vunpack.c.h.b16 %v77
      %v4999 = vunpack.c.l.b16 %v78
      %v5000 = vunpack.c.h.b16 %v78
      %v5001 = vunpack.c.l.b16 %v79
      %v5002 = vunpack.c.h.b16 %v79
      %v5003 = vunpack.c.l.b16 %v80
      %v5004 = vunpack.c.h.b16 %v80
      %v5005 = vunpack.c.l.b16 %v81
      %v5006 = vunpack.c.h.b16 %v81
      %v5007 = vunpack.c.l.b16 %v82
      %v5008 = vunpack.c.h.b16 %v82
      %v5009 = vunpack.c.l.b16 %v83
      %v5010 = vunpack.c.h.b16 %v83
      %v5011 = vunpack.c.l.b16 %v84
      %v5012 = vunpack.c.h.b16 %v84
      %v5013 = vunpack.c.l.b16 %v85
      %v5014 = vunpack.c.h.b16 %v85
      %v5015 = vunpack.c.l.b16 %v86
      %v5016 = vunpack.c.h.b16 %v86
      %v5017 = vunpack.c.l.b16 %v87
      %v5018 = vunpack.c.h.b16 %v87
      %v5019 = vunpack.c.l.b16 %v88
      %v5020 = vunpack.c.h.b16 %v88
      %v5021 = vunpack.c.l.b16 %v89
      %v5022 = vunpack.c.h.b16 %v89
      %v5023 = vunpack.c.l.b16 %v90
      %v5024 = vunpack.c.h.b16 %v90
      %v5025 = vunpack.c.l.b16 %v91
      %v5026 = vunpack.c.h.b16 %v91
      %v5027 = vunpack.c.l.b16 %v92
      %v5028 = vunpack.c.h.b16 %v92
      %v5029 = vunpack.c.l.b16 %v93
      %v5030 = vunpack.c.h.b16 %v93
      %v5031 = vunpack.c.l.b16 %v94
      %v5032 = vunpack.c.h.b16 %v94
      %v5033 = vunpack.c.l.b16 %v95
      %v5034 = vunpack.c.h.b16 %v95
      %v5035 = vunpack.c.l.b16 %v96
      %v5036 = vunpack.c.h.b16 %v96
      %v5037 = vunpack.c.l.b16 %v97
      %v5038 = vunpack.c.h.b16 %v97
      %v5039 = vunpack.c.l.b16 %v98
      %v5040 = vunpack.c.h.b16 %v98
      %v5041 = vunpack.c.l.b16 %v99
      %v5042 = vunpack.c.h.b16 %v99
      %v5043 = vunpack.c.l.b16 %v100
      %v5044 = vunpack.c.h.b16 %v100
      %v5045 = vunpack.c.l.b16 %v101
      %v5046 = vunpack.c.h.b16 %v101
      %v5047 = vunpack.c.l.b16 %v102
      %v5048 = vunpack.c.h.b16 %v102
      %v5049 = vunpack.c.l.b16 %v103
      %v5050 = vunpack.c.h.b16 %v103
      %v5051 = vunpack.c.l.b16 %v104
      %v5052 = vunpack.c.h.b16 %v104
      %v5053 = vunpack.c.l.b16 %v105
      %v5054 = vunpack.c.h.b16 %v105
      %v5055 = vunpack.c.l.b16 %v106
      %v5056 = vunpack.c.h.b16 %v106
      %v5057 = vunpack.c.l.b16 %v107
      %v5058 = vunpack.c.h.b16 %v107
      %v5059 = vunpack.c.l.b16 %v108
      %v5060 = vunpack.c.h.b16 %v108
      %v5061 = vunpack.c.l.b16 %v109
      %v5062 = vunpack.c.h.b16 %v109
      %v5063 = vunpack.c.l.b16 %v110
      %v5064 = vunpack.c.h.b16 %v110
      %v5065 = vunpack.c.l.b16 %v111
      %v5066 = vunpack.c.h.b16 %v111
      %v5067 = vunpack.c.l.b16 %v112
      %v5068 = vunpack.c.h.b16 %v112
      %v5069 = vunpack.c.l.b16 %v113
      %v5070 = vunpack.c.h.b16 %v113
      %v5071 = vunpack.c.l.b16 %v114
      %v5072 = vunpack.c.h.b16 %v114
      %v5073 = vunpack.c.l.b16 %v115
      %v5074 = vunpack.c.h.b16 %v115
      %v5075 = vunpack.c.l.b16 %v116
      %v5076 = vunpack.c.h.b16 %v116
      %v5077 = vunpack.c.l.b16 %v117
      %v5078 = vunpack.c.h.b16 %v117
      %v5079 = vunpack.c.l.b16 %v118
      %v5080 = vunpack.c.h.b16 %v118
      %v5081 = vunpack.c.l.b16 %v119
      %v5082 = vunpack.c.h.b16 %v119
      %v5083 = vunpack.c.l.b16 %v120
      %v5084 = vunpack.c.h.b16 %v120
      %v5085 = vunpack.c.l.b16 %v121
      %v5086 = vunpack.c.h.b16 %v121
      %v5087 = vunpack.c.l.b16 %v122
      %v5088 = vunpack.c.h.b16 %v122
      %v5089 = vunpack.c.l.b16 %v123
      %v5090 = vunpack.c.h.b16 %v123
      %v5091 = vunpack.c.l.b16 %v124
      %v5092 = vunpack.c.h.b16 %v124
      %v5093 = vunpack.c.l.b16 %v125
      %v5094 = vunpack.c.h.b16 %v125
      %v5095 = vunpack.c.l.b16 %v126
      %v5096 = vunpack.c.h.b16 %v126
      %v5097 = vunpack.c.l.b16 %v127
      %v5098 = vunpack.c.h.b16 %v127
      %v5099 = vunpack.c.l.b16 %v128
      %v5100 = vunpack.c.h.b16 %v128
      %v5101 = vunpack.c.l.b16 %v129
      %v5102 = vunpack.c.h.b16 %v129
      %v5103 = vunpack.c.l.b16 %v130
      %v5104 = vunpack.c.h.b16 %v130
      %v5105 = vunpack.c.l.b16 %v131
      %v5106 = vunpack.c.h.b16 %v131
      %v5107 = vunpack.c.l.b16 %v132
      %v5108 = vunpack.c.h.b16 %v132
      %v5109 = vunpack.c.l.b16 %v133
      %v5110 = vunpack.c.h.b16 %v133
      %v5111 = vunpack.c.l.b16 %v134
      %v5112 = vunpack.c.h.b16 %v134
      %v5113 = vunpack.c.l.b16 %v135
      %v5114 = vunpack.c.h.b16 %v135
      %v5115 = vunpack.c.l.b16 %v136
      %v5116 = vunpack.c.h.b16 %v136
      %v5117 = vunpack.c.l.b16 %v137
      %v5118 = vunpack.c.h.b16 %v137
      %v5119 = vunpack.c.l.b16 %v138
      %v5120 = vunpack.c.h.b16 %v138
      %v5121 = vunpack.c.l.b16 %v139
      %v5122 = vunpack.c.h.b16 %v139
      %v5123 = vunpack.c.l.b16 %v140
      %v5124 = vunpack.c.h.b16 %v140
      %v5125 = vunpack.c.l.b16 %v141
      %v5126 = vunpack.c.h.b16 %v141
      %v5127 = vunpack.c.l.b16 %v142
      %v5128 = vunpack.c.h.b16 %v142
      %v5129 = vunpack.c.l.b16 %v143
      %v5130 = vunpack.c.h.b16 %v143
      %v5131 = vunpack.c.l.b16 %v144
      %v5132 = vunpack.c.h.b16 %v144
      %v5133 = vunpack.c.l.b16 %v145
      %v5134 = vunpack.c.h.b16 %v145
      %v5135 = vunpack.c.l.b16 %v146
      %v5136 = vunpack.c.h.b16 %v146
      %v5137 = vunpack.c.l.b16 %v147
      %v5138 = vunpack.c.h.b16 %v147
      %v5139 = vunpack.c.l.b16 %v148
      %v5140 = vunpack.c.h.b16 %v148
      %v5141 = vunpack.c.l.b16 %v149
      %v5142 = vunpack.c.h.b16 %v149
      %v5143 = vunpack.c.l.b16 %v150
      %v5144 = vunpack.c.h.b16 %v150
      %v5145 = vunpack.c.l.b16 %v151
      %v5146 = vunpack.c.h.b16 %v151
      %v5147 = vunpack.c.l.b16 %v152
      %v5148 = vunpack.c.h.b16 %v152
      %v5149 = vunpack.c.l.b16 %v153
      %v5150 = vunpack.c.h.b16 %v153
      %v5151 = vunpack.c.l.b16 %v154
      %v5152 = vunpack.c.h.b16 %v154
      %v5153 = vunpack.c.l.b16 %v155
      %v5154 = vunpack.c.h.b16 %v155
      %v5155 = vunpack.c.l.b16 %v156
      %v5156 = vunpack.c.h.b16 %v156
      %v5157 = vunpack.c.l.b16 %v157
      %v5158 = vunpack.c.h.b16 %v157
      %v5159 = vunpack.c.l.b16 %v158
      %v5160 = vunpack.c.h.b16 %v158
      %v5161 = vunpack.c.l.b16 %v159
      %v5162 = vunpack.c.h.b16 %v159
      %v5163 = vunpack.c.l.b16 %v160
      %v5164 = vunpack.c.h.b16 %v160
      %v5165 = vunpack.c.l.b16 %v161
      %v5166 = vunpack.c.h.b16 %v161
      %v5167 = vunpack.c.l.b16 %v162
      %v5168 = vunpack.c.h.b16 %v162
      %v5169 = vunpack.c.l.b16 %v163
      %v5170 = vunpack.c.h.b16 %v163
      %v5171 = vunpack.c.l.b16 %v164
      %v5172 = vunpack.c.h.b16 %v164
      %v5173 = vunpack.c.l.b16 %v165
      %v5174 = vunpack.c.h.b16 %v165
      %v5175 = vunpack.c.l.b16 %v166
      %v5176 = vunpack.c.h.b16 %v166
      %v5177 = vunpack.c.l.b16 %v167
      %v5178 = vunpack.c.h.b16 %v167
      %v5179 = vunpack.c.l.b16 %v168
      %v5180 = vunpack.c.h.b16 %v168
      %v5181 = vunpack.c.l.b16 %v169
      %v5182 = vunpack.c.h.b16 %v169
      %v5183 = vunpack.c.l.b16 %v170
      %v5184 = vunpack.c.h.b16 %v170
      %v5185 = vunpack.c.l.b16 %v171
      %v5186 = vunpack.c.h.b16 %v171
      %v5187 = vunpack.c.l.b16 %v172
      %v5188 = vunpack.c.h.b16 %v172
      %v5189 = vunpack.c.l.b16 %v173
      %v5190 = vunpack.c.h.b16 %v173
      %v5191 = vunpack.c.l.b16 %v174
      %v5192 = vunpack.c.h.b16 %v174
      %v5193 = vunpack.c.l.b16 %v175
      %v5194 = vunpack.c.h.b16 %v175
      %v5195 = vunpack.c.l.b16 %v176
      %v5196 = vunpack.c.h.b16 %v176
      %v5197 = vunpack.c.l.b16 %v177
      %v5198 = vunpack.c.h.b16 %v177
      %v5199 = vunpack.c.l.b16 %v178
      %v5200 = vunpack.c.h.b16 %v178
      %v5201 = vunpack.c.l.b16 %v179
      %v5202 = vunpack.c.h.b16 %v179
      %v5203 = vunpack.c.l.b16 %v180
      %v5204 = vunpack.c.h.b16 %v180
      %v5205 = vunpack.c.l.b16 %v181
      %v5206 = vunpack.c.h.b16 %v181
      %v5207 = vunpack.c.l.b16 %v182
      %v5208 = vunpack.c.h.b16 %v182
      %v5209 = vunpack.c.l.b16 %v183
      %v5210 = vunpack.c.h.b16 %v183
      %v5211 = vunpack.c.l.b16 %v184
      %v5212 = vunpack.c.h.b16 %v184
      %v5213 = vunpack.c.l.b16 %v185
      %v5214 = vunpack.c.h.b16 %v185
      %v5215 = vunpack.c.l.b16 %v186
      %v5216 = vunpack.c.h.b16 %v186
      %v5217 = vunpack.c.l.b16 %v187
      %v5218 = vunpack.c.h.b16 %v187
      %v5219 = vunpack.c.l.b16 %v188
      %v5220 = vunpack.c.h.b16 %v188
      %v5221 = vunpack.c.l.b16 %v189
      %v5222 = vunpack.c.h.b16 %v189
      %v5223 = vunpack.c.l.b16 %v190
      %v5224 = vunpack.c.h.b16 %v190
      %v5225 = vunpack.c.l.b16 %v191
      %v5226 = vunpack.c.h.b16 %v191
      %v5227 = vunpack.c.l.b16 %v192
      %v5228 = vunpack.c.h.b16 %v192
      %v5229 = vunpack.c.l.b16 %v193
      %v5230 = vunpack.c.h.b16 %v193
      %v5231 = vunpack.c.l.b16 %v194
      %v5232 = vunpack.c.h.b16 %v194
      %v5233 = vunpack.c.l.b16 %v195
      %v5234 = vunpack.c.h.b16 %v195
      %v5235 = vunpack.c.l.b16 %v196
      %v5236 = vunpack.c.h.b16 %v196
      %v5237 = vunpack.c.l.b16 %v197
      %v5238 = vunpack.c.h.b16 %v197
      %v5239 = vunpack.c.l.b16 %v198
      %v5240 = vunpack.c.h.b16 %v198
      %v5241 = vunpack.c.l.b16 %v199
      %v5242 = vunpack.c.h.b16 %v199
      %v5243 = vunpack.c.l.b16 %v200
      %v5244 = vunpack.c.h.b16 %v200
      %v5245 = vunpack.c.l.b16 %v201
      %v5246 = vunpack.c.h.b16 %v201
      %v5247 = vunpack.c.l.b16 %v202
      %v5248 = vunpack.c.h.b16 %v202
      %v5249 = vunpack.c.l.b16 %v203
      %v5250 = vunpack.c.h.b16 %v203
      %v5251 = vunpack.c.l.b16 %v204
      %v5252 = vunpack.c.h.b16 %v204
      %v5253 = vunpack.c.l.b16 %v205
      %v5254 = vunpack.c.h.b16 %v205
      %v5255 = vunpack.c.l.b16 %v206
      %v5256 = vunpack.c.h.b16 %v206
      %v5257 = vunpack.c.l.b16 %v207
      %v5258 = vunpack.c.h.b16 %v207
      %v5259 = vunpack.c.l.b16 %v208
      %v5260 = vunpack.c.h.b16 %v208
      %v5261 = vunpack.c.l.b16 %v209
      %v5262 = vunpack.c.h.b16 %v209
      %v5263 = vunpack.c.l.b16 %v210
      %v5264 = vunpack.c.h.b16 %v210
      %v5265 = vunpack.c.l.b16 %v211
      %v5266 = vunpack.c.h.b16 %v211
      %v5267 = vunpack.c.l.b16 %v212
      %v5268 = vunpack.c.h.b16 %v212
      %v5269 = vunpack.c.l.b16 %v213
      %v5270 = vunpack.c.h.b16 %v213
      %v5271 = vunpack.c.l.b16 %v214
      %v5272 = vunpack.c.h.b16 %v214
      %v5273 = vunpack.c.l.b16 %v215
      %v5274 = vunpack.c.h.b16 %v215
      %v5275 = vunpack.c.l.b16 %v216
      %v5276 = vunpack.c.h.b16 %v216
      %v5277 = vunpack.c.l.b16 %v217
      %v5278 = vunpack.c.h.b16 %v217
      %v5279 = vunpack.c.l.b16 %v218
      %v5280 = vunpack.c.h.b16 %v218
      %v5281 = vunpack.c.l.b16 %v219
      %v5282 = vunpack.c.h.b16 %v219
      %v5283 = vunpack.c.l.b16 %v220
      %v5284 = vunpack.c.h.b16 %v220
      %v5285 = vunpack.c.l.b16 %v221
      %v5286 = vunpack.c.h.b16 %v221
      %v5287 = vunpack.c.l.b16 %v222
      %v5288 = vunpack.c.h.b16 %v222
      %v5289 = vunpack.c.l.b16 %v223
      %v5290 = vunpack.c.h.b16 %v223
      %v5291 = vunpack.c.l.b16 %v224
      %v5292 = vunpack.c.h.b16 %v224
      %v5293 = vunpack.c.l.b16 %v225
      %v5294 = vunpack.c.h.b16 %v225
      %v5295 = vunpack.c.l.b16 %v226
      %v5296 = vunpack.c.h.b16 %v226
      %v5297 = vunpack.c.l.b16 %v227
      %v5298 = vunpack.c.h.b16 %v227
      %v5299 = vunpack.c.l.b16 %v228
      %v5300 = vunpack.c.h.b16 %v228
      %v5301 = vunpack.c.l.b16 %v229
      %v5302 = vunpack.c.h.b16 %v229
      %v5303 = vunpack.c.l.b16 %v230
      %v5304 = vunpack.c.h.b16 %v230
      %v5305 = vunpack.c.l.b16 %v231
      %v5306 = vunpack.c.h.b16 %v231
      %v5307 = vunpack.c.l.b16 %v232
      %v5308 = vunpack.c.h.b16 %v232
      %v5309 = vunpack.c.l.b16 %v233
      %v5310 = vunpack.c.h.b16 %v233
      %v5311 = vunpack.c.l.b16 %v234
      %v5312 = vunpack.c.h.b16 %v234
      %v5313 = vunpack.c.l.b16 %v235
      %v5314 = vunpack.c.h.b16 %v235
      %v5315 = vunpack.c.l.b16 %v236
      %v5316 = vunpack.c.h.b16 %v236
      %v5317 = vunpack.c.l.b16 %v237
      %v5318 = vunpack.c.h.b16 %v237
      %v5319 = vunpack.c.l.b16 %v238
      %v5320 = vunpack.c.h.b16 %v238
      %v5321 = vunpack.c.l.b16 %v239
      %v5322 = vunpack.c.h.b16 %v239
      %v5323 = vunpack.c.l.b16 %v240
      %v5324 = vunpack.c.h.b16 %v240
      %v5325 = vunpack.c.l.b16 %v241
      %v5326 = vunpack.c.h.b16 %v241
      %v5327 = vunpack.c.l.b16 %v242
      %v5328 = vunpack.c.h.b16 %v242
      %v5329 = vunpack.c.l.b16 %v243
      %v5330 = vunpack.c.h.b16 %v243
      %v5331 = vunpack.c.l.b16 %v244
      %v5332 = vunpack.c.h.b16 %v244
      %v5333 = vunpack.c.l.b16 %v245
      %v5334 = vunpack.c.h.b16 %v245
      %v5335 = vunpack.c.l.b16 %v246
      %v5336 = vunpack.c.h.b16 %v246
      %v5337 = vunpack.c.l.b16 %v247
      %v5338 = vunpack.c.h.b16 %v247
      %v5339 = vunpack.c.l.b16 %v248
      %v5340 = vunpack.c.h.b16 %v248
      %v5341 = vunpack.c.l.b16 %v249
      %v5342 = vunpack.c.h.b16 %v249
      %v5343 = vunpack.c.l.b16 %v250
      %v5344 = vunpack.c.h.b16 %v250
      %v5345 = vunpack.c.l.b16 %v251
      %v5346 = vunpack.c.h.b16 %v251
      %v5347 = vunpack.c.l.b16 %v252
      %v5348 = vunpack.c.h.b16 %v252
      %v5349 = vunpack.c.l.b16 %v253
      %v5350 = vunpack.c.h.b16 %v253
      %v5351 = vunpack.c.l.b16 %v254
      %v5352 = vunpack.c.h.b16 %v254
      %v5353 = vunpack.c.l.b16 %v255
      %v5354 = vunpack.c.h.b16 %v255
      %v5355 = vunpack.c.l.b16 %v256
      %v5356 = vunpack.c.h.b16 %v256
      %v5357 = vunpack.c.l.b16 %v257
      %v5358 = vunpack.c.h.b16 %v257
      %v5359 = vunpack.c.l.b16 %v258
      %v5360 = vunpack.c.h.b16 %v258
      %v5361 = vunpack.c.l.b16 %v259
      %v5362 = vunpack.c.h.b16 %v259
      %v5363 = vunpack.c.l.b16 %v260
      %v5364 = vunpack.c.h.b16 %v260
      %v5365 = vunpack.c.l.b16 %v261
      %v5366 = vunpack.c.h.b16 %v261
      %v5367 = vunpack.c.l.b16 %v262
      %v5368 = vunpack.c.h.b16 %v262
      %v5369 = vunpack.c.l.b16 %v263
      %v5370 = vunpack.c.h.b16 %v263
      %v5371 = vunpack.c.l.b16 %v264
      %v5372 = vunpack.c.h.b16 %v264
      %v5373 = vunpack.c.l.b16 %v265
      %v5374 = vunpack.c.h.b16 %v265
      %v5375 = vunpack.c.l.b16 %v266
      %v5376 = vunpack.c.h.b16 %v266
      %v5377 = vunpack.c.l.b16 %v267
      %v5378 = vunpack.c.h.b16 %v267
      %v5379 = vunpack.c.l.b16 %v268
      %v5380 = vunpack.c.h.b16 %v268
      %v5381 = vunpack.c.l.b16 %v269
      %v5382 = vunpack.c.h.b16 %v269
      %v5383 = vunpack.c.l.b16 %v270
      %v5384 = vunpack.c.h.b16 %v270
      %v5385 = vunpack.c.l.b16 %v271
      %v5386 = vunpack.c.h.b16 %v271
      %v5387 = vunpack.c.l.b16 %v272
      %v5388 = vunpack.c.h.b16 %v272
      %v5389 = vunpack.c.l.b16 %v273
      %v5390 = vunpack.c.h.b16 %v273
      %v5391 = vunpack.c.l.b16 %v274
      %v5392 = vunpack.c.h.b16 %v274
      %v5393 = vunpack.c.l.b16 %v275
      %v5394 = vunpack.c.h.b16 %v275
      %v5395 = vunpack.c.l.b16 %v276
      %v5396 = vunpack.c.h.b16 %v276
      %v5397 = vunpack.c.l.b16 %v277
      %v5398 = vunpack.c.h.b16 %v277
      %v5399 = vunpack.c.l.b16 %v278
      %v5400 = vunpack.c.h.b16 %v278
      %v5401 = vunpack.c.l.b16 %v279
      %v5402 = vunpack.c.h.b16 %v279
      %v5403 = vunpack.c.l.b16 %v280
      %v5404 = vunpack.c.h.b16 %v280
      %v5405 = vunpack.c.l.b16 %v281
      %v5406 = vunpack.c.h.b16 %v281
      %v5407 = vunpack.c.l.b16 %v282
      %v5408 = vunpack.c.h.b16 %v282
      %v5409 = vunpack.c.l.b16 %v283
      %v5410 = vunpack.c.h.b16 %v283
      %v5411 = vunpack.c.l.b16 %v284
      %v5412 = vunpack.c.h.b16 %v284
      %v5413 = vunpack.c.l.b16 %v285
      %v5414 = vunpack.c.h.b16 %v285
      %v5415 = vunpack.c.l.b16 %v286
      %v5416 = vunpack.c.h.b16 %v286
      %v5417 = vunpack.c.l.b16 %v287
      %v5418 = vunpack.c.h.b16 %v287
      %v5419 = vunpack.c.l.b16 %v288
      %v5420 = vunpack.c.h.b16 %v288
      %v5421 = vunpack.c.l.b16 %v289
      %v5422 = vunpack.c.h.b16 %v289
      %v5423 = vunpack.c.l.b16 %v290
      %v5424 = vunpack.c.h.b16 %v290
      %v5425 = vunpack.c.l.b16 %v291
      %v5426 = vunpack.c.h.b16 %v291
      %v5427 = vunpack.c.l.b16 %v292
      %v5428 = vunpack.c.h.b16 %v292
      %v5429 = vunpack.c.l.b16 %v293
      %v5430 = vunpack.c.h.b16 %v293
      %v5431 = vunpack.c.l.b16 %v294
      %v5432 = vunpack.c.h.b16 %v294
      %v5433 = vunpack.c.l.b16 %v295
      %v5434 = vunpack.c.h.b16 %v295
      %v5435 = vunpack.c.l.b16 %v296
      %v5436 = vunpack.c.h.b16 %v296
      %v5437 = vunpack.c.l.b16 %v297
      %v5438 = vunpack.c.h.b16 %v297
      %v5439 = vunpack.c.l.b16 %v298
      %v5440 = vunpack.c.h.b16 %v298
      %v5441 = vunpack.c.l.b16 %v299
      %v5442 = vunpack.c.h.b16 %v299
      %v5443 = vunpack.c.l.b16 %v300
      %v5444 = vunpack.c.h.b16 %v300
      %v5445 = vunpack.c.l.b16 %v301
      %v5446 = vunpack.c.h.b16 %v301
      %v5447 = vunpack.c.l.b16 %v302
      %v5448 = vunpack.c.h.b16 %v302
      %v5449 = vunpack.c.l.b16 %v303
      %v5450 = vunpack.c.h.b16 %v303
      %v5451 = vunpack.c.l.b16 %v304
      %v5452 = vunpack.c.h.b16 %v304
      %v5453 = vunpack.c.l.b16 %v305
      %v5454 = vunpack.c.h.b16 %v305
      %v5455 = vunpack.c.l.b16 %v306
      %v5456 = vunpack.c.h.b16 %v306
      %v5457 = vunpack.c.l.b16 %v307
      %v5458 = vunpack.c.h.b16 %v307
      %v5459 = vunpack.c.l.b16 %v308
      %v5460 = vunpack.c.h.b16 %v308
      %v5461 = vunpack.c.l.b16 %v309
      %v5462 = vunpack.c.h.b16 %v309
      %v5463 = vunpack.c.l.b16 %v310
      %v5464 = vunpack.c.h.b16 %v310
      %v5465 = vunpack.c.l.b16 %v311
      %v5466 = vunpack.c.h.b16 %v311
      %v5467 = vunpack.c.l.b16 %v312
      %v5468 = vunpack.c.h.b16 %v312
      %v5469 = vunpack.c.l.b16 %v313
      %v5470 = vunpack.c.h.b16 %v313
      %v5471 = vunpack.c.l.b16 %v314
      %v5472 = vunpack.c.h.b16 %v314
      %v5473 = vunpack.c.l.b16 %v315
      %v5474 = vunpack.c.h.b16 %v315
      %v5475 = vunpack.c.l.b16 %v316
      %v5476 = vunpack.c.h.b16 %v316
      %v5477 = vunpack.c.l.b16 %v317
      %v5478 = vunpack.c.h.b16 %v317
      %v5479 = vunpack.c.l.b16 %v318
      %v5480 = vunpack.c.h.b16 %v318
      %v5481 = vunpack.c.l.b16 %v319
      %v5482 = vunpack.c.h.b16 %v319
      %v5483 = vunpack.c.l.b16 %v320
      %v5484 = vunpack.c.h.b16 %v320
      %v5485 = vunpack.c.l.b16 %v321
      %v5486 = vunpack.c.h.b16 %v321
      %v5487 = vunpack.c.l.b16 %v322
      %v5488 = vunpack.c.h.b16 %v322
      %v5489 = vunpack.c.l.b16 %v323
      %v5490 = vunpack.c.h.b16 %v323
      %v5491 = vunpack.c.l.b16 %v324
      %v5492 = vunpack.c.h.b16 %v324
      %v5493 = vunpack.c.l.b16 %v325
      %v5494 = vunpack.c.h.b16 %v325
      %v5495 = vunpack.c.l.b16 %v326
      %v5496 = vunpack.c.h.b16 %v326
      %v5497 = vunpack.c.l.b16 %v327
      %v5498 = vunpack.c.h.b16 %v327
      %v5499 = vunpack.c.l.b16 %v328
      %v5500 = vunpack.c.h.b16 %v328
      %v5501 = vunpack.c.l.b16 %v329
      %v5502 = vunpack.c.h.b16 %v329
      %v5503 = vunpack.c.l.b16 %v330
      %v5504 = vunpack.c.h.b16 %v330
      %v5505 = vunpack.c.l.b16 %v331
      %v5506 = vunpack.c.h.b16 %v331
      %v5507 = vunpack.c.l.b16 %v332
      %v5508 = vunpack.c.h.b16 %v332
      %v5509 = vunpack.c.l.b16 %v333
      %v5510 = vunpack.c.h.b16 %v333
      %v5511 = vunpack.c.l.b16 %v334
      %v5512 = vunpack.c.h.b16 %v334
      %v5513 = vunpack.c.l.b16 %v335
      %v5514 = vunpack.c.h.b16 %v335
      %v5515 = vunpack.c.l.b16 %v336
      %v5516 = vunpack.c.h.b16 %v336
      %v5517 = vunpack.c.l.b16 %v337
      %v5518 = vunpack.c.h.b16 %v337
      %v5519 = vunpack.c.l.b16 %v338
      %v5520 = vunpack.c.h.b16 %v338
      %v5521 = vunpack.c.l.b16 %v339
      %v5522 = vunpack.c.h.b16 %v339
      %v5523 = vunpack.c.l.b16 %v340
      %v5524 = vunpack.c.h.b16 %v340
      %v5525 = vunpack.c.l.b16 %v341
      %v5526 = vunpack.c.h.b16 %v341
      %v5527 = vunpack.c.l.b16 %v342
      %v5528 = vunpack.c.h.b16 %v342
      %v5529 = vunpack.c.l.b16 %v343
      %v5530 = vunpack.c.h.b16 %v343
      %v5531 = vunpack.c.l.b16 %v344
      %v5532 = vunpack.c.h.b16 %v344
      %v5533 = vunpack.c.l.b16 %v345
      %v5534 = vunpack.c.h.b16 %v345
      %v5535 = vunpack.c.l.b16 %v346
      %v5536 = vunpack.c.h.b16 %v346
      %v5537 = vunpack.c.l.b16 %v347
      %v5538 = vunpack.c.h.b16 %v347
      %v5539 = vunpack.c.l.b16 %v348
      %v5540 = vunpack.c.h.b16 %v348
      %v5541 = vunpack.c.l.b16 %v349
      %v5542 = vunpack.c.h.b16 %v349
      %v5543 = vunpack.c.l.b16 %v350
      %v5544 = vunpack.c.h.b16 %v350
      %v5545 = vunpack.c.l.b16 %v351
      %v5546 = vunpack.c.h.b16 %v351
      %v5547 = vunpack.c.l.b16 %v352
      %v5548 = vunpack.c.h.b16 %v352
      %v5549 = vunpack.c.l.b16 %v353
      %v5550 = vunpack.c.h.b16 %v353
      %v5551 = vunpack.c.l.b16 %v354
      %v5552 = vunpack.c.h.b16 %v354
      %v5553 = vunpack.c.l.b16 %v355
      %v5554 = vunpack.c.h.b16 %v355
      %v5555 = vunpack.c.l.b16 %v356
      %v5556 = vunpack.c.h.b16 %v356
      %v5557 = vunpack.c.l.b16 %v357
      %v5558 = vunpack.c.h.b16 %v357
      %v5559 = vunpack.c.l.b16 %v358
      %v5560 = vunpack.c.h.b16 %v358
      %v5561 = vunpack.c.l.b16 %v359
      %v5562 = vunpack.c.h.b16 %v359
      %v5563 = vunpack.c.l.b16 %v360
      %v5564 = vunpack.c.h.b16 %v360
      %v5565 = vunpack.c.l.b16 %v361
      %v5566 = vunpack.c.h.b16 %v361
      %v5567 = vunpack.c.l.b16 %v362
      %v5568 = vunpack.c.h.b16 %v362
      %v5569 = vunpack.c.l.b16 %v363
      %v5570 = vunpack.c.h.b16 %v363
      %v5571 = vunpack.c.l.b16 %v364
      %v5572 = vunpack.c.h.b16 %v364
      %v5573 = vunpack.c.l.b16 %v365
      %v5574 = vunpack.c.h.b16 %v365
      %v5575 = vunpack.c.l.b16 %v366
      %v5576 = vunpack.c.h.b16 %v366
      %v5577 = vunpack.c.l.b16 %v367
      %v5578 = vunpack.c.h.b16 %v367
      %v5579 = vunpack.c.l.b16 %v368
      %v5580 = vunpack.c.h.b16 %v368
      %v5581 = vunpack.c.l.b16 %v369
      %v5582 = vunpack.c.h.b16 %v369
      %v5583 = vunpack.c.l.b16 %v370
      %v5584 = vunpack.c.h.b16 %v370
      %v5585 = vunpack.c.l.b16 %v371
      %v5586 = vunpack.c.h.b16 %v371
      %v5587 = vunpack.c.l.b16 %v372
      %v5588 = vunpack.c.h.b16 %v372
      %v5589 = vunpack.c.l.b16 %v373
      %v5590 = vunpack.c.h.b16 %v373
      %v5591 = vunpack.c.l.b16 %v374
      %v5592 = vunpack.c.h.b16 %v374
      %v5593 = vunpack.c.l.b16 %v375
      %v5594 = vunpack.c.h.b16 %v375
      %v5595 = vunpack.c.l.b16 %v376
      %v5596 = vunpack.c.h.b16 %v376
      %v5597 = vunpack.c.l.b16 %v377
      %v5598 = vunpack.c.h.b16 %v377
      %v5599 = vunpack.c.l.b16 %v378
      %v5600 = vunpack.c.h.b16 %v378
      %v5601 = vunpack.c.l.b16 %v379
      %v5602 = vunpack.c.h.b16 %v379
      %v5603 = vunpack.c.l.b16 %v380
      %v5604 = vunpack.c.h.b16 %v380
      %v5605 = vunpack.c.l.b16 %v381
      %v5606 = vunpack.c.h.b16 %v381
      %v5607 = vunpack.c.l.b16 %v382
      %v5608 = vunpack.c.h.b16 %v382
      %v5609 = vunpack.c.l.b16 %v383
      %v5610 = vunpack.c.h.b16 %v383
      %v5611 = vunpack.c.l.b16 %v384
      %v5612 = vunpack.c.h.b16 %v384
      %v5613 = vunpack.c.l.b16 %v385
      %v5614 = vunpack.c.h.b16 %v385
      %v5615 = vunpack.c.l.b16 %v386
      %v5616 = vunpack.c.h.b16 %v386
      %v5617 = vunpack.c.l.b16 %v387
      %v5618 = vunpack.c.h.b16 %v387
      %v5619 = vunpack.c.l.b16 %v388
      %v5620 = vunpack.c.h.b16 %v388
      %v5621 = vunpack.c.l.b16 %v389
      %v5622 = vunpack.c.h.b16 %v389
      %v5623 = vunpack.c.l.b16 %v390
      %v5624 = vunpack.c.h.b16 %v390
      %v5625 = vunpack.c.l.b16 %v391
      %v5626 = vunpack.c.h.b16 %v391
      %v5627 = vunpack.c.l.b16 %v392
      %v5628 = vunpack.c.h.b16 %v392
      %v5629 = vunpack.c.l.b16 %v393
      %v5630 = vunpack.c.h.b16 %v393
      %v5631 = vunpack.c.l.b16 %v394
      %v5632 = vunpack.c.h.b16 %v394
      %v5633 = vunpack.c.l.b16 %v395
      %v5634 = vunpack.c.h.b16 %v395
      %v5635 = vunpack.c.l.b16 %v396
      %v5636 = vunpack.c.h.b16 %v396
      %v5637 = vunpack.c.l.b16 %v397
      %v5638 = vunpack.c.h.b16 %v397
      %v5639 = vunpack.c.l.b16 %v398
      %v5640 = vunpack.c.h.b16 %v398
      %v5641 = vunpack.c.l.b16 %v399
      %v5642 = vunpack.c.h.b16 %v399
      %v5643 = vunpack.c.l.b16 %v400
      %v5644 = vunpack.c.h.b16 %v400
      %v5645 = vunpack.c.l.b16 %v401
      %v5646 = vunpack.c.h.b16 %v401
      %v5647 = vunpack.c.l.b16 %v402
      %v5648 = vunpack.c.h.b16 %v402
      %v5649 = vunpack.c.l.b16 %v403
      %v5650 = vunpack.c.h.b16 %v403
      %v5651 = vunpack.c.l.b16 %v404
      %v5652 = vunpack.c.h.b16 %v404
      %v5653 = vunpack.c.l.b16 %v405
      %v5654 = vunpack.c.h.b16 %v405
      %v5655 = vunpack.c.l.b16 %v406
      %v5656 = vunpack.c.h.b16 %v406
      %v5657 = vunpack.c.l.b16 %v407
      %v5658 = vunpack.c.h.b16 %v407
      %v5659 = vunpack.c.l.b16 %v408
      %v5660 = vunpack.c.h.b16 %v408
      %v5661 = vunpack.c.l.b16 %v409
      %v5662 = vunpack.c.h.b16 %v409
      %v5663 = vunpack.c.l.b16 %v410
      %v5664 = vunpack.c.h.b16 %v410
      %v5665 = vunpack.c.l.b16 %v411
      %v5666 = vunpack.c.h.b16 %v411
      %v5667 = vunpack.c.l.b16 %v412
      %v5668 = vunpack.c.h.b16 %v412
      %v5669 = vunpack.c.l.b16 %v413
      %v5670 = vunpack.c.h.b16 %v413
      %v5671 = vunpack.c.l.b16 %v414
      %v5672 = vunpack.c.h.b16 %v414
      %v5673 = vunpack.c.l.b16 %v415
      %v5674 = vunpack.c.h.b16 %v415
      %v5675 = vunpack.c.l.b16 %v416
      %v5676 = vunpack.c.h.b16 %v416
      %v5677 = vunpack.c.l.b16 %v417
      %v5678 = vunpack.c.h.b16 %v417
      %v5679 = vunpack.c.l.b16 %v418
      %v5680 = vunpack.c.h.b16 %v418
      %v5681 = vunpack.c.l.b16 %v419
      %v5682 = vunpack.c.h.b16 %v419
      %v5683 = vunpack.c.l.b16 %v420
      %v5684 = vunpack.c.h.b16 %v420
      %v5685 = vunpack.c.l.b16 %v421
      %v5686 = vunpack.c.h.b16 %v421
      %v5687 = vunpack.c.l.b16 %v422
      %v5688 = vunpack.c.h.b16 %v422
      %v5689 = vunpack.c.l.b16 %v423
      %v5690 = vunpack.c.h.b16 %v423
      %v5691 = vunpack.c.l.b16 %v424
      %v5692 = vunpack.c.h.b16 %v424
      %v5693 = vunpack.c.l.b16 %v425
      %v5694 = vunpack.c.h.b16 %v425
      %v5695 = vunpack.c.l.b16 %v426
      %v5696 = vunpack.c.h.b16 %v426
      %v5697 = vunpack.c.l.b16 %v427
      %v5698 = vunpack.c.h.b16 %v427
      %v5699 = vunpack.c.l.b16 %v428
      %v5700 = vunpack.c.h.b16 %v428
      %v5701 = vunpack.c.l.b16 %v429
      %v5702 = vunpack.c.h.b16 %v429
      %v5703 = vunpack.c.l.b16 %v430
      %v5704 = vunpack.c.h.b16 %v430
      %v5705 = vunpack.c.l.b16 %v431
      %v5706 = vunpack.c.h.b16 %v431
      %v5707 = vunpack.c.l.b16 %v432
      %v5708 = vunpack.c.h.b16 %v432
      %v5709 = vunpack.c.l.b16 %v433
      %v5710 = vunpack.c.h.b16 %v433
      %v5711 = vunpack.c.l.b16 %v434
      %v5712 = vunpack.c.h.b16 %v434
      %v5713 = vunpack.c.l.b16 %v435
      %v5714 = vunpack.c.h.b16 %v435
      %v5715 = vunpack.c.l.b16 %v436
      %v5716 = vunpack.c.h.b16 %v436
      %v5717 = vunpack.c.l.b16 %v437
      %v5718 = vunpack.c.h.b16 %v437
      %v5719 = vunpack.c.l.b16 %v438
      %v5720 = vunpack.c.h.b16 %v438
      %v5721 = vunpack.c.l.b16 %v439
      %v5722 = vunpack.c.h.b16 %v439
      %v5723 = vunpack.c.l.b16 %v440
      %v5724 = vunpack.c.h.b16 %v440
      %v5725 = vunpack.c.l.b16 %v441
      %v5726 = vunpack.c.h.b16 %v441
      %v5727 = vunpack.c.l.b16 %v442
      %v5728 = vunpack.c.h.b16 %v442
      %v5729 = vunpack.c.l.b16 %v443
      %v5730 = vunpack.c.h.b16 %v443
      %v5731 = vunpack.c.l.b16 %v444
      %v5732 = vunpack.c.h.b16 %v444
      %v5733 = vunpack.c.l.b16 %v445
      %v5734 = vunpack.c.h.b16 %v445
      %v5735 = vunpack.c.l.b16 %v446
      %v5736 = vunpack.c.h.b16 %v446
      %v5737 = vunpack.c.l.b16 %v447
      %v5738 = vunpack.c.h.b16 %v447
      %v5739 = vunpack.c.l.b16 %v448
      %v5740 = vunpack.c.h.b16 %v448
      %v5741 = vunpack.c.l.b16 %v449
      %v5742 = vunpack.c.h.b16 %v449
      %v5743 = vunpack.c.l.b16 %v450
      %v5744 = vunpack.c.h.b16 %v450
      %v5745 = vunpack.c.l.b16 %v451
      %v5746 = vunpack.c.h.b16 %v451
      %v5747 = vunpack.c.l.b16 %v452
      %v5748 = vunpack.c.h.b16 %v452
      %v5749 = vunpack.c.l.b16 %v453
      %v5750 = vunpack.c.h.b16 %v453
      %v5751 = vunpack.c.l.b16 %v454
      %v5752 = vunpack.c.h.b16 %v454
      %v5753 = vunpack.c.l.b16 %v455
      %v5754 = vunpack.c.h.b16 %v455
      %v5755 = vunpack.c.l.b16 %v456
      %v5756 = vunpack.c.h.b16 %v456
      %v5757 = vunpack.c.l.b16 %v457
      %v5758 = vunpack.c.h.b16 %v457
      %v5759 = vunpack.c.l.b16 %v458
      %v5760 = vunpack.c.h.b16 %v458
      %v5761 = vunpack.c.l.b16 %v459
      %v5762 = vunpack.c.h.b16 %v459
      %v5763 = vunpack.c.l.b16 %v460
      %v5764 = vunpack.c.h.b16 %v460
      %v5765 = vunpack.c.l.b16 %v461
      %v5766 = vunpack.c.h.b16 %v461
      %v5767 = vunpack.c.l.b16 %v462
      %v5768 = vunpack.c.h.b16 %v462
      %v5769 = vunpack.c.l.b16 %v463
      %v5770 = vunpack.c.h.b16 %v463
      %v5771 = vunpack.c.l.b16 %v464
      %v5772 = vunpack.c.h.b16 %v464
      %v5773 = vunpack.c.l.b16 %v465
      %v5774 = vunpack.c.h.b16 %v465
      %v5775 = vunpack.c.l.b16 %v466
      %v5776 = vunpack.c.h.b16 %v466
      %v5777 = vunpack.c.l.b16 %v467
      %v5778 = vunpack.c.h.b16 %v467
      %v5779 = vunpack.c.l.b16 %v468
      %v5780 = vunpack.c.h.b16 %v468
      %v5781 = vunpack.c.l.b16 %v469
      %v5782 = vunpack.c.h.b16 %v469
      %v5783 = vunpack.c.l.b16 %v470
      %v5784 = vunpack.c.h.b16 %v470
      %v5785 = vunpack.c.l.b16 %v471
      %v5786 = vunpack.c.h.b16 %v471
      %v5787 = vunpack.c.l.b16 %v472
      %v5788 = vunpack.c.h.b16 %v472
      %v5789 = vunpack.c.l.b16 %v473
      %v5790 = vunpack.c.h.b16 %v473
      %v5791 = vunpack.c.l.b16 %v474
      %v5792 = vunpack.c.h.b16 %v474
      %v5793 = vunpack.c.l.b16 %v475
      %v5794 = vunpack.c.h.b16 %v475
      %v5795 = vunpack.c.l.b16 %v476
      %v5796 = vunpack.c.h.b16 %v476
      %v5797 = vunpack.c.l.b16 %v477
      %v5798 = vunpack.c.h.b16 %v477
      %v5799 = vunpack.c.l.b16 %v478
      %v5800 = vunpack.c.h.b16 %v478
      %v5801 = vunpack.c.l.b16 %v479
      %v5802 = vunpack.c.h.b16 %v479
      %v5803 = vunpack.c.l.b16 %v480
      %v5804 = vunpack.c.h.b16 %v480
      %v5805 = vunpack.c.l.b16 %v481
      %v5806 = vunpack.c.h.b16 %v481
      %v5807 = vunpack.c.l.b16 %v482
      %v5808 = vunpack.c.h.b16 %v482
      %v5809 = vunpack.c.l.b16 %v483
      %v5810 = vunpack.c.h.b16 %v483
      %v5811 = vunpack.c.l.b16 %v484
      %v5812 = vunpack.c.h.b16 %v484
      %v5813 = vunpack.c.l.b16 %v485
      %v5814 = vunpack.c.h.b16 %v485
      %v5815 = vunpack.c.l.b16 %v486
      %v5816 = vunpack.c.h.b16 %v486
      %v5817 = vunpack.c.l.b16 %v487
      %v5818 = vunpack.c.h.b16 %v487
      %v5819 = vunpack.c.l.b16 %v488
      %v5820 = vunpack.c.h.b16 %v488
      %v5821 = vunpack.c.l.b16 %v489
      %v5822 = vunpack.c.h.b16 %v489
      %v5823 = vunpack.c.l.b16 %v490
      %v5824 = vunpack.c.h.b16 %v490
      %v5825 = vunpack.c.l.b16 %v491
      %v5826 = vunpack.c.h.b16 %v491
      %v5827 = vunpack.c.l.b16 %v492
      %v5828 = vunpack.c.h.b16 %v492
      %v5829 = vunpack.c.l.b16 %v493
      %v5830 = vunpack.c.h.b16 %v493
      %v5831 = vunpack.c.l.b16 %v494
      %v5832 = vunpack.c.h.b16 %v494
      %v5833 = vunpack.c.l.b16 %v495
      %v5834 = vunpack.c.h.b16 %v495
      %v5835 = vunpack.c.l.b16 %v496
      %v5836 = vunpack.c.h.b16 %v496
      %v5837 = vunpack.c.l.b16 %v497
      %v5838 = vunpack.c.h.b16 %v497
      %v5839 = vunpack.c.l.b16 %v498
      %v5840 = vunpack.c.h.b16 %v498
      %v5841 = vunpack.c.l.b16 %v499
      %v5842 = vunpack.c.h.b16 %v499
      %v5843 = vunpack.c.l.b16 %v500
      %v5844 = vunpack.c.h.b16 %v500
      %v5845 = vunpack.c.l.b16 %v501
      %v5846 = vunpack.c.h.b16 %v501
      %v5847 = vunpack.c.l.b16 %v502
      %v5848 = vunpack.c.h.b16 %v502
      %v5849 = vunpack.c.l.b16 %v503
      %v5850 = vunpack.c.h.b16 %v503
      %v5851 = vunpack.c.l.b16 %v504
      %v5852 = vunpack.c.h.b16 %v504
      %v5853 = vunpack.c.l.b16 %v505
      %v5854 = vunpack.c.h.b16 %v505
      %v5855 = vunpack.c.l.b16 %v506
      %v5856 = vunpack.c.h.b16 %v506
      %v5857 = vunpack.c.l.b16 %v507
      %v5858 = vunpack.c.h.b16 %v507
      %v5859 = vunpack.c.l.b16 %v508
      %v5860 = vunpack.c.h.b16 %v508
      %v5861 = vunpack.c.l.b16 %v509
      %v5862 = vunpack.c.h.b16 %v509
      %v5863 = vunpack.c.l.b16 %v510
      %v5864 = vunpack.c.h.b16 %v510
      %v5865 = vunpack.c.l.b16 %v511
      %v5866 = vunpack.c.h.b16 %v511
      %v5867 = vunpack.c.l.b16 %v512
      %v5868 = vunpack.c.h.b16 %v512
      %v5869 = vunpack.c.l.b16 %v513
      %v5870 = vunpack.c.h.b16 %v513
      %v5871 = vunpack.c.l.b16 %v514
      %v5872 = vunpack.c.h.b16 %v514
      %v5873 = vunpack.c.l.b16 %v515
      %v5874 = vunpack.c.h.b16 %v515
      %v5875 = vunpack.c.l.b16 %v516
      %v5876 = vunpack.c.h.b16 %v516
      %v5877 = vunpack.c.l.b16 %v517
      %v5878 = vunpack.c.h.b16 %v517
      %v5879 = vunpack.c.l.b16 %v518
      %v5880 = vunpack.c.h.b16 %v518
      %v5881 = vunpack.c.l.b16 %v519
      %v5882 = vunpack.c.h.b16 %v519
      %v5883 = vunpack.c.l.b16 %v520
      %v5884 = vunpack.c.h.b16 %v520
      %v5885 = vunpack.c.l.b16 %v521
      %v5886 = vunpack.c.h.b16 %v521
      %v5887 = vunpack.c.l.b16 %v522
      %v5888 = vunpack.c.h.b16 %v522
      %v5889 = vunpack.c.l.b16 %v523
      %v5890 = vunpack.c.h.b16 %v523
      %v5891 = vunpack.c.l.b16 %v524
      %v5892 = vunpack.c.h.b16 %v524
      %v5893 = vunpack.c.l.b16 %v525
      %v5894 = vunpack.c.h.b16 %v525
      %v5895 = vunpack.c.l.b16 %v526
      %v5896 = vunpack.c.h.b16 %v526
      %v5897 = vunpack.c.l.b16 %v527
      %v5898 = vunpack.c.h.b16 %v527
      %v5899 = vunpack.c.l.b16 %v528
      %v5900 = vunpack.c.h.b16 %v528
      %v5901 = vunpack.c.l.b16 %v529
      %v5902 = vunpack.c.h.b16 %v529
      %v5903 = vunpack.c.l.b16 %v530
      %v5904 = vunpack.c.h.b16 %v530
      %v5905 = vunpack.c.l.b16 %v531
      %v5906 = vunpack.c.h.b16 %v531
      %v5907 = vunpack.c.l.b16 %v532
      %v5908 = vunpack.c.h.b16 %v532
      %v5909 = vunpack.c.l.b16 %v533
      %v5910 = vunpack.c.h.b16 %v533
      %v5911 = vunpack.c.l.b16 %v534
      %v5912 = vunpack.c.h.b16 %v534
      %v5913 = vunpack.c.l.b16 %v535
      %v5914 = vunpack.c.h.b16 %v535
      %v5915 = vunpack.c.l.b16 %v536
      %v5916 = vunpack.c.h.b16 %v536
      %v5917 = vunpack.c.l.b16 %v537
      %v5918 = vunpack.c.h.b16 %v537
      %v5919 = vunpack.c.l.b16 %v538
      %v5920 = vunpack.c.h.b16 %v538
      %v5921 = vunpack.c.l.b16 %v539
      %v5922 = vunpack.c.h.b16 %v539
      %v5923 = vunpack.c.l.b16 %v540
      %v5924 = vunpack.c.h.b16 %v540
      %v5925 = vunpack.c.l.b16 %v541
      %v5926 = vunpack.c.h.b16 %v541
      %v5927 = vunpack.c.l.b16 %v542
      %v5928 = vunpack.c.h.b16 %v542
      %v5929 = vunpack.c.l.b16 %v543
      %v5930 = vunpack.c.h.b16 %v543
      %v5931 = vunpack.c.l.b16 %v544
      %v5932 = vunpack.c.h.b16 %v544
      %v5933 = vunpack.c.l.b16 %v545
      %v5934 = vunpack.c.h.b16 %v545
      %v5935 = vunpack.c.l.b16 %v546
      %v5936 = vunpack.c.h.b16 %v546
      %v5937 = vunpack.c.l.b16 %v547
      %v5938 = vunpack.c.h.b16 %v547
      %v5939 = vunpack.c.l.b16 %v548
      %v5940 = vunpack.c.h.b16 %v548
      %v5941 = vunpack.c.l.b16 %v549
      %v5942 = vunpack.c.h.b16 %v549
      %v5943 = vunpack.c.l.b16 %v550
      %v5944 = vunpack.c.h.b16 %v550
      %v5945 = vunpack.c.l.b16 %v551
      %v5946 = vunpack.c.h.b16 %v551
      %v5947 = vunpack.c.l.b16 %v552
      %v5948 = vunpack.c.h.b16 %v552
      %v5949 = vunpack.c.l.b16 %v553
      %v5950 = vunpack.c.h.b16 %v553
      %v5951 = vunpack.c.l.b16 %v554
      %v5952 = vunpack.c.h.b16 %v554
      %v5953 = vunpack.c.l.b16 %v555
      %v5954 = vunpack.c.h.b16 %v555
      %v5955 = vunpack.c.l.b16 %v556
      %v5956 = vunpack.c.h.b16 %v556
      %v5957 = vunpack.c.l.b16 %v557
      %v5958 = vunpack.c.h.b16 %v557
      %v5959 = vunpack.c.l.b16 %v558
      %v5960 = vunpack.c.h.b16 %v558
      %v5961 = vunpack.c.l.b16 %v559
      %v5962 = vunpack.c.h.b16 %v559
      %v5963 = vunpack.c.l.b16 %v560
      %v5964 = vunpack.c.h.b16 %v560
      %v5965 = vunpack.c.l.b16 %v561
      %v5966 = vunpack.c.h.b16 %v561
      %v5967 = vunpack.c.l.b16 %v562
      %v5968 = vunpack.c.h.b16 %v562
      %v5969 = vunpack.c.l.b16 %v563
      %v5970 = vunpack.c.h.b16 %v563
      %v5971 = vunpack.c.l.b16 %v564
      %v5972 = vunpack.c.h.b16 %v564
      %v5973 = vunpack.c.l.b16 %v565
      %v5974 = vunpack.c.h.b16 %v565
      %v5975 = vunpack.c.l.b16 %v566
      %v5976 = vunpack.c.h.b16 %v566
      %v5977 = vpack.c.b16 %v4961, %v4953
      %v5978 = vpack.c.b16 %v4962, %v4954
      %v5979 = vpack.c.b16 %v4963, %v4955
      %v5980 = vpack.c.b16 %v4964, %v4956
      %v5981 = vpack.c.b16 %v4965, %v4957
      %v5982 = vpack.c.b16 %v4966, %v4958
      %v5983 = vpack.c.b16 %v4967, %v4959
      %v5984 = vpack.c.b16 %v4968, %v4960
      %v5985 = vpack.c.b16 %v4977, %v4969
      %v5986 = vpack.c.b16 %v4978, %v4970
      %v5987 = vpack.c.b16 %v4979, %v4971
      %v5988 = vpack.c.b16 %v4980, %v4972
      %v5989 = vpack.c.b16 %v4981, %v4973
      %v5990 = vpack.c.b16 %v4982, %v4974
      %v5991 = vpack.c.b16 %v4983, %v4975
      %v5992 = vpack.c.b16 %v4984, %v4976
      %v5993 = vpack.c.b16 %v4993, %v4985
      %v5994 = vpack.c.b16 %v4994, %v4986
      %v5995 = vpack.c.b16 %v4995, %v4987
      %v5996 = vpack.c.b16 %v4996, %v4988
      %v5997 = vpack.c.b16 %v4997, %v4989
      %v5998 = vpack.c.b16 %v4998, %v4990
      %v5999 = vpack.c.b16 %v4999, %v4991
      %v6000 = vpack.c.b16 %v5000, %v4992
      %v6001 = vpack.c.b16 %v5009, %v5001
      %v6002 = vpack.c.b16 %v5010, %v5002
      %v6003 = vpack.c.b16 %v5011, %v5003
      %v6004 = vpack.c.b16 %v5012, %v5004
      %v6005 = vpack.c.b16 %v5013, %v5005
      %v6006 = vpack.c.b16 %v5014, %v5006
      %v6007 = vpack.c.b16 %v5015, %v5007
      %v6008 = vpack.c.b16 %v5016, %v5008
      %v6009 = vpack.c.b16 %v5025, %v5017
      %v6010 = vpack.c.b16 %v5026, %v5018
      %v6011 = vpack.c.b16 %v5027, %v5019
      %v6012 = vpack.c.b16 %v5028, %v5020
      %v6013 = vpack.c.b16 %v5029, %v5021
      %v6014 = vpack.c.b16 %v5030, %v5022
      %v6015 = vpack.c.b16 %v5031, %v5023
      %v6016 = vpack.c.b16 %v5032, %v5024
      %v6017 = vpack.c.b16 %v5041, %v5033
      %v6018 = vpack.c.b16 %v5042, %v5034
      %v6019 = vpack.c.b16 %v5043, %v5035
      %v6020 = vpack.c.b16 %v5044, %v5036
      %v6021 = vpack.c.b16 %v5045, %v5037
      %v6022 = vpack.c.b16 %v5046, %v5038
      %v6023 = vpack.c.b16 %v5047, %v5039
      %v6024 = vpack.c.b16 %v5048, %v5040
      %v6025 = vpack.c.b16 %v5057, %v5049
      %v6026 = vpack.c.b16 %v5058, %v5050
      %v6027 = vpack.c.b16 %v5059, %v5051
      %v6028 = vpack.c.b16 %v5060, %v5052
      %v6029 = vpack.c.b16 %v5061, %v5053
      %v6030 = vpack.c.b16 %v5062, %v5054
      %v6031 = vpack.c.b16 %v5063, %v5055
      %v6032 = vpack.c.b16 %v5064, %v5056
      %v6033 = vpack.c.b16 %v5073, %v5065
      %v6034 = vpack.c.b16 %v5074, %v5066
      %v6035 = vpack.c.b16 %v5075, %v5067
      %v6036 = vpack.c.b16 %v5076, %v5068
      %v6037 = vpack.c.b16 %v5077, %v5069
      %v6038 = vpack.c.b16 %v5078, %v5070
      %v6039 = vpack.c.b16 %v5079, %v5071
      %v6040 = vpack.c.b16 %v5080, %v5072
      %v6041 = vpack.c.b16 %v5089, %v5081
      %v6042 = vpack.c.b16 %v5090, %v5082
      %v6043 = vpack.c.b16 %v5091, %v5083
      %v6044 = vpack.c.b16 %v5092, %v5084
      %v6045 = vpack.c.b16 %v5093, %v5085
      %v6046 = vpack.c.b16 %v5094, %v5086
      %v6047 = vpack.c.b16 %v5095, %v5087
      %v6048 = vpack.c.b16 %v5096, %v5088
      %v6049 = vpack.c.b16 %v5105, %v5097
      %v6050 = vpack.c.b16 %v5106, %v5098
      %v6051 = vpack.c.b16 %v5107, %v5099
      %v6052 = vpack.c.b16 %v5108, %v5100
      %v6053 = vpack.c.b16 %v5109, %v5101
      %v6054 = vpack.c.b16 %v5110, %v5102
      %v6055 = vpack.c.b16 %v5111, %v5103
      %v6056 = vpack.c.b16 %v5112, %v5104
      %v6057 = vpack.c.b16 %v5121, %v5113
      %v6058 = vpack.c.b16 %v5122, %v5114
      %v6059 = vpack.c.b16 %v5123, %v5115
      %v6060 = vpack.c.b16 %v5124, %v5116
      %v6061 = vpack.c.b16 %v5125, %v5117
      %v6062 = vpack.c.b16 %v5126, %v5118
      %v6063 = vpack.c.b16 %v5127, %v5119
      %v6064 = vpack.c.b16 %v5128, %v5120
      %v6065 = vpack.c.b16 %v5137, %v5129
      %v6066 = vpack.c.b16 %v5138, %v5130
      %v6067 = vpack.c.b16 %v5139, %v5131
      %v6068 = vpack.c.b16 %v5140, %v5132
      %v6069 = vpack.c.b16 %v5141, %v5133
      %v6070 = vpack.c.b16 %v5142, %v5134
      %v6071 = vpack.c.b16 %v5143, %v5135
      %v6072 = vpack.c.b16 %v5144, %v5136
      %v6073 = vpack.c.b16 %v5153, %v5145
      %v6074 = vpack.c.b16 %v5154, %v5146
      %v6075 = vpack.c.b16 %v5155, %v5147
      %v6076 = vpack.c.b16 %v5156, %v5148
      %v6077 = vpack.c.b16 %v5157, %v5149
      %v6078 = vpack.c.b16 %v5158, %v5150
      %v6079 = vpack.c.b16 %v5159, %v5151
      %v6080 = vpack.c.b16 %v5160, %v5152
      %v6081 = vpack.c.b16 %v5169, %v5161
      %v6082 = vpack.c.b16 %v5170, %v5162
      %v6083 = vpack.c.b16 %v5171, %v5163
      %v6084 = vpack.c.b16 %v5172, %v5164
      %v6085 = vpack.c.b16 %v5173, %v5165
      %v6086 = vpack.c.b16 %v5174, %v5166
      %v6087 = vpack.c.b16 %v5175, %v5167
      %v6088 = vpack.c.b16 %v5176, %v5168
      %v6089 = vpack.c.b16 %v5185, %v5177
      %v6090 = vpack.c.b16 %v5186, %v5178
      %v6091 = vpack.c.b16 %v5187, %v5179
      %v6092 = vpack.c.b16 %v5188, %v5180
      %v6093 = vpack.c.b16 %v5189, %v5181
      %v6094 = vpack.c.b16 %v5190, %v5182
      %v6095 = vpack.c.b16 %v5191, %v5183
      %v6096 = vpack.c.b16 %v5192, %v5184
      %v6097 = vpack.c.b16 %v5201, %v5193
      %v6098 = vpack.c.b16 %v5202, %v5194
      %v6099 = vpack.c.b16 %v5203, %v5195
      %v6100 = vpack.c.b16 %v5204, %v5196
      %v6101 = vpack.c.b16 %v5205, %v5197
      %v6102 = vpack.c.b16 %v5206, %v5198
      %v6103 = vpack.c.b16 %v5207, %v5199
      %v6104 = vpack.c.b16 %v5208, %v5200
      %v6105 = vpack.c.b16 %v5217, %v5209
      %v6106 = vpack.c.b16 %v5218, %v5210
      %v6107 = vpack.c.b16 %v5219, %v5211
      %v6108 = vpack.c.b16 %v5220, %v5212
      %v6109 = vpack.c.b16 %v5221, %v5213
      %v6110 = vpack.c.b16 %v5222, %v5214
      %v6111 = vpack.c.b16 %v5223, %v5215
      %v6112 = vpack.c.b16 %v5224, %v5216
      %v6113 = vpack.c.b16 %v5233, %v5225
      %v6114 = vpack.c.b16 %v5234, %v5226
      %v6115 = vpack.c.b16 %v5235, %v5227
      %v6116 = vpack.c.b16 %v5236, %v5228
      %v6117 = vpack.c.b16 %v5237, %v5229
      %v6118 = vpack.c.b16 %v5238, %v5230
      %v6119 = vpack.c.b16 %v5239, %v5231
      %v6120 = vpack.c.b16 %v5240, %v5232
      %v6121 = vpack.c.b16 %v5249, %v5241
      %v6122 = vpack.c.b16 %v5250, %v5242
      %v6123 = vpack.c.b16 %v5251, %v5243
      %v6124 = vpack.c.b16 %v5252, %v5244
      %v6125 = vpack.c.b16 %v5253, %v5245
      %v6126 = vpack.c.b16 %v5254, %v5246
      %v6127 = vpack.c.b16 %v5255, %v5247
      %v6128 = vpack.c.b16 %v5256, %v5248
      %v6129 = vpack.c.b16 %v5265, %v5257
      %v6130 = vpack.c.b16 %v5266, %v5258
      %v6131 = vpack.c.b16 %v5267, %v5259
      %v6132 = vpack.c.b16 %v5268, %v5260
      %v6133 = vpack.c.b16 %v5269, %v5261
      %v6134 = vpack.c.b16 %v5270, %v5262
      %v6135 = vpack.c.b16 %v5271, %v5263
      %v6136 = vpack.c.b16 %v5272, %v5264
      %v6137 = vpack.c.b16 %v5281, %v5273
      %v6138 = vpack.c.b16 %v5282, %v5274
      %v6139 = vpack.c.b16 %v5283, %v5275
      %v6140 = vpack.c.b16 %v5284, %v5276
      %v6141 = vpack.c.b16 %v5285, %v5277
      %v6142 = vpack.c.b16 %v5286, %v5278
      %v6143 = vpack.c.b16 %v5287, %v5279
      %v6144 = vpack.c.b16 %v5288, %v5280
      %v6145 = vpack.c.b16 %v5297, %v5289
      %v6146 = vpack.c.b16 %v5298, %v5290
      %v6147 = vpack.c.b16 %v5299, %v5291
      %v6148 = vpack.c.b16 %v5300, %v5292
      %v6149 = vpack.c.b16 %v5301, %v5293
      %v6150 = vpack.c.b16 %v5302, %v5294
      %v6151 = vpack.c.b16 %v5303, %v5295
      %v6152 = vpack.c.b16 %v5304, %v5296
      %v6153 = vpack.c.b16 %v5313, %v5305
      %v6154 = vpack.c.b16 %v5314, %v5306
      %v6155 = vpack.c.b16 %v5315, %v5307
      %v6156 = vpack.c.b16 %v5316, %v5308
      %v6157 = vpack.c.b16 %v5317, %v5309
      %v6158 = vpack.c.b16 %v5318, %v5310
      %v6159 = vpack.c.b16 %v5319, %v5311
      %v6160 = vpack.c.b16 %v5320, %v5312
      %v6161 = vpack.c.b16 %v5329, %v5321
      %v6162 = vpack.c.b16 %v5330, %v5322
      %v6163 = vpack.c.b16 %v5331, %v5323
      %v6164 = vpack.c.b16 %v5332, %v5324
      %v6165 = vpack.c.b16 %v5333, %v5325
      %v6166 = vpack.c.b16 %v5334, %v5326
      %v6167 = vpack.c.b16 %v5335, %v5327
      %v6168 = vpack.c.b16 %v5336, %v5328
      %v6169 = vpack.c.b16 %v5345, %v5337
      %v6170 = vpack.c.b16 %v5346, %v5338
      %v6171 = vpack.c.b16 %v5347, %v5339
      %v6172 = vpack.c.b16 %v5348, %v5340
      %v6173 = vpack.c.b16 %v5349, %v5341
      %v6174 = vpack.c.b16 %v5350, %v5342
      %v6175 = vpack.c.b16 %v5351, %v5343
      %v6176 = vpack.c.b16 %v5352, %v5344
      %v6177 = vpack.c.b16 %v5361, %v5353
      %v6178 = vpack.c.b16 %v5362, %v5354
      %v6179 = vpack.c.b16 %v5363, %v5355
      %v6180 = vpack.c.b16 %v5364, %v5356
      %v6181 = vpack.c.b16 %v5365, %v5357
      %v6182 = vpack.c.b16 %v5366, %v5358
      %v6183 = vpack.c.b16 %v5367, %v5359
      %v6184 = vpack.c.b16 %v5368, %v5360
      %v6185 = vpack.c.b16 %v5377, %v5369
      %v6186 = vpack.c.b16 %v5378, %v5370
      %v6187 = vpack.c.b16 %v5379, %v5371
      %v6188 = vpack.c.b16 %v5380, %v5372
      %v6189 = vpack.c.b16 %v5381, %v5373
      %v6190 = vpack.c.b16 %v5382, %v5374
      %v6191 = vpack.c.b16 %v5383, %v5375
      %v6192 = vpack.c.b16 %v5384, %v5376
      %v6193 = vpack.c.b16 %v5393, %v5385
      %v6194 = vpack.c.b16 %v5394, %v5386
      %v6195 = vpack.c.b16 %v5395, %v5387
      %v6196 = vpack.c.b16 %v5396, %v5388
      %v6197 = vpack.c.b16 %v5397, %v5389
      %v6198 = vpack.c.b16 %v5398, %v5390
      %v6199 = vpack.c.b16 %v5399, %v5391
      %v6200 = vpack.c.b16 %v5400, %v5392
      %v6201 = vpack.c.b16 %v5409, %v5401
      %v6202 = vpack.c.b16 %v5410, %v5402
      %v6203 = vpack.c.b16 %v5411, %v5403
      %v6204 = vpack.c.b16 %v5412, %v5404
      %v6205 = vpack.c.b16 %v5413, %v5405
      %v6206 = vpack.c.b16 %v5414, %v5406
      %v6207 = vpack.c.b16 %v5415, %v5407
      %v6208 = vpack.c.b16 %v5416, %v5408
      %v6209 = vpack.c.b16 %v5425, %v5417
      %v6210 = vpack.c.b16 %v5426, %v5418
      %v6211 = vpack.c.b16 %v5427, %v5419
      %v6212 = vpack.c.b16 %v5428, %v5420
      %v6213 = vpack.c.b16 %v5429, %v5421
      %v6214 = vpack.c.b16 %v5430, %v5422
      %v6215 = vpack.c.b16 %v5431, %v5423
      %v6216 = vpack.c.b16 %v5432, %v5424
      %v6217 = vpack.c.b16 %v5441, %v5433
      %v6218 = vpack.c.b16 %v5442, %v5434
      %v6219 = vpack.c.b16 %v5443, %v5435
      %v6220 = vpack.c.b16 %v5444, %v5436
      %v6221 = vpack.c.b16 %v5445, %v5437
      %v6222 = vpack.c.b16 %v5446, %v5438
      %v6223 = vpack.c.b16 %v5447, %v5439
      %v6224 = vpack.c.b16 %v5448, %v5440
      %v6225 = vpack.c.b16 %v5457, %v5449
      %v6226 = vpack.c.b16 %v5458, %v5450
      %v6227 = vpack.c.b16 %v5459, %v5451
      %v6228 = vpack.c.b16 %v5460, %v5452
      %v6229 = vpack.c.b16 %v5461, %v5453
      %v6230 = vpack.c.b16 %v5462, %v5454
      %v6231 = vpack.c.b16 %v5463, %v5455
      %v6232 = vpack.c.b16 %v5464, %v5456
      %v6233 = vpack.c.b16 %v5473, %v5465
      %v6234 = vpack.c.b16 %v5474, %v5466
      %v6235 = vpack.c.b16 %v5475, %v5467
      %v6236 = vpack.c.b16 %v5476, %v5468
      %v6237 = vpack.c.b16 %v5477, %v5469
      %v6238 = vpack.c.b16 %v5478, %v5470
      %v6239 = vpack.c.b16 %v5479, %v5471
      %v6240 = vpack.c.b16 %v5480, %v5472
      %v6241 = vpack.c.b16 %v5489, %v5481
      %v6242 = vpack.c.b16 %v5490, %v5482
      %v6243 = vpack.c.b16 %v5491, %v5483
      %v6244 = vpack.c.b16 %v5492, %v5484
      %v6245 = vpack.c.b16 %v5493, %v5485
      %v6246 = vpack.c.b16 %v5494, %v5486
      %v6247 = vpack.c.b16 %v5495, %v5487
      %v6248 = vpack.c.b16 %v5496, %v5488
      %v6249 = vpack.c.b16 %v5505, %v5497
      %v6250 = vpack.c.b16 %v5506, %v5498
      %v6251 = vpack.c.b16 %v5507, %v5499
      %v6252 = vpack.c.b16 %v5508, %v5500
      %v6253 = vpack.c.b16 %v5509, %v5501
      %v6254 = vpack.c.b16 %v5510, %v5502
      %v6255 = vpack.c.b16 %v5511, %v5503
      %v6256 = vpack.c.b16 %v5512, %v5504
      %v6257 = vpack.c.b16 %v5521, %v5513
      %v6258 = vpack.c.b16 %v5522, %v5514
      %v6259 = vpack.c.b16 %v5523, %v5515
      %v6260 = vpack.c.b16 %v5524, %v5516
      %v6261 = vpack.c.b16 %v5525, %v5517
      %v6262 = vpack.c.b16 %v5526, %v5518
      %v6263 = vpack.c.b16 %v5527, %v5519
      %v6264 = vpack.c.b16 %v5528, %v5520
      %v6265 = vpack.c.b16 %v5537, %v5529
      %v6266 = vpack.c.b16 %v5538, %v5530
      %v6267 = vpack.c.b16 %v5539, %v5531
      %v6268 = vpack.c.b16 %v5540, %v5532
      %v6269 = vpack.c.b16 %v5541, %v5533
      %v6270 = vpack.c.b16 %v5542, %v5534
      %v6271 = vpack.c.b16 %v5543, %v5535
      %v6272 = vpack.c.b16 %v5544, %v5536
      %v6273 = vpack.c.b16 %v5553, %v5545
      %v6274 = vpack.c.b16 %v5554, %v5546
      %v6275 = vpack.c.b16 %v5555, %v5547
      %v6276 = vpack.c.b16 %v5556, %v5548
      %v6277 = vpack.c.b16 %v5557, %v5549
      %v6278 = vpack.c.b16 %v5558, %v5550
      %v6279 = vpack.c.b16 %v5559, %v5551
      %v6280 = vpack.c.b16 %v5560, %v5552
      %v6281 = vpack.c.b16 %v5569, %v5561
      %v6282 = vpack.c.b16 %v5570, %v5562
      %v6283 = vpack.c.b16 %v5571, %v5563
      %v6284 = vpack.c.b16 %v5572, %v5564
      %v6285 = vpack.c.b16 %v5573, %v5565
      %v6286 = vpack.c.b16 %v5574, %v5566
      %v6287 = vpack.c.b16 %v5575, %v5567
      %v6288 = vpack.c.b16 %v5576, %v5568
      %v6289 = vpack.c.b16 %v5585, %v5577
      %v6290 = vpack.c.b16 %v5586, %v5578
      %v6291 = vpack.c.b16 %v5587, %v5579
      %v6292 = vpack.c.b16 %v5588, %v5580
      %v6293 = vpack.c.b16 %v5589, %v5581
      %v6294 = vpack.c.b16 %v5590, %v5582
      %v6295 = vpack.c.b16 %v5591, %v5583
      %v6296 = vpack.c.b16 %v5592, %v5584
      %v6297 = vpack.c.b16 %v5601, %v5593
      %v6298 = vpack.c.b16 %v5602, %v5594
      %v6299 = vpack.c.b16 %v5603, %v5595
      %v6300 = vpack.c.b16 %v5604, %v5596
      %v6301 = vpack.c.b16 %v5605, %v5597
      %v6302 = vpack.c.b16 %v5606, %v5598
      %v6303 = vpack.c.b16 %v5607, %v5599
      %v6304 = vpack.c.b16 %v5608, %v5600
      %v6305 = vpack.c.b16 %v5617, %v5609
      %v6306 = vpack.c.b16 %v5618, %v5610
      %v6307 = vpack.c.b16 %v5619, %v5611
      %v6308 = vpack.c.b16 %v5620, %v5612
      %v6309 = vpack.c.b16 %v5621, %v5613
      %v6310 = vpack.c.b16 %v5622, %v5614
      %v6311 = vpack.c.b16 %v5623, %v5615
      %v6312 = vpack.c.b16 %v5624, %v5616
      %v6313 = vpack.c.b16 %v5633, %v5625
      %v6314 = vpack.c.b16 %v5634, %v5626
      %v6315 = vpack.c.b16 %v5635, %v5627
      %v6316 = vpack.c.b16 %v5636, %v5628
      %v6317 = vpack.c.b16 %v5637, %v5629
      %v6318 = vpack.c.b16 %v5638, %v5630
      %v6319 = vpack.c.b16 %v5639, %v5631
      %v6320 = vpack.c.b16 %v5640, %v5632
      %v6321 = vpack.c.b16 %v5649, %v5641
      %v6322 = vpack.c.b16 %v5650, %v5642
      %v6323 = vpack.c.b16 %v5651, %v5643
      %v6324 = vpack.c.b16 %v5652, %v5644
      %v6325 = vpack.c.b16 %v5653, %v5645
      %v6326 = vpack.c.b16 %v5654, %v5646
      %v6327 = vpack.c.b16 %v5655, %v5647
      %v6328 = vpack.c.b16 %v5656, %v5648
      %v6329 = vpack.c.b16 %v5665, %v5657
      %v6330 = vpack.c.b16 %v5666, %v5658
      %v6331 = vpack.c.b16 %v5667, %v5659
      %v6332 = vpack.c.b16 %v5668, %v5660
      %v6333 = vpack.c.b16 %v5669, %v5661
      %v6334 = vpack.c.b16 %v5670, %v5662
      %v6335 = vpack.c.b16 %v5671, %v5663
      %v6336 = vpack.c.b16 %v5672, %v5664
      %v6337 = vpack.c.b16 %v5681, %v5673
      %v6338 = vpack.c.b16 %v5682, %v5674
      %v6339 = vpack.c.b16 %v5683, %v5675
      %v6340 = vpack.c.b16 %v5684, %v5676
      %v6341 = vpack.c.b16 %v5685, %v5677
      %v6342 = vpack.c.b16 %v5686, %v5678
      %v6343 = vpack.c.b16 %v5687, %v5679
      %v6344 = vpack.c.b16 %v5688, %v5680
      %v6345 = vpack.c.b16 %v5697, %v5689
      %v6346 = vpack.c.b16 %v5698, %v5690
      %v6347 = vpack.c.b16 %v5699, %v5691
      %v6348 = vpack.c.b16 %v5700, %v5692
      %v6349 = vpack.c.b16 %v5701, %v5693
      %v6350 = vpack.c.b16 %v5702, %v5694
      %v6351 = vpack.c.b16 %v5703, %v5695
      %v6352 = vpack.c.b16 %v5704, %v5696
      %v6353 = vpack.c.b16 %v5713, %v5705
      %v6354 = vpack.c.b16 %v5714, %v5706
      %v6355 = vpack.c.b16 %v5715, %v5707
      %v6356 = vpack.c.b16 %v5716, %v5708
      %v6357 = vpack.c.b16 %v5717, %v5709
      %v6358 = vpack.c.b16 %v5718, %v5710
      %v6359 = vpack.c.b16 %v5719, %v5711
      %v6360 = vpack.c.b16 %v5720, %v5712
      %v6361 = vpack.c.b16 %v5729, %v5721
      %v6362 = vpack.c.b16 %v5730, %v5722
      %v6363 = vpack.c.b16 %v5731, %v5723
      %v6364 = vpack.c.b16 %v5732, %v5724
      %v6365 = vpack.c.b16 %v5733, %v5725
      %v6366 = vpack.c.b16 %v5734, %v5726
      %v6367 = vpack.c.b16 %v5735, %v5727
      %v6368 = vpack.c.b16 %v5736, %v5728
      %v6369 = vpack.c.b16 %v5745, %v5737
      %v6370 = vpack.c.b16 %v5746, %v5738
      %v6371 = vpack.c.b16 %v5747, %v5739
      %v6372 = vpack.c.b16 %v5748, %v5740
      %v6373 = vpack.c.b16 %v5749, %v5741
      %v6374 = vpack.c.b16 %v5750, %v5742
      %v6375 = vpack.c.b16 %v5751, %v5743
      %v6376 = vpack.c.b16 %v5752, %v5744
      %v6377 = vpack.c.b16 %v5761, %v5753
      %v6378 = vpack.c.b16 %v5762, %v5754
      %v6379 = vpack.c.b16 %v5763, %v5755
      %v6380 = vpack.c.b16 %v5764, %v5756
      %v6381 = vpack.c.b16 %v5765, %v5757
      %v6382 = vpack.c.b16 %v5766, %v5758
      %v6383 = vpack.c.b16 %v5767, %v5759
      %v6384 = vpack.c.b16 %v5768, %v5760
      %v6385 = vpack.c.b16 %v5777, %v5769
      %v6386 = vpack.c.b16 %v5778, %v5770
      %v6387 = vpack.c.b16 %v5779, %v5771
      %v6388 = vpack.c.b16 %v5780, %v5772
      %v6389 = vpack.c.b16 %v5781, %v5773
      %v6390 = vpack.c.b16 %v5782, %v5774
      %v6391 = vpack.c.b16 %v5783, %v5775
      %v6392 = vpack.c.b16 %v5784, %v5776
      %v6393 = vpack.c.b16 %v5793, %v5785
      %v6394 = vpack.c.b16 %v5794, %v5786
      %v6395 = vpack.c.b16 %v5795, %v5787
      %v6396 = vpack.c.b16 %v5796, %v5788
      %v6397 = vpack.c.b16 %v5797, %v5789
      %v6398 = vpack.c.b16 %v5798, %v5790
      %v6399 = vpack.c.b16 %v5799, %v5791
      %v6400 = vpack.c.b16 %v5800, %v5792
      %v6401 = vpack.c.b16 %v5809, %v5801
      %v6402 = vpack.c.b16 %v5810, %v5802
      %v6403 = vpack.c.b16 %v5811, %v5803
      %v6404 = vpack.c.b16 %v5812, %v5804
      %v6405 = vpack.c.b16 %v5813, %v5805
      %v6406 = vpack.c.b16 %v5814, %v5806
      %v6407 = vpack.c.b16 %v5815, %v5807
      %v6408 = vpack.c.b16 %v5816, %v5808
      %v6409 = vpack.c.b16 %v5825, %v5817
      %v6410 = vpack.c.b16 %v5826, %v5818
      %v6411 = vpack.c.b16 %v5827, %v5819
      %v6412 = vpack.c.b16 %v5828, %v5820
      %v6413 = vpack.c.b16 %v5829, %v5821
      %v6414 = vpack.c.b16 %v5830, %v5822
      %v6415 = vpack.c.b16 %v5831, %v5823
      %v6416 = vpack.c.b16 %v5832, %v5824
      %v6417 = vpack.c.b16 %v5841, %v5833
      %v6418 = vpack.c.b16 %v5842, %v5834
      %v6419 = vpack.c.b16 %v5843, %v5835
      %v6420 = vpack.c.b16 %v5844, %v5836
      %v6421 = vpack.c.b16 %v5845, %v5837
      %v6422 = vpack.c.b16 %v5846, %v5838
      %v6423 = vpack.c.b16 %v5847, %v5839
      %v6424 = vpack.c.b16 %v5848, %v5840
      %v6425 = vpack.c.b16 %v5857, %v5849
      %v6426 = vpack.c.b16 %v5858, %v5850
      %v6427 = vpack.c.b16 %v5859, %v5851
      %v6428 = vpack.c.b16 %v5860, %v5852
      %v6429 = vpack.c.b16 %v5861, %v5853
      %v6430 = vpack.c.b16 %v5862, %v5854
      %v6431 = vpack.c.b16 %v5863, %v5855
      %v6432 = vpack.c.b16 %v5864, %v5856
      %v6433 = vpack.c.b16 %v5873, %v5865
      %v6434 = vpack.c.b16 %v5874, %v5866
      %v6435 = vpack.c.b16 %v5875, %v5867
      %v6436 = vpack.c.b16 %v5876, %v5868
      %v6437 = vpack.c.b16 %v5877, %v5869
      %v6438 = vpack.c.b16 %v5878, %v5870
      %v6439 = vpack.c.b16 %v5879, %v5871
      %v6440 = vpack.c.b16 %v5880, %v5872
      %v6441 = vpack.c.b16 %v5889, %v5881
      %v6442 = vpack.c.b16 %v5890, %v5882
      %v6443 = vpack.c.b16 %v5891, %v5883
      %v6444 = vpack.c.b16 %v5892, %v5884
      %v6445 = vpack.c.b16 %v5893, %v5885
      %v6446 = vpack.c.b16 %v5894, %v5886
      %v6447 = vpack.c.b16 %v5895, %v5887
      %v6448 = vpack.c.b16 %v5896, %v5888
      %v6449 = vpack.c.b16 %v5905, %v5897
      %v6450 = vpack.c.b16 %v5906, %v5898
      %v6451 = vpack.c.b16 %v5907, %v5899
      %v6452 = vpack.c.b16 %v5908, %v5900
      %v6453 = vpack.c.b16 %v5909, %v5901
      %v6454 = vpack.c.b16 %v5910, %v5902
      %v6455 = vpack.c.b16 %v5911, %v5903
      %v6456 = vpack.c.b16 %v5912, %v5904
      %v6457 = vpack.c.b16 %v5921, %v5913
      %v6458 = vpack.c.b16 %v5922, %v5914
      %v6459 = vpack.c.b16 %v5923, %v5915
      %v6460 = vpack.c.b16 %v5924, %v5916
      %v6461 = vpack.c.b16 %v5925, %v5917
      %v6462 = vpack.c.b16 %v5926, %v5918
      %v6463 = vpack.c.b16 %v5927, %v5919
      %v6464 = vpack.c.b16 %v5928, %v5920
      %v6465 = vpack.c.b16 %v5937, %v5929
      %v6466 = vpack.c.b16 %v5938, %v5930
      %v6467 = vpack.c.b16 %v5939, %v5931
      %v6468 = vpack.c.b16 %v5940, %v5932
      %v6469 = vpack.c.b16 %v5941, %v5933
      %v6470 = vpack.c.b16 %v5942, %v5934
      %v6471 = vpack.c.b16 %v5943, %v5935
      %v6472 = vpack.c.b16 %v5944, %v5936
      %v6473 = vpack.c.b16 %v5953, %v5945
      %v6474 = vpack.c.b16 %v5954, %v5946
      %v6475 = vpack.c.b16 %v5955, %v5947
      %v6476 = vpack.c.b16 %v5956, %v5948
      %v6477 = vpack.c.b16 %v5957, %v5949
      %v6478 = vpack.c.b16 %v5958, %v5950
      %v6479 = vpack.c.b16 %v5959, %v5951
      %v6480 = vpack.c.b16 %v5960, %v5952
      %v6481 = vpack.c.b16 %v5969, %v5961
      %v6482 = vpack.c.b16 %v5970, %v5962
      %v6483 = vpack.c.b16 %v5971, %v5963
      %v6484 = vpack.c.b16 %v5972, %v5964
      %v6485 = vpack.c.b16 %v5973, %v5965
      %v6486 = vpack.c.b16 %v5974, %v5966
      %v6487 = vpack.c.b16 %v5975, %v5967
      %v6488 = vpack.c.b16 %v5976, %v5968
      %7001 = vmatprep.subr.bf16.mxu0 %v5978
      %7002 = vmatpush1.bf16.msra.mxu0 %v5977
      %7003 = vmatprep.subr.bf16.mxu0 %v5986
      %7004 = vmatpush1.bf16.msra.mxu0 %v5985
      %7005 = vmatprep.subr.bf16.mxu0 %v5994
      %7006 = vmatpush1.bf16.msra.mxu0 %v5993
      %7007 = vmatprep.subr.bf16.mxu0 %v6002
      %7008 = vmatpush1.bf16.msra.mxu0 %v6001
      %7009 = vmatprep.subr.bf16.mxu0 %v6010
      %7010 = vmatpush1.bf16.msra.mxu0 %v6009
      %7011 = vmatprep.subr.bf16.mxu0 %v6018
      %7012 = vmatpush1.bf16.msra.mxu0 %v6017
      %7013 = vmatprep.subr.bf16.mxu0 %v6026
      %7014 = vmatpush1.bf16.msra.mxu0 %v6025
      %7015 = vmatprep.subr.bf16.mxu0 %v6034
      %7016 = vmatpush1.bf16.msra.mxu0 %v6033
      %7017 = vmatprep.subr.bf16.mxu0 %v6042
      %7018 = vmatpush1.bf16.msra.mxu0 %v6041
      %7019 = vmatprep.subr.bf16.mxu0 %v6050
      %7020 = vmatpush1.bf16.msra.mxu0 %v6049
      %7021 = vmatprep.subr.bf16.mxu0 %v6058
      %7022 = vmatpush1.bf16.msra.mxu0 %v6057
      %7023 = vmatprep.subr.bf16.mxu0 %v6066
      %7024 = vmatpush1.bf16.msra.mxu0 %v6065
      %7025 = vmatprep.subr.bf16.mxu0 %v6074
      %7026 = vmatpush1.bf16.msra.mxu0 %v6073
      %7027 = vmatprep.subr.bf16.mxu0 %v6082
      %7028 = vmatpush1.bf16.msra.mxu0 %v6081
      %7029 = vmatprep.subr.bf16.mxu0 %v6090
      %7030 = vmatpush1.bf16.msra.mxu0 %v6089
      %7031 = vmatprep.subr.bf16.mxu0 %v6098
      %7032 = vmatpush1.bf16.msra.mxu0 %v6097
      %7033 = vmatprep.mubr.bf16.mxu0 %v1218
      %7034 = vmatmul.mubr.bf16.gmra.mrb[0].mxu0 %v1217
      %v7035 = vpop.f32.mrb[0].mxu0
      %v7036 = vadd.f32 %v3943, %v7035
      %v7037 = vpop.f32.mrb[0].mxu0
      %v7038 = vadd.f32 %v3945, %v7037
      %v7039 = vpop.f32.mrb[0].mxu0
      %v7040 = vpop.f32.mrb[0].mxu0
      %7041 = vdwg.mxu0
      %7042 = vmatprep.subr.bf16.mxu0 %v6106
      %7043 = vmatpush1.bf16.msra.mxu0 %v6105
      %7044 = vmatprep.subr.bf16.mxu0 %v6114
      %7045 = vmatpush1.bf16.msra.mxu0 %v6113
      %7046 = vmatprep.subr.bf16.mxu0 %v6122
      %7047 = vmatpush1.bf16.msra.mxu0 %v6121
      %7048 = vmatprep.subr.bf16.mxu0 %v6130
      %7049 = vmatpush1.bf16.msra.mxu0 %v6129
      %7050 = vmatprep.subr.bf16.mxu0 %v6138
      %7051 = vmatpush1.bf16.msra.mxu0 %v6137
      %7052 = vmatprep.subr.bf16.mxu0 %v6146
      %7053 = vmatpush1.bf16.msra.mxu0 %v6145
      %7054 = vmatprep.subr.bf16.mxu0 %v6154
      %7055 = vmatpush1.bf16.msra.mxu0 %v6153
      %7056 = vmatprep.subr.bf16.mxu0 %v6162
      %7057 = vmatpush1.bf16.msra.mxu0 %v6161
      %7058 = vmatprep.subr.bf16.mxu0 %v6170
      %7059 = vmatpush1.bf16.msra.mxu0 %v6169
      %7060 = vmatprep.subr.bf16.mxu0 %v6178
      %7061 = vmatpush1.bf16.msra.mxu0 %v6177
      %7062 = vmatprep.subr.bf16.mxu0 %v6186
      %7063 = vmatpush1.bf16.msra.mxu0 %v6185
      %7064 = vmatprep.subr.bf16.mxu0 %v6194
      %7065 = vmatpush1.bf16.msra.mxu0 %v6193
      %7066 = vmatprep.subr.bf16.mxu0 %v6202
      %7067 = vmatpush1.bf16.msra.mxu0 %v6201
      %7068 = vmatprep.subr.bf16.mxu0 %v6210
      %7069 = vmatpush1.bf16.msra.mxu0 %v6209
      %7070 = vmatprep.subr.bf16.mxu0 %v6218
      %7071 = vmatpush1.bf16.msra.mxu0 %v6217
      %7072 = vmatprep.subr.bf16.mxu0 %v6226
      %7073 = vmatpush1.bf16.msra.mxu0 %v6225
      %7074 = vmatprep.mubr.bf16.mxu0 %v1220
      %7075 = vmatmul.mubr.bf16.gmra.mrb[0].mxu0 %v1219
      %v7076 = vpop.f32.mrb[0].mxu0
      %v7077 = vadd.f32 %v7036, %v7076
      %v7078 = vpop.f32.mrb[0].mxu0
      %v7079 = vadd.f32 %v7038, %v7078
      %v7080 = vpop.f32.mrb[0].mxu0
      %v7081 = vpop.f32.mrb[0].mxu0
      %7082 = vdwg.mxu0
      %7083 = vmatprep.subr.bf16.mxu0 %v6234
      %7084 = vmatpush1.bf16.msra.mxu0 %v6233
      %7085 = vmatprep.subr.bf16.mxu0 %v6242
      %7086 = vmatpush1.bf16.msra.mxu0 %v6241
      %7087 = vmatprep.subr.bf16.mxu0 %v6250
      %7088 = vmatpush1.bf16.msra.mxu0 %v6249
      %7089 = vmatprep.subr.bf16.mxu0 %v6258
      %7090 = vmatpush1.bf16.msra.mxu0 %v6257
      %7091 = vmatprep.subr.bf16.mxu0 %v6266
      %7092 = vmatpush1.bf16.msra.mxu0 %v6265
      %7093 = vmatprep.subr.bf16.mxu0 %v6274
      %7094 = vmatpush1.bf16.msra.mxu0 %v6273
      %7095 = vmatprep.subr.bf16.mxu0 %v6282
      %7096 = vmatpush1.bf16.msra.mxu0 %v6281
      %7097 = vmatprep.subr.bf16.mxu0 %v6290
      %7098 = vmatpush1.bf16.msra.mxu0 %v6289
      %7099 = vmatprep.subr.bf16.mxu0 %v6298
      %7100 = vmatpush1.bf16.msra.mxu0 %v6297
      %7101 = vmatprep.subr.bf16.mxu0 %v6306
      %7102 = vmatpush1.bf16.msra.mxu0 %v6305
      %7103 = vmatprep.subr.bf16.mxu0 %v6314
      %7104 = vmatpush1.bf16.msra.mxu0 %v6313
      %7105 = vmatprep.subr.bf16.mxu0 %v6322
      %7106 = vmatpush1.bf16.msra.mxu0 %v6321
      %7107 = vmatprep.subr.bf16.mxu0 %v6330
      %7108 = vmatpush1.bf16.msra.mxu0 %v6329
      %7109 = vmatprep.subr.bf16.mxu0 %v6338
      %7110 = vmatpush1.bf16.msra.mxu0 %v6337
      %7111 = vmatprep.subr.bf16.mxu0 %v6346
      %7112 = vmatpush1.bf16.msra.mxu0 %v6345
      %7113 = vmatprep.subr.bf16.mxu0 %v6354
      %7114 = vmatpush1.bf16.msra.mxu0 %v6353
      %7115 = vmatprep.mubr.bf16.mxu0 %v1222
      %7116 = vmatmul.mubr.bf16.gmra.mrb[0].mxu0 %v1221
      %v7117 = vpop.f32.mrb[0].mxu0
      %v7118 = vadd.f32 %v7077, %v7117
      %v7119 = vpop.f32.mrb[0].mxu0
      %v7120 = vadd.f32 %v7079, %v7119
      %v7121 = vpop.f32.mrb[0].mxu0
      %v7122 = vpop.f32.mrb[0].mxu0
      %7123 = vdwg.mxu0
      %7124 = vmatprep.subr.bf16.mxu0 %v6362
      %7125 = vmatpush1.bf16.msra.mxu0 %v6361
      %7126 = vmatprep.subr.bf16.mxu0 %v6370
      %7127 = vmatpush1.bf16.msra.mxu0 %v6369
      %7128 = vmatprep.subr.bf16.mxu0 %v6378
      %7129 = vmatpush1.bf16.msra.mxu0 %v6377
      %7130 = vmatprep.subr.bf16.mxu0 %v6386
      %7131 = vmatpush1.bf16.msra.mxu0 %v6385
      %7132 = vmatprep.subr.bf16.mxu0 %v6394
      %7133 = vmatpush1.bf16.msra.mxu0 %v6393
      %7134 = vmatprep.subr.bf16.mxu0 %v6402
      %7135 = vmatpush1.bf16.msra.mxu0 %v6401
      %7136 = vmatprep.subr.bf16.mxu0 %v6410
      %7137 = vmatpush1.bf16.msra.mxu0 %v6409
      %7138 = vmatprep.subr.bf16.mxu0 %v6418
      %7139 = vmatpush1.bf16.msra.mxu0 %v6417
      %7140 = vmatprep.subr.bf16.mxu0 %v6426
      %7141 = vmatpush1.bf16.msra.mxu0 %v6425
      %7142 = vmatprep.subr.bf16.mxu0 %v6434
      %7143 = vmatpush1.bf16.msra.mxu0 %v6433
      %7144 = vmatprep.subr.bf16.mxu0 %v6442
      %7145 = vmatpush1.bf16.msra.mxu0 %v6441
      %7146 = vmatprep.subr.bf16.mxu0 %v6450
      %7147 = vmatpush1.bf16.msra.mxu0 %v6449
      %7148 = vmatprep.subr.bf16.mxu0 %v6458
      %7149 = vmatpush1.bf16.msra.mxu0 %v6457
      %7150 = vmatprep.subr.bf16.mxu0 %v6466
      %7151 = vmatpush1.bf16.msra.mxu0 %v6465
      %7152 = vmatprep.subr.bf16.mxu0 %v6474
      %7153 = vmatpush1.bf16.msra.mxu0 %v6473
      %7154 = vmatprep.subr.bf16.mxu0 %v6482
      %7155 = vmatpush1.bf16.msra.mxu0 %v6481
      %7156 = vmatprep.mubr.bf16.mxu0 %v1224
      %7157 = vmatmul.mubr.bf16.gmra.mrb[0].mxu0 %v1223
      %v7158 = vpop.f32.mrb[0].mxu0
      %v7159 = vadd.f32 %v7118, %v7158
      %v7160 = vpop.f32.mrb[0].mxu0
      %v7161 = vadd.f32 %v7120, %v7160
      %v7162 = vpop.f32.mrb[0].mxu0
      %v7163 = vpop.f32.mrb[0].mxu0
      %7164 = vdwg.mxu0
      %7165 = vmatprep.subr.bf16.mxu0 %v5980
      %7166 = vmatpush1.bf16.msra.mxu0 %v5979
      %7167 = vmatprep.subr.bf16.mxu0 %v5988
      %7168 = vmatpush1.bf16.msra.mxu0 %v5987
      %7169 = vmatprep.subr.bf16.mxu0 %v5996
      %7170 = vmatpush1.bf16.msra.mxu0 %v5995
      %7171 = vmatprep.subr.bf16.mxu0 %v6004
      %7172 = vmatpush1.bf16.msra.mxu0 %v6003
      %7173 = vmatprep.subr.bf16.mxu0 %v6012
      %7174 = vmatpush1.bf16.msra.mxu0 %v6011
      %7175 = vmatprep.subr.bf16.mxu0 %v6020
      %7176 = vmatpush1.bf16.msra.mxu0 %v6019
      %7177 = vmatprep.subr.bf16.mxu0 %v6028
      %7178 = vmatpush1.bf16.msra.mxu0 %v6027
      %7179 = vmatprep.subr.bf16.mxu0 %v6036
      %7180 = vmatpush1.bf16.msra.mxu0 %v6035
      %7181 = vmatprep.subr.bf16.mxu0 %v6044
      %7182 = vmatpush1.bf16.msra.mxu0 %v6043
      %7183 = vmatprep.subr.bf16.mxu0 %v6052
      %7184 = vmatpush1.bf16.msra.mxu0 %v6051
      %7185 = vmatprep.subr.bf16.mxu0 %v6060
      %7186 = vmatpush1.bf16.msra.mxu0 %v6059
      %7187 = vmatprep.subr.bf16.mxu0 %v6068
      %7188 = vmatpush1.bf16.msra.mxu0 %v6067
      %7189 = vmatprep.subr.bf16.mxu0 %v6076
      %7190 = vmatpush1.bf16.msra.mxu0 %v6075
      %7191 = vmatprep.subr.bf16.mxu0 %v6084
      %7192 = vmatpush1.bf16.msra.mxu0 %v6083
      %7193 = vmatprep.subr.bf16.mxu0 %v6092
      %7194 = vmatpush1.bf16.msra.mxu0 %v6091
      %7195 = vmatprep.subr.bf16.mxu0 %v6100
      %7196 = vmatpush1.bf16.msra.mxu0 %v6099
      %7197 = vmatprep.mubr.bf16.mxu0 %v1218
      %7198 = vmatmul.mubr.bf16.gmra.mrb[0].mxu0 %v1217
      %v7199 = vpop.f32.mrb[0].mxu0
      %v7200 = vadd.f32 %v4107, %v7199
      %v7201 = vpop.f32.mrb[0].mxu0
      %v7202 = vadd.f32 %v4109, %v7201
      %v7203 = vpop.f32.mrb[0].mxu0
      %v7204 = vpop.f32.mrb[0].mxu0
      %7205 = vdwg.mxu0
      %7206 = vmatprep.subr.bf16.mxu0 %v6108
      %7207 = vmatpush1.bf16.msra.mxu0 %v6107
      %7208 = vmatprep.subr.bf16.mxu0 %v6116
      %7209 = vmatpush1.bf16.msra.mxu0 %v6115
      %7210 = vmatprep.subr.bf16.mxu0 %v6124
      %7211 = vmatpush1.bf16.msra.mxu0 %v6123
      %7212 = vmatprep.subr.bf16.mxu0 %v6132
      %7213 = vmatpush1.bf16.msra.mxu0 %v6131
      %7214 = vmatprep.subr.bf16.mxu0 %v6140
      %7215 = vmatpush1.bf16.msra.mxu0 %v6139
      %7216 = vmatprep.subr.bf16.mxu0 %v6148
      %7217 = vmatpush1.bf16.msra.mxu0 %v6147
      %7218 = vmatprep.subr.bf16.mxu0 %v6156
      %7219 = vmatpush1.bf16.msra.mxu0 %v6155
      %7220 = vmatprep.subr.bf16.mxu0 %v6164
      %7221 = vmatpush1.bf16.msra.mxu0 %v6163
      %7222 = vmatprep.subr.bf16.mxu0 %v6172
      %7223 = vmatpush1.bf16.msra.mxu0 %v6171
      %7224 = vmatprep.subr.bf16.mxu0 %v6180
      %7225 = vmatpush1.bf16.msra.mxu0 %v6179
      %7226 = vmatprep.subr.bf16.mxu0 %v6188
      %7227 = vmatpush1.bf16.msra.mxu0 %v6187
      %7228 = vmatprep.subr.bf16.mxu0 %v6196
      %7229 = vmatpush1.bf16.msra.mxu0 %v6195
      %7230 = vmatprep.subr.bf16.mxu0 %v6204
      %7231 = vmatpush1.bf16.msra.mxu0 %v6203
      %7232 = vmatprep.subr.bf16.mxu0 %v6212
      %7233 = vmatpush1.bf16.msra.mxu0 %v6211
      %7234 = vmatprep.subr.bf16.mxu0 %v6220
      %7235 = vmatpush1.bf16.msra.mxu0 %v6219
      %7236 = vmatprep.subr.bf16.mxu0 %v6228
      %7237 = vmatpush1.bf16.msra.mxu0 %v6227
      %7238 = vmatprep.mubr.bf16.mxu0 %v1220
      %7239 = vmatmul.mubr.bf16.gmra.mrb[0].mxu0 %v1219
      %v7240 = vpop.f32.mrb[0].mxu0
      %v7241 = vadd.f32 %v7200, %v7240
      %v7242 = vpop.f32.mrb[0].mxu0
      %v7243 = vadd.f32 %v7202, %v7242
      %v7244 = vpop.f32.mrb[0].mxu0
      %v7245 = vpop.f32.mrb[0].mxu0
      %7246 = vdwg.mxu0
      %7247 = vmatprep.subr.bf16.mxu0 %v6236
      %7248 = vmatpush1.bf16.msra.mxu0 %v6235
      %7249 = vmatprep.subr.bf16.mxu0 %v6244
      %7250 = vmatpush1.bf16.msra.mxu0 %v6243
      %7251 = vmatprep.subr.bf16.mxu0 %v6252
      %7252 = vmatpush1.bf16.msra.mxu0 %v6251
      %7253 = vmatprep.subr.bf16.mxu0 %v6260
      %7254 = vmatpush1.bf16.msra.mxu0 %v6259
      %7255 = vmatprep.subr.bf16.mxu0 %v6268
      %7256 = vmatpush1.bf16.msra.mxu0 %v6267
      %7257 = vmatprep.subr.bf16.mxu0 %v6276
      %7258 = vmatpush1.bf16.msra.mxu0 %v6275
      %7259 = vmatprep.subr.bf16.mxu0 %v6284
      %7260 = vmatpush1.bf16.msra.mxu0 %v6283
      %7261 = vmatprep.subr.bf16.mxu0 %v6292
      %7262 = vmatpush1.bf16.msra.mxu0 %v6291
      %7263 = vmatprep.subr.bf16.mxu0 %v6300
      %7264 = vmatpush1.bf16.msra.mxu0 %v6299
      %7265 = vmatprep.subr.bf16.mxu0 %v6308
      %7266 = vmatpush1.bf16.msra.mxu0 %v6307
      %7267 = vmatprep.subr.bf16.mxu0 %v6316
      %7268 = vmatpush1.bf16.msra.mxu0 %v6315
      %7269 = vmatprep.subr.bf16.mxu0 %v6324
      %7270 = vmatpush1.bf16.msra.mxu0 %v6323
      %7271 = vmatprep.subr.bf16.mxu0 %v6332
      %7272 = vmatpush1.bf16.msra.mxu0 %v6331
      %7273 = vmatprep.subr.bf16.mxu0 %v6340
      %7274 = vmatpush1.bf16.msra.mxu0 %v6339
      %7275 = vmatprep.subr.bf16.mxu0 %v6348
      %7276 = vmatpush1.bf16.msra.mxu0 %v6347
      %7277 = vmatprep.subr.bf16.mxu0 %v6356
      %7278 = vmatpush1.bf16.msra.mxu0 %v6355
      %7279 = vmatprep.mubr.bf16.mxu0 %v1222
      %7280 = vmatmul.mubr.bf16.gmra.mrb[0].mxu0 %v1221
      %v7281 = vpop.f32.mrb[0].mxu0
      %v7282 = vadd.f32 %v7241, %v7281
      %v7283 = vpop.f32.mrb[0].mxu0
      %v7284 = vadd.f32 %v7243, %v7283
      %v7285 = vpop.f32.mrb[0].mxu0
      %v7286 = vpop.f32.mrb[0].mxu0
      %7287 = vdwg.mxu0
      %7288 = vmatprep.subr.bf16.mxu0 %v6364
      %7289 = vmatpush1.bf16.msra.mxu0 %v6363
      %7290 = vmatprep.subr.bf16.mxu0 %v6372
      %7291 = vmatpush1.bf16.msra.mxu0 %v6371
      %7292 = vmatprep.subr.bf16.mxu0 %v6380
      %7293 = vmatpush1.bf16.msra.mxu0 %v6379
      %7294 = vmatprep.subr.bf16.mxu0 %v6388
      %7295 = vmatpush1.bf16.msra.mxu0 %v6387
      %7296 = vmatprep.subr.bf16.mxu0 %v6396
      %7297 = vmatpush1.bf16.msra.mxu0 %v6395
      %7298 = vmatprep.subr.bf16.mxu0 %v6404
      %7299 = vmatpush1.bf16.msra.mxu0 %v6403
      %7300 = vmatprep.subr.bf16.mxu0 %v6412
      %7301 = vmatpush1.bf16.msra.mxu0 %v6411
      %7302 = vmatprep.subr.bf16.mxu0 %v6420
      %7303 = vmatpush1.bf16.msra.mxu0 %v6419
      %7304 = vmatprep.subr.bf16.mxu0 %v6428
      %7305 = vmatpush1.bf16.msra.mxu0 %v6427
      %7306 = vmatprep.subr.bf16.mxu0 %v6436
      %7307 = vmatpush1.bf16.msra.mxu0 %v6435
      %7308 = vmatprep.subr.bf16.mxu0 %v6444
      %7309 = vmatpush1.bf16.msra.mxu0 %v6443
      %7310 = vmatprep.subr.bf16.mxu0 %v6452
      %7311 = vmatpush1.bf16.msra.mxu0 %v6451
      %7312 = vmatprep.subr.bf16.mxu0 %v6460
      %7313 = vmatpush1.bf16.msra.mxu0 %v6459
      %7314 = vmatprep.subr.bf16.mxu0 %v6468
      %7315 = vmatpush1.bf16.msra.mxu0 %v6467
      %7316 = vmatprep.subr.bf16.mxu0 %v6476
      %7317 = vmatpush1.bf16.msra.mxu0 %v6475
      %7318 = vmatprep.subr.bf16.mxu0 %v6484
      %7319 = vmatpush1.bf16.msra.mxu0 %v6483
      %7320 = vmatprep.mubr.bf16.mxu0 %v1224
      %7321 = vmatmul.mubr.bf16.gmra.mrb[0].mxu0 %v1223
      %v7322 = vpop.f32.mrb[0].mxu0
      %v7323 = vadd.f32 %v7282, %v7322
      %v7324 = vpop.f32.mrb[0].mxu0
      %v7325 = vadd.f32 %v7284, %v7324
      %v7326 = vpop.f32.mrb[0].mxu0
      %v7327 = vpop.f32.mrb[0].mxu0
      %7328 = vdwg.mxu0
      %7329 = vmatprep.subr.bf16.mxu0 %v5982
      %7330 = vmatpush1.bf16.msra.mxu0 %v5981
      %7331 = vmatprep.subr.bf16.mxu0 %v5990
      %7332 = vmatpush1.bf16.msra.mxu0 %v5989
      %7333 = vmatprep.subr.bf16.mxu0 %v5998
      %7334 = vmatpush1.bf16.msra.mxu0 %v5997
      %7335 = vmatprep.subr.bf16.mxu0 %v6006
      %7336 = vmatpush1.bf16.msra.mxu0 %v6005
      %7337 = vmatprep.subr.bf16.mxu0 %v6014
      %7338 = vmatpush1.bf16.msra.mxu0 %v6013
      %7339 = vmatprep.subr.bf16.mxu0 %v6022
      %7340 = vmatpush1.bf16.msra.mxu0 %v6021
      %7341 = vmatprep.subr.bf16.mxu0 %v6030
      %7342 = vmatpush1.bf16.msra.mxu0 %v6029
      %7343 = vmatprep.subr.bf16.mxu0 %v6038
      %7344 = vmatpush1.bf16.msra.mxu0 %v6037
      %7345 = vmatprep.subr.bf16.mxu0 %v6046
      %7346 = vmatpush1.bf16.msra.mxu0 %v6045
      %7347 = vmatprep.subr.bf16.mxu0 %v6054
      %7348 = vmatpush1.bf16.msra.mxu0 %v6053
      %7349 = vmatprep.subr.bf16.mxu0 %v6062
      %7350 = vmatpush1.bf16.msra.mxu0 %v6061
      %7351 = vmatprep.subr.bf16.mxu0 %v6070
      %7352 = vmatpush1.bf16.msra.mxu0 %v6069
      %7353 = vmatprep.subr.bf16.mxu0 %v6078
      %7354 = vmatpush1.bf16.msra.mxu0 %v6077
      %7355 = vmatprep.subr.bf16.mxu0 %v6086
      %7356 = vmatpush1.bf16.msra.mxu0 %v6085
      %7357 = vmatprep.subr.bf16.mxu0 %v6094
      %7358 = vmatpush1.bf16.msra.mxu0 %v6093
      %7359 = vmatprep.subr.bf16.mxu0 %v6102
      %7360 = vmatpush1.bf16.msra.mxu0 %v6101
      %7361 = vmatprep.mubr.bf16.mxu0 %v1218
      %7362 = vmatmul.mubr.bf16.gmra.mrb[0].mxu0 %v1217
      %v7363 = vpop.f32.mrb[0].mxu0
      %v7364 = vadd.f32 %v4271, %v7363
      %v7365 = vpop.f32.mrb[0].mxu0
      %v7366 = vadd.f32 %v4273, %v7365
      %v7367 = vpop.f32.mrb[0].mxu0
      %v7368 = vpop.f32.mrb[0].mxu0
      %7369 = vdwg.mxu0
      %7370 = vmatprep.subr.bf16.mxu0 %v6110
      %7371 = vmatpush1.bf16.msra.mxu0 %v6109
      %7372 = vmatprep.subr.bf16.mxu0 %v6118
      %7373 = vmatpush1.bf16.msra.mxu0 %v6117
      %7374 = vmatprep.subr.bf16.mxu0 %v6126
      %7375 = vmatpush1.bf16.msra.mxu0 %v6125
      %7376 = vmatprep.subr.bf16.mxu0 %v6134
      %7377 = vmatpush1.bf16.msra.mxu0 %v6133
      %7378 = vmatprep.subr.bf16.mxu0 %v6142
      %7379 = vmatpush1.bf16.msra.mxu0 %v6141
      %7380 = vmatprep.subr.bf16.mxu0 %v6150
      %7381 = vmatpush1.bf16.msra.mxu0 %v6149
      %7382 = vmatprep.subr.bf16.mxu0 %v6158
      %7383 = vmatpush1.bf16.msra.mxu0 %v6157
      %7384 = vmatprep.subr.bf16.mxu0 %v6166
      %7385 = vmatpush1.bf16.msra.mxu0 %v6165
      %7386 = vmatprep.subr.bf16.mxu0 %v6174
      %7387 = vmatpush1.bf16.msra.mxu0 %v6173
      %7388 = vmatprep.subr.bf16.mxu0 %v6182
      %7389 = vmatpush1.bf16.msra.mxu0 %v6181
      %7390 = vmatprep.subr.bf16.mxu0 %v6190
      %7391 = vmatpush1.bf16.msra.mxu0 %v6189
      %7392 = vmatprep.subr.bf16.mxu0 %v6198
      %7393 = vmatpush1.bf16.msra.mxu0 %v6197
      %7394 = vmatprep.subr.bf16.mxu0 %v6206
      %7395 = vmatpush1.bf16.msra.mxu0 %v6205
      %7396 = vmatprep.subr.bf16.mxu0 %v6214
      %7397 = vmatpush1.bf16.msra.mxu0 %v6213
      %7398 = vmatprep.subr.bf16.mxu0 %v6222
      %7399 = vmatpush1.bf16.msra.mxu0 %v6221
      %7400 = vmatprep.subr.bf16.mxu0 %v6230
      %7401 = vmatpush1.bf16.msra.mxu0 %v6229
      %7402 = vmatprep.mubr.bf16.mxu0 %v1220
      %7403 = vmatmul.mubr.bf16.gmra.mrb[0].mxu0 %v1219
      %v7404 = vpop.f32.mrb[0].mxu0
      %v7405 = vadd.f32 %v7364, %v7404
      %v7406 = vpop.f32.mrb[0].mxu0
      %v7407 = vadd.f32 %v7366, %v7406
      %v7408 = vpop.f32.mrb[0].mxu0
      %v7409 = vpop.f32.mrb[0].mxu0
      %7410 = vdwg.mxu0
      %7411 = vmatprep.subr.bf16.mxu0 %v6238
      %7412 = vmatpush1.bf16.msra.mxu0 %v6237
      %7413 = vmatprep.subr.bf16.mxu0 %v6246
      %7414 = vmatpush1.bf16.msra.mxu0 %v6245
      %7415 = vmatprep.subr.bf16.mxu0 %v6254
      %7416 = vmatpush1.bf16.msra.mxu0 %v6253
      %7417 = vmatprep.subr.bf16.mxu0 %v6262
      %7418 = vmatpush1.bf16.msra.mxu0 %v6261
      %7419 = vmatprep.subr.bf16.mxu0 %v6270
      %7420 = vmatpush1.bf16.msra.mxu0 %v6269
      %7421 = vmatprep.subr.bf16.mxu0 %v6278
      %7422 = vmatpush1.bf16.msra.mxu0 %v6277
      %7423 = vmatprep.subr.bf16.mxu0 %v6286
      %7424 = vmatpush1.bf16.msra.mxu0 %v6285
      %7425 = vmatprep.subr.bf16.mxu0 %v6294
      %7426 = vmatpush1.bf16.msra.mxu0 %v6293
      %7427 = vmatprep.subr.bf16.mxu0 %v6302
      %7428 = vmatpush1.bf16.msra.mxu0 %v6301
      %7429 = vmatprep.subr.bf16.mxu0 %v6310
      %7430 = vmatpush1.bf16.msra.mxu0 %v6309
      %7431 = vmatprep.subr.bf16.mxu0 %v6318
      %7432 = vmatpush1.bf16.msra.mxu0 %v6317
      %7433 = vmatprep.subr.bf16.mxu0 %v6326
      %7434 = vmatpush1.bf16.msra.mxu0 %v6325
      %7435 = vmatprep.subr.bf16.mxu0 %v6334
      %7436 = vmatpush1.bf16.msra.mxu0 %v6333
      %7437 = vmatprep.subr.bf16.mxu0 %v6342
      %7438 = vmatpush1.bf16.msra.mxu0 %v6341
      %7439 = vmatprep.subr.bf16.mxu0 %v6350
      %7440 = vmatpush1.bf16.msra.mxu0 %v6349
      %7441 = vmatprep.subr.bf16.mxu0 %v6358
      %7442 = vmatpush1.bf16.msra.mxu0 %v6357
      %7443 = vmatprep.mubr.bf16.mxu0 %v1222
      %7444 = vmatmul.mubr.bf16.gmra.mrb[0].mxu0 %v1221
      %v7445 = vpop.f32.mrb[0].mxu0
      %v7446 = vadd.f32 %v7405, %v7445
      %v7447 = vpop.f32.mrb[0].mxu0
      %v7448 = vadd.f32 %v7407, %v7447
      %v7449 = vpop.f32.mrb[0].mxu0
      %v7450 = vpop.f32.mrb[0].mxu0
      %7451 = vdwg.mxu0
      %7452 = vmatprep.subr.bf16.mxu0 %v6366
      %7453 = vmatpush1.bf16.msra.mxu0 %v6365
      %7454 = vmatprep.subr.bf16.mxu0 %v6374
      %7455 = vmatpush1.bf16.msra.mxu0 %v6373
      %7456 = vmatprep.subr.bf16.mxu0 %v6382
      %7457 = vmatpush1.bf16.msra.mxu0 %v6381
      %7458 = vmatprep.subr.bf16.mxu0 %v6390
      %7459 = vmatpush1.bf16.msra.mxu0 %v6389
      %7460 = vmatprep.subr.bf16.mxu0 %v6398
      %7461 = vmatpush1.bf16.msra.mxu0 %v6397
      %7462 = vmatprep.subr.bf16.mxu0 %v6406
      %7463 = vmatpush1.bf16.msra.mxu0 %v6405
      %7464 = vmatprep.subr.bf16.mxu0 %v6414
      %7465 = vmatpush1.bf16.msra.mxu0 %v6413
      %7466 = vmatprep.subr.bf16.mxu0 %v6422
      %7467 = vmatpush1.bf16.msra.mxu0 %v6421
      %7468 = vmatprep.subr.bf16.mxu0 %v6430
      %7469 = vmatpush1.bf16.msra.mxu0 %v6429
      %7470 = vmatprep.subr.bf16.mxu0 %v6438
      %7471 = vmatpush1.bf16.msra.mxu0 %v6437
      %7472 = vmatprep.subr.bf16.mxu0 %v6446
      %7473 = vmatpush1.bf16.msra.mxu0 %v6445
      %7474 = vmatprep.subr.bf16.mxu0 %v6454
      %7475 = vmatpush1.bf16.msra.mxu0 %v6453
      %7476 = vmatprep.subr.bf16.mxu0 %v6462
      %7477 = vmatpush1.bf16.msra.mxu0 %v6461
      %7478 = vmatprep.subr.bf16.mxu0 %v6470
      %7479 = vmatpush1.bf16.msra.mxu0 %v6469
      %7480 = vmatprep.subr.bf16.mxu0 %v6478
      %7481 = vmatpush1.bf16.msra.mxu0 %v6477
      %7482 = vmatprep.subr.bf16.mxu0 %v6486
      %7483 = vmatpush1.bf16.msra.mxu0 %v6485
      %7484 = vmatprep.mubr.bf16.mxu0 %v1224
      %7485 = vmatmul.mubr.bf16.gmra.mrb[0].mxu0 %v1223
      %v7486 = vpop.f32.mrb[0].mxu0
      %v7487 = vadd.f32 %v7446, %v7486
      %v7488 = vpop.f32.mrb[0].mxu0
      %v7489 = vadd.f32 %v7448, %v7488
      %v7490 = vpop.f32.mrb[0].mxu0
      %v7491 = vpop.f32.mrb[0].mxu0
      %7492 = vdwg.mxu0
      %7493 = vmatprep.subr.bf16.mxu0 %v5984
      %7494 = vmatpush1.bf16.msra.mxu0 %v5983
      %7495 = vmatprep.subr.bf16.mxu0 %v5992
      %7496 = vmatpush1.bf16.msra.mxu0 %v5991
      %7497 = vmatprep.subr.bf16.mxu0 %v6000
      %7498 = vmatpush1.bf16.msra.mxu0 %v5999
      %7499 = vmatprep.subr.bf16.mxu0 %v6008
      %7500 = vmatpush1.bf16.msra.mxu0 %v6007
      %7501 = vmatprep.subr.bf16.mxu0 %v6016
      %7502 = vmatpush1.bf16.msra.mxu0 %v6015
      %7503 = vmatprep.subr.bf16.mxu0 %v6024
      %7504 = vmatpush1.bf16.msra.mxu0 %v6023
      %7505 = vmatprep.subr.bf16.mxu0 %v6032
      %7506 = vmatpush1.bf16.msra.mxu0 %v6031
      %7507 = vmatprep.subr.bf16.mxu0 %v6040
      %7508 = vmatpush1.bf16.msra.mxu0 %v6039
      %7509 = vmatprep.subr.bf16.mxu0 %v6048
      %7510 = vmatpush1.bf16.msra.mxu0 %v6047
      %7511 = vmatprep.subr.bf16.mxu0 %v6056
      %7512 = vmatpush1.bf16.msra.mxu0 %v6055
      %7513 = vmatprep.subr.bf16.mxu0 %v6064
      %7514 = vmatpush1.bf16.msra.mxu0 %v6063
      %7515 = vmatprep.subr.bf16.mxu0 %v6072
      %7516 = vmatpush1.bf16.msra.mxu0 %v6071
      %7517 = vmatprep.subr.bf16.mxu0 %v6080
      %7518 = vmatpush1.bf16.msra.mxu0 %v6079
      %7519 = vmatprep.subr.bf16.mxu0 %v6088
      %7520 = vmatpush1.bf16.msra.mxu0 %v6087
      %7521 = vmatprep.subr.bf16.mxu0 %v6096
      %7522 = vmatpush1.bf16.msra.mxu0 %v6095
      %7523 = vmatprep.subr.bf16.mxu0 %v6104
      %7524 = vmatpush1.bf16.msra.mxu0 %v6103
      %7525 = vmatprep.mubr.bf16.mxu0 %v1218
      %7526 = vmatmul.mubr.bf16.gmra.mrb[0].mxu0 %v1217
      %v7527 = vpop.f32.mrb[0].mxu0
      %v7528 = vadd.f32 %v4435, %v7527
      %v7529 = vpop.f32.mrb[0].mxu0
      %v7530 = vadd.f32 %v4437, %v7529
      %v7531 = vpop.f32.mrb[0].mxu0
      %v7532 = vpop.f32.mrb[0].mxu0
      %7533 = vdwg.mxu0
      %7534 = vmatprep.subr.bf16.mxu0 %v6112
      %7535 = vmatpush1.bf16.msra.mxu0 %v6111
      %7536 = vmatprep.subr.bf16.mxu0 %v6120
      %7537 = vmatpush1.bf16.msra.mxu0 %v6119
      %7538 = vmatprep.subr.bf16.mxu0 %v6128
      %7539 = vmatpush1.bf16.msra.mxu0 %v6127
      %7540 = vmatprep.subr.bf16.mxu0 %v6136
      %7541 = vmatpush1.bf16.msra.mxu0 %v6135
      %7542 = vmatprep.subr.bf16.mxu0 %v6144
      %7543 = vmatpush1.bf16.msra.mxu0 %v6143
      %7544 = vmatprep.subr.bf16.mxu0 %v6152
      %7545 = vmatpush1.bf16.msra.mxu0 %v6151
      %7546 = vmatprep.subr.bf16.mxu0 %v6160
      %7547 = vmatpush1.bf16.msra.mxu0 %v6159
      %7548 = vmatprep.subr.bf16.mxu0 %v6168
      %7549 = vmatpush1.bf16.msra.mxu0 %v6167
      %7550 = vmatprep.subr.bf16.mxu0 %v6176
      %7551 = vmatpush1.bf16.msra.mxu0 %v6175
      %7552 = vmatprep.subr.bf16.mxu0 %v6184
      %7553 = vmatpush1.bf16.msra.mxu0 %v6183
      %7554 = vmatprep.subr.bf16.mxu0 %v6192
      %7555 = vmatpush1.bf16.msra.mxu0 %v6191
      %7556 = vmatprep.subr.bf16.mxu0 %v6200
      %7557 = vmatpush1.bf16.msra.mxu0 %v6199
      %7558 = vmatprep.subr.bf16.mxu0 %v6208
      %7559 = vmatpush1.bf16.msra.mxu0 %v6207
      %7560 = vmatprep.subr.bf16.mxu0 %v6216
      %7561 = vmatpush1.bf16.msra.mxu0 %v6215
      %7562 = vmatprep.subr.bf16.mxu0 %v6224
      %7563 = vmatpush1.bf16.msra.mxu0 %v6223
      %7564 = vmatprep.subr.bf16.mxu0 %v6232
      %7565 = vmatpush1.bf16.msra.mxu0 %v6231
      %7566 = vmatprep.mubr.bf16.mxu0 %v1220
      %7567 = vmatmul.mubr.bf16.gmra.mrb[0].mxu0 %v1219
      %v7568 = vpop.f32.mrb[0].mxu0
      %v7569 = vadd.f32 %v7528, %v7568
      %v7570 = vpop.f32.mrb[0].mxu0
      %v7571 = vadd.f32 %v7530, %v7570
      %v7572 = vpop.f32.mrb[0].mxu0
      %v7573 = vpop.f32.mrb[0].mxu0
      %7574 = vdwg.mxu0
      %7575 = vmatprep.subr.bf16.mxu0 %v6240
      %7576 = vmatpush1.bf16.msra.mxu0 %v6239
      %7577 = vmatprep.subr.bf16.mxu0 %v6248
      %7578 = vmatpush1.bf16.msra.mxu0 %v6247
      %7579 = vmatprep.subr.bf16.mxu0 %v6256
      %7580 = vmatpush1.bf16.msra.mxu0 %v6255
      %7581 = vmatprep.subr.bf16.mxu0 %v6264
      %7582 = vmatpush1.bf16.msra.mxu0 %v6263
      %7583 = vmatprep.subr.bf16.mxu0 %v6272
      %7584 = vmatpush1.bf16.msra.mxu0 %v6271
      %7585 = vmatprep.subr.bf16.mxu0 %v6280
      %7586 = vmatpush1.bf16.msra.mxu0 %v6279
      %7587 = vmatprep.subr.bf16.mxu0 %v6288
      %7588 = vmatpush1.bf16.msra.mxu0 %v6287
      %7589 = vmatprep.subr.bf16.mxu0 %v6296
      %7590 = vmatpush1.bf16.msra.mxu0 %v6295
      %7591 = vmatprep.subr.bf16.mxu0 %v6304
      %7592 = vmatpush1.bf16.msra.mxu0 %v6303
      %7593 = vmatprep.subr.bf16.mxu0 %v6312
      %7594 = vmatpush1.bf16.msra.mxu0 %v6311
      %7595 = vmatprep.subr.bf16.mxu0 %v6320
      %7596 = vmatpush1.bf16.msra.mxu0 %v6319
      %7597 = vmatprep.subr.bf16.mxu0 %v6328
      %7598 = vmatpush1.bf16.msra.mxu0 %v6327
      %7599 = vmatprep.subr.bf16.mxu0 %v6336
      %7600 = vmatpush1.bf16.msra.mxu0 %v6335
      %7601 = vmatprep.subr.bf16.mxu0 %v6344
      %7602 = vmatpush1.bf16.msra.mxu0 %v6343
      %7603 = vmatprep.subr.bf16.mxu0 %v6352
      %7604 = vmatpush1.bf16.msra.mxu0 %v6351
      %7605 = vmatprep.subr.bf16.mxu0 %v6360
      %7606 = vmatpush1.bf16.msra.mxu0 %v6359
      %7607 = vmatprep.mubr.bf16.mxu0 %v1222
      %7608 = vmatmul.mubr.bf16.gmra.mrb[0].mxu0 %v1221
      %v7609 = vpop.f32.mrb[0].mxu0
      %v7610 = vadd.f32 %v7569, %v7609
      %v7611 = vpop.f32.mrb[0].mxu0
      %v7612 = vadd.f32 %v7571, %v7611
      %v7613 = vpop.f32.mrb[0].mxu0
      %v7614 = vpop.f32.mrb[0].mxu0
      %7615 = vdwg.mxu0
      %7616 = vmatprep.subr.bf16.mxu0 %v6368
      %7617 = vmatpush1.bf16.msra.mxu0 %v6367
      %7618 = vmatprep.subr.bf16.mxu0 %v6376
      %7619 = vmatpush1.bf16.msra.mxu0 %v6375
      %7620 = vmatprep.subr.bf16.mxu0 %v6384
      %7621 = vmatpush1.bf16.msra.mxu0 %v6383
      %7622 = vmatprep.subr.bf16.mxu0 %v6392
      %7623 = vmatpush1.bf16.msra.mxu0 %v6391
      %7624 = vmatprep.subr.bf16.mxu0 %v6400
      %7625 = vmatpush1.bf16.msra.mxu0 %v6399
      %7626 = vmatprep.subr.bf16.mxu0 %v6408
      %7627 = vmatpush1.bf16.msra.mxu0 %v6407
      %7628 = vmatprep.subr.bf16.mxu0 %v6416
      %7629 = vmatpush1.bf16.msra.mxu0 %v6415
      %7630 = vmatprep.subr.bf16.mxu0 %v6424
      %7631 = vmatpush1.bf16.msra.mxu0 %v6423
      %7632 = vmatprep.subr.bf16.mxu0 %v6432
      %7633 = vmatpush1.bf16.msra.mxu0 %v6431
      %7634 = vmatprep.subr.bf16.mxu0 %v6440
      %7635 = vmatpush1.bf16.msra.mxu0 %v6439
      %7636 = vmatprep.subr.bf16.mxu0 %v6448
      %7637 = vmatpush1.bf16.msra.mxu0 %v6447
      %7638 = vmatprep.subr.bf16.mxu0 %v6456
      %7639 = vmatpush1.bf16.msra.mxu0 %v6455
      %7640 = vmatprep.subr.bf16.mxu0 %v6464
      %7641 = vmatpush1.bf16.msra.mxu0 %v6463
      %7642 = vmatprep.subr.bf16.mxu0 %v6472
      %7643 = vmatpush1.bf16.msra.mxu0 %v6471
      %7644 = vmatprep.subr.bf16.mxu0 %v6480
      %7645 = vmatpush1.bf16.msra.mxu0 %v6479
      %7646 = vmatprep.subr.bf16.mxu0 %v6488
      %7647 = vmatpush1.bf16.msra.mxu0 %v6487
      %7648 = vmatprep.mubr.bf16.mxu0 %v1224
      %7649 = vmatmul.mubr.bf16.gmra.mrb[0].mxu0 %v1223
      %v7650 = vpop.f32.mrb[0].mxu0
      %v7651 = vadd.f32 %v7610, %v7650
      %v7652 = vpop.f32.mrb[0].mxu0
      %v7653 = vadd.f32 %v7612, %v7652
      %v7654 = vpop.f32.mrb[0].mxu0
      %v7655 = vpop.f32.mrb[0].mxu0
      %7656 = vdwg.mxu0
      %v7657 = vmul.f32 %v7159, %v7159
      %v7658 = vmul.f32 %v7161, %v7161
      %v7659 = vmul.f32 %v7323, %v7323
      %v7660 = vmul.f32 %v7325, %v7325
      %v7661 = vmul.f32 %v7487, %v7487
      %v7662 = vmul.f32 %v7489, %v7489
      %v7663 = vmul.f32 %v7651, %v7651
      %v7664 = vmul.f32 %v7653, %v7653
      %v7665 = vsel %vm1125, %v7657, 0.0
      %v7666 = vsel %vm1125, %v7658, 0.0
      %v7667 = vadd.f32 %v7665, %v7666
      %v7668 = vsel %vm1125, %v7659, 0.0
      %v7669 = vadd.f32 %v7667, %v7668
      %v7670 = vsel %vm1125, %v7660, 0.0
      %v7671 = vadd.f32 %v7669, %v7670
      %v7672 = vsel %vm1125, %v7661, 0.0
      %v7673 = vadd.f32 %v7671, %v7672
      %v7674 = vsel %vm1125, %v7662, 0.0
      %v7675 = vadd.f32 %v7673, %v7674
      %v7676 = vsel %vm1125, %v7663, 0.0
      %v7677 = vadd.f32 %v7675, %v7676
      %v7678 = vsel %vm1125, %v7664, 0.0
      %v7679 = vadd.f32 %v7677, %v7678
      %7680 = vadd.xlane.f32.xlu0 %v7679
      %v7681 = vpop.xlane.xlu0 %7680
      %v7682 = vrcp.pop %v7681
      %v7683 = vmul.f32 %v7159, %v7682
      %v7684 = vmul.f32 %v7161, %v7682
      %v7685 = vmul.f32 %v7323, %v7682
      %v7686 = vmul.f32 %v7325, %v7682
      %v7687 = vmul.f32 %v7487, %v7682
      %v7688 = vmul.f32 %v7489, %v7682
      %v7689 = vmul.f32 %v7651, %v7682
      %v7690 = vmul.f32 %v7653, %v7682
      %v7691 = vpack.c.bf16 %v7683, %v7683
      %v7692 = vpack.c.bf16 %v7684, %v7684
      %v7693 = vpack.c.bf16 %v7685, %v7685
      %v7694 = vpack.c.bf16 %v7686, %v7686
      %v7695 = vpack.c.bf16 %v7687, %v7687
      %v7696 = vpack.c.bf16 %v7688, %v7688
      %v7697 = vpack.c.bf16 %v7689, %v7689
      %v7698 = vpack.c.bf16 %v7690, %v7690
      %7699 = vmatprep.subr.bf16.mxu0 %v2762
      %7700 = vmatpush1.bf16.msra.mxu0 %v2761
      %7701 = vmatprep.subr.bf16.mxu0 %v2770
      %7702 = vmatpush1.bf16.msra.mxu0 %v2769
      %7703 = vmatprep.subr.bf16.mxu0 %v2778
      %7704 = vmatpush1.bf16.msra.mxu0 %v2777
      %7705 = vmatprep.subr.bf16.mxu0 %v2786
      %7706 = vmatpush1.bf16.msra.mxu0 %v2785
      %7707 = vmatprep.subr.bf16.mxu0 %v2794
      %7708 = vmatpush1.bf16.msra.mxu0 %v2793
      %7709 = vmatprep.subr.bf16.mxu0 %v2802
      %7710 = vmatpush1.bf16.msra.mxu0 %v2801
      %7711 = vmatprep.subr.bf16.mxu0 %v2810
      %7712 = vmatpush1.bf16.msra.mxu0 %v2809
      %7713 = vmatprep.subr.bf16.mxu0 %v2818
      %7714 = vmatpush1.bf16.msra.mxu0 %v2817
      %7715 = vmatprep.subr.bf16.mxu0 %v2826
      %7716 = vmatpush1.bf16.msra.mxu0 %v2825
      %7717 = vmatprep.subr.bf16.mxu0 %v2834
      %7718 = vmatpush1.bf16.msra.mxu0 %v2833
      %7719 = vmatprep.subr.bf16.mxu0 %v2842
      %7720 = vmatpush1.bf16.msra.mxu0 %v2841
      %7721 = vmatprep.subr.bf16.mxu0 %v2850
      %7722 = vmatpush1.bf16.msra.mxu0 %v2849
      %7723 = vmatprep.subr.bf16.mxu0 %v2858
      %7724 = vmatpush1.bf16.msra.mxu0 %v2857
      %7725 = vmatprep.subr.bf16.mxu0 %v2866
      %7726 = vmatpush1.bf16.msra.mxu0 %v2865
      %7727 = vmatprep.subr.bf16.mxu0 %v2874
      %7728 = vmatpush1.bf16.msra.mxu0 %v2873
      %7729 = vmatprep.subr.bf16.mxu0 %v2882
      %7730 = vmatpush1.bf16.msra.mxu0 %v2881
      %7731 = vmatprep.mubr.bf16.mxu0 %v7692
      %7732 = vmatmul.mubr.bf16.gmra.mrb[0].mxu0 %v7691
      %v7733 = vpop.f32.mrb[0].mxu0
      %v7734 = vadd.f32 0.0, %v7733
      %v7735 = vpop.f32.mrb[0].mxu0
      %v7736 = vadd.f32 0.0, %v7735
      %v7737 = vpop.f32.mrb[0].mxu0
      %v7738 = vpop.f32.mrb[0].mxu0
      %7739 = vdwg.mxu0
      %7740 = vmatprep.subr.bf16.mxu0 %v2890
      %7741 = vmatpush1.bf16.msra.mxu0 %v2889
      %7742 = vmatprep.subr.bf16.mxu0 %v2898
      %7743 = vmatpush1.bf16.msra.mxu0 %v2897
      %7744 = vmatprep.subr.bf16.mxu0 %v2906
      %7745 = vmatpush1.bf16.msra.mxu0 %v2905
      %7746 = vmatprep.subr.bf16.mxu0 %v2914
      %7747 = vmatpush1.bf16.msra.mxu0 %v2913
      %7748 = vmatprep.subr.bf16.mxu0 %v2922
      %7749 = vmatpush1.bf16.msra.mxu0 %v2921
      %7750 = vmatprep.subr.bf16.mxu0 %v2930
      %7751 = vmatpush1.bf16.msra.mxu0 %v2929
      %7752 = vmatprep.subr.bf16.mxu0 %v2938
      %7753 = vmatpush1.bf16.msra.mxu0 %v2937
      %7754 = vmatprep.subr.bf16.mxu0 %v2946
      %7755 = vmatpush1.bf16.msra.mxu0 %v2945
      %7756 = vmatprep.subr.bf16.mxu0 %v2954
      %7757 = vmatpush1.bf16.msra.mxu0 %v2953
      %7758 = vmatprep.subr.bf16.mxu0 %v2962
      %7759 = vmatpush1.bf16.msra.mxu0 %v2961
      %7760 = vmatprep.subr.bf16.mxu0 %v2970
      %7761 = vmatpush1.bf16.msra.mxu0 %v2969
      %7762 = vmatprep.subr.bf16.mxu0 %v2978
      %7763 = vmatpush1.bf16.msra.mxu0 %v2977
      %7764 = vmatprep.subr.bf16.mxu0 %v2986
      %7765 = vmatpush1.bf16.msra.mxu0 %v2985
      %7766 = vmatprep.subr.bf16.mxu0 %v2994
      %7767 = vmatpush1.bf16.msra.mxu0 %v2993
      %7768 = vmatprep.subr.bf16.mxu0 %v3002
      %7769 = vmatpush1.bf16.msra.mxu0 %v3001
      %7770 = vmatprep.subr.bf16.mxu0 %v3010
      %7771 = vmatpush1.bf16.msra.mxu0 %v3009
      %7772 = vmatprep.mubr.bf16.mxu0 %v7694
      %7773 = vmatmul.mubr.bf16.gmra.mrb[0].mxu0 %v7693
      %v7774 = vpop.f32.mrb[0].mxu0
      %v7775 = vadd.f32 %v7734, %v7774
      %v7776 = vpop.f32.mrb[0].mxu0
      %v7777 = vadd.f32 %v7736, %v7776
      %v7778 = vpop.f32.mrb[0].mxu0
      %v7779 = vpop.f32.mrb[0].mxu0
      %7780 = vdwg.mxu0
      %7781 = vmatprep.subr.bf16.mxu0 %v3018
      %7782 = vmatpush1.bf16.msra.mxu0 %v3017
      %7783 = vmatprep.subr.bf16.mxu0 %v3026
      %7784 = vmatpush1.bf16.msra.mxu0 %v3025
      %7785 = vmatprep.subr.bf16.mxu0 %v3034
      %7786 = vmatpush1.bf16.msra.mxu0 %v3033
      %7787 = vmatprep.subr.bf16.mxu0 %v3042
      %7788 = vmatpush1.bf16.msra.mxu0 %v3041
      %7789 = vmatprep.subr.bf16.mxu0 %v3050
      %7790 = vmatpush1.bf16.msra.mxu0 %v3049
      %7791 = vmatprep.subr.bf16.mxu0 %v3058
      %7792 = vmatpush1.bf16.msra.mxu0 %v3057
      %7793 = vmatprep.subr.bf16.mxu0 %v3066
      %7794 = vmatpush1.bf16.msra.mxu0 %v3065
      %7795 = vmatprep.subr.bf16.mxu0 %v3074
      %7796 = vmatpush1.bf16.msra.mxu0 %v3073
      %7797 = vmatprep.subr.bf16.mxu0 %v3082
      %7798 = vmatpush1.bf16.msra.mxu0 %v3081
      %7799 = vmatprep.subr.bf16.mxu0 %v3090
      %7800 = vmatpush1.bf16.msra.mxu0 %v3089
      %7801 = vmatprep.subr.bf16.mxu0 %v3098
      %7802 = vmatpush1.bf16.msra.mxu0 %v3097
      %7803 = vmatprep.subr.bf16.mxu0 %v3106
      %7804 = vmatpush1.bf16.msra.mxu0 %v3105
      %7805 = vmatprep.subr.bf16.mxu0 %v3114
      %7806 = vmatpush1.bf16.msra.mxu0 %v3113
      %7807 = vmatprep.subr.bf16.mxu0 %v3122
      %7808 = vmatpush1.bf16.msra.mxu0 %v3121
      %7809 = vmatprep.subr.bf16.mxu0 %v3130
      %7810 = vmatpush1.bf16.msra.mxu0 %v3129
      %7811 = vmatprep.subr.bf16.mxu0 %v3138
      %7812 = vmatpush1.bf16.msra.mxu0 %v3137
      %7813 = vmatprep.mubr.bf16.mxu0 %v7696
      %7814 = vmatmul.mubr.bf16.gmra.mrb[0].mxu0 %v7695
      %v7815 = vpop.f32.mrb[0].mxu0
      %v7816 = vadd.f32 %v7775, %v7815
      %v7817 = vpop.f32.mrb[0].mxu0
      %v7818 = vadd.f32 %v7777, %v7817
      %v7819 = vpop.f32.mrb[0].mxu0
      %v7820 = vpop.f32.mrb[0].mxu0
      %7821 = vdwg.mxu0
      %7822 = vmatprep.subr.bf16.mxu0 %v3146
      %7823 = vmatpush1.bf16.msra.mxu0 %v3145
      %7824 = vmatprep.subr.bf16.mxu0 %v3154
      %7825 = vmatpush1.bf16.msra.mxu0 %v3153
      %7826 = vmatprep.subr.bf16.mxu0 %v3162
      %7827 = vmatpush1.bf16.msra.mxu0 %v3161
      %7828 = vmatprep.subr.bf16.mxu0 %v3170
      %7829 = vmatpush1.bf16.msra.mxu0 %v3169
      %7830 = vmatprep.subr.bf16.mxu0 %v3178
      %7831 = vmatpush1.bf16.msra.mxu0 %v3177
      %7832 = vmatprep.subr.bf16.mxu0 %v3186
      %7833 = vmatpush1.bf16.msra.mxu0 %v3185
      %7834 = vmatprep.subr.bf16.mxu0 %v3194
      %7835 = vmatpush1.bf16.msra.mxu0 %v3193
      %7836 = vmatprep.subr.bf16.mxu0 %v3202
      %7837 = vmatpush1.bf16.msra.mxu0 %v3201
      %7838 = vmatprep.subr.bf16.mxu0 %v3210
      %7839 = vmatpush1.bf16.msra.mxu0 %v3209
      %7840 = vmatprep.subr.bf16.mxu0 %v3218
      %7841 = vmatpush1.bf16.msra.mxu0 %v3217
      %7842 = vmatprep.subr.bf16.mxu0 %v3226
      %7843 = vmatpush1.bf16.msra.mxu0 %v3225
      %7844 = vmatprep.subr.bf16.mxu0 %v3234
      %7845 = vmatpush1.bf16.msra.mxu0 %v3233
      %7846 = vmatprep.subr.bf16.mxu0 %v3242
      %7847 = vmatpush1.bf16.msra.mxu0 %v3241
      %7848 = vmatprep.subr.bf16.mxu0 %v3250
      %7849 = vmatpush1.bf16.msra.mxu0 %v3249
      %7850 = vmatprep.subr.bf16.mxu0 %v3258
      %7851 = vmatpush1.bf16.msra.mxu0 %v3257
      %7852 = vmatprep.subr.bf16.mxu0 %v3266
      %7853 = vmatpush1.bf16.msra.mxu0 %v3265
      %7854 = vmatprep.mubr.bf16.mxu0 %v7698
      %7855 = vmatmul.mubr.bf16.gmra.mrb[0].mxu0 %v7697
      %v7856 = vpop.f32.mrb[0].mxu0
      %v7857 = vadd.f32 %v7816, %v7856
      %v7858 = vpop.f32.mrb[0].mxu0
      %v7859 = vadd.f32 %v7818, %v7858
      %v7860 = vpop.f32.mrb[0].mxu0
      %v7861 = vpop.f32.mrb[0].mxu0
      %7862 = vdwg.mxu0
      %7863 = vmatprep.subr.bf16.mxu0 %v2764
      %7864 = vmatpush1.bf16.msra.mxu0 %v2763
      %7865 = vmatprep.subr.bf16.mxu0 %v2772
      %7866 = vmatpush1.bf16.msra.mxu0 %v2771
      %7867 = vmatprep.subr.bf16.mxu0 %v2780
      %7868 = vmatpush1.bf16.msra.mxu0 %v2779
      %7869 = vmatprep.subr.bf16.mxu0 %v2788
      %7870 = vmatpush1.bf16.msra.mxu0 %v2787
      %7871 = vmatprep.subr.bf16.mxu0 %v2796
      %7872 = vmatpush1.bf16.msra.mxu0 %v2795
      %7873 = vmatprep.subr.bf16.mxu0 %v2804
      %7874 = vmatpush1.bf16.msra.mxu0 %v2803
      %7875 = vmatprep.subr.bf16.mxu0 %v2812
      %7876 = vmatpush1.bf16.msra.mxu0 %v2811
      %7877 = vmatprep.subr.bf16.mxu0 %v2820
      %7878 = vmatpush1.bf16.msra.mxu0 %v2819
      %7879 = vmatprep.subr.bf16.mxu0 %v2828
      %7880 = vmatpush1.bf16.msra.mxu0 %v2827
      %7881 = vmatprep.subr.bf16.mxu0 %v2836
      %7882 = vmatpush1.bf16.msra.mxu0 %v2835
      %7883 = vmatprep.subr.bf16.mxu0 %v2844
      %7884 = vmatpush1.bf16.msra.mxu0 %v2843
      %7885 = vmatprep.subr.bf16.mxu0 %v2852
      %7886 = vmatpush1.bf16.msra.mxu0 %v2851
      %7887 = vmatprep.subr.bf16.mxu0 %v2860
      %7888 = vmatpush1.bf16.msra.mxu0 %v2859
      %7889 = vmatprep.subr.bf16.mxu0 %v2868
      %7890 = vmatpush1.bf16.msra.mxu0 %v2867
      %7891 = vmatprep.subr.bf16.mxu0 %v2876
      %7892 = vmatpush1.bf16.msra.mxu0 %v2875
      %7893 = vmatprep.subr.bf16.mxu0 %v2884
      %7894 = vmatpush1.bf16.msra.mxu0 %v2883
      %7895 = vmatprep.mubr.bf16.mxu0 %v7692
      %7896 = vmatmul.mubr.bf16.gmra.mrb[0].mxu0 %v7691
      %v7897 = vpop.f32.mrb[0].mxu0
      %v7898 = vadd.f32 0.0, %v7897
      %v7899 = vpop.f32.mrb[0].mxu0
      %v7900 = vadd.f32 0.0, %v7899
      %v7901 = vpop.f32.mrb[0].mxu0
      %v7902 = vpop.f32.mrb[0].mxu0
      %7903 = vdwg.mxu0
      %7904 = vmatprep.subr.bf16.mxu0 %v2892
      %7905 = vmatpush1.bf16.msra.mxu0 %v2891
      %7906 = vmatprep.subr.bf16.mxu0 %v2900
      %7907 = vmatpush1.bf16.msra.mxu0 %v2899
      %7908 = vmatprep.subr.bf16.mxu0 %v2908
      %7909 = vmatpush1.bf16.msra.mxu0 %v2907
      %7910 = vmatprep.subr.bf16.mxu0 %v2916
      %7911 = vmatpush1.bf16.msra.mxu0 %v2915
      %7912 = vmatprep.subr.bf16.mxu0 %v2924
      %7913 = vmatpush1.bf16.msra.mxu0 %v2923
      %7914 = vmatprep.subr.bf16.mxu0 %v2932
      %7915 = vmatpush1.bf16.msra.mxu0 %v2931
      %7916 = vmatprep.subr.bf16.mxu0 %v2940
      %7917 = vmatpush1.bf16.msra.mxu0 %v2939
      %7918 = vmatprep.subr.bf16.mxu0 %v2948
      %7919 = vmatpush1.bf16.msra.mxu0 %v2947
      %7920 = vmatprep.subr.bf16.mxu0 %v2956
      %7921 = vmatpush1.bf16.msra.mxu0 %v2955
      %7922 = vmatprep.subr.bf16.mxu0 %v2964
      %7923 = vmatpush1.bf16.msra.mxu0 %v2963
      %7924 = vmatprep.subr.bf16.mxu0 %v2972
      %7925 = vmatpush1.bf16.msra.mxu0 %v2971
      %7926 = vmatprep.subr.bf16.mxu0 %v2980
      %7927 = vmatpush1.bf16.msra.mxu0 %v2979
      %7928 = vmatprep.subr.bf16.mxu0 %v2988
      %7929 = vmatpush1.bf16.msra.mxu0 %v2987
      %7930 = vmatprep.subr.bf16.mxu0 %v2996
      %7931 = vmatpush1.bf16.msra.mxu0 %v2995
      %7932 = vmatprep.subr.bf16.mxu0 %v3004
      %7933 = vmatpush1.bf16.msra.mxu0 %v3003
      %7934 = vmatprep.subr.bf16.mxu0 %v3012
      %7935 = vmatpush1.bf16.msra.mxu0 %v3011
      %7936 = vmatprep.mubr.bf16.mxu0 %v7694
      %7937 = vmatmul.mubr.bf16.gmra.mrb[0].mxu0 %v7693
      %v7938 = vpop.f32.mrb[0].mxu0
      %v7939 = vadd.f32 %v7898, %v7938
      %v7940 = vpop.f32.mrb[0].mxu0
      %v7941 = vadd.f32 %v7900, %v7940
      %v7942 = vpop.f32.mrb[0].mxu0
      %v7943 = vpop.f32.mrb[0].mxu0
      %7944 = vdwg.mxu0
      %7945 = vmatprep.subr.bf16.mxu0 %v3020
      %7946 = vmatpush1.bf16.msra.mxu0 %v3019
      %7947 = vmatprep.subr.bf16.mxu0 %v3028
      %7948 = vmatpush1.bf16.msra.mxu0 %v3027
      %7949 = vmatprep.subr.bf16.mxu0 %v3036
      %7950 = vmatpush1.bf16.msra.mxu0 %v3035
      %7951 = vmatprep.subr.bf16.mxu0 %v3044
      %7952 = vmatpush1.bf16.msra.mxu0 %v3043
      %7953 = vmatprep.subr.bf16.mxu0 %v3052
      %7954 = vmatpush1.bf16.msra.mxu0 %v3051
      %7955 = vmatprep.subr.bf16.mxu0 %v3060
      %7956 = vmatpush1.bf16.msra.mxu0 %v3059
      %7957 = vmatprep.subr.bf16.mxu0 %v3068
      %7958 = vmatpush1.bf16.msra.mxu0 %v3067
      %7959 = vmatprep.subr.bf16.mxu0 %v3076
      %7960 = vmatpush1.bf16.msra.mxu0 %v3075
      %7961 = vmatprep.subr.bf16.mxu0 %v3084
      %7962 = vmatpush1.bf16.msra.mxu0 %v3083
      %7963 = vmatprep.subr.bf16.mxu0 %v3092
      %7964 = vmatpush1.bf16.msra.mxu0 %v3091
      %7965 = vmatprep.subr.bf16.mxu0 %v3100
      %7966 = vmatpush1.bf16.msra.mxu0 %v3099
      %7967 = vmatprep.subr.bf16.mxu0 %v3108
      %7968 = vmatpush1.bf16.msra.mxu0 %v3107
      %7969 = vmatprep.subr.bf16.mxu0 %v3116
      %7970 = vmatpush1.bf16.msra.mxu0 %v3115
      %7971 = vmatprep.subr.bf16.mxu0 %v3124
      %7972 = vmatpush1.bf16.msra.mxu0 %v3123
      %7973 = vmatprep.subr.bf16.mxu0 %v3132
      %7974 = vmatpush1.bf16.msra.mxu0 %v3131
      %7975 = vmatprep.subr.bf16.mxu0 %v3140
      %7976 = vmatpush1.bf16.msra.mxu0 %v3139
      %7977 = vmatprep.mubr.bf16.mxu0 %v7696
      %7978 = vmatmul.mubr.bf16.gmra.mrb[0].mxu0 %v7695
      %v7979 = vpop.f32.mrb[0].mxu0
      %v7980 = vadd.f32 %v7939, %v7979
      %v7981 = vpop.f32.mrb[0].mxu0
      %v7982 = vadd.f32 %v7941, %v7981
      %v7983 = vpop.f32.mrb[0].mxu0
      %v7984 = vpop.f32.mrb[0].mxu0
      %7985 = vdwg.mxu0
      %7986 = vmatprep.subr.bf16.mxu0 %v3148
      %7987 = vmatpush1.bf16.msra.mxu0 %v3147
      %7988 = vmatprep.subr.bf16.mxu0 %v3156
      %7989 = vmatpush1.bf16.msra.mxu0 %v3155
      %7990 = vmatprep.subr.bf16.mxu0 %v3164
      %7991 = vmatpush1.bf16.msra.mxu0 %v3163
      %7992 = vmatprep.subr.bf16.mxu0 %v3172
      %7993 = vmatpush1.bf16.msra.mxu0 %v3171
      %7994 = vmatprep.subr.bf16.mxu0 %v3180
      %7995 = vmatpush1.bf16.msra.mxu0 %v3179
      %7996 = vmatprep.subr.bf16.mxu0 %v3188
      %7997 = vmatpush1.bf16.msra.mxu0 %v3187
      %7998 = vmatprep.subr.bf16.mxu0 %v3196
      %7999 = vmatpush1.bf16.msra.mxu0 %v3195
      %8000 = vmatprep.subr.bf16.mxu0 %v3204
      %8001 = vmatpush1.bf16.msra.mxu0 %v3203
      %8002 = vmatprep.subr.bf16.mxu0 %v3212
      %8003 = vmatpush1.bf16.msra.mxu0 %v3211
      %8004 = vmatprep.subr.bf16.mxu0 %v3220
      %8005 = vmatpush1.bf16.msra.mxu0 %v3219
      %8006 = vmatprep.subr.bf16.mxu0 %v3228
      %8007 = vmatpush1.bf16.msra.mxu0 %v3227
      %8008 = vmatprep.subr.bf16.mxu0 %v3236
      %8009 = vmatpush1.bf16.msra.mxu0 %v3235
      %8010 = vmatprep.subr.bf16.mxu0 %v3244
      %8011 = vmatpush1.bf16.msra.mxu0 %v3243
      %8012 = vmatprep.subr.bf16.mxu0 %v3252
      %8013 = vmatpush1.bf16.msra.mxu0 %v3251
      %8014 = vmatprep.subr.bf16.mxu0 %v3260
      %8015 = vmatpush1.bf16.msra.mxu0 %v3259
      %8016 = vmatprep.subr.bf16.mxu0 %v3268
      %8017 = vmatpush1.bf16.msra.mxu0 %v3267
      %8018 = vmatprep.mubr.bf16.mxu0 %v7698
      %8019 = vmatmul.mubr.bf16.gmra.mrb[0].mxu0 %v7697
      %v8020 = vpop.f32.mrb[0].mxu0
      %v8021 = vadd.f32 %v7980, %v8020
      %v8022 = vpop.f32.mrb[0].mxu0
      %v8023 = vadd.f32 %v7982, %v8022
      %v8024 = vpop.f32.mrb[0].mxu0
      %v8025 = vpop.f32.mrb[0].mxu0
      %8026 = vdwg.mxu0
      %8027 = vmatprep.subr.bf16.mxu0 %v2766
      %8028 = vmatpush1.bf16.msra.mxu0 %v2765
      %8029 = vmatprep.subr.bf16.mxu0 %v2774
      %8030 = vmatpush1.bf16.msra.mxu0 %v2773
      %8031 = vmatprep.subr.bf16.mxu0 %v2782
      %8032 = vmatpush1.bf16.msra.mxu0 %v2781
      %8033 = vmatprep.subr.bf16.mxu0 %v2790
      %8034 = vmatpush1.bf16.msra.mxu0 %v2789
      %8035 = vmatprep.subr.bf16.mxu0 %v2798
      %8036 = vmatpush1.bf16.msra.mxu0 %v2797
      %8037 = vmatprep.subr.bf16.mxu0 %v2806
      %8038 = vmatpush1.bf16.msra.mxu0 %v2805
      %8039 = vmatprep.subr.bf16.mxu0 %v2814
      %8040 = vmatpush1.bf16.msra.mxu0 %v2813
      %8041 = vmatprep.subr.bf16.mxu0 %v2822
      %8042 = vmatpush1.bf16.msra.mxu0 %v2821
      %8043 = vmatprep.subr.bf16.mxu0 %v2830
      %8044 = vmatpush1.bf16.msra.mxu0 %v2829
      %8045 = vmatprep.subr.bf16.mxu0 %v2838
      %8046 = vmatpush1.bf16.msra.mxu0 %v2837
      %8047 = vmatprep.subr.bf16.mxu0 %v2846
      %8048 = vmatpush1.bf16.msra.mxu0 %v2845
      %8049 = vmatprep.subr.bf16.mxu0 %v2854
      %8050 = vmatpush1.bf16.msra.mxu0 %v2853
      %8051 = vmatprep.subr.bf16.mxu0 %v2862
      %8052 = vmatpush1.bf16.msra.mxu0 %v2861
      %8053 = vmatprep.subr.bf16.mxu0 %v2870
      %8054 = vmatpush1.bf16.msra.mxu0 %v2869
      %8055 = vmatprep.subr.bf16.mxu0 %v2878
      %8056 = vmatpush1.bf16.msra.mxu0 %v2877
      %8057 = vmatprep.subr.bf16.mxu0 %v2886
      %8058 = vmatpush1.bf16.msra.mxu0 %v2885
      %8059 = vmatprep.mubr.bf16.mxu0 %v7692
      %8060 = vmatmul.mubr.bf16.gmra.mrb[0].mxu0 %v7691
      %v8061 = vpop.f32.mrb[0].mxu0
      %v8062 = vadd.f32 0.0, %v8061
      %v8063 = vpop.f32.mrb[0].mxu0
      %v8064 = vadd.f32 0.0, %v8063
      %v8065 = vpop.f32.mrb[0].mxu0
      %v8066 = vpop.f32.mrb[0].mxu0
      %8067 = vdwg.mxu0
      %8068 = vmatprep.subr.bf16.mxu0 %v2894
      %8069 = vmatpush1.bf16.msra.mxu0 %v2893
      %8070 = vmatprep.subr.bf16.mxu0 %v2902
      %8071 = vmatpush1.bf16.msra.mxu0 %v2901
      %8072 = vmatprep.subr.bf16.mxu0 %v2910
      %8073 = vmatpush1.bf16.msra.mxu0 %v2909
      %8074 = vmatprep.subr.bf16.mxu0 %v2918
      %8075 = vmatpush1.bf16.msra.mxu0 %v2917
      %8076 = vmatprep.subr.bf16.mxu0 %v2926
      %8077 = vmatpush1.bf16.msra.mxu0 %v2925
      %8078 = vmatprep.subr.bf16.mxu0 %v2934
      %8079 = vmatpush1.bf16.msra.mxu0 %v2933
      %8080 = vmatprep.subr.bf16.mxu0 %v2942
      %8081 = vmatpush1.bf16.msra.mxu0 %v2941
      %8082 = vmatprep.subr.bf16.mxu0 %v2950
      %8083 = vmatpush1.bf16.msra.mxu0 %v2949
      %8084 = vmatprep.subr.bf16.mxu0 %v2958
      %8085 = vmatpush1.bf16.msra.mxu0 %v2957
      %8086 = vmatprep.subr.bf16.mxu0 %v2966
      %8087 = vmatpush1.bf16.msra.mxu0 %v2965
      %8088 = vmatprep.subr.bf16.mxu0 %v2974
      %8089 = vmatpush1.bf16.msra.mxu0 %v2973
      %8090 = vmatprep.subr.bf16.mxu0 %v2982
      %8091 = vmatpush1.bf16.msra.mxu0 %v2981
      %8092 = vmatprep.subr.bf16.mxu0 %v2990
      %8093 = vmatpush1.bf16.msra.mxu0 %v2989
      %8094 = vmatprep.subr.bf16.mxu0 %v2998
      %8095 = vmatpush1.bf16.msra.mxu0 %v2997
      %8096 = vmatprep.subr.bf16.mxu0 %v3006
      %8097 = vmatpush1.bf16.msra.mxu0 %v3005
      %8098 = vmatprep.subr.bf16.mxu0 %v3014
      %8099 = vmatpush1.bf16.msra.mxu0 %v3013
      %8100 = vmatprep.mubr.bf16.mxu0 %v7694
      %8101 = vmatmul.mubr.bf16.gmra.mrb[0].mxu0 %v7693
      %v8102 = vpop.f32.mrb[0].mxu0
      %v8103 = vadd.f32 %v8062, %v8102
      %v8104 = vpop.f32.mrb[0].mxu0
      %v8105 = vadd.f32 %v8064, %v8104
      %v8106 = vpop.f32.mrb[0].mxu0
      %v8107 = vpop.f32.mrb[0].mxu0
      %8108 = vdwg.mxu0
      %8109 = vmatprep.subr.bf16.mxu0 %v3022
      %8110 = vmatpush1.bf16.msra.mxu0 %v3021
      %8111 = vmatprep.subr.bf16.mxu0 %v3030
      %8112 = vmatpush1.bf16.msra.mxu0 %v3029
      %8113 = vmatprep.subr.bf16.mxu0 %v3038
      %8114 = vmatpush1.bf16.msra.mxu0 %v3037
      %8115 = vmatprep.subr.bf16.mxu0 %v3046
      %8116 = vmatpush1.bf16.msra.mxu0 %v3045
      %8117 = vmatprep.subr.bf16.mxu0 %v3054
      %8118 = vmatpush1.bf16.msra.mxu0 %v3053
      %8119 = vmatprep.subr.bf16.mxu0 %v3062
      %8120 = vmatpush1.bf16.msra.mxu0 %v3061
      %8121 = vmatprep.subr.bf16.mxu0 %v3070
      %8122 = vmatpush1.bf16.msra.mxu0 %v3069
      %8123 = vmatprep.subr.bf16.mxu0 %v3078
      %8124 = vmatpush1.bf16.msra.mxu0 %v3077
      %8125 = vmatprep.subr.bf16.mxu0 %v3086
      %8126 = vmatpush1.bf16.msra.mxu0 %v3085
      %8127 = vmatprep.subr.bf16.mxu0 %v3094
      %8128 = vmatpush1.bf16.msra.mxu0 %v3093
      %8129 = vmatprep.subr.bf16.mxu0 %v3102
      %8130 = vmatpush1.bf16.msra.mxu0 %v3101
      %8131 = vmatprep.subr.bf16.mxu0 %v3110
      %8132 = vmatpush1.bf16.msra.mxu0 %v3109
      %8133 = vmatprep.subr.bf16.mxu0 %v3118
      %8134 = vmatpush1.bf16.msra.mxu0 %v3117
      %8135 = vmatprep.subr.bf16.mxu0 %v3126
      %8136 = vmatpush1.bf16.msra.mxu0 %v3125
      %8137 = vmatprep.subr.bf16.mxu0 %v3134
      %8138 = vmatpush1.bf16.msra.mxu0 %v3133
      %8139 = vmatprep.subr.bf16.mxu0 %v3142
      %8140 = vmatpush1.bf16.msra.mxu0 %v3141
      %8141 = vmatprep.mubr.bf16.mxu0 %v7696
      %8142 = vmatmul.mubr.bf16.gmra.mrb[0].mxu0 %v7695
      %v8143 = vpop.f32.mrb[0].mxu0
      %v8144 = vadd.f32 %v8103, %v8143
      %v8145 = vpop.f32.mrb[0].mxu0
      %v8146 = vadd.f32 %v8105, %v8145
      %v8147 = vpop.f32.mrb[0].mxu0
      %v8148 = vpop.f32.mrb[0].mxu0
      %8149 = vdwg.mxu0
      %8150 = vmatprep.subr.bf16.mxu0 %v3150
      %8151 = vmatpush1.bf16.msra.mxu0 %v3149
      %8152 = vmatprep.subr.bf16.mxu0 %v3158
      %8153 = vmatpush1.bf16.msra.mxu0 %v3157
      %8154 = vmatprep.subr.bf16.mxu0 %v3166
      %8155 = vmatpush1.bf16.msra.mxu0 %v3165
      %8156 = vmatprep.subr.bf16.mxu0 %v3174
      %8157 = vmatpush1.bf16.msra.mxu0 %v3173
      %8158 = vmatprep.subr.bf16.mxu0 %v3182
      %8159 = vmatpush1.bf16.msra.mxu0 %v3181
      %8160 = vmatprep.subr.bf16.mxu0 %v3190
      %8161 = vmatpush1.bf16.msra.mxu0 %v3189
      %8162 = vmatprep.subr.bf16.mxu0 %v3198
      %8163 = vmatpush1.bf16.msra.mxu0 %v3197
      %8164 = vmatprep.subr.bf16.mxu0 %v3206
      %8165 = vmatpush1.bf16.msra.mxu0 %v3205
      %8166 = vmatprep.subr.bf16.mxu0 %v3214
      %8167 = vmatpush1.bf16.msra.mxu0 %v3213
      %8168 = vmatprep.subr.bf16.mxu0 %v3222
      %8169 = vmatpush1.bf16.msra.mxu0 %v3221
      %8170 = vmatprep.subr.bf16.mxu0 %v3230
      %8171 = vmatpush1.bf16.msra.mxu0 %v3229
      %8172 = vmatprep.subr.bf16.mxu0 %v3238
      %8173 = vmatpush1.bf16.msra.mxu0 %v3237
      %8174 = vmatprep.subr.bf16.mxu0 %v3246
      %8175 = vmatpush1.bf16.msra.mxu0 %v3245
      %8176 = vmatprep.subr.bf16.mxu0 %v3254
      %8177 = vmatpush1.bf16.msra.mxu0 %v3253
      %8178 = vmatprep.subr.bf16.mxu0 %v3262
      %8179 = vmatpush1.bf16.msra.mxu0 %v3261
      %8180 = vmatprep.subr.bf16.mxu0 %v3270
      %8181 = vmatpush1.bf16.msra.mxu0 %v3269
      %8182 = vmatprep.mubr.bf16.mxu0 %v7698
      %8183 = vmatmul.mubr.bf16.gmra.mrb[0].mxu0 %v7697
      %v8184 = vpop.f32.mrb[0].mxu0
      %v8185 = vadd.f32 %v8144, %v8184
      %v8186 = vpop.f32.mrb[0].mxu0
      %v8187 = vadd.f32 %v8146, %v8186
      %v8188 = vpop.f32.mrb[0].mxu0
      %v8189 = vpop.f32.mrb[0].mxu0
      %8190 = vdwg.mxu0
      %8191 = vmatprep.subr.bf16.mxu0 %v2768
      %8192 = vmatpush1.bf16.msra.mxu0 %v2767
      %8193 = vmatprep.subr.bf16.mxu0 %v2776
      %8194 = vmatpush1.bf16.msra.mxu0 %v2775
      %8195 = vmatprep.subr.bf16.mxu0 %v2784
      %8196 = vmatpush1.bf16.msra.mxu0 %v2783
      %8197 = vmatprep.subr.bf16.mxu0 %v2792
      %8198 = vmatpush1.bf16.msra.mxu0 %v2791
      %8199 = vmatprep.subr.bf16.mxu0 %v2800
      %8200 = vmatpush1.bf16.msra.mxu0 %v2799
      %8201 = vmatprep.subr.bf16.mxu0 %v2808
      %8202 = vmatpush1.bf16.msra.mxu0 %v2807
      %8203 = vmatprep.subr.bf16.mxu0 %v2816
      %8204 = vmatpush1.bf16.msra.mxu0 %v2815
      %8205 = vmatprep.subr.bf16.mxu0 %v2824
      %8206 = vmatpush1.bf16.msra.mxu0 %v2823
      %8207 = vmatprep.subr.bf16.mxu0 %v2832
      %8208 = vmatpush1.bf16.msra.mxu0 %v2831
      %8209 = vmatprep.subr.bf16.mxu0 %v2840
      %8210 = vmatpush1.bf16.msra.mxu0 %v2839
      %8211 = vmatprep.subr.bf16.mxu0 %v2848
      %8212 = vmatpush1.bf16.msra.mxu0 %v2847
      %8213 = vmatprep.subr.bf16.mxu0 %v2856
      %8214 = vmatpush1.bf16.msra.mxu0 %v2855
      %8215 = vmatprep.subr.bf16.mxu0 %v2864
      %8216 = vmatpush1.bf16.msra.mxu0 %v2863
      %8217 = vmatprep.subr.bf16.mxu0 %v2872
      %8218 = vmatpush1.bf16.msra.mxu0 %v2871
      %8219 = vmatprep.subr.bf16.mxu0 %v2880
      %8220 = vmatpush1.bf16.msra.mxu0 %v2879
      %8221 = vmatprep.subr.bf16.mxu0 %v2888
      %8222 = vmatpush1.bf16.msra.mxu0 %v2887
      %8223 = vmatprep.mubr.bf16.mxu0 %v7692
      %8224 = vmatmul.mubr.bf16.gmra.mrb[0].mxu0 %v7691
      %v8225 = vpop.f32.mrb[0].mxu0
      %v8226 = vadd.f32 0.0, %v8225
      %v8227 = vpop.f32.mrb[0].mxu0
      %v8228 = vadd.f32 0.0, %v8227
      %v8229 = vpop.f32.mrb[0].mxu0
      %v8230 = vpop.f32.mrb[0].mxu0
      %8231 = vdwg.mxu0
      %8232 = vmatprep.subr.bf16.mxu0 %v2896
      %8233 = vmatpush1.bf16.msra.mxu0 %v2895
      %8234 = vmatprep.subr.bf16.mxu0 %v2904
      %8235 = vmatpush1.bf16.msra.mxu0 %v2903
      %8236 = vmatprep.subr.bf16.mxu0 %v2912
      %8237 = vmatpush1.bf16.msra.mxu0 %v2911
      %8238 = vmatprep.subr.bf16.mxu0 %v2920
      %8239 = vmatpush1.bf16.msra.mxu0 %v2919
      %8240 = vmatprep.subr.bf16.mxu0 %v2928
      %8241 = vmatpush1.bf16.msra.mxu0 %v2927
      %8242 = vmatprep.subr.bf16.mxu0 %v2936
      %8243 = vmatpush1.bf16.msra.mxu0 %v2935
      %8244 = vmatprep.subr.bf16.mxu0 %v2944
      %8245 = vmatpush1.bf16.msra.mxu0 %v2943
      %8246 = vmatprep.subr.bf16.mxu0 %v2952
      %8247 = vmatpush1.bf16.msra.mxu0 %v2951
      %8248 = vmatprep.subr.bf16.mxu0 %v2960
      %8249 = vmatpush1.bf16.msra.mxu0 %v2959
      %8250 = vmatprep.subr.bf16.mxu0 %v2968
      %8251 = vmatpush1.bf16.msra.mxu0 %v2967
      %8252 = vmatprep.subr.bf16.mxu0 %v2976
      %8253 = vmatpush1.bf16.msra.mxu0 %v2975
      %8254 = vmatprep.subr.bf16.mxu0 %v2984
      %8255 = vmatpush1.bf16.msra.mxu0 %v2983
      %8256 = vmatprep.subr.bf16.mxu0 %v2992
      %8257 = vmatpush1.bf16.msra.mxu0 %v2991
      %8258 = vmatprep.subr.bf16.mxu0 %v3000
      %8259 = vmatpush1.bf16.msra.mxu0 %v2999
      %8260 = vmatprep.subr.bf16.mxu0 %v3008
      %8261 = vmatpush1.bf16.msra.mxu0 %v3007
      %8262 = vmatprep.subr.bf16.mxu0 %v3016
      %8263 = vmatpush1.bf16.msra.mxu0 %v3015
      %8264 = vmatprep.mubr.bf16.mxu0 %v7694
      %8265 = vmatmul.mubr.bf16.gmra.mrb[0].mxu0 %v7693
      %v8266 = vpop.f32.mrb[0].mxu0
      %v8267 = vadd.f32 %v8226, %v8266
      %v8268 = vpop.f32.mrb[0].mxu0
      %v8269 = vadd.f32 %v8228, %v8268
      %v8270 = vpop.f32.mrb[0].mxu0
      %v8271 = vpop.f32.mrb[0].mxu0
      %8272 = vdwg.mxu0
      %8273 = vmatprep.subr.bf16.mxu0 %v3024
      %8274 = vmatpush1.bf16.msra.mxu0 %v3023
      %8275 = vmatprep.subr.bf16.mxu0 %v3032
      %8276 = vmatpush1.bf16.msra.mxu0 %v3031
      %8277 = vmatprep.subr.bf16.mxu0 %v3040
      %8278 = vmatpush1.bf16.msra.mxu0 %v3039
      %8279 = vmatprep.subr.bf16.mxu0 %v3048
      %8280 = vmatpush1.bf16.msra.mxu0 %v3047
      %8281 = vmatprep.subr.bf16.mxu0 %v3056
      %8282 = vmatpush1.bf16.msra.mxu0 %v3055
      %8283 = vmatprep.subr.bf16.mxu0 %v3064
      %8284 = vmatpush1.bf16.msra.mxu0 %v3063
      %8285 = vmatprep.subr.bf16.mxu0 %v3072
      %8286 = vmatpush1.bf16.msra.mxu0 %v3071
      %8287 = vmatprep.subr.bf16.mxu0 %v3080
      %8288 = vmatpush1.bf16.msra.mxu0 %v3079
      %8289 = vmatprep.subr.bf16.mxu0 %v3088
      %8290 = vmatpush1.bf16.msra.mxu0 %v3087
      %8291 = vmatprep.subr.bf16.mxu0 %v3096
      %8292 = vmatpush1.bf16.msra.mxu0 %v3095
      %8293 = vmatprep.subr.bf16.mxu0 %v3104
      %8294 = vmatpush1.bf16.msra.mxu0 %v3103
      %8295 = vmatprep.subr.bf16.mxu0 %v3112
      %8296 = vmatpush1.bf16.msra.mxu0 %v3111
      %8297 = vmatprep.subr.bf16.mxu0 %v3120
      %8298 = vmatpush1.bf16.msra.mxu0 %v3119
      %8299 = vmatprep.subr.bf16.mxu0 %v3128
      %8300 = vmatpush1.bf16.msra.mxu0 %v3127
      %8301 = vmatprep.subr.bf16.mxu0 %v3136
      %8302 = vmatpush1.bf16.msra.mxu0 %v3135
      %8303 = vmatprep.subr.bf16.mxu0 %v3144
      %8304 = vmatpush1.bf16.msra.mxu0 %v3143
      %8305 = vmatprep.mubr.bf16.mxu0 %v7696
      %8306 = vmatmul.mubr.bf16.gmra.mrb[0].mxu0 %v7695
      %v8307 = vpop.f32.mrb[0].mxu0
      %v8308 = vadd.f32 %v8267, %v8307
      %v8309 = vpop.f32.mrb[0].mxu0
      %v8310 = vadd.f32 %v8269, %v8309
      %v8311 = vpop.f32.mrb[0].mxu0
      %v8312 = vpop.f32.mrb[0].mxu0
      %8313 = vdwg.mxu0
      %8314 = vmatprep.subr.bf16.mxu0 %v3152
      %8315 = vmatpush1.bf16.msra.mxu0 %v3151
      %8316 = vmatprep.subr.bf16.mxu0 %v3160
      %8317 = vmatpush1.bf16.msra.mxu0 %v3159
      %8318 = vmatprep.subr.bf16.mxu0 %v3168
      %8319 = vmatpush1.bf16.msra.mxu0 %v3167
      %8320 = vmatprep.subr.bf16.mxu0 %v3176
      %8321 = vmatpush1.bf16.msra.mxu0 %v3175
      %8322 = vmatprep.subr.bf16.mxu0 %v3184
      %8323 = vmatpush1.bf16.msra.mxu0 %v3183
      %8324 = vmatprep.subr.bf16.mxu0 %v3192
      %8325 = vmatpush1.bf16.msra.mxu0 %v3191
      %8326 = vmatprep.subr.bf16.mxu0 %v3200
      %8327 = vmatpush1.bf16.msra.mxu0 %v3199
      %8328 = vmatprep.subr.bf16.mxu0 %v3208
      %8329 = vmatpush1.bf16.msra.mxu0 %v3207
      %8330 = vmatprep.subr.bf16.mxu0 %v3216
      %8331 = vmatpush1.bf16.msra.mxu0 %v3215
      %8332 = vmatprep.subr.bf16.mxu0 %v3224
      %8333 = vmatpush1.bf16.msra.mxu0 %v3223
      %8334 = vmatprep.subr.bf16.mxu0 %v3232
      %8335 = vmatpush1.bf16.msra.mxu0 %v3231
      %8336 = vmatprep.subr.bf16.mxu0 %v3240
      %8337 = vmatpush1.bf16.msra.mxu0 %v3239
      %8338 = vmatprep.subr.bf16.mxu0 %v3248
      %8339 = vmatpush1.bf16.msra.mxu0 %v3247
      %8340 = vmatprep.subr.bf16.mxu0 %v3256
      %8341 = vmatpush1.bf16.msra.mxu0 %v3255
      %8342 = vmatprep.subr.bf16.mxu0 %v3264
      %8343 = vmatpush1.bf16.msra.mxu0 %v3263
      %8344 = vmatprep.subr.bf16.mxu0 %v3272
      %8345 = vmatpush1.bf16.msra.mxu0 %v3271
      %8346 = vmatprep.mubr.bf16.mxu0 %v7698
      %8347 = vmatmul.mubr.bf16.gmra.mrb[0].mxu0 %v7697
      %v8348 = vpop.f32.mrb[0].mxu0
      %v8349 = vadd.f32 %v8308, %v8348
      %v8350 = vpop.f32.mrb[0].mxu0
      %v8351 = vadd.f32 %v8310, %v8350
      %v8352 = vpop.f32.mrb[0].mxu0
      %v8353 = vpop.f32.mrb[0].mxu0
      %8354 = vdwg.mxu0
      %8355 = vmatprep.subr.bf16.mxu0 %v5978
      %8356 = vmatpush1.bf16.msra.mxu0 %v5977
      %8357 = vmatprep.subr.bf16.mxu0 %v5986
      %8358 = vmatpush1.bf16.msra.mxu0 %v5985
      %8359 = vmatprep.subr.bf16.mxu0 %v5994
      %8360 = vmatpush1.bf16.msra.mxu0 %v5993
      %8361 = vmatprep.subr.bf16.mxu0 %v6002
      %8362 = vmatpush1.bf16.msra.mxu0 %v6001
      %8363 = vmatprep.subr.bf16.mxu0 %v6010
      %8364 = vmatpush1.bf16.msra.mxu0 %v6009
      %8365 = vmatprep.subr.bf16.mxu0 %v6018
      %8366 = vmatpush1.bf16.msra.mxu0 %v6017
      %8367 = vmatprep.subr.bf16.mxu0 %v6026
      %8368 = vmatpush1.bf16.msra.mxu0 %v6025
      %8369 = vmatprep.subr.bf16.mxu0 %v6034
      %8370 = vmatpush1.bf16.msra.mxu0 %v6033
      %8371 = vmatprep.subr.bf16.mxu0 %v6042
      %8372 = vmatpush1.bf16.msra.mxu0 %v6041
      %8373 = vmatprep.subr.bf16.mxu0 %v6050
      %8374 = vmatpush1.bf16.msra.mxu0 %v6049
      %8375 = vmatprep.subr.bf16.mxu0 %v6058
      %8376 = vmatpush1.bf16.msra.mxu0 %v6057
      %8377 = vmatprep.subr.bf16.mxu0 %v6066
      %8378 = vmatpush1.bf16.msra.mxu0 %v6065
      %8379 = vmatprep.subr.bf16.mxu0 %v6074
      %8380 = vmatpush1.bf16.msra.mxu0 %v6073
      %8381 = vmatprep.subr.bf16.mxu0 %v6082
      %8382 = vmatpush1.bf16.msra.mxu0 %v6081
      %8383 = vmatprep.subr.bf16.mxu0 %v6090
      %8384 = vmatpush1.bf16.msra.mxu0 %v6089
      %8385 = vmatprep.subr.bf16.mxu0 %v6098
      %8386 = vmatpush1.bf16.msra.mxu0 %v6097
      %8387 = vmatprep.mubr.bf16.mxu0 %v7692
      %8388 = vmatmul.mubr.bf16.gmra.mrb[0].mxu0 %v7691
      %v8389 = vpop.f32.mrb[0].mxu0
      %v8390 = vadd.f32 %v7857, %v8389
      %v8391 = vpop.f32.mrb[0].mxu0
      %v8392 = vadd.f32 %v7859, %v8391
      %v8393 = vpop.f32.mrb[0].mxu0
      %v8394 = vpop.f32.mrb[0].mxu0
      %8395 = vdwg.mxu0
      %8396 = vmatprep.subr.bf16.mxu0 %v6106
      %8397 = vmatpush1.bf16.msra.mxu0 %v6105
      %8398 = vmatprep.subr.bf16.mxu0 %v6114
      %8399 = vmatpush1.bf16.msra.mxu0 %v6113
      %8400 = vmatprep.subr.bf16.mxu0 %v6122
      %8401 = vmatpush1.bf16.msra.mxu0 %v6121
      %8402 = vmatprep.subr.bf16.mxu0 %v6130
      %8403 = vmatpush1.bf16.msra.mxu0 %v6129
      %8404 = vmatprep.subr.bf16.mxu0 %v6138
      %8405 = vmatpush1.bf16.msra.mxu0 %v6137
      %8406 = vmatprep.subr.bf16.mxu0 %v6146
      %8407 = vmatpush1.bf16.msra.mxu0 %v6145
      %8408 = vmatprep.subr.bf16.mxu0 %v6154
      %8409 = vmatpush1.bf16.msra.mxu0 %v6153
      %8410 = vmatprep.subr.bf16.mxu0 %v6162
      %8411 = vmatpush1.bf16.msra.mxu0 %v6161
      %8412 = vmatprep.subr.bf16.mxu0 %v6170
      %8413 = vmatpush1.bf16.msra.mxu0 %v6169
      %8414 = vmatprep.subr.bf16.mxu0 %v6178
      %8415 = vmatpush1.bf16.msra.mxu0 %v6177
      %8416 = vmatprep.subr.bf16.mxu0 %v6186
      %8417 = vmatpush1.bf16.msra.mxu0 %v6185
      %8418 = vmatprep.subr.bf16.mxu0 %v6194
      %8419 = vmatpush1.bf16.msra.mxu0 %v6193
      %8420 = vmatprep.subr.bf16.mxu0 %v6202
      %8421 = vmatpush1.bf16.msra.mxu0 %v6201
      %8422 = vmatprep.subr.bf16.mxu0 %v6210
      %8423 = vmatpush1.bf16.msra.mxu0 %v6209
      %8424 = vmatprep.subr.bf16.mxu0 %v6218
      %8425 = vmatpush1.bf16.msra.mxu0 %v6217
      %8426 = vmatprep.subr.bf16.mxu0 %v6226
      %8427 = vmatpush1.bf16.msra.mxu0 %v6225
      %8428 = vmatprep.mubr.bf16.mxu0 %v7694
      %8429 = vmatmul.mubr.bf16.gmra.mrb[0].mxu0 %v7693
      %v8430 = vpop.f32.mrb[0].mxu0
      %v8431 = vadd.f32 %v8390, %v8430
      %v8432 = vpop.f32.mrb[0].mxu0
      %v8433 = vadd.f32 %v8392, %v8432
      %v8434 = vpop.f32.mrb[0].mxu0
      %v8435 = vpop.f32.mrb[0].mxu0
      %8436 = vdwg.mxu0
      %8437 = vmatprep.subr.bf16.mxu0 %v6234
      %8438 = vmatpush1.bf16.msra.mxu0 %v6233
      %8439 = vmatprep.subr.bf16.mxu0 %v6242
      %8440 = vmatpush1.bf16.msra.mxu0 %v6241
      %8441 = vmatprep.subr.bf16.mxu0 %v6250
      %8442 = vmatpush1.bf16.msra.mxu0 %v6249
      %8443 = vmatprep.subr.bf16.mxu0 %v6258
      %8444 = vmatpush1.bf16.msra.mxu0 %v6257
      %8445 = vmatprep.subr.bf16.mxu0 %v6266
      %8446 = vmatpush1.bf16.msra.mxu0 %v6265
      %8447 = vmatprep.subr.bf16.mxu0 %v6274
      %8448 = vmatpush1.bf16.msra.mxu0 %v6273
      %8449 = vmatprep.subr.bf16.mxu0 %v6282
      %8450 = vmatpush1.bf16.msra.mxu0 %v6281
      %8451 = vmatprep.subr.bf16.mxu0 %v6290
      %8452 = vmatpush1.bf16.msra.mxu0 %v6289
      %8453 = vmatprep.subr.bf16.mxu0 %v6298
      %8454 = vmatpush1.bf16.msra.mxu0 %v6297
      %8455 = vmatprep.subr.bf16.mxu0 %v6306
      %8456 = vmatpush1.bf16.msra.mxu0 %v6305
      %8457 = vmatprep.subr.bf16.mxu0 %v6314
      %8458 = vmatpush1.bf16.msra.mxu0 %v6313
      %8459 = vmatprep.subr.bf16.mxu0 %v6322
      %8460 = vmatpush1.bf16.msra.mxu0 %v6321
      %8461 = vmatprep.subr.bf16.mxu0 %v6330
      %8462 = vmatpush1.bf16.msra.mxu0 %v6329
      %8463 = vmatprep.subr.bf16.mxu0 %v6338
      %8464 = vmatpush1.bf16.msra.mxu0 %v6337
      %8465 = vmatprep.subr.bf16.mxu0 %v6346
      %8466 = vmatpush1.bf16.msra.mxu0 %v6345
      %8467 = vmatprep.subr.bf16.mxu0 %v6354
      %8468 = vmatpush1.bf16.msra.mxu0 %v6353
      %8469 = vmatprep.mubr.bf16.mxu0 %v7696
      %8470 = vmatmul.mubr.bf16.gmra.mrb[0].mxu0 %v7695
      %v8471 = vpop.f32.mrb[0].mxu0
      %v8472 = vadd.f32 %v8431, %v8471
      %v8473 = vpop.f32.mrb[0].mxu0
      %v8474 = vadd.f32 %v8433, %v8473
      %v8475 = vpop.f32.mrb[0].mxu0
      %v8476 = vpop.f32.mrb[0].mxu0
      %8477 = vdwg.mxu0
      %8478 = vmatprep.subr.bf16.mxu0 %v6362
      %8479 = vmatpush1.bf16.msra.mxu0 %v6361
      %8480 = vmatprep.subr.bf16.mxu0 %v6370
      %8481 = vmatpush1.bf16.msra.mxu0 %v6369
      %8482 = vmatprep.subr.bf16.mxu0 %v6378
      %8483 = vmatpush1.bf16.msra.mxu0 %v6377
      %8484 = vmatprep.subr.bf16.mxu0 %v6386
      %8485 = vmatpush1.bf16.msra.mxu0 %v6385
      %8486 = vmatprep.subr.bf16.mxu0 %v6394
      %8487 = vmatpush1.bf16.msra.mxu0 %v6393
      %8488 = vmatprep.subr.bf16.mxu0 %v6402
      %8489 = vmatpush1.bf16.msra.mxu0 %v6401
      %8490 = vmatprep.subr.bf16.mxu0 %v6410
      %8491 = vmatpush1.bf16.msra.mxu0 %v6409
      %8492 = vmatprep.subr.bf16.mxu0 %v6418
      %8493 = vmatpush1.bf16.msra.mxu0 %v6417
      %8494 = vmatprep.subr.bf16.mxu0 %v6426
      %8495 = vmatpush1.bf16.msra.mxu0 %v6425
      %8496 = vmatprep.subr.bf16.mxu0 %v6434
      %8497 = vmatpush1.bf16.msra.mxu0 %v6433
      %8498 = vmatprep.subr.bf16.mxu0 %v6442
      %8499 = vmatpush1.bf16.msra.mxu0 %v6441
      %8500 = vmatprep.subr.bf16.mxu0 %v6450
      %8501 = vmatpush1.bf16.msra.mxu0 %v6449
      %8502 = vmatprep.subr.bf16.mxu0 %v6458
      %8503 = vmatpush1.bf16.msra.mxu0 %v6457
      %8504 = vmatprep.subr.bf16.mxu0 %v6466
      %8505 = vmatpush1.bf16.msra.mxu0 %v6465
      %8506 = vmatprep.subr.bf16.mxu0 %v6474
      %8507 = vmatpush1.bf16.msra.mxu0 %v6473
      %8508 = vmatprep.subr.bf16.mxu0 %v6482
      %8509 = vmatpush1.bf16.msra.mxu0 %v6481
      %8510 = vmatprep.mubr.bf16.mxu0 %v7698
      %8511 = vmatmul.mubr.bf16.gmra.mrb[0].mxu0 %v7697
      %v8512 = vpop.f32.mrb[0].mxu0
      %v8513 = vadd.f32 %v8472, %v8512
      %v8514 = vpop.f32.mrb[0].mxu0
      %v8515 = vadd.f32 %v8474, %v8514
      %v8516 = vpop.f32.mrb[0].mxu0
      %v8517 = vpop.f32.mrb[0].mxu0
      %8518 = vdwg.mxu0
      %8519 = vmatprep.subr.bf16.mxu0 %v5980
      %8520 = vmatpush1.bf16.msra.mxu0 %v5979
      %8521 = vmatprep.subr.bf16.mxu0 %v5988
      %8522 = vmatpush1.bf16.msra.mxu0 %v5987
      %8523 = vmatprep.subr.bf16.mxu0 %v5996
      %8524 = vmatpush1.bf16.msra.mxu0 %v5995
      %8525 = vmatprep.subr.bf16.mxu0 %v6004
      %8526 = vmatpush1.bf16.msra.mxu0 %v6003
      %8527 = vmatprep.subr.bf16.mxu0 %v6012
      %8528 = vmatpush1.bf16.msra.mxu0 %v6011
      %8529 = vmatprep.subr.bf16.mxu0 %v6020
      %8530 = vmatpush1.bf16.msra.mxu0 %v6019
      %8531 = vmatprep.subr.bf16.mxu0 %v6028
      %8532 = vmatpush1.bf16.msra.mxu0 %v6027
      %8533 = vmatprep.subr.bf16.mxu0 %v6036
      %8534 = vmatpush1.bf16.msra.mxu0 %v6035
      %8535 = vmatprep.subr.bf16.mxu0 %v6044
      %8536 = vmatpush1.bf16.msra.mxu0 %v6043
      %8537 = vmatprep.subr.bf16.mxu0 %v6052
      %8538 = vmatpush1.bf16.msra.mxu0 %v6051
      %8539 = vmatprep.subr.bf16.mxu0 %v6060
      %8540 = vmatpush1.bf16.msra.mxu0 %v6059
      %8541 = vmatprep.subr.bf16.mxu0 %v6068
      %8542 = vmatpush1.bf16.msra.mxu0 %v6067
      %8543 = vmatprep.subr.bf16.mxu0 %v6076
      %8544 = vmatpush1.bf16.msra.mxu0 %v6075
      %8545 = vmatprep.subr.bf16.mxu0 %v6084
      %8546 = vmatpush1.bf16.msra.mxu0 %v6083
      %8547 = vmatprep.subr.bf16.mxu0 %v6092
      %8548 = vmatpush1.bf16.msra.mxu0 %v6091
      %8549 = vmatprep.subr.bf16.mxu0 %v6100
      %8550 = vmatpush1.bf16.msra.mxu0 %v6099
      %8551 = vmatprep.mubr.bf16.mxu0 %v7692
      %8552 = vmatmul.mubr.bf16.gmra.mrb[0].mxu0 %v7691
      %v8553 = vpop.f32.mrb[0].mxu0
      %v8554 = vadd.f32 %v8021, %v8553
      %v8555 = vpop.f32.mrb[0].mxu0
      %v8556 = vadd.f32 %v8023, %v8555
      %v8557 = vpop.f32.mrb[0].mxu0
      %v8558 = vpop.f32.mrb[0].mxu0
      %8559 = vdwg.mxu0
      %8560 = vmatprep.subr.bf16.mxu0 %v6108
      %8561 = vmatpush1.bf16.msra.mxu0 %v6107
      %8562 = vmatprep.subr.bf16.mxu0 %v6116
      %8563 = vmatpush1.bf16.msra.mxu0 %v6115
      %8564 = vmatprep.subr.bf16.mxu0 %v6124
      %8565 = vmatpush1.bf16.msra.mxu0 %v6123
      %8566 = vmatprep.subr.bf16.mxu0 %v6132
      %8567 = vmatpush1.bf16.msra.mxu0 %v6131
      %8568 = vmatprep.subr.bf16.mxu0 %v6140
      %8569 = vmatpush1.bf16.msra.mxu0 %v6139
      %8570 = vmatprep.subr.bf16.mxu0 %v6148
      %8571 = vmatpush1.bf16.msra.mxu0 %v6147
      %8572 = vmatprep.subr.bf16.mxu0 %v6156
      %8573 = vmatpush1.bf16.msra.mxu0 %v6155
      %8574 = vmatprep.subr.bf16.mxu0 %v6164
      %8575 = vmatpush1.bf16.msra.mxu0 %v6163
      %8576 = vmatprep.subr.bf16.mxu0 %v6172
      %8577 = vmatpush1.bf16.msra.mxu0 %v6171
      %8578 = vmatprep.subr.bf16.mxu0 %v6180
      %8579 = vmatpush1.bf16.msra.mxu0 %v6179
      %8580 = vmatprep.subr.bf16.mxu0 %v6188
      %8581 = vmatpush1.bf16.msra.mxu0 %v6187
      %8582 = vmatprep.subr.bf16.mxu0 %v6196
      %8583 = vmatpush1.bf16.msra.mxu0 %v6195
      %8584 = vmatprep.subr.bf16.mxu0 %v6204
      %8585 = vmatpush1.bf16.msra.mxu0 %v6203
      %8586 = vmatprep.subr.bf16.mxu0 %v6212
      %8587 = vmatpush1.bf16.msra.mxu0 %v6211
      %8588 = vmatprep.subr.bf16.mxu0 %v6220
      %8589 = vmatpush1.bf16.msra.mxu0 %v6219
      %8590 = vmatprep.subr.bf16.mxu0 %v6228
      %8591 = vmatpush1.bf16.msra.mxu0 %v6227
      %8592 = vmatprep.mubr.bf16.mxu0 %v7694
      %8593 = vmatmul.mubr.bf16.gmra.mrb[0].mxu0 %v7693
      %v8594 = vpop.f32.mrb[0].mxu0
      %v8595 = vadd.f32 %v8554, %v8594
      %v8596 = vpop.f32.mrb[0].mxu0
      %v8597 = vadd.f32 %v8556, %v8596
      %v8598 = vpop.f32.mrb[0].mxu0
      %v8599 = vpop.f32.mrb[0].mxu0
      %8600 = vdwg.mxu0
      %8601 = vmatprep.subr.bf16.mxu0 %v6236
      %8602 = vmatpush1.bf16.msra.mxu0 %v6235
      %8603 = vmatprep.subr.bf16.mxu0 %v6244
      %8604 = vmatpush1.bf16.msra.mxu0 %v6243
      %8605 = vmatprep.subr.bf16.mxu0 %v6252
      %8606 = vmatpush1.bf16.msra.mxu0 %v6251
      %8607 = vmatprep.subr.bf16.mxu0 %v6260
      %8608 = vmatpush1.bf16.msra.mxu0 %v6259
      %8609 = vmatprep.subr.bf16.mxu0 %v6268
      %8610 = vmatpush1.bf16.msra.mxu0 %v6267
      %8611 = vmatprep.subr.bf16.mxu0 %v6276
      %8612 = vmatpush1.bf16.msra.mxu0 %v6275
      %8613 = vmatprep.subr.bf16.mxu0 %v6284
      %8614 = vmatpush1.bf16.msra.mxu0 %v6283
      %8615 = vmatprep.subr.bf16.mxu0 %v6292
      %8616 = vmatpush1.bf16.msra.mxu0 %v6291
      %8617 = vmatprep.subr.bf16.mxu0 %v6300
      %8618 = vmatpush1.bf16.msra.mxu0 %v6299
      %8619 = vmatprep.subr.bf16.mxu0 %v6308
      %8620 = vmatpush1.bf16.msra.mxu0 %v6307
      %8621 = vmatprep.subr.bf16.mxu0 %v6316
      %8622 = vmatpush1.bf16.msra.mxu0 %v6315
      %8623 = vmatprep.subr.bf16.mxu0 %v6324
      %8624 = vmatpush1.bf16.msra.mxu0 %v6323
      %8625 = vmatprep.subr.bf16.mxu0 %v6332
      %8626 = vmatpush1.bf16.msra.mxu0 %v6331
      %8627 = vmatprep.subr.bf16.mxu0 %v6340
      %8628 = vmatpush1.bf16.msra.mxu0 %v6339
      %8629 = vmatprep.subr.bf16.mxu0 %v6348
      %8630 = vmatpush1.bf16.msra.mxu0 %v6347
      %8631 = vmatprep.subr.bf16.mxu0 %v6356
      %8632 = vmatpush1.bf16.msra.mxu0 %v6355
      %8633 = vmatprep.mubr.bf16.mxu0 %v7696
      %8634 = vmatmul.mubr.bf16.gmra.mrb[0].mxu0 %v7695
      %v8635 = vpop.f32.mrb[0].mxu0
      %v8636 = vadd.f32 %v8595, %v8635
      %v8637 = vpop.f32.mrb[0].mxu0
      %v8638 = vadd.f32 %v8597, %v8637
      %v8639 = vpop.f32.mrb[0].mxu0
      %v8640 = vpop.f32.mrb[0].mxu0
      %8641 = vdwg.mxu0
      %8642 = vmatprep.subr.bf16.mxu0 %v6364
      %8643 = vmatpush1.bf16.msra.mxu0 %v6363
      %8644 = vmatprep.subr.bf16.mxu0 %v6372
      %8645 = vmatpush1.bf16.msra.mxu0 %v6371
      %8646 = vmatprep.subr.bf16.mxu0 %v6380
      %8647 = vmatpush1.bf16.msra.mxu0 %v6379
      %8648 = vmatprep.subr.bf16.mxu0 %v6388
      %8649 = vmatpush1.bf16.msra.mxu0 %v6387
      %8650 = vmatprep.subr.bf16.mxu0 %v6396
      %8651 = vmatpush1.bf16.msra.mxu0 %v6395
      %8652 = vmatprep.subr.bf16.mxu0 %v6404
      %8653 = vmatpush1.bf16.msra.mxu0 %v6403
      %8654 = vmatprep.subr.bf16.mxu0 %v6412
      %8655 = vmatpush1.bf16.msra.mxu0 %v6411
      %8656 = vmatprep.subr.bf16.mxu0 %v6420
      %8657 = vmatpush1.bf16.msra.mxu0 %v6419
      %8658 = vmatprep.subr.bf16.mxu0 %v6428
      %8659 = vmatpush1.bf16.msra.mxu0 %v6427
      %8660 = vmatprep.subr.bf16.mxu0 %v6436
      %8661 = vmatpush1.bf16.msra.mxu0 %v6435
      %8662 = vmatprep.subr.bf16.mxu0 %v6444
      %8663 = vmatpush1.bf16.msra.mxu0 %v6443
      %8664 = vmatprep.subr.bf16.mxu0 %v6452
      %8665 = vmatpush1.bf16.msra.mxu0 %v6451
      %8666 = vmatprep.subr.bf16.mxu0 %v6460
      %8667 = vmatpush1.bf16.msra.mxu0 %v6459
      %8668 = vmatprep.subr.bf16.mxu0 %v6468
      %8669 = vmatpush1.bf16.msra.mxu0 %v6467
      %8670 = vmatprep.subr.bf16.mxu0 %v6476
      %8671 = vmatpush1.bf16.msra.mxu0 %v6475
      %8672 = vmatprep.subr.bf16.mxu0 %v6484
      %8673 = vmatpush1.bf16.msra.mxu0 %v6483
      %8674 = vmatprep.mubr.bf16.mxu0 %v7698
      %8675 = vmatmul.mubr.bf16.gmra.mrb[0].mxu0 %v7697
      %v8676 = vpop.f32.mrb[0].mxu0
      %v8677 = vadd.f32 %v8636, %v8676
      %v8678 = vpop.f32.mrb[0].mxu0
      %v8679 = vadd.f32 %v8638, %v8678
      %v8680 = vpop.f32.mrb[0].mxu0
      %v8681 = vpop.f32.mrb[0].mxu0
      %8682 = vdwg.mxu0
      %8683 = vmatprep.subr.bf16.mxu0 %v5982
      %8684 = vmatpush1.bf16.msra.mxu0 %v5981
      %8685 = vmatprep.subr.bf16.mxu0 %v5990
      %8686 = vmatpush1.bf16.msra.mxu0 %v5989
      %8687 = vmatprep.subr.bf16.mxu0 %v5998
      %8688 = vmatpush1.bf16.msra.mxu0 %v5997
      %8689 = vmatprep.subr.bf16.mxu0 %v6006
      %8690 = vmatpush1.bf16.msra.mxu0 %v6005
      %8691 = vmatprep.subr.bf16.mxu0 %v6014
      %8692 = vmatpush1.bf16.msra.mxu0 %v6013
      %8693 = vmatprep.subr.bf16.mxu0 %v6022
      %8694 = vmatpush1.bf16.msra.mxu0 %v6021
      %8695 = vmatprep.subr.bf16.mxu0 %v6030
      %8696 = vmatpush1.bf16.msra.mxu0 %v6029
      %8697 = vmatprep.subr.bf16.mxu0 %v6038
      %8698 = vmatpush1.bf16.msra.mxu0 %v6037
      %8699 = vmatprep.subr.bf16.mxu0 %v6046
      %8700 = vmatpush1.bf16.msra.mxu0 %v6045
      %8701 = vmatprep.subr.bf16.mxu0 %v6054
      %8702 = vmatpush1.bf16.msra.mxu0 %v6053
      %8703 = vmatprep.subr.bf16.mxu0 %v6062
      %8704 = vmatpush1.bf16.msra.mxu0 %v6061
      %8705 = vmatprep.subr.bf16.mxu0 %v6070
      %8706 = vmatpush1.bf16.msra.mxu0 %v6069
      %8707 = vmatprep.subr.bf16.mxu0 %v6078
      %8708 = vmatpush1.bf16.msra.mxu0 %v6077
      %8709 = vmatprep.subr.bf16.mxu0 %v6086
      %8710 = vmatpush1.bf16.msra.mxu0 %v6085
      %8711 = vmatprep.subr.bf16.mxu0 %v6094
      %8712 = vmatpush1.bf16.msra.mxu0 %v6093
      %8713 = vmatprep.subr.bf16.mxu0 %v6102
      %8714 = vmatpush1.bf16.msra.mxu0 %v6101
      %8715 = vmatprep.mubr.bf16.mxu0 %v7692
      %8716 = vmatmul.mubr.bf16.gmra.mrb[0].mxu0 %v7691
      %v8717 = vpop.f32.mrb[0].mxu0
      %v8718 = vadd.f32 %v8185, %v8717
      %v8719 = vpop.f32.mrb[0].mxu0
      %v8720 = vadd.f32 %v8187, %v8719
      %v8721 = vpop.f32.mrb[0].mxu0
      %v8722 = vpop.f32.mrb[0].mxu0
      %8723 = vdwg.mxu0
      %8724 = vmatprep.subr.bf16.mxu0 %v6110
      %8725 = vmatpush1.bf16.msra.mxu0 %v6109
      %8726 = vmatprep.subr.bf16.mxu0 %v6118
      %8727 = vmatpush1.bf16.msra.mxu0 %v6117
      %8728 = vmatprep.subr.bf16.mxu0 %v6126
      %8729 = vmatpush1.bf16.msra.mxu0 %v6125
      %8730 = vmatprep.subr.bf16.mxu0 %v6134
      %8731 = vmatpush1.bf16.msra.mxu0 %v6133
      %8732 = vmatprep.subr.bf16.mxu0 %v6142
      %8733 = vmatpush1.bf16.msra.mxu0 %v6141
      %8734 = vmatprep.subr.bf16.mxu0 %v6150
      %8735 = vmatpush1.bf16.msra.mxu0 %v6149
      %8736 = vmatprep.subr.bf16.mxu0 %v6158
      %8737 = vmatpush1.bf16.msra.mxu0 %v6157
      %8738 = vmatprep.subr.bf16.mxu0 %v6166
      %8739 = vmatpush1.bf16.msra.mxu0 %v6165
      %8740 = vmatprep.subr.bf16.mxu0 %v6174
      %8741 = vmatpush1.bf16.msra.mxu0 %v6173
      %8742 = vmatprep.subr.bf16.mxu0 %v6182
      %8743 = vmatpush1.bf16.msra.mxu0 %v6181
      %8744 = vmatprep.subr.bf16.mxu0 %v6190
      %8745 = vmatpush1.bf16.msra.mxu0 %v6189
      %8746 = vmatprep.subr.bf16.mxu0 %v6198
      %8747 = vmatpush1.bf16.msra.mxu0 %v6197
      %8748 = vmatprep.subr.bf16.mxu0 %v6206
      %8749 = vmatpush1.bf16.msra.mxu0 %v6205
      %8750 = vmatprep.subr.bf16.mxu0 %v6214
      %8751 = vmatpush1.bf16.msra.mxu0 %v6213
      %8752 = vmatprep.subr.bf16.mxu0 %v6222
      %8753 = vmatpush1.bf16.msra.mxu0 %v6221
      %8754 = vmatprep.subr.bf16.mxu0 %v6230
      %8755 = vmatpush1.bf16.msra.mxu0 %v6229
      %8756 = vmatprep.mubr.bf16.mxu0 %v7694
      %8757 = vmatmul.mubr.bf16.gmra.mrb[0].mxu0 %v7693
      %v8758 = vpop.f32.mrb[0].mxu0
      %v8759 = vadd.f32 %v8718, %v8758
      %v8760 = vpop.f32.mrb[0].mxu0
      %v8761 = vadd.f32 %v8720, %v8760
      %v8762 = vpop.f32.mrb[0].mxu0
      %v8763 = vpop.f32.mrb[0].mxu0
      %8764 = vdwg.mxu0
      %8765 = vmatprep.subr.bf16.mxu0 %v6238
      %8766 = vmatpush1.bf16.msra.mxu0 %v6237
      %8767 = vmatprep.subr.bf16.mxu0 %v6246
      %8768 = vmatpush1.bf16.msra.mxu0 %v6245
      %8769 = vmatprep.subr.bf16.mxu0 %v6254
      %8770 = vmatpush1.bf16.msra.mxu0 %v6253
      %8771 = vmatprep.subr.bf16.mxu0 %v6262
      %8772 = vmatpush1.bf16.msra.mxu0 %v6261
      %8773 = vmatprep.subr.bf16.mxu0 %v6270
      %8774 = vmatpush1.bf16.msra.mxu0 %v6269
      %8775 = vmatprep.subr.bf16.mxu0 %v6278
      %8776 = vmatpush1.bf16.msra.mxu0 %v6277
      %8777 = vmatprep.subr.bf16.mxu0 %v6286
      %8778 = vmatpush1.bf16.msra.mxu0 %v6285
      %8779 = vmatprep.subr.bf16.mxu0 %v6294
      %8780 = vmatpush1.bf16.msra.mxu0 %v6293
      %8781 = vmatprep.subr.bf16.mxu0 %v6302
      %8782 = vmatpush1.bf16.msra.mxu0 %v6301
      %8783 = vmatprep.subr.bf16.mxu0 %v6310
      %8784 = vmatpush1.bf16.msra.mxu0 %v6309
      %8785 = vmatprep.subr.bf16.mxu0 %v6318
      %8786 = vmatpush1.bf16.msra.mxu0 %v6317
      %8787 = vmatprep.subr.bf16.mxu0 %v6326
      %8788 = vmatpush1.bf16.msra.mxu0 %v6325
      %8789 = vmatprep.subr.bf16.mxu0 %v6334
      %8790 = vmatpush1.bf16.msra.mxu0 %v6333
      %8791 = vmatprep.subr.bf16.mxu0 %v6342
      %8792 = vmatpush1.bf16.msra.mxu0 %v6341
      %8793 = vmatprep.subr.bf16.mxu0 %v6350
      %8794 = vmatpush1.bf16.msra.mxu0 %v6349
      %8795 = vmatprep.subr.bf16.mxu0 %v6358
      %8796 = vmatpush1.bf16.msra.mxu0 %v6357
      %8797 = vmatprep.mubr.bf16.mxu0 %v7696
      %8798 = vmatmul.mubr.bf16.gmra.mrb[0].mxu0 %v7695
      %v8799 = vpop.f32.mrb[0].mxu0
      %v8800 = vadd.f32 %v8759, %v8799
      %v8801 = vpop.f32.mrb[0].mxu0
      %v8802 = vadd.f32 %v8761, %v8801
      %v8803 = vpop.f32.mrb[0].mxu0
      %v8804 = vpop.f32.mrb[0].mxu0
      %8805 = vdwg.mxu0
      %8806 = vmatprep.subr.bf16.mxu0 %v6366
      %8807 = vmatpush1.bf16.msra.mxu0 %v6365
      %8808 = vmatprep.subr.bf16.mxu0 %v6374
      %8809 = vmatpush1.bf16.msra.mxu0 %v6373
      %8810 = vmatprep.subr.bf16.mxu0 %v6382
      %8811 = vmatpush1.bf16.msra.mxu0 %v6381
      %8812 = vmatprep.subr.bf16.mxu0 %v6390
      %8813 = vmatpush1.bf16.msra.mxu0 %v6389
      %8814 = vmatprep.subr.bf16.mxu0 %v6398
      %8815 = vmatpush1.bf16.msra.mxu0 %v6397
      %8816 = vmatprep.subr.bf16.mxu0 %v6406
      %8817 = vmatpush1.bf16.msra.mxu0 %v6405
      %8818 = vmatprep.subr.bf16.mxu0 %v6414
      %8819 = vmatpush1.bf16.msra.mxu0 %v6413
      %8820 = vmatprep.subr.bf16.mxu0 %v6422
      %8821 = vmatpush1.bf16.msra.mxu0 %v6421
      %8822 = vmatprep.subr.bf16.mxu0 %v6430
      %8823 = vmatpush1.bf16.msra.mxu0 %v6429
      %8824 = vmatprep.subr.bf16.mxu0 %v6438
      %8825 = vmatpush1.bf16.msra.mxu0 %v6437
      %8826 = vmatprep.subr.bf16.mxu0 %v6446
      %8827 = vmatpush1.bf16.msra.mxu0 %v6445
      %8828 = vmatprep.subr.bf16.mxu0 %v6454
      %8829 = vmatpush1.bf16.msra.mxu0 %v6453
      %8830 = vmatprep.subr.bf16.mxu0 %v6462
      %8831 = vmatpush1.bf16.msra.mxu0 %v6461
      %8832 = vmatprep.subr.bf16.mxu0 %v6470
      %8833 = vmatpush1.bf16.msra.mxu0 %v6469
      %8834 = vmatprep.subr.bf16.mxu0 %v6478
      %8835 = vmatpush1.bf16.msra.mxu0 %v6477
      %8836 = vmatprep.subr.bf16.mxu0 %v6486
      %8837 = vmatpush1.bf16.msra.mxu0 %v6485
      %8838 = vmatprep.mubr.bf16.mxu0 %v7698
      %8839 = vmatmul.mubr.bf16.gmra.mrb[0].mxu0 %v7697
      %v8840 = vpop.f32.mrb[0].mxu0
      %v8841 = vadd.f32 %v8800, %v8840
      %v8842 = vpop.f32.mrb[0].mxu0
      %v8843 = vadd.f32 %v8802, %v8842
      %v8844 = vpop.f32.mrb[0].mxu0
      %v8845 = vpop.f32.mrb[0].mxu0
      %8846 = vdwg.mxu0
      %8847 = vmatprep.subr.bf16.mxu0 %v5984
      %8848 = vmatpush1.bf16.msra.mxu0 %v5983
      %8849 = vmatprep.subr.bf16.mxu0 %v5992
      %8850 = vmatpush1.bf16.msra.mxu0 %v5991
      %8851 = vmatprep.subr.bf16.mxu0 %v6000
      %8852 = vmatpush1.bf16.msra.mxu0 %v5999
      %8853 = vmatprep.subr.bf16.mxu0 %v6008
      %8854 = vmatpush1.bf16.msra.mxu0 %v6007
      %8855 = vmatprep.subr.bf16.mxu0 %v6016
      %8856 = vmatpush1.bf16.msra.mxu0 %v6015
      %8857 = vmatprep.subr.bf16.mxu0 %v6024
      %8858 = vmatpush1.bf16.msra.mxu0 %v6023
      %8859 = vmatprep.subr.bf16.mxu0 %v6032
      %8860 = vmatpush1.bf16.msra.mxu0 %v6031
      %8861 = vmatprep.subr.bf16.mxu0 %v6040
      %8862 = vmatpush1.bf16.msra.mxu0 %v6039
      %8863 = vmatprep.subr.bf16.mxu0 %v6048
      %8864 = vmatpush1.bf16.msra.mxu0 %v6047
      %8865 = vmatprep.subr.bf16.mxu0 %v6056
      %8866 = vmatpush1.bf16.msra.mxu0 %v6055
      %8867 = vmatprep.subr.bf16.mxu0 %v6064
      %8868 = vmatpush1.bf16.msra.mxu0 %v6063
      %8869 = vmatprep.subr.bf16.mxu0 %v6072
      %8870 = vmatpush1.bf16.msra.mxu0 %v6071
      %8871 = vmatprep.subr.bf16.mxu0 %v6080
      %8872 = vmatpush1.bf16.msra.mxu0 %v6079
      %8873 = vmatprep.subr.bf16.mxu0 %v6088
      %8874 = vmatpush1.bf16.msra.mxu0 %v6087
      %8875 = vmatprep.subr.bf16.mxu0 %v6096
      %8876 = vmatpush1.bf16.msra.mxu0 %v6095
      %8877 = vmatprep.subr.bf16.mxu0 %v6104
      %8878 = vmatpush1.bf16.msra.mxu0 %v6103
      %8879 = vmatprep.mubr.bf16.mxu0 %v7692
      %8880 = vmatmul.mubr.bf16.gmra.mrb[0].mxu0 %v7691
      %v8881 = vpop.f32.mrb[0].mxu0
      %v8882 = vadd.f32 %v8349, %v8881
      %v8883 = vpop.f32.mrb[0].mxu0
      %v8884 = vadd.f32 %v8351, %v8883
      %v8885 = vpop.f32.mrb[0].mxu0
      %v8886 = vpop.f32.mrb[0].mxu0
      %8887 = vdwg.mxu0
      %8888 = vmatprep.subr.bf16.mxu0 %v6112
      %8889 = vmatpush1.bf16.msra.mxu0 %v6111
      %8890 = vmatprep.subr.bf16.mxu0 %v6120
      %8891 = vmatpush1.bf16.msra.mxu0 %v6119
      %8892 = vmatprep.subr.bf16.mxu0 %v6128
      %8893 = vmatpush1.bf16.msra.mxu0 %v6127
      %8894 = vmatprep.subr.bf16.mxu0 %v6136
      %8895 = vmatpush1.bf16.msra.mxu0 %v6135
      %8896 = vmatprep.subr.bf16.mxu0 %v6144
      %8897 = vmatpush1.bf16.msra.mxu0 %v6143
      %8898 = vmatprep.subr.bf16.mxu0 %v6152
      %8899 = vmatpush1.bf16.msra.mxu0 %v6151
      %8900 = vmatprep.subr.bf16.mxu0 %v6160
      %8901 = vmatpush1.bf16.msra.mxu0 %v6159
      %8902 = vmatprep.subr.bf16.mxu0 %v6168
      %8903 = vmatpush1.bf16.msra.mxu0 %v6167
      %8904 = vmatprep.subr.bf16.mxu0 %v6176
      %8905 = vmatpush1.bf16.msra.mxu0 %v6175
      %8906 = vmatprep.subr.bf16.mxu0 %v6184
      %8907 = vmatpush1.bf16.msra.mxu0 %v6183
      %8908 = vmatprep.subr.bf16.mxu0 %v6192
      %8909 = vmatpush1.bf16.msra.mxu0 %v6191
      %8910 = vmatprep.subr.bf16.mxu0 %v6200
      %8911 = vmatpush1.bf16.msra.mxu0 %v6199
      %8912 = vmatprep.subr.bf16.mxu0 %v6208
      %8913 = vmatpush1.bf16.msra.mxu0 %v6207
      %8914 = vmatprep.subr.bf16.mxu0 %v6216
      %8915 = vmatpush1.bf16.msra.mxu0 %v6215
      %8916 = vmatprep.subr.bf16.mxu0 %v6224
      %8917 = vmatpush1.bf16.msra.mxu0 %v6223
      %8918 = vmatprep.subr.bf16.mxu0 %v6232
      %8919 = vmatpush1.bf16.msra.mxu0 %v6231
      %8920 = vmatprep.mubr.bf16.mxu0 %v7694
      %8921 = vmatmul.mubr.bf16.gmra.mrb[0].mxu0 %v7693
      %v8922 = vpop.f32.mrb[0].mxu0
      %v8923 = vadd.f32 %v8882, %v8922
      %v8924 = vpop.f32.mrb[0].mxu0
      %v8925 = vadd.f32 %v8884, %v8924
      %v8926 = vpop.f32.mrb[0].mxu0
      %v8927 = vpop.f32.mrb[0].mxu0
      %8928 = vdwg.mxu0
      %8929 = vmatprep.subr.bf16.mxu0 %v6240
      %8930 = vmatpush1.bf16.msra.mxu0 %v6239
      %8931 = vmatprep.subr.bf16.mxu0 %v6248
      %8932 = vmatpush1.bf16.msra.mxu0 %v6247
      %8933 = vmatprep.subr.bf16.mxu0 %v6256
      %8934 = vmatpush1.bf16.msra.mxu0 %v6255
      %8935 = vmatprep.subr.bf16.mxu0 %v6264
      %8936 = vmatpush1.bf16.msra.mxu0 %v6263
      %8937 = vmatprep.subr.bf16.mxu0 %v6272
      %8938 = vmatpush1.bf16.msra.mxu0 %v6271
      %8939 = vmatprep.subr.bf16.mxu0 %v6280
      %8940 = vmatpush1.bf16.msra.mxu0 %v6279
      %8941 = vmatprep.subr.bf16.mxu0 %v6288
      %8942 = vmatpush1.bf16.msra.mxu0 %v6287
      %8943 = vmatprep.subr.bf16.mxu0 %v6296
      %8944 = vmatpush1.bf16.msra.mxu0 %v6295
      %8945 = vmatprep.subr.bf16.mxu0 %v6304
      %8946 = vmatpush1.bf16.msra.mxu0 %v6303
      %8947 = vmatprep.subr.bf16.mxu0 %v6312
      %8948 = vmatpush1.bf16.msra.mxu0 %v6311
      %8949 = vmatprep.subr.bf16.mxu0 %v6320
      %8950 = vmatpush1.bf16.msra.mxu0 %v6319
      %8951 = vmatprep.subr.bf16.mxu0 %v6328
      %8952 = vmatpush1.bf16.msra.mxu0 %v6327
      %8953 = vmatprep.subr.bf16.mxu0 %v6336
      %8954 = vmatpush1.bf16.msra.mxu0 %v6335
      %8955 = vmatprep.subr.bf16.mxu0 %v6344
      %8956 = vmatpush1.bf16.msra.mxu0 %v6343
      %8957 = vmatprep.subr.bf16.mxu0 %v6352
      %8958 = vmatpush1.bf16.msra.mxu0 %v6351
      %8959 = vmatprep.subr.bf16.mxu0 %v6360
      %8960 = vmatpush1.bf16.msra.mxu0 %v6359
      %8961 = vmatprep.mubr.bf16.mxu0 %v7696
      %8962 = vmatmul.mubr.bf16.gmra.mrb[0].mxu0 %v7695
      %v8963 = vpop.f32.mrb[0].mxu0
      %v8964 = vadd.f32 %v8923, %v8963
      %v8965 = vpop.f32.mrb[0].mxu0
      %v8966 = vadd.f32 %v8925, %v8965
      %v8967 = vpop.f32.mrb[0].mxu0
      %v8968 = vpop.f32.mrb[0].mxu0
      %8969 = vdwg.mxu0
      %8970 = vmatprep.subr.bf16.mxu0 %v6368
      %8971 = vmatpush1.bf16.msra.mxu0 %v6367
      %8972 = vmatprep.subr.bf16.mxu0 %v6376
      %8973 = vmatpush1.bf16.msra.mxu0 %v6375
      %8974 = vmatprep.subr.bf16.mxu0 %v6384
      %8975 = vmatpush1.bf16.msra.mxu0 %v6383
      %8976 = vmatprep.subr.bf16.mxu0 %v6392
      %8977 = vmatpush1.bf16.msra.mxu0 %v6391
      %8978 = vmatprep.subr.bf16.mxu0 %v6400
      %8979 = vmatpush1.bf16.msra.mxu0 %v6399
      %8980 = vmatprep.subr.bf16.mxu0 %v6408
      %8981 = vmatpush1.bf16.msra.mxu0 %v6407
      %8982 = vmatprep.subr.bf16.mxu0 %v6416
      %8983 = vmatpush1.bf16.msra.mxu0 %v6415
      %8984 = vmatprep.subr.bf16.mxu0 %v6424
      %8985 = vmatpush1.bf16.msra.mxu0 %v6423
      %8986 = vmatprep.subr.bf16.mxu0 %v6432
      %8987 = vmatpush1.bf16.msra.mxu0 %v6431
      %8988 = vmatprep.subr.bf16.mxu0 %v6440
      %8989 = vmatpush1.bf16.msra.mxu0 %v6439
      %8990 = vmatprep.subr.bf16.mxu0 %v6448
      %8991 = vmatpush1.bf16.msra.mxu0 %v6447
      %8992 = vmatprep.subr.bf16.mxu0 %v6456
      %8993 = vmatpush1.bf16.msra.mxu0 %v6455
      %8994 = vmatprep.subr.bf16.mxu0 %v6464
      %8995 = vmatpush1.bf16.msra.mxu0 %v6463
      %8996 = vmatprep.subr.bf16.mxu0 %v6472
      %8997 = vmatpush1.bf16.msra.mxu0 %v6471
      %8998 = vmatprep.subr.bf16.mxu0 %v6480
      %8999 = vmatpush1.bf16.msra.mxu0 %v6479
      %9000 = vmatprep.subr.bf16.mxu0 %v6488
      %9001 = vmatpush1.bf16.msra.mxu0 %v6487
      %9002 = vmatprep.mubr.bf16.mxu0 %v7698
      %9003 = vmatmul.mubr.bf16.gmra.mrb[0].mxu0 %v7697
      %v9004 = vpop.f32.mrb[0].mxu0
      %v9005 = vadd.f32 %v8964, %v9004
      %v9006 = vpop.f32.mrb[0].mxu0
      %v9007 = vadd.f32 %v8966, %v9006
      %v9008 = vpop.f32.mrb[0].mxu0
      %v9009 = vpop.f32.mrb[0].mxu0
      %9010 = vdwg.mxu0
      %v9011 = vmul.f32 %v8513, %v8513
      %v9012 = vmul.f32 %v8515, %v8515
      %v9013 = vmul.f32 %v8677, %v8677
      %v9014 = vmul.f32 %v8679, %v8679
      %v9015 = vmul.f32 %v8841, %v8841
      %v9016 = vmul.f32 %v8843, %v8843
      %v9017 = vmul.f32 %v9005, %v9005
      %v9018 = vmul.f32 %v9007, %v9007
      %v9019 = vsel %vm1125, %v9011, 0.0
      %v9020 = vsel %vm1125, %v9012, 0.0
      %v9021 = vadd.f32 %v9019, %v9020
      %v9022 = vsel %vm1125, %v9013, 0.0
      %v9023 = vadd.f32 %v9021, %v9022
      %v9024 = vsel %vm1125, %v9014, 0.0
      %v9025 = vadd.f32 %v9023, %v9024
      %v9026 = vsel %vm1125, %v9015, 0.0
      %v9027 = vadd.f32 %v9025, %v9026
      %v9028 = vsel %vm1125, %v9016, 0.0
      %v9029 = vadd.f32 %v9027, %v9028
      %v9030 = vsel %vm1125, %v9017, 0.0
      %v9031 = vadd.f32 %v9029, %v9030
      %v9032 = vsel %vm1125, %v9018, 0.0
      %v9033 = vadd.f32 %v9031, %v9032
      %9034 = vadd.xlane.f32.xlu0 %v9033
      %v9035 = vpop.xlane.xlu0 %9034
      %v9036 = vrcp.pop %v9035
      %v9037 = vmul.f32 %v8513, %v9036
      %v9038 = vmul.f32 %v8515, %v9036
      %v9039 = vmul.f32 %v8677, %v9036
      %v9040 = vmul.f32 %v8679, %v9036
      %v9041 = vmul.f32 %v8841, %v9036
      %v9042 = vmul.f32 %v8843, %v9036
      %v9043 = vmul.f32 %v9005, %v9036
      %v9044 = vmul.f32 %v9007, %v9036
      %v9045 = vpack.c.bf16 %v9037, %v9037
      %v9046 = vpack.c.bf16 %v9038, %v9038
      %v9047 = vpack.c.bf16 %v9039, %v9039
      %v9048 = vpack.c.bf16 %v9040, %v9040
      %v9049 = vpack.c.bf16 %v9041, %v9041
      %v9050 = vpack.c.bf16 %v9042, %v9042
      %v9051 = vpack.c.bf16 %v9043, %v9043
      %v9052 = vpack.c.bf16 %v9044, %v9044
      %9053 = vmatprep.subr.bf16.mxu0 %v2762
      %9054 = vmatpush1.bf16.msra.mxu0 %v2761
      %9055 = vmatprep.subr.bf16.mxu0 %v2770
      %9056 = vmatpush1.bf16.msra.mxu0 %v2769
      %9057 = vmatprep.subr.bf16.mxu0 %v2778
      %9058 = vmatpush1.bf16.msra.mxu0 %v2777
      %9059 = vmatprep.subr.bf16.mxu0 %v2786
      %9060 = vmatpush1.bf16.msra.mxu0 %v2785
      %9061 = vmatprep.subr.bf16.mxu0 %v2794
      %9062 = vmatpush1.bf16.msra.mxu0 %v2793
      %9063 = vmatprep.subr.bf16.mxu0 %v2802
      %9064 = vmatpush1.bf16.msra.mxu0 %v2801
      %9065 = vmatprep.subr.bf16.mxu0 %v2810
      %9066 = vmatpush1.bf16.msra.mxu0 %v2809
      %9067 = vmatprep.subr.bf16.mxu0 %v2818
      %9068 = vmatpush1.bf16.msra.mxu0 %v2817
      %9069 = vmatprep.subr.bf16.mxu0 %v2826
      %9070 = vmatpush1.bf16.msra.mxu0 %v2825
      %9071 = vmatprep.subr.bf16.mxu0 %v2834
      %9072 = vmatpush1.bf16.msra.mxu0 %v2833
      %9073 = vmatprep.subr.bf16.mxu0 %v2842
      %9074 = vmatpush1.bf16.msra.mxu0 %v2841
      %9075 = vmatprep.subr.bf16.mxu0 %v2850
      %9076 = vmatpush1.bf16.msra.mxu0 %v2849
      %9077 = vmatprep.subr.bf16.mxu0 %v2858
      %9078 = vmatpush1.bf16.msra.mxu0 %v2857
      %9079 = vmatprep.subr.bf16.mxu0 %v2866
      %9080 = vmatpush1.bf16.msra.mxu0 %v2865
      %9081 = vmatprep.subr.bf16.mxu0 %v2874
      %9082 = vmatpush1.bf16.msra.mxu0 %v2873
      %9083 = vmatprep.subr.bf16.mxu0 %v2882
      %9084 = vmatpush1.bf16.msra.mxu0 %v2881
      %9085 = vmatprep.mubr.bf16.mxu0 %v9046
      %9086 = vmatmul.mubr.bf16.gmra.mrb[0].mxu0 %v9045
      %v9087 = vpop.f32.mrb[0].mxu0
      %v9088 = vadd.f32 0.0, %v9087
      %v9089 = vpop.f32.mrb[0].mxu0
      %v9090 = vadd.f32 0.0, %v9089
      %v9091 = vpop.f32.mrb[0].mxu0
      %v9092 = vpop.f32.mrb[0].mxu0
      %9093 = vdwg.mxu0
      %9094 = vmatprep.subr.bf16.mxu0 %v2890
      %9095 = vmatpush1.bf16.msra.mxu0 %v2889
      %9096 = vmatprep.subr.bf16.mxu0 %v2898
      %9097 = vmatpush1.bf16.msra.mxu0 %v2897
      %9098 = vmatprep.subr.bf16.mxu0 %v2906
      %9099 = vmatpush1.bf16.msra.mxu0 %v2905
      %9100 = vmatprep.subr.bf16.mxu0 %v2914
      %9101 = vmatpush1.bf16.msra.mxu0 %v2913
      %9102 = vmatprep.subr.bf16.mxu0 %v2922
      %9103 = vmatpush1.bf16.msra.mxu0 %v2921
      %9104 = vmatprep.subr.bf16.mxu0 %v2930
      %9105 = vmatpush1.bf16.msra.mxu0 %v2929
      %9106 = vmatprep.subr.bf16.mxu0 %v2938
      %9107 = vmatpush1.bf16.msra.mxu0 %v2937
      %9108 = vmatprep.subr.bf16.mxu0 %v2946
      %9109 = vmatpush1.bf16.msra.mxu0 %v2945
      %9110 = vmatprep.subr.bf16.mxu0 %v2954
      %9111 = vmatpush1.bf16.msra.mxu0 %v2953
      %9112 = vmatprep.subr.bf16.mxu0 %v2962
      %9113 = vmatpush1.bf16.msra.mxu0 %v2961
      %9114 = vmatprep.subr.bf16.mxu0 %v2970
      %9115 = vmatpush1.bf16.msra.mxu0 %v2969
      %9116 = vmatprep.subr.bf16.mxu0 %v2978
      %9117 = vmatpush1.bf16.msra.mxu0 %v2977
      %9118 = vmatprep.subr.bf16.mxu0 %v2986
      %9119 = vmatpush1.bf16.msra.mxu0 %v2985
      %9120 = vmatprep.subr.bf16.mxu0 %v2994
      %9121 = vmatpush1.bf16.msra.mxu0 %v2993
      %9122 = vmatprep.subr.bf16.mxu0 %v3002
      %9123 = vmatpush1.bf16.msra.mxu0 %v3001
      %9124 = vmatprep.subr.bf16.mxu0 %v3010
      %9125 = vmatpush1.bf16.msra.mxu0 %v3009
      %9126 = vmatprep.mubr.bf16.mxu0 %v9048
      %9127 = vmatmul.mubr.bf16.gmra.mrb[0].mxu0 %v9047
      %v9128 = vpop.f32.mrb[0].mxu0
      %v9129 = vadd.f32 %v9088, %v9128
      %v9130 = vpop.f32.mrb[0].mxu0
      %v9131 = vadd.f32 %v9090, %v9130
      %v9132 = vpop.f32.mrb[0].mxu0
      %v9133 = vpop.f32.mrb[0].mxu0
      %9134 = vdwg.mxu0
      %9135 = vmatprep.subr.bf16.mxu0 %v3018
      %9136 = vmatpush1.bf16.msra.mxu0 %v3017
      %9137 = vmatprep.subr.bf16.mxu0 %v3026
      %9138 = vmatpush1.bf16.msra.mxu0 %v3025
      %9139 = vmatprep.subr.bf16.mxu0 %v3034
      %9140 = vmatpush1.bf16.msra.mxu0 %v3033
      %9141 = vmatprep.subr.bf16.mxu0 %v3042
      %9142 = vmatpush1.bf16.msra.mxu0 %v3041
      %9143 = vmatprep.subr.bf16.mxu0 %v3050
      %9144 = vmatpush1.bf16.msra.mxu0 %v3049
      %9145 = vmatprep.subr.bf16.mxu0 %v3058
      %9146 = vmatpush1.bf16.msra.mxu0 %v3057
      %9147 = vmatprep.subr.bf16.mxu0 %v3066
      %9148 = vmatpush1.bf16.msra.mxu0 %v3065
      %9149 = vmatprep.subr.bf16.mxu0 %v3074
      %9150 = vmatpush1.bf16.msra.mxu0 %v3073
      %9151 = vmatprep.subr.bf16.mxu0 %v3082
      %9152 = vmatpush1.bf16.msra.mxu0 %v3081
      %9153 = vmatprep.subr.bf16.mxu0 %v3090
      %9154 = vmatpush1.bf16.msra.mxu0 %v3089
      %9155 = vmatprep.subr.bf16.mxu0 %v3098
      %9156 = vmatpush1.bf16.msra.mxu0 %v3097
      %9157 = vmatprep.subr.bf16.mxu0 %v3106
      %9158 = vmatpush1.bf16.msra.mxu0 %v3105
      %9159 = vmatprep.subr.bf16.mxu0 %v3114
      %9160 = vmatpush1.bf16.msra.mxu0 %v3113
      %9161 = vmatprep.subr.bf16.mxu0 %v3122
      %9162 = vmatpush1.bf16.msra.mxu0 %v3121
      %9163 = vmatprep.subr.bf16.mxu0 %v3130
      %9164 = vmatpush1.bf16.msra.mxu0 %v3129
      %9165 = vmatprep.subr.bf16.mxu0 %v3138
      %9166 = vmatpush1.bf16.msra.mxu0 %v3137
      %9167 = vmatprep.mubr.bf16.mxu0 %v9050
      %9168 = vmatmul.mubr.bf16.gmra.mrb[0].mxu0 %v9049
      %v9169 = vpop.f32.mrb[0].mxu0
      %v9170 = vadd.f32 %v9129, %v9169
      %v9171 = vpop.f32.mrb[0].mxu0
      %v9172 = vadd.f32 %v9131, %v9171
      %v9173 = vpop.f32.mrb[0].mxu0
      %v9174 = vpop.f32.mrb[0].mxu0
      %9175 = vdwg.mxu0
      %9176 = vmatprep.subr.bf16.mxu0 %v3146
      %9177 = vmatpush1.bf16.msra.mxu0 %v3145
      %9178 = vmatprep.subr.bf16.mxu0 %v3154
      %9179 = vmatpush1.bf16.msra.mxu0 %v3153
      %9180 = vmatprep.subr.bf16.mxu0 %v3162
      %9181 = vmatpush1.bf16.msra.mxu0 %v3161
      %9182 = vmatprep.subr.bf16.mxu0 %v3170
      %9183 = vmatpush1.bf16.msra.mxu0 %v3169
      %9184 = vmatprep.subr.bf16.mxu0 %v3178
      %9185 = vmatpush1.bf16.msra.mxu0 %v3177
      %9186 = vmatprep.subr.bf16.mxu0 %v3186
      %9187 = vmatpush1.bf16.msra.mxu0 %v3185
      %9188 = vmatprep.subr.bf16.mxu0 %v3194
      %9189 = vmatpush1.bf16.msra.mxu0 %v3193
      %9190 = vmatprep.subr.bf16.mxu0 %v3202
      %9191 = vmatpush1.bf16.msra.mxu0 %v3201
      %9192 = vmatprep.subr.bf16.mxu0 %v3210
      %9193 = vmatpush1.bf16.msra.mxu0 %v3209
      %9194 = vmatprep.subr.bf16.mxu0 %v3218
      %9195 = vmatpush1.bf16.msra.mxu0 %v3217
      %9196 = vmatprep.subr.bf16.mxu0 %v3226
      %9197 = vmatpush1.bf16.msra.mxu0 %v3225
      %9198 = vmatprep.subr.bf16.mxu0 %v3234
      %9199 = vmatpush1.bf16.msra.mxu0 %v3233
      %9200 = vmatprep.subr.bf16.mxu0 %v3242
      %9201 = vmatpush1.bf16.msra.mxu0 %v3241
      %9202 = vmatprep.subr.bf16.mxu0 %v3250
      %9203 = vmatpush1.bf16.msra.mxu0 %v3249
      %9204 = vmatprep.subr.bf16.mxu0 %v3258
      %9205 = vmatpush1.bf16.msra.mxu0 %v3257
      %9206 = vmatprep.subr.bf16.mxu0 %v3266
      %9207 = vmatpush1.bf16.msra.mxu0 %v3265
      %9208 = vmatprep.mubr.bf16.mxu0 %v9052
      %9209 = vmatmul.mubr.bf16.gmra.mrb[0].mxu0 %v9051
      %v9210 = vpop.f32.mrb[0].mxu0
      %v9211 = vadd.f32 %v9170, %v9210
      %v9212 = vpop.f32.mrb[0].mxu0
      %v9213 = vadd.f32 %v9172, %v9212
      %v9214 = vpop.f32.mrb[0].mxu0
      %v9215 = vpop.f32.mrb[0].mxu0
      %9216 = vdwg.mxu0
      %9217 = vmatprep.subr.bf16.mxu0 %v2764
      %9218 = vmatpush1.bf16.msra.mxu0 %v2763
      %9219 = vmatprep.subr.bf16.mxu0 %v2772
      %9220 = vmatpush1.bf16.msra.mxu0 %v2771
      %9221 = vmatprep.subr.bf16.mxu0 %v2780
      %9222 = vmatpush1.bf16.msra.mxu0 %v2779
      %9223 = vmatprep.subr.bf16.mxu0 %v2788
      %9224 = vmatpush1.bf16.msra.mxu0 %v2787
      %9225 = vmatprep.subr.bf16.mxu0 %v2796
      %9226 = vmatpush1.bf16.msra.mxu0 %v2795
      %9227 = vmatprep.subr.bf16.mxu0 %v2804
      %9228 = vmatpush1.bf16.msra.mxu0 %v2803
      %9229 = vmatprep.subr.bf16.mxu0 %v2812
      %9230 = vmatpush1.bf16.msra.mxu0 %v2811
      %9231 = vmatprep.subr.bf16.mxu0 %v2820
      %9232 = vmatpush1.bf16.msra.mxu0 %v2819
      %9233 = vmatprep.subr.bf16.mxu0 %v2828
      %9234 = vmatpush1.bf16.msra.mxu0 %v2827
      %9235 = vmatprep.subr.bf16.mxu0 %v2836
      %9236 = vmatpush1.bf16.msra.mxu0 %v2835
      %9237 = vmatprep.subr.bf16.mxu0 %v2844
      %9238 = vmatpush1.bf16.msra.mxu0 %v2843
      %9239 = vmatprep.subr.bf16.mxu0 %v2852
      %9240 = vmatpush1.bf16.msra.mxu0 %v2851
      %9241 = vmatprep.subr.bf16.mxu0 %v2860
      %9242 = vmatpush1.bf16.msra.mxu0 %v2859
      %9243 = vmatprep.subr.bf16.mxu0 %v2868
      %9244 = vmatpush1.bf16.msra.mxu0 %v2867
      %9245 = vmatprep.subr.bf16.mxu0 %v2876
      %9246 = vmatpush1.bf16.msra.mxu0 %v2875
      %9247 = vmatprep.subr.bf16.mxu0 %v2884
      %9248 = vmatpush1.bf16.msra.mxu0 %v2883
      %9249 = vmatprep.mubr.bf16.mxu0 %v9046
      %9250 = vmatmul.mubr.bf16.gmra.mrb[0].mxu0 %v9045
      %v9251 = vpop.f32.mrb[0].mxu0
      %v9252 = vadd.f32 0.0, %v9251
      %v9253 = vpop.f32.mrb[0].mxu0
      %v9254 = vadd.f32 0.0, %v9253
      %v9255 = vpop.f32.mrb[0].mxu0
      %v9256 = vpop.f32.mrb[0].mxu0
      %9257 = vdwg.mxu0
      %9258 = vmatprep.subr.bf16.mxu0 %v2892
      %9259 = vmatpush1.bf16.msra.mxu0 %v2891
      %9260 = vmatprep.subr.bf16.mxu0 %v2900
      %9261 = vmatpush1.bf16.msra.mxu0 %v2899
      %9262 = vmatprep.subr.bf16.mxu0 %v2908
      %9263 = vmatpush1.bf16.msra.mxu0 %v2907
      %9264 = vmatprep.subr.bf16.mxu0 %v2916
      %9265 = vmatpush1.bf16.msra.mxu0 %v2915
      %9266 = vmatprep.subr.bf16.mxu0 %v2924
      %9267 = vmatpush1.bf16.msra.mxu0 %v2923
      %9268 = vmatprep.subr.bf16.mxu0 %v2932
      %9269 = vmatpush1.bf16.msra.mxu0 %v2931
      %9270 = vmatprep.subr.bf16.mxu0 %v2940
      %9271 = vmatpush1.bf16.msra.mxu0 %v2939
      %9272 = vmatprep.subr.bf16.mxu0 %v2948
      %9273 = vmatpush1.bf16.msra.mxu0 %v2947
      %9274 = vmatprep.subr.bf16.mxu0 %v2956
      %9275 = vmatpush1.bf16.msra.mxu0 %v2955
      %9276 = vmatprep.subr.bf16.mxu0 %v2964
      %9277 = vmatpush1.bf16.msra.mxu0 %v2963
      %9278 = vmatprep.subr.bf16.mxu0 %v2972
      %9279 = vmatpush1.bf16.msra.mxu0 %v2971
      %9280 = vmatprep.subr.bf16.mxu0 %v2980
      %9281 = vmatpush1.bf16.msra.mxu0 %v2979
      %9282 = vmatprep.subr.bf16.mxu0 %v2988
      %9283 = vmatpush1.bf16.msra.mxu0 %v2987
      %9284 = vmatprep.subr.bf16.mxu0 %v2996
      %9285 = vmatpush1.bf16.msra.mxu0 %v2995
      %9286 = vmatprep.subr.bf16.mxu0 %v3004
      %9287 = vmatpush1.bf16.msra.mxu0 %v3003
      %9288 = vmatprep.subr.bf16.mxu0 %v3012
      %9289 = vmatpush1.bf16.msra.mxu0 %v3011
      %9290 = vmatprep.mubr.bf16.mxu0 %v9048
      %9291 = vmatmul.mubr.bf16.gmra.mrb[0].mxu0 %v9047
      %v9292 = vpop.f32.mrb[0].mxu0
      %v9293 = vadd.f32 %v9252, %v9292
      %v9294 = vpop.f32.mrb[0].mxu0
      %v9295 = vadd.f32 %v9254, %v9294
      %v9296 = vpop.f32.mrb[0].mxu0
      %v9297 = vpop.f32.mrb[0].mxu0
      %9298 = vdwg.mxu0
      %9299 = vmatprep.subr.bf16.mxu0 %v3020
      %9300 = vmatpush1.bf16.msra.mxu0 %v3019
      %9301 = vmatprep.subr.bf16.mxu0 %v3028
      %9302 = vmatpush1.bf16.msra.mxu0 %v3027
      %9303 = vmatprep.subr.bf16.mxu0 %v3036
      %9304 = vmatpush1.bf16.msra.mxu0 %v3035
      %9305 = vmatprep.subr.bf16.mxu0 %v3044
      %9306 = vmatpush1.bf16.msra.mxu0 %v3043
      %9307 = vmatprep.subr.bf16.mxu0 %v3052
      %9308 = vmatpush1.bf16.msra.mxu0 %v3051
      %9309 = vmatprep.subr.bf16.mxu0 %v3060
      %9310 = vmatpush1.bf16.msra.mxu0 %v3059
      %9311 = vmatprep.subr.bf16.mxu0 %v3068
      %9312 = vmatpush1.bf16.msra.mxu0 %v3067
      %9313 = vmatprep.subr.bf16.mxu0 %v3076
      %9314 = vmatpush1.bf16.msra.mxu0 %v3075
      %9315 = vmatprep.subr.bf16.mxu0 %v3084
      %9316 = vmatpush1.bf16.msra.mxu0 %v3083
      %9317 = vmatprep.subr.bf16.mxu0 %v3092
      %9318 = vmatpush1.bf16.msra.mxu0 %v3091
      %9319 = vmatprep.subr.bf16.mxu0 %v3100
      %9320 = vmatpush1.bf16.msra.mxu0 %v3099
      %9321 = vmatprep.subr.bf16.mxu0 %v3108
      %9322 = vmatpush1.bf16.msra.mxu0 %v3107
      %9323 = vmatprep.subr.bf16.mxu0 %v3116
      %9324 = vmatpush1.bf16.msra.mxu0 %v3115
      %9325 = vmatprep.subr.bf16.mxu0 %v3124
      %9326 = vmatpush1.bf16.msra.mxu0 %v3123
      %9327 = vmatprep.subr.bf16.mxu0 %v3132
      %9328 = vmatpush1.bf16.msra.mxu0 %v3131
      %9329 = vmatprep.subr.bf16.mxu0 %v3140
      %9330 = vmatpush1.bf16.msra.mxu0 %v3139
      %9331 = vmatprep.mubr.bf16.mxu0 %v9050
      %9332 = vmatmul.mubr.bf16.gmra.mrb[0].mxu0 %v9049
      %v9333 = vpop.f32.mrb[0].mxu0
      %v9334 = vadd.f32 %v9293, %v9333
      %v9335 = vpop.f32.mrb[0].mxu0
      %v9336 = vadd.f32 %v9295, %v9335
      %v9337 = vpop.f32.mrb[0].mxu0
      %v9338 = vpop.f32.mrb[0].mxu0
      %9339 = vdwg.mxu0
      %9340 = vmatprep.subr.bf16.mxu0 %v3148
      %9341 = vmatpush1.bf16.msra.mxu0 %v3147
      %9342 = vmatprep.subr.bf16.mxu0 %v3156
      %9343 = vmatpush1.bf16.msra.mxu0 %v3155
      %9344 = vmatprep.subr.bf16.mxu0 %v3164
      %9345 = vmatpush1.bf16.msra.mxu0 %v3163
      %9346 = vmatprep.subr.bf16.mxu0 %v3172
      %9347 = vmatpush1.bf16.msra.mxu0 %v3171
      %9348 = vmatprep.subr.bf16.mxu0 %v3180
      %9349 = vmatpush1.bf16.msra.mxu0 %v3179
      %9350 = vmatprep.subr.bf16.mxu0 %v3188
      %9351 = vmatpush1.bf16.msra.mxu0 %v3187
      %9352 = vmatprep.subr.bf16.mxu0 %v3196
      %9353 = vmatpush1.bf16.msra.mxu0 %v3195
      %9354 = vmatprep.subr.bf16.mxu0 %v3204
      %9355 = vmatpush1.bf16.msra.mxu0 %v3203
      %9356 = vmatprep.subr.bf16.mxu0 %v3212
      %9357 = vmatpush1.bf16.msra.mxu0 %v3211
      %9358 = vmatprep.subr.bf16.mxu0 %v3220
      %9359 = vmatpush1.bf16.msra.mxu0 %v3219
      %9360 = vmatprep.subr.bf16.mxu0 %v3228
      %9361 = vmatpush1.bf16.msra.mxu0 %v3227
      %9362 = vmatprep.subr.bf16.mxu0 %v3236
      %9363 = vmatpush1.bf16.msra.mxu0 %v3235
      %9364 = vmatprep.subr.bf16.mxu0 %v3244
      %9365 = vmatpush1.bf16.msra.mxu0 %v3243
      %9366 = vmatprep.subr.bf16.mxu0 %v3252
      %9367 = vmatpush1.bf16.msra.mxu0 %v3251
      %9368 = vmatprep.subr.bf16.mxu0 %v3260
      %9369 = vmatpush1.bf16.msra.mxu0 %v3259
      %9370 = vmatprep.subr.bf16.mxu0 %v3268
      %9371 = vmatpush1.bf16.msra.mxu0 %v3267
      %9372 = vmatprep.mubr.bf16.mxu0 %v9052
      %9373 = vmatmul.mubr.bf16.gmra.mrb[0].mxu0 %v9051
      %v9374 = vpop.f32.mrb[0].mxu0
      %v9375 = vadd.f32 %v9334, %v9374
      %v9376 = vpop.f32.mrb[0].mxu0
      %v9377 = vadd.f32 %v9336, %v9376
      %v9378 = vpop.f32.mrb[0].mxu0
      %v9379 = vpop.f32.mrb[0].mxu0
      %9380 = vdwg.mxu0
      %9381 = vmatprep.subr.bf16.mxu0 %v2766
      %9382 = vmatpush1.bf16.msra.mxu0 %v2765
      %9383 = vmatprep.subr.bf16.mxu0 %v2774
      %9384 = vmatpush1.bf16.msra.mxu0 %v2773
      %9385 = vmatprep.subr.bf16.mxu0 %v2782
      %9386 = vmatpush1.bf16.msra.mxu0 %v2781
      %9387 = vmatprep.subr.bf16.mxu0 %v2790
      %9388 = vmatpush1.bf16.msra.mxu0 %v2789
      %9389 = vmatprep.subr.bf16.mxu0 %v2798
      %9390 = vmatpush1.bf16.msra.mxu0 %v2797
      %9391 = vmatprep.subr.bf16.mxu0 %v2806
      %9392 = vmatpush1.bf16.msra.mxu0 %v2805
      %9393 = vmatprep.subr.bf16.mxu0 %v2814
      %9394 = vmatpush1.bf16.msra.mxu0 %v2813
      %9395 = vmatprep.subr.bf16.mxu0 %v2822
      %9396 = vmatpush1.bf16.msra.mxu0 %v2821
      %9397 = vmatprep.subr.bf16.mxu0 %v2830
      %9398 = vmatpush1.bf16.msra.mxu0 %v2829
      %9399 = vmatprep.subr.bf16.mxu0 %v2838
      %9400 = vmatpush1.bf16.msra.mxu0 %v2837
      %9401 = vmatprep.subr.bf16.mxu0 %v2846
      %9402 = vmatpush1.bf16.msra.mxu0 %v2845
      %9403 = vmatprep.subr.bf16.mxu0 %v2854
      %9404 = vmatpush1.bf16.msra.mxu0 %v2853
      %9405 = vmatprep.subr.bf16.mxu0 %v2862
      %9406 = vmatpush1.bf16.msra.mxu0 %v2861
      %9407 = vmatprep.subr.bf16.mxu0 %v2870
      %9408 = vmatpush1.bf16.msra.mxu0 %v2869
      %9409 = vmatprep.subr.bf16.mxu0 %v2878
      %9410 = vmatpush1.bf16.msra.mxu0 %v2877
      %9411 = vmatprep.subr.bf16.mxu0 %v2886
      %9412 = vmatpush1.bf16.msra.mxu0 %v2885
      %9413 = vmatprep.mubr.bf16.mxu0 %v9046
      %9414 = vmatmul.mubr.bf16.gmra.mrb[0].mxu0 %v9045
      %v9415 = vpop.f32.mrb[0].mxu0
      %v9416 = vadd.f32 0.0, %v9415
      %v9417 = vpop.f32.mrb[0].mxu0
      %v9418 = vadd.f32 0.0, %v9417
      %v9419 = vpop.f32.mrb[0].mxu0
      %v9420 = vpop.f32.mrb[0].mxu0
      %9421 = vdwg.mxu0
      %9422 = vmatprep.subr.bf16.mxu0 %v2894
      %9423 = vmatpush1.bf16.msra.mxu0 %v2893
      %9424 = vmatprep.subr.bf16.mxu0 %v2902
      %9425 = vmatpush1.bf16.msra.mxu0 %v2901
      %9426 = vmatprep.subr.bf16.mxu0 %v2910
      %9427 = vmatpush1.bf16.msra.mxu0 %v2909
      %9428 = vmatprep.subr.bf16.mxu0 %v2918
      %9429 = vmatpush1.bf16.msra.mxu0 %v2917
      %9430 = vmatprep.subr.bf16.mxu0 %v2926
      %9431 = vmatpush1.bf16.msra.mxu0 %v2925
      %9432 = vmatprep.subr.bf16.mxu0 %v2934
      %9433 = vmatpush1.bf16.msra.mxu0 %v2933
      %9434 = vmatprep.subr.bf16.mxu0 %v2942
      %9435 = vmatpush1.bf16.msra.mxu0 %v2941
      %9436 = vmatprep.subr.bf16.mxu0 %v2950
      %9437 = vmatpush1.bf16.msra.mxu0 %v2949
      %9438 = vmatprep.subr.bf16.mxu0 %v2958
      %9439 = vmatpush1.bf16.msra.mxu0 %v2957
      %9440 = vmatprep.subr.bf16.mxu0 %v2966
      %9441 = vmatpush1.bf16.msra.mxu0 %v2965
      %9442 = vmatprep.subr.bf16.mxu0 %v2974
      %9443 = vmatpush1.bf16.msra.mxu0 %v2973
      %9444 = vmatprep.subr.bf16.mxu0 %v2982
      %9445 = vmatpush1.bf16.msra.mxu0 %v2981
      %9446 = vmatprep.subr.bf16.mxu0 %v2990
      %9447 = vmatpush1.bf16.msra.mxu0 %v2989
      %9448 = vmatprep.subr.bf16.mxu0 %v2998
      %9449 = vmatpush1.bf16.msra.mxu0 %v2997
      %9450 = vmatprep.subr.bf16.mxu0 %v3006
      %9451 = vmatpush1.bf16.msra.mxu0 %v3005
      %9452 = vmatprep.subr.bf16.mxu0 %v3014
      %9453 = vmatpush1.bf16.msra.mxu0 %v3013
      %9454 = vmatprep.mubr.bf16.mxu0 %v9048
      %9455 = vmatmul.mubr.bf16.gmra.mrb[0].mxu0 %v9047
      %v9456 = vpop.f32.mrb[0].mxu0
      %v9457 = vadd.f32 %v9416, %v9456
      %v9458 = vpop.f32.mrb[0].mxu0
      %v9459 = vadd.f32 %v9418, %v9458
      %v9460 = vpop.f32.mrb[0].mxu0
      %v9461 = vpop.f32.mrb[0].mxu0
      %9462 = vdwg.mxu0
      %9463 = vmatprep.subr.bf16.mxu0 %v3022
      %9464 = vmatpush1.bf16.msra.mxu0 %v3021
      %9465 = vmatprep.subr.bf16.mxu0 %v3030
      %9466 = vmatpush1.bf16.msra.mxu0 %v3029
      %9467 = vmatprep.subr.bf16.mxu0 %v3038
      %9468 = vmatpush1.bf16.msra.mxu0 %v3037
      %9469 = vmatprep.subr.bf16.mxu0 %v3046
      %9470 = vmatpush1.bf16.msra.mxu0 %v3045
      %9471 = vmatprep.subr.bf16.mxu0 %v3054
      %9472 = vmatpush1.bf16.msra.mxu0 %v3053
      %9473 = vmatprep.subr.bf16.mxu0 %v3062
      %9474 = vmatpush1.bf16.msra.mxu0 %v3061
      %9475 = vmatprep.subr.bf16.mxu0 %v3070
      %9476 = vmatpush1.bf16.msra.mxu0 %v3069
      %9477 = vmatprep.subr.bf16.mxu0 %v3078
      %9478 = vmatpush1.bf16.msra.mxu0 %v3077
      %9479 = vmatprep.subr.bf16.mxu0 %v3086
      %9480 = vmatpush1.bf16.msra.mxu0 %v3085
      %9481 = vmatprep.subr.bf16.mxu0 %v3094
      %9482 = vmatpush1.bf16.msra.mxu0 %v3093
      %9483 = vmatprep.subr.bf16.mxu0 %v3102
      %9484 = vmatpush1.bf16.msra.mxu0 %v3101
      %9485 = vmatprep.subr.bf16.mxu0 %v3110
      %9486 = vmatpush1.bf16.msra.mxu0 %v3109
      %9487 = vmatprep.subr.bf16.mxu0 %v3118
      %9488 = vmatpush1.bf16.msra.mxu0 %v3117
      %9489 = vmatprep.subr.bf16.mxu0 %v3126
      %9490 = vmatpush1.bf16.msra.mxu0 %v3125
      %9491 = vmatprep.subr.bf16.mxu0 %v3134
      %9492 = vmatpush1.bf16.msra.mxu0 %v3133
      %9493 = vmatprep.subr.bf16.mxu0 %v3142
      %9494 = vmatpush1.bf16.msra.mxu0 %v3141
      %9495 = vmatprep.mubr.bf16.mxu0 %v9050
      %9496 = vmatmul.mubr.bf16.gmra.mrb[0].mxu0 %v9049
      %v9497 = vpop.f32.mrb[0].mxu0
      %v9498 = vadd.f32 %v9457, %v9497
      %v9499 = vpop.f32.mrb[0].mxu0
      %v9500 = vadd.f32 %v9459, %v9499
      %v9501 = vpop.f32.mrb[0].mxu0
      %v9502 = vpop.f32.mrb[0].mxu0
      %9503 = vdwg.mxu0
      %9504 = vmatprep.subr.bf16.mxu0 %v3150
      %9505 = vmatpush1.bf16.msra.mxu0 %v3149
      %9506 = vmatprep.subr.bf16.mxu0 %v3158
      %9507 = vmatpush1.bf16.msra.mxu0 %v3157
      %9508 = vmatprep.subr.bf16.mxu0 %v3166
      %9509 = vmatpush1.bf16.msra.mxu0 %v3165
      %9510 = vmatprep.subr.bf16.mxu0 %v3174
      %9511 = vmatpush1.bf16.msra.mxu0 %v3173
      %9512 = vmatprep.subr.bf16.mxu0 %v3182
      %9513 = vmatpush1.bf16.msra.mxu0 %v3181
      %9514 = vmatprep.subr.bf16.mxu0 %v3190
      %9515 = vmatpush1.bf16.msra.mxu0 %v3189
      %9516 = vmatprep.subr.bf16.mxu0 %v3198
      %9517 = vmatpush1.bf16.msra.mxu0 %v3197
      %9518 = vmatprep.subr.bf16.mxu0 %v3206
      %9519 = vmatpush1.bf16.msra.mxu0 %v3205
      %9520 = vmatprep.subr.bf16.mxu0 %v3214
      %9521 = vmatpush1.bf16.msra.mxu0 %v3213
      %9522 = vmatprep.subr.bf16.mxu0 %v3222
      %9523 = vmatpush1.bf16.msra.mxu0 %v3221
      %9524 = vmatprep.subr.bf16.mxu0 %v3230
      %9525 = vmatpush1.bf16.msra.mxu0 %v3229
      %9526 = vmatprep.subr.bf16.mxu0 %v3238
      %9527 = vmatpush1.bf16.msra.mxu0 %v3237
      %9528 = vmatprep.subr.bf16.mxu0 %v3246
      %9529 = vmatpush1.bf16.msra.mxu0 %v3245
      %9530 = vmatprep.subr.bf16.mxu0 %v3254
      %9531 = vmatpush1.bf16.msra.mxu0 %v3253
      %9532 = vmatprep.subr.bf16.mxu0 %v3262
      %9533 = vmatpush1.bf16.msra.mxu0 %v3261
      %9534 = vmatprep.subr.bf16.mxu0 %v3270
      %9535 = vmatpush1.bf16.msra.mxu0 %v3269
      %9536 = vmatprep.mubr.bf16.mxu0 %v9052
      %9537 = vmatmul.mubr.bf16.gmra.mrb[0].mxu0 %v9051
      %v9538 = vpop.f32.mrb[0].mxu0
      %v9539 = vadd.f32 %v9498, %v9538
      %v9540 = vpop.f32.mrb[0].mxu0
      %v9541 = vadd.f32 %v9500, %v9540
      %v9542 = vpop.f32.mrb[0].mxu0
      %v9543 = vpop.f32.mrb[0].mxu0
      %9544 = vdwg.mxu0
      %9545 = vmatprep.subr.bf16.mxu0 %v2768
      %9546 = vmatpush1.bf16.msra.mxu0 %v2767
      %9547 = vmatprep.subr.bf16.mxu0 %v2776
      %9548 = vmatpush1.bf16.msra.mxu0 %v2775
      %9549 = vmatprep.subr.bf16.mxu0 %v2784
      %9550 = vmatpush1.bf16.msra.mxu0 %v2783
      %9551 = vmatprep.subr.bf16.mxu0 %v2792
      %9552 = vmatpush1.bf16.msra.mxu0 %v2791
      %9553 = vmatprep.subr.bf16.mxu0 %v2800
      %9554 = vmatpush1.bf16.msra.mxu0 %v2799
      %9555 = vmatprep.subr.bf16.mxu0 %v2808
      %9556 = vmatpush1.bf16.msra.mxu0 %v2807
      %9557 = vmatprep.subr.bf16.mxu0 %v2816
      %9558 = vmatpush1.bf16.msra.mxu0 %v2815
      %9559 = vmatprep.subr.bf16.mxu0 %v2824
      %9560 = vmatpush1.bf16.msra.mxu0 %v2823
      %9561 = vmatprep.subr.bf16.mxu0 %v2832
      %9562 = vmatpush1.bf16.msra.mxu0 %v2831
      %9563 = vmatprep.subr.bf16.mxu0 %v2840
      %9564 = vmatpush1.bf16.msra.mxu0 %v2839
      %9565 = vmatprep.subr.bf16.mxu0 %v2848
      %9566 = vmatpush1.bf16.msra.mxu0 %v2847
      %9567 = vmatprep.subr.bf16.mxu0 %v2856
      %9568 = vmatpush1.bf16.msra.mxu0 %v2855
      %9569 = vmatprep.subr.bf16.mxu0 %v2864
      %9570 = vmatpush1.bf16.msra.mxu0 %v2863
      %9571 = vmatprep.subr.bf16.mxu0 %v2872
      %9572 = vmatpush1.bf16.msra.mxu0 %v2871
      %9573 = vmatprep.subr.bf16.mxu0 %v2880
      %9574 = vmatpush1.bf16.msra.mxu0 %v2879
      %9575 = vmatprep.subr.bf16.mxu0 %v2888
      %9576 = vmatpush1.bf16.msra.mxu0 %v2887
      %9577 = vmatprep.mubr.bf16.mxu0 %v9046
      %9578 = vmatmul.mubr.bf16.gmra.mrb[0].mxu0 %v9045
      %v9579 = vpop.f32.mrb[0].mxu0
      %v9580 = vadd.f32 0.0, %v9579
      %v9581 = vpop.f32.mrb[0].mxu0
      %v9582 = vadd.f32 0.0, %v9581
      %v9583 = vpop.f32.mrb[0].mxu0
      %v9584 = vpop.f32.mrb[0].mxu0
      %9585 = vdwg.mxu0
      %9586 = vmatprep.subr.bf16.mxu0 %v2896
      %9587 = vmatpush1.bf16.msra.mxu0 %v2895
      %9588 = vmatprep.subr.bf16.mxu0 %v2904
      %9589 = vmatpush1.bf16.msra.mxu0 %v2903
      %9590 = vmatprep.subr.bf16.mxu0 %v2912
      %9591 = vmatpush1.bf16.msra.mxu0 %v2911
      %9592 = vmatprep.subr.bf16.mxu0 %v2920
      %9593 = vmatpush1.bf16.msra.mxu0 %v2919
      %9594 = vmatprep.subr.bf16.mxu0 %v2928
      %9595 = vmatpush1.bf16.msra.mxu0 %v2927
      %9596 = vmatprep.subr.bf16.mxu0 %v2936
      %9597 = vmatpush1.bf16.msra.mxu0 %v2935
      %9598 = vmatprep.subr.bf16.mxu0 %v2944
      %9599 = vmatpush1.bf16.msra.mxu0 %v2943
      %9600 = vmatprep.subr.bf16.mxu0 %v2952
      %9601 = vmatpush1.bf16.msra.mxu0 %v2951
      %9602 = vmatprep.subr.bf16.mxu0 %v2960
      %9603 = vmatpush1.bf16.msra.mxu0 %v2959
      %9604 = vmatprep.subr.bf16.mxu0 %v2968
      %9605 = vmatpush1.bf16.msra.mxu0 %v2967
      %9606 = vmatprep.subr.bf16.mxu0 %v2976
      %9607 = vmatpush1.bf16.msra.mxu0 %v2975
      %9608 = vmatprep.subr.bf16.mxu0 %v2984
      %9609 = vmatpush1.bf16.msra.mxu0 %v2983
      %9610 = vmatprep.subr.bf16.mxu0 %v2992
      %9611 = vmatpush1.bf16.msra.mxu0 %v2991
      %9612 = vmatprep.subr.bf16.mxu0 %v3000
      %9613 = vmatpush1.bf16.msra.mxu0 %v2999
      %9614 = vmatprep.subr.bf16.mxu0 %v3008
      %9615 = vmatpush1.bf16.msra.mxu0 %v3007
      %9616 = vmatprep.subr.bf16.mxu0 %v3016
      %9617 = vmatpush1.bf16.msra.mxu0 %v3015
      %9618 = vmatprep.mubr.bf16.mxu0 %v9048
      %9619 = vmatmul.mubr.bf16.gmra.mrb[0].mxu0 %v9047
      %v9620 = vpop.f32.mrb[0].mxu0
      %v9621 = vadd.f32 %v9580, %v9620
      %v9622 = vpop.f32.mrb[0].mxu0
      %v9623 = vadd.f32 %v9582, %v9622
      %v9624 = vpop.f32.mrb[0].mxu0
      %v9625 = vpop.f32.mrb[0].mxu0
      %9626 = vdwg.mxu0
      %9627 = vmatprep.subr.bf16.mxu0 %v3024
      %9628 = vmatpush1.bf16.msra.mxu0 %v3023
      %9629 = vmatprep.subr.bf16.mxu0 %v3032
      %9630 = vmatpush1.bf16.msra.mxu0 %v3031
      %9631 = vmatprep.subr.bf16.mxu0 %v3040
      %9632 = vmatpush1.bf16.msra.mxu0 %v3039
      %9633 = vmatprep.subr.bf16.mxu0 %v3048
      %9634 = vmatpush1.bf16.msra.mxu0 %v3047
      %9635 = vmatprep.subr.bf16.mxu0 %v3056
      %9636 = vmatpush1.bf16.msra.mxu0 %v3055
      %9637 = vmatprep.subr.bf16.mxu0 %v3064
      %9638 = vmatpush1.bf16.msra.mxu0 %v3063
      %9639 = vmatprep.subr.bf16.mxu0 %v3072
      %9640 = vmatpush1.bf16.msra.mxu0 %v3071
      %9641 = vmatprep.subr.bf16.mxu0 %v3080
      %9642 = vmatpush1.bf16.msra.mxu0 %v3079
      %9643 = vmatprep.subr.bf16.mxu0 %v3088
      %9644 = vmatpush1.bf16.msra.mxu0 %v3087
      %9645 = vmatprep.subr.bf16.mxu0 %v3096
      %9646 = vmatpush1.bf16.msra.mxu0 %v3095
      %9647 = vmatprep.subr.bf16.mxu0 %v3104
      %9648 = vmatpush1.bf16.msra.mxu0 %v3103
      %9649 = vmatprep.subr.bf16.mxu0 %v3112
      %9650 = vmatpush1.bf16.msra.mxu0 %v3111
      %9651 = vmatprep.subr.bf16.mxu0 %v3120
      %9652 = vmatpush1.bf16.msra.mxu0 %v3119
      %9653 = vmatprep.subr.bf16.mxu0 %v3128
      %9654 = vmatpush1.bf16.msra.mxu0 %v3127
      %9655 = vmatprep.subr.bf16.mxu0 %v3136
      %9656 = vmatpush1.bf16.msra.mxu0 %v3135
      %9657 = vmatprep.subr.bf16.mxu0 %v3144
      %9658 = vmatpush1.bf16.msra.mxu0 %v3143
      %9659 = vmatprep.mubr.bf16.mxu0 %v9050
      %9660 = vmatmul.mubr.bf16.gmra.mrb[0].mxu0 %v9049
      %v9661 = vpop.f32.mrb[0].mxu0
      %v9662 = vadd.f32 %v9621, %v9661
      %v9663 = vpop.f32.mrb[0].mxu0
      %v9664 = vadd.f32 %v9623, %v9663
      %v9665 = vpop.f32.mrb[0].mxu0
      %v9666 = vpop.f32.mrb[0].mxu0
      %9667 = vdwg.mxu0
      %9668 = vmatprep.subr.bf16.mxu0 %v3152
      %9669 = vmatpush1.bf16.msra.mxu0 %v3151
      %9670 = vmatprep.subr.bf16.mxu0 %v3160
      %9671 = vmatpush1.bf16.msra.mxu0 %v3159
      %9672 = vmatprep.subr.bf16.mxu0 %v3168
      %9673 = vmatpush1.bf16.msra.mxu0 %v3167
      %9674 = vmatprep.subr.bf16.mxu0 %v3176
      %9675 = vmatpush1.bf16.msra.mxu0 %v3175
      %9676 = vmatprep.subr.bf16.mxu0 %v3184
      %9677 = vmatpush1.bf16.msra.mxu0 %v3183
      %9678 = vmatprep.subr.bf16.mxu0 %v3192
      %9679 = vmatpush1.bf16.msra.mxu0 %v3191
      %9680 = vmatprep.subr.bf16.mxu0 %v3200
      %9681 = vmatpush1.bf16.msra.mxu0 %v3199
      %9682 = vmatprep.subr.bf16.mxu0 %v3208
      %9683 = vmatpush1.bf16.msra.mxu0 %v3207
      %9684 = vmatprep.subr.bf16.mxu0 %v3216
      %9685 = vmatpush1.bf16.msra.mxu0 %v3215
      %9686 = vmatprep.subr.bf16.mxu0 %v3224
      %9687 = vmatpush1.bf16.msra.mxu0 %v3223
      %9688 = vmatprep.subr.bf16.mxu0 %v3232
      %9689 = vmatpush1.bf16.msra.mxu0 %v3231
      %9690 = vmatprep.subr.bf16.mxu0 %v3240
      %9691 = vmatpush1.bf16.msra.mxu0 %v3239
      %9692 = vmatprep.subr.bf16.mxu0 %v3248
      %9693 = vmatpush1.bf16.msra.mxu0 %v3247
      %9694 = vmatprep.subr.bf16.mxu0 %v3256
      %9695 = vmatpush1.bf16.msra.mxu0 %v3255
      %9696 = vmatprep.subr.bf16.mxu0 %v3264
      %9697 = vmatpush1.bf16.msra.mxu0 %v3263
      %9698 = vmatprep.subr.bf16.mxu0 %v3272
      %9699 = vmatpush1.bf16.msra.mxu0 %v3271
      %9700 = vmatprep.mubr.bf16.mxu0 %v9052
      %9701 = vmatmul.mubr.bf16.gmra.mrb[0].mxu0 %v9051
      %v9702 = vpop.f32.mrb[0].mxu0
      %v9703 = vadd.f32 %v9662, %v9702
      %v9704 = vpop.f32.mrb[0].mxu0
      %v9705 = vadd.f32 %v9664, %v9704
      %v9706 = vpop.f32.mrb[0].mxu0
      %v9707 = vpop.f32.mrb[0].mxu0
      %9708 = vdwg.mxu0
      %9709 = vmatprep.subr.bf16.mxu0 %v5978
      %9710 = vmatpush1.bf16.msra.mxu0 %v5977
      %9711 = vmatprep.subr.bf16.mxu0 %v5986
      %9712 = vmatpush1.bf16.msra.mxu0 %v5985
      %9713 = vmatprep.subr.bf16.mxu0 %v5994
      %9714 = vmatpush1.bf16.msra.mxu0 %v5993
      %9715 = vmatprep.subr.bf16.mxu0 %v6002
      %9716 = vmatpush1.bf16.msra.mxu0 %v6001
      %9717 = vmatprep.subr.bf16.mxu0 %v6010
      %9718 = vmatpush1.bf16.msra.mxu0 %v6009
      %9719 = vmatprep.subr.bf16.mxu0 %v6018
      %9720 = vmatpush1.bf16.msra.mxu0 %v6017
      %9721 = vmatprep.subr.bf16.mxu0 %v6026
      %9722 = vmatpush1.bf16.msra.mxu0 %v6025
      %9723 = vmatprep.subr.bf16.mxu0 %v6034
      %9724 = vmatpush1.bf16.msra.mxu0 %v6033
      %9725 = vmatprep.subr.bf16.mxu0 %v6042
      %9726 = vmatpush1.bf16.msra.mxu0 %v6041
      %9727 = vmatprep.subr.bf16.mxu0 %v6050
      %9728 = vmatpush1.bf16.msra.mxu0 %v6049
      %9729 = vmatprep.subr.bf16.mxu0 %v6058
      %9730 = vmatpush1.bf16.msra.mxu0 %v6057
      %9731 = vmatprep.subr.bf16.mxu0 %v6066
      %9732 = vmatpush1.bf16.msra.mxu0 %v6065
      %9733 = vmatprep.subr.bf16.mxu0 %v6074
      %9734 = vmatpush1.bf16.msra.mxu0 %v6073
      %9735 = vmatprep.subr.bf16.mxu0 %v6082
      %9736 = vmatpush1.bf16.msra.mxu0 %v6081
      %9737 = vmatprep.subr.bf16.mxu0 %v6090
      %9738 = vmatpush1.bf16.msra.mxu0 %v6089
      %9739 = vmatprep.subr.bf16.mxu0 %v6098
      %9740 = vmatpush1.bf16.msra.mxu0 %v6097
      %9741 = vmatprep.mubr.bf16.mxu0 %v9046
      %9742 = vmatmul.mubr.bf16.gmra.mrb[0].mxu0 %v9045
      %v9743 = vpop.f32.mrb[0].mxu0
      %v9744 = vadd.f32 %v9211, %v9743
      %v9745 = vpop.f32.mrb[0].mxu0
      %v9746 = vadd.f32 %v9213, %v9745
      %v9747 = vpop.f32.mrb[0].mxu0
      %v9748 = vpop.f32.mrb[0].mxu0
      %9749 = vdwg.mxu0
      %9750 = vmatprep.subr.bf16.mxu0 %v6106
      %9751 = vmatpush1.bf16.msra.mxu0 %v6105
      %9752 = vmatprep.subr.bf16.mxu0 %v6114
      %9753 = vmatpush1.bf16.msra.mxu0 %v6113
      %9754 = vmatprep.subr.bf16.mxu0 %v6122
      %9755 = vmatpush1.bf16.msra.mxu0 %v6121
      %9756 = vmatprep.subr.bf16.mxu0 %v6130
      %9757 = vmatpush1.bf16.msra.mxu0 %v6129
      %9758 = vmatprep.subr.bf16.mxu0 %v6138
      %9759 = vmatpush1.bf16.msra.mxu0 %v6137
      %9760 = vmatprep.subr.bf16.mxu0 %v6146
      %9761 = vmatpush1.bf16.msra.mxu0 %v6145
      %9762 = vmatprep.subr.bf16.mxu0 %v6154
      %9763 = vmatpush1.bf16.msra.mxu0 %v6153
      %9764 = vmatprep.subr.bf16.mxu0 %v6162
      %9765 = vmatpush1.bf16.msra.mxu0 %v6161
      %9766 = vmatprep.subr.bf16.mxu0 %v6170
      %9767 = vmatpush1.bf16.msra.mxu0 %v6169
      %9768 = vmatprep.subr.bf16.mxu0 %v6178
      %9769 = vmatpush1.bf16.msra.mxu0 %v6177
      %9770 = vmatprep.subr.bf16.mxu0 %v6186
      %9771 = vmatpush1.bf16.msra.mxu0 %v6185
      %9772 = vmatprep.subr.bf16.mxu0 %v6194
      %9773 = vmatpush1.bf16.msra.mxu0 %v6193
      %9774 = vmatprep.subr.bf16.mxu0 %v6202
      %9775 = vmatpush1.bf16.msra.mxu0 %v6201
      %9776 = vmatprep.subr.bf16.mxu0 %v6210
      %9777 = vmatpush1.bf16.msra.mxu0 %v6209
      %9778 = vmatprep.subr.bf16.mxu0 %v6218
      %9779 = vmatpush1.bf16.msra.mxu0 %v6217
      %9780 = vmatprep.subr.bf16.mxu0 %v6226
      %9781 = vmatpush1.bf16.msra.mxu0 %v6225
      %9782 = vmatprep.mubr.bf16.mxu0 %v9048
      %9783 = vmatmul.mubr.bf16.gmra.mrb[0].mxu0 %v9047
      %v9784 = vpop.f32.mrb[0].mxu0
      %v9785 = vadd.f32 %v9744, %v9784
      %v9786 = vpop.f32.mrb[0].mxu0
      %v9787 = vadd.f32 %v9746, %v9786
      %v9788 = vpop.f32.mrb[0].mxu0
      %v9789 = vpop.f32.mrb[0].mxu0
      %9790 = vdwg.mxu0
      %9791 = vmatprep.subr.bf16.mxu0 %v6234
      %9792 = vmatpush1.bf16.msra.mxu0 %v6233
      %9793 = vmatprep.subr.bf16.mxu0 %v6242
      %9794 = vmatpush1.bf16.msra.mxu0 %v6241
      %9795 = vmatprep.subr.bf16.mxu0 %v6250
      %9796 = vmatpush1.bf16.msra.mxu0 %v6249
      %9797 = vmatprep.subr.bf16.mxu0 %v6258
      %9798 = vmatpush1.bf16.msra.mxu0 %v6257
      %9799 = vmatprep.subr.bf16.mxu0 %v6266
      %9800 = vmatpush1.bf16.msra.mxu0 %v6265
      %9801 = vmatprep.subr.bf16.mxu0 %v6274
      %9802 = vmatpush1.bf16.msra.mxu0 %v6273
      %9803 = vmatprep.subr.bf16.mxu0 %v6282
      %9804 = vmatpush1.bf16.msra.mxu0 %v6281
      %9805 = vmatprep.subr.bf16.mxu0 %v6290
      %9806 = vmatpush1.bf16.msra.mxu0 %v6289
      %9807 = vmatprep.subr.bf16.mxu0 %v6298
      %9808 = vmatpush1.bf16.msra.mxu0 %v6297
      %9809 = vmatprep.subr.bf16.mxu0 %v6306
      %9810 = vmatpush1.bf16.msra.mxu0 %v6305
      %9811 = vmatprep.subr.bf16.mxu0 %v6314
      %9812 = vmatpush1.bf16.msra.mxu0 %v6313
      %9813 = vmatprep.subr.bf16.mxu0 %v6322
      %9814 = vmatpush1.bf16.msra.mxu0 %v6321
      %9815 = vmatprep.subr.bf16.mxu0 %v6330
      %9816 = vmatpush1.bf16.msra.mxu0 %v6329
      %9817 = vmatprep.subr.bf16.mxu0 %v6338
      %9818 = vmatpush1.bf16.msra.mxu0 %v6337
      %9819 = vmatprep.subr.bf16.mxu0 %v6346
      %9820 = vmatpush1.bf16.msra.mxu0 %v6345
      %9821 = vmatprep.subr.bf16.mxu0 %v6354
      %9822 = vmatpush1.bf16.msra.mxu0 %v6353
      %9823 = vmatprep.mubr.bf16.mxu0 %v9050
      %9824 = vmatmul.mubr.bf16.gmra.mrb[0].mxu0 %v9049
      %v9825 = vpop.f32.mrb[0].mxu0
      %v9826 = vadd.f32 %v9785, %v9825
      %v9827 = vpop.f32.mrb[0].mxu0
      %v9828 = vadd.f32 %v9787, %v9827
      %v9829 = vpop.f32.mrb[0].mxu0
      %v9830 = vpop.f32.mrb[0].mxu0
      %9831 = vdwg.mxu0
      %9832 = vmatprep.subr.bf16.mxu0 %v6362
      %9833 = vmatpush1.bf16.msra.mxu0 %v6361
      %9834 = vmatprep.subr.bf16.mxu0 %v6370
      %9835 = vmatpush1.bf16.msra.mxu0 %v6369
      %9836 = vmatprep.subr.bf16.mxu0 %v6378
      %9837 = vmatpush1.bf16.msra.mxu0 %v6377
      %9838 = vmatprep.subr.bf16.mxu0 %v6386
      %9839 = vmatpush1.bf16.msra.mxu0 %v6385
      %9840 = vmatprep.subr.bf16.mxu0 %v6394
      %9841 = vmatpush1.bf16.msra.mxu0 %v6393
      %9842 = vmatprep.subr.bf16.mxu0 %v6402
      %9843 = vmatpush1.bf16.msra.mxu0 %v6401
      %9844 = vmatprep.subr.bf16.mxu0 %v6410
      %9845 = vmatpush1.bf16.msra.mxu0 %v6409
      %9846 = vmatprep.subr.bf16.mxu0 %v6418
      %9847 = vmatpush1.bf16.msra.mxu0 %v6417
      %9848 = vmatprep.subr.bf16.mxu0 %v6426
      %9849 = vmatpush1.bf16.msra.mxu0 %v6425
      %9850 = vmatprep.subr.bf16.mxu0 %v6434
      %9851 = vmatpush1.bf16.msra.mxu0 %v6433
      %9852 = vmatprep.subr.bf16.mxu0 %v6442
      %9853 = vmatpush1.bf16.msra.mxu0 %v6441
      %9854 = vmatprep.subr.bf16.mxu0 %v6450
      %9855 = vmatpush1.bf16.msra.mxu0 %v6449
      %9856 = vmatprep.subr.bf16.mxu0 %v6458
      %9857 = vmatpush1.bf16.msra.mxu0 %v6457
      %9858 = vmatprep.subr.bf16.mxu0 %v6466
      %9859 = vmatpush1.bf16.msra.mxu0 %v6465
      %9860 = vmatprep.subr.bf16.mxu0 %v6474
      %9861 = vmatpush1.bf16.msra.mxu0 %v6473
      %9862 = vmatprep.subr.bf16.mxu0 %v6482
      %9863 = vmatpush1.bf16.msra.mxu0 %v6481
      %9864 = vmatprep.mubr.bf16.mxu0 %v9052
      %9865 = vmatmul.mubr.bf16.gmra.mrb[0].mxu0 %v9051
      %v9866 = vpop.f32.mrb[0].mxu0
      %v9867 = vadd.f32 %v9826, %v9866
      %v9868 = vpop.f32.mrb[0].mxu0
      %v9869 = vadd.f32 %v9828, %v9868
      %v9870 = vpop.f32.mrb[0].mxu0
      %v9871 = vpop.f32.mrb[0].mxu0
      %9872 = vdwg.mxu0
      %9873 = vmatprep.subr.bf16.mxu0 %v5980
      %9874 = vmatpush1.bf16.msra.mxu0 %v5979
      %9875 = vmatprep.subr.bf16.mxu0 %v5988
      %9876 = vmatpush1.bf16.msra.mxu0 %v5987
      %9877 = vmatprep.subr.bf16.mxu0 %v5996
      %9878 = vmatpush1.bf16.msra.mxu0 %v5995
      %9879 = vmatprep.subr.bf16.mxu0 %v6004
      %9880 = vmatpush1.bf16.msra.mxu0 %v6003
      %9881 = vmatprep.subr.bf16.mxu0 %v6012
      %9882 = vmatpush1.bf16.msra.mxu0 %v6011
      %9883 = vmatprep.subr.bf16.mxu0 %v6020
      %9884 = vmatpush1.bf16.msra.mxu0 %v6019
      %9885 = vmatprep.subr.bf16.mxu0 %v6028
      %9886 = vmatpush1.bf16.msra.mxu0 %v6027
      %9887 = vmatprep.subr.bf16.mxu0 %v6036
      %9888 = vmatpush1.bf16.msra.mxu0 %v6035
      %9889 = vmatprep.subr.bf16.mxu0 %v6044
      %9890 = vmatpush1.bf16.msra.mxu0 %v6043
      %9891 = vmatprep.subr.bf16.mxu0 %v6052
      %9892 = vmatpush1.bf16.msra.mxu0 %v6051
      %9893 = vmatprep.subr.bf16.mxu0 %v6060
      %9894 = vmatpush1.bf16.msra.mxu0 %v6059
      %9895 = vmatprep.subr.bf16.mxu0 %v6068
      %9896 = vmatpush1.bf16.msra.mxu0 %v6067
      %9897 = vmatprep.subr.bf16.mxu0 %v6076
      %9898 = vmatpush1.bf16.msra.mxu0 %v6075
      %9899 = vmatprep.subr.bf16.mxu0 %v6084
      %9900 = vmatpush1.bf16.msra.mxu0 %v6083
      %9901 = vmatprep.subr.bf16.mxu0 %v6092
      %9902 = vmatpush1.bf16.msra.mxu0 %v6091
      %9903 = vmatprep.subr.bf16.mxu0 %v6100
      %9904 = vmatpush1.bf16.msra.mxu0 %v6099
      %9905 = vmatprep.mubr.bf16.mxu0 %v9046
      %9906 = vmatmul.mubr.bf16.gmra.mrb[0].mxu0 %v9045
      %v9907 = vpop.f32.mrb[0].mxu0
      %v9908 = vadd.f32 %v9375, %v9907
      %v9909 = vpop.f32.mrb[0].mxu0
      %v9910 = vadd.f32 %v9377, %v9909
      %v9911 = vpop.f32.mrb[0].mxu0
      %v9912 = vpop.f32.mrb[0].mxu0
      %9913 = vdwg.mxu0
      %9914 = vmatprep.subr.bf16.mxu0 %v6108
      %9915 = vmatpush1.bf16.msra.mxu0 %v6107
      %9916 = vmatprep.subr.bf16.mxu0 %v6116
      %9917 = vmatpush1.bf16.msra.mxu0 %v6115
      %9918 = vmatprep.subr.bf16.mxu0 %v6124
      %9919 = vmatpush1.bf16.msra.mxu0 %v6123
      %9920 = vmatprep.subr.bf16.mxu0 %v6132
      %9921 = vmatpush1.bf16.msra.mxu0 %v6131
      %9922 = vmatprep.subr.bf16.mxu0 %v6140
      %9923 = vmatpush1.bf16.msra.mxu0 %v6139
      %9924 = vmatprep.subr.bf16.mxu0 %v6148
      %9925 = vmatpush1.bf16.msra.mxu0 %v6147
      %9926 = vmatprep.subr.bf16.mxu0 %v6156
      %9927 = vmatpush1.bf16.msra.mxu0 %v6155
      %9928 = vmatprep.subr.bf16.mxu0 %v6164
      %9929 = vmatpush1.bf16.msra.mxu0 %v6163
      %9930 = vmatprep.subr.bf16.mxu0 %v6172
      %9931 = vmatpush1.bf16.msra.mxu0 %v6171
      %9932 = vmatprep.subr.bf16.mxu0 %v6180
      %9933 = vmatpush1.bf16.msra.mxu0 %v6179
      %9934 = vmatprep.subr.bf16.mxu0 %v6188
      %9935 = vmatpush1.bf16.msra.mxu0 %v6187
      %9936 = vmatprep.subr.bf16.mxu0 %v6196
      %9937 = vmatpush1.bf16.msra.mxu0 %v6195
      %9938 = vmatprep.subr.bf16.mxu0 %v6204
      %9939 = vmatpush1.bf16.msra.mxu0 %v6203
      %9940 = vmatprep.subr.bf16.mxu0 %v6212
      %9941 = vmatpush1.bf16.msra.mxu0 %v6211
      %9942 = vmatprep.subr.bf16.mxu0 %v6220
      %9943 = vmatpush1.bf16.msra.mxu0 %v6219
      %9944 = vmatprep.subr.bf16.mxu0 %v6228
      %9945 = vmatpush1.bf16.msra.mxu0 %v6227
      %9946 = vmatprep.mubr.bf16.mxu0 %v9048
      %9947 = vmatmul.mubr.bf16.gmra.mrb[0].mxu0 %v9047
      %v9948 = vpop.f32.mrb[0].mxu0
      %v9949 = vadd.f32 %v9908, %v9948
      %v9950 = vpop.f32.mrb[0].mxu0
      %v9951 = vadd.f32 %v9910, %v9950
      %v9952 = vpop.f32.mrb[0].mxu0
      %v9953 = vpop.f32.mrb[0].mxu0
      %9954 = vdwg.mxu0
      %9955 = vmatprep.subr.bf16.mxu0 %v6236
      %9956 = vmatpush1.bf16.msra.mxu0 %v6235
      %9957 = vmatprep.subr.bf16.mxu0 %v6244
      %9958 = vmatpush1.bf16.msra.mxu0 %v6243
      %9959 = vmatprep.subr.bf16.mxu0 %v6252
      %9960 = vmatpush1.bf16.msra.mxu0 %v6251
      %9961 = vmatprep.subr.bf16.mxu0 %v6260
      %9962 = vmatpush1.bf16.msra.mxu0 %v6259
      %9963 = vmatprep.subr.bf16.mxu0 %v6268
      %9964 = vmatpush1.bf16.msra.mxu0 %v6267
      %9965 = vmatprep.subr.bf16.mxu0 %v6276
      %9966 = vmatpush1.bf16.msra.mxu0 %v6275
      %9967 = vmatprep.subr.bf16.mxu0 %v6284
      %9968 = vmatpush1.bf16.msra.mxu0 %v6283
      %9969 = vmatprep.subr.bf16.mxu0 %v6292
      %9970 = vmatpush1.bf16.msra.mxu0 %v6291
      %9971 = vmatprep.subr.bf16.mxu0 %v6300
      %9972 = vmatpush1.bf16.msra.mxu0 %v6299
      %9973 = vmatprep.subr.bf16.mxu0 %v6308
      %9974 = vmatpush1.bf16.msra.mxu0 %v6307
      %9975 = vmatprep.subr.bf16.mxu0 %v6316
      %9976 = vmatpush1.bf16.msra.mxu0 %v6315
      %9977 = vmatprep.subr.bf16.mxu0 %v6324
      %9978 = vmatpush1.bf16.msra.mxu0 %v6323
      %9979 = vmatprep.subr.bf16.mxu0 %v6332
      %9980 = vmatpush1.bf16.msra.mxu0 %v6331
      %9981 = vmatprep.subr.bf16.mxu0 %v6340
      %9982 = vmatpush1.bf16.msra.mxu0 %v6339
      %9983 = vmatprep.subr.bf16.mxu0 %v6348
      %9984 = vmatpush1.bf16.msra.mxu0 %v6347
      %9985 = vmatprep.subr.bf16.mxu0 %v6356
      %9986 = vmatpush1.bf16.msra.mxu0 %v6355
      %9987 = vmatprep.mubr.bf16.mxu0 %v9050
      %9988 = vmatmul.mubr.bf16.gmra.mrb[0].mxu0 %v9049
      %v9989 = vpop.f32.mrb[0].mxu0
      %v9990 = vadd.f32 %v9949, %v9989
      %v9991 = vpop.f32.mrb[0].mxu0
      %v9992 = vadd.f32 %v9951, %v9991
      %v9993 = vpop.f32.mrb[0].mxu0
      %v9994 = vpop.f32.mrb[0].mxu0
      %9995 = vdwg.mxu0
      %9996 = vmatprep.subr.bf16.mxu0 %v6364
      %9997 = vmatpush1.bf16.msra.mxu0 %v6363
      %9998 = vmatprep.subr.bf16.mxu0 %v6372
      %9999 = vmatpush1.bf16.msra.mxu0 %v6371
      %10000 = vmatprep.subr.bf16.mxu0 %v6380
      %10001 = vmatpush1.bf16.msra.mxu0 %v6379
      %10002 = vmatprep.subr.bf16.mxu0 %v6388
      %10003 = vmatpush1.bf16.msra.mxu0 %v6387
      %10004 = vmatprep.subr.bf16.mxu0 %v6396
      %10005 = vmatpush1.bf16.msra.mxu0 %v6395
      %10006 = vmatprep.subr.bf16.mxu0 %v6404
      %10007 = vmatpush1.bf16.msra.mxu0 %v6403
      %10008 = vmatprep.subr.bf16.mxu0 %v6412
      %10009 = vmatpush1.bf16.msra.mxu0 %v6411
      %10010 = vmatprep.subr.bf16.mxu0 %v6420
      %10011 = vmatpush1.bf16.msra.mxu0 %v6419
      %10012 = vmatprep.subr.bf16.mxu0 %v6428
      %10013 = vmatpush1.bf16.msra.mxu0 %v6427
      %10014 = vmatprep.subr.bf16.mxu0 %v6436
      %10015 = vmatpush1.bf16.msra.mxu0 %v6435
      %10016 = vmatprep.subr.bf16.mxu0 %v6444
      %10017 = vmatpush1.bf16.msra.mxu0 %v6443
      %10018 = vmatprep.subr.bf16.mxu0 %v6452
      %10019 = vmatpush1.bf16.msra.mxu0 %v6451
      %10020 = vmatprep.subr.bf16.mxu0 %v6460
      %10021 = vmatpush1.bf16.msra.mxu0 %v6459
      %10022 = vmatprep.subr.bf16.mxu0 %v6468
      %10023 = vmatpush1.bf16.msra.mxu0 %v6467
      %10024 = vmatprep.subr.bf16.mxu0 %v6476
      %10025 = vmatpush1.bf16.msra.mxu0 %v6475
      %10026 = vmatprep.subr.bf16.mxu0 %v6484
      %10027 = vmatpush1.bf16.msra.mxu0 %v6483
      %10028 = vmatprep.mubr.bf16.mxu0 %v9052
      %10029 = vmatmul.mubr.bf16.gmra.mrb[0].mxu0 %v9051
      %v10030 = vpop.f32.mrb[0].mxu0
      %v10031 = vadd.f32 %v9990, %v10030
      %v10032 = vpop.f32.mrb[0].mxu0
      %v10033 = vadd.f32 %v9992, %v10032
      %v10034 = vpop.f32.mrb[0].mxu0
      %v10035 = vpop.f32.mrb[0].mxu0
      %10036 = vdwg.mxu0
      %10037 = vmatprep.subr.bf16.mxu0 %v5982
      %10038 = vmatpush1.bf16.msra.mxu0 %v5981
      %10039 = vmatprep.subr.bf16.mxu0 %v5990
      %10040 = vmatpush1.bf16.msra.mxu0 %v5989
      %10041 = vmatprep.subr.bf16.mxu0 %v5998
      %10042 = vmatpush1.bf16.msra.mxu0 %v5997
      %10043 = vmatprep.subr.bf16.mxu0 %v6006
      %10044 = vmatpush1.bf16.msra.mxu0 %v6005
      %10045 = vmatprep.subr.bf16.mxu0 %v6014
      %10046 = vmatpush1.bf16.msra.mxu0 %v6013
      %10047 = vmatprep.subr.bf16.mxu0 %v6022
      %10048 = vmatpush1.bf16.msra.mxu0 %v6021
      %10049 = vmatprep.subr.bf16.mxu0 %v6030
      %10050 = vmatpush1.bf16.msra.mxu0 %v6029
      %10051 = vmatprep.subr.bf16.mxu0 %v6038
      %10052 = vmatpush1.bf16.msra.mxu0 %v6037
      %10053 = vmatprep.subr.bf16.mxu0 %v6046
      %10054 = vmatpush1.bf16.msra.mxu0 %v6045
      %10055 = vmatprep.subr.bf16.mxu0 %v6054
      %10056 = vmatpush1.bf16.msra.mxu0 %v6053
      %10057 = vmatprep.subr.bf16.mxu0 %v6062
      %10058 = vmatpush1.bf16.msra.mxu0 %v6061
      %10059 = vmatprep.subr.bf16.mxu0 %v6070
      %10060 = vmatpush1.bf16.msra.mxu0 %v6069
      %10061 = vmatprep.subr.bf16.mxu0 %v6078
      %10062 = vmatpush1.bf16.msra.mxu0 %v6077
      %10063 = vmatprep.subr.bf16.mxu0 %v6086
      %10064 = vmatpush1.bf16.msra.mxu0 %v6085
      %10065 = vmatprep.subr.bf16.mxu0 %v6094
      %10066 = vmatpush1.bf16.msra.mxu0 %v6093
      %10067 = vmatprep.subr.bf16.mxu0 %v6102
      %10068 = vmatpush1.bf16.msra.mxu0 %v6101
      %10069 = vmatprep.mubr.bf16.mxu0 %v9046
      %10070 = vmatmul.mubr.bf16.gmra.mrb[0].mxu0 %v9045
      %v10071 = vpop.f32.mrb[0].mxu0
      %v10072 = vadd.f32 %v9539, %v10071
      %v10073 = vpop.f32.mrb[0].mxu0
      %v10074 = vadd.f32 %v9541, %v10073
      %v10075 = vpop.f32.mrb[0].mxu0
      %v10076 = vpop.f32.mrb[0].mxu0
      %10077 = vdwg.mxu0
      %10078 = vmatprep.subr.bf16.mxu0 %v6110
      %10079 = vmatpush1.bf16.msra.mxu0 %v6109
      %10080 = vmatprep.subr.bf16.mxu0 %v6118
      %10081 = vmatpush1.bf16.msra.mxu0 %v6117
      %10082 = vmatprep.subr.bf16.mxu0 %v6126
      %10083 = vmatpush1.bf16.msra.mxu0 %v6125
      %10084 = vmatprep.subr.bf16.mxu0 %v6134
      %10085 = vmatpush1.bf16.msra.mxu0 %v6133
      %10086 = vmatprep.subr.bf16.mxu0 %v6142
      %10087 = vmatpush1.bf16.msra.mxu0 %v6141
      %10088 = vmatprep.subr.bf16.mxu0 %v6150
      %10089 = vmatpush1.bf16.msra.mxu0 %v6149
      %10090 = vmatprep.subr.bf16.mxu0 %v6158
      %10091 = vmatpush1.bf16.msra.mxu0 %v6157
      %10092 = vmatprep.subr.bf16.mxu0 %v6166
      %10093 = vmatpush1.bf16.msra.mxu0 %v6165
      %10094 = vmatprep.subr.bf16.mxu0 %v6174
      %10095 = vmatpush1.bf16.msra.mxu0 %v6173
      %10096 = vmatprep.subr.bf16.mxu0 %v6182
      %10097 = vmatpush1.bf16.msra.mxu0 %v6181
      %10098 = vmatprep.subr.bf16.mxu0 %v6190
      %10099 = vmatpush1.bf16.msra.mxu0 %v6189
      %10100 = vmatprep.subr.bf16.mxu0 %v6198
      %10101 = vmatpush1.bf16.msra.mxu0 %v6197
      %10102 = vmatprep.subr.bf16.mxu0 %v6206
      %10103 = vmatpush1.bf16.msra.mxu0 %v6205
      %10104 = vmatprep.subr.bf16.mxu0 %v6214
      %10105 = vmatpush1.bf16.msra.mxu0 %v6213
      %10106 = vmatprep.subr.bf16.mxu0 %v6222
      %10107 = vmatpush1.bf16.msra.mxu0 %v6221
      %10108 = vmatprep.subr.bf16.mxu0 %v6230
      %10109 = vmatpush1.bf16.msra.mxu0 %v6229
      %10110 = vmatprep.mubr.bf16.mxu0 %v9048
      %10111 = vmatmul.mubr.bf16.gmra.mrb[0].mxu0 %v9047
      %v10112 = vpop.f32.mrb[0].mxu0
      %v10113 = vadd.f32 %v10072, %v10112
      %v10114 = vpop.f32.mrb[0].mxu0
      %v10115 = vadd.f32 %v10074, %v10114
      %v10116 = vpop.f32.mrb[0].mxu0
      %v10117 = vpop.f32.mrb[0].mxu0
      %10118 = vdwg.mxu0
      %10119 = vmatprep.subr.bf16.mxu0 %v6238
      %10120 = vmatpush1.bf16.msra.mxu0 %v6237
      %10121 = vmatprep.subr.bf16.mxu0 %v6246
      %10122 = vmatpush1.bf16.msra.mxu0 %v6245
      %10123 = vmatprep.subr.bf16.mxu0 %v6254
      %10124 = vmatpush1.bf16.msra.mxu0 %v6253
      %10125 = vmatprep.subr.bf16.mxu0 %v6262
      %10126 = vmatpush1.bf16.msra.mxu0 %v6261
      %10127 = vmatprep.subr.bf16.mxu0 %v6270
      %10128 = vmatpush1.bf16.msra.mxu0 %v6269
      %10129 = vmatprep.subr.bf16.mxu0 %v6278
      %10130 = vmatpush1.bf16.msra.mxu0 %v6277
      %10131 = vmatprep.subr.bf16.mxu0 %v6286
      %10132 = vmatpush1.bf16.msra.mxu0 %v6285
      %10133 = vmatprep.subr.bf16.mxu0 %v6294
      %10134 = vmatpush1.bf16.msra.mxu0 %v6293
      %10135 = vmatprep.subr.bf16.mxu0 %v6302
      %10136 = vmatpush1.bf16.msra.mxu0 %v6301
      %10137 = vmatprep.subr.bf16.mxu0 %v6310
      %10138 = vmatpush1.bf16.msra.mxu0 %v6309
      %10139 = vmatprep.subr.bf16.mxu0 %v6318
      %10140 = vmatpush1.bf16.msra.mxu0 %v6317
      %10141 = vmatprep.subr.bf16.mxu0 %v6326
      %10142 = vmatpush1.bf16.msra.mxu0 %v6325
      %10143 = vmatprep.subr.bf16.mxu0 %v6334
      %10144 = vmatpush1.bf16.msra.mxu0 %v6333
      %10145 = vmatprep.subr.bf16.mxu0 %v6342
      %10146 = vmatpush1.bf16.msra.mxu0 %v6341
      %10147 = vmatprep.subr.bf16.mxu0 %v6350
      %10148 = vmatpush1.bf16.msra.mxu0 %v6349
      %10149 = vmatprep.subr.bf16.mxu0 %v6358
      %10150 = vmatpush1.bf16.msra.mxu0 %v6357
      %10151 = vmatprep.mubr.bf16.mxu0 %v9050
      %10152 = vmatmul.mubr.bf16.gmra.mrb[0].mxu0 %v9049
      %v10153 = vpop.f32.mrb[0].mxu0
      %v10154 = vadd.f32 %v10113, %v10153
      %v10155 = vpop.f32.mrb[0].mxu0
      %v10156 = vadd.f32 %v10115, %v10155
      %v10157 = vpop.f32.mrb[0].mxu0
      %v10158 = vpop.f32.mrb[0].mxu0
      %10159 = vdwg.mxu0
      %10160 = vmatprep.subr.bf16.mxu0 %v6366
      %10161 = vmatpush1.bf16.msra.mxu0 %v6365
      %10162 = vmatprep.subr.bf16.mxu0 %v6374
      %10163 = vmatpush1.bf16.msra.mxu0 %v6373
      %10164 = vmatprep.subr.bf16.mxu0 %v6382
      %10165 = vmatpush1.bf16.msra.mxu0 %v6381
      %10166 = vmatprep.subr.bf16.mxu0 %v6390
      %10167 = vmatpush1.bf16.msra.mxu0 %v6389
      %10168 = vmatprep.subr.bf16.mxu0 %v6398
      %10169 = vmatpush1.bf16.msra.mxu0 %v6397
      %10170 = vmatprep.subr.bf16.mxu0 %v6406
      %10171 = vmatpush1.bf16.msra.mxu0 %v6405
      %10172 = vmatprep.subr.bf16.mxu0 %v6414
      %10173 = vmatpush1.bf16.msra.mxu0 %v6413
      %10174 = vmatprep.subr.bf16.mxu0 %v6422
      %10175 = vmatpush1.bf16.msra.mxu0 %v6421
      %10176 = vmatprep.subr.bf16.mxu0 %v6430
      %10177 = vmatpush1.bf16.msra.mxu0 %v6429
      %10178 = vmatprep.subr.bf16.mxu0 %v6438
      %10179 = vmatpush1.bf16.msra.mxu0 %v6437
      %10180 = vmatprep.subr.bf16.mxu0 %v6446
      %10181 = vmatpush1.bf16.msra.mxu0 %v6445
      %10182 = vmatprep.subr.bf16.mxu0 %v6454
      %10183 = vmatpush1.bf16.msra.mxu0 %v6453
      %10184 = vmatprep.subr.bf16.mxu0 %v6462
      %10185 = vmatpush1.bf16.msra.mxu0 %v6461
      %10186 = vmatprep.subr.bf16.mxu0 %v6470
      %10187 = vmatpush1.bf16.msra.mxu0 %v6469
      %10188 = vmatprep.subr.bf16.mxu0 %v6478
      %10189 = vmatpush1.bf16.msra.mxu0 %v6477
      %10190 = vmatprep.subr.bf16.mxu0 %v6486
      %10191 = vmatpush1.bf16.msra.mxu0 %v6485
      %10192 = vmatprep.mubr.bf16.mxu0 %v9052
      %10193 = vmatmul.mubr.bf16.gmra.mrb[0].mxu0 %v9051
      %v10194 = vpop.f32.mrb[0].mxu0
      %v10195 = vadd.f32 %v10154, %v10194
      %v10196 = vpop.f32.mrb[0].mxu0
      %v10197 = vadd.f32 %v10156, %v10196
      %v10198 = vpop.f32.mrb[0].mxu0
      %v10199 = vpop.f32.mrb[0].mxu0
      %10200 = vdwg.mxu0
      %10201 = vmatprep.subr.bf16.mxu0 %v5984
      %10202 = vmatpush1.bf16.msra.mxu0 %v5983
      %10203 = vmatprep.subr.bf16.mxu0 %v5992
      %10204 = vmatpush1.bf16.msra.mxu0 %v5991
      %10205 = vmatprep.subr.bf16.mxu0 %v6000
      %10206 = vmatpush1.bf16.msra.mxu0 %v5999
      %10207 = vmatprep.subr.bf16.mxu0 %v6008
      %10208 = vmatpush1.bf16.msra.mxu0 %v6007
      %10209 = vmatprep.subr.bf16.mxu0 %v6016
      %10210 = vmatpush1.bf16.msra.mxu0 %v6015
      %10211 = vmatprep.subr.bf16.mxu0 %v6024
      %10212 = vmatpush1.bf16.msra.mxu0 %v6023
      %10213 = vmatprep.subr.bf16.mxu0 %v6032
      %10214 = vmatpush1.bf16.msra.mxu0 %v6031
      %10215 = vmatprep.subr.bf16.mxu0 %v6040
      %10216 = vmatpush1.bf16.msra.mxu0 %v6039
      %10217 = vmatprep.subr.bf16.mxu0 %v6048
      %10218 = vmatpush1.bf16.msra.mxu0 %v6047
      %10219 = vmatprep.subr.bf16.mxu0 %v6056
      %10220 = vmatpush1.bf16.msra.mxu0 %v6055
      %10221 = vmatprep.subr.bf16.mxu0 %v6064
      %10222 = vmatpush1.bf16.msra.mxu0 %v6063
      %10223 = vmatprep.subr.bf16.mxu0 %v6072
      %10224 = vmatpush1.bf16.msra.mxu0 %v6071
      %10225 = vmatprep.subr.bf16.mxu0 %v6080
      %10226 = vmatpush1.bf16.msra.mxu0 %v6079
      %10227 = vmatprep.subr.bf16.mxu0 %v6088
      %10228 = vmatpush1.bf16.msra.mxu0 %v6087
      %10229 = vmatprep.subr.bf16.mxu0 %v6096
      %10230 = vmatpush1.bf16.msra.mxu0 %v6095
      %10231 = vmatprep.subr.bf16.mxu0 %v6104
      %10232 = vmatpush1.bf16.msra.mxu0 %v6103
      %10233 = vmatprep.mubr.bf16.mxu0 %v9046
      %10234 = vmatmul.mubr.bf16.gmra.mrb[0].mxu0 %v9045
      %v10235 = vpop.f32.mrb[0].mxu0
      %v10236 = vadd.f32 %v9703, %v10235
      %v10237 = vpop.f32.mrb[0].mxu0
      %v10238 = vadd.f32 %v9705, %v10237
      %v10239 = vpop.f32.mrb[0].mxu0
      %v10240 = vpop.f32.mrb[0].mxu0
      %10241 = vdwg.mxu0
      %10242 = vmatprep.subr.bf16.mxu0 %v6112
      %10243 = vmatpush1.bf16.msra.mxu0 %v6111
      %10244 = vmatprep.subr.bf16.mxu0 %v6120
      %10245 = vmatpush1.bf16.msra.mxu0 %v6119
      %10246 = vmatprep.subr.bf16.mxu0 %v6128
      %10247 = vmatpush1.bf16.msra.mxu0 %v6127
      %10248 = vmatprep.subr.bf16.mxu0 %v6136
      %10249 = vmatpush1.bf16.msra.mxu0 %v6135
      %10250 = vmatprep.subr.bf16.mxu0 %v6144
      %10251 = vmatpush1.bf16.msra.mxu0 %v6143
      %10252 = vmatprep.subr.bf16.mxu0 %v6152
      %10253 = vmatpush1.bf16.msra.mxu0 %v6151
      %10254 = vmatprep.subr.bf16.mxu0 %v6160
      %10255 = vmatpush1.bf16.msra.mxu0 %v6159
      %10256 = vmatprep.subr.bf16.mxu0 %v6168
      %10257 = vmatpush1.bf16.msra.mxu0 %v6167
      %10258 = vmatprep.subr.bf16.mxu0 %v6176
      %10259 = vmatpush1.bf16.msra.mxu0 %v6175
      %10260 = vmatprep.subr.bf16.mxu0 %v6184
      %10261 = vmatpush1.bf16.msra.mxu0 %v6183
      %10262 = vmatprep.subr.bf16.mxu0 %v6192
      %10263 = vmatpush1.bf16.msra.mxu0 %v6191
      %10264 = vmatprep.subr.bf16.mxu0 %v6200
      %10265 = vmatpush1.bf16.msra.mxu0 %v6199
      %10266 = vmatprep.subr.bf16.mxu0 %v6208
      %10267 = vmatpush1.bf16.msra.mxu0 %v6207
      %10268 = vmatprep.subr.bf16.mxu0 %v6216
      %10269 = vmatpush1.bf16.msra.mxu0 %v6215
      %10270 = vmatprep.subr.bf16.mxu0 %v6224
      %10271 = vmatpush1.bf16.msra.mxu0 %v6223
      %10272 = vmatprep.subr.bf16.mxu0 %v6232
      %10273 = vmatpush1.bf16.msra.mxu0 %v6231
      %10274 = vmatprep.mubr.bf16.mxu0 %v9048
      %10275 = vmatmul.mubr.bf16.gmra.mrb[0].mxu0 %v9047
      %v10276 = vpop.f32.mrb[0].mxu0
      %v10277 = vadd.f32 %v10236, %v10276
      %v10278 = vpop.f32.mrb[0].mxu0
      %v10279 = vadd.f32 %v10238, %v10278
      %v10280 = vpop.f32.mrb[0].mxu0
      %v10281 = vpop.f32.mrb[0].mxu0
      %10282 = vdwg.mxu0
      %10283 = vmatprep.subr.bf16.mxu0 %v6240
      %10284 = vmatpush1.bf16.msra.mxu0 %v6239
      %10285 = vmatprep.subr.bf16.mxu0 %v6248
      %10286 = vmatpush1.bf16.msra.mxu0 %v6247
      %10287 = vmatprep.subr.bf16.mxu0 %v6256
      %10288 = vmatpush1.bf16.msra.mxu0 %v6255
      %10289 = vmatprep.subr.bf16.mxu0 %v6264
      %10290 = vmatpush1.bf16.msra.mxu0 %v6263
      %10291 = vmatprep.subr.bf16.mxu0 %v6272
      %10292 = vmatpush1.bf16.msra.mxu0 %v6271
      %10293 = vmatprep.subr.bf16.mxu0 %v6280
      %10294 = vmatpush1.bf16.msra.mxu0 %v6279
      %10295 = vmatprep.subr.bf16.mxu0 %v6288
      %10296 = vmatpush1.bf16.msra.mxu0 %v6287
      %10297 = vmatprep.subr.bf16.mxu0 %v6296
      %10298 = vmatpush1.bf16.msra.mxu0 %v6295
      %10299 = vmatprep.subr.bf16.mxu0 %v6304
      %10300 = vmatpush1.bf16.msra.mxu0 %v6303
      %10301 = vmatprep.subr.bf16.mxu0 %v6312
      %10302 = vmatpush1.bf16.msra.mxu0 %v6311
      %10303 = vmatprep.subr.bf16.mxu0 %v6320
      %10304 = vmatpush1.bf16.msra.mxu0 %v6319
      %10305 = vmatprep.subr.bf16.mxu0 %v6328
      %10306 = vmatpush1.bf16.msra.mxu0 %v6327
      %10307 = vmatprep.subr.bf16.mxu0 %v6336
      %10308 = vmatpush1.bf16.msra.mxu0 %v6335
      %10309 = vmatprep.subr.bf16.mxu0 %v6344
      %10310 = vmatpush1.bf16.msra.mxu0 %v6343
      %10311 = vmatprep.subr.bf16.mxu0 %v6352
      %10312 = vmatpush1.bf16.msra.mxu0 %v6351
      %10313 = vmatprep.subr.bf16.mxu0 %v6360
      %10314 = vmatpush1.bf16.msra.mxu0 %v6359
      %10315 = vmatprep.mubr.bf16.mxu0 %v9050
      %10316 = vmatmul.mubr.bf16.gmra.mrb[0].mxu0 %v9049
      %v10317 = vpop.f32.mrb[0].mxu0
      %v10318 = vadd.f32 %v10277, %v10317
      %v10319 = vpop.f32.mrb[0].mxu0
      %v10320 = vadd.f32 %v10279, %v10319
      %v10321 = vpop.f32.mrb[0].mxu0
      %v10322 = vpop.f32.mrb[0].mxu0
      %10323 = vdwg.mxu0
      %10324 = vmatprep.subr.bf16.mxu0 %v6368
      %10325 = vmatpush1.bf16.msra.mxu0 %v6367
      %10326 = vmatprep.subr.bf16.mxu0 %v6376
      %10327 = vmatpush1.bf16.msra.mxu0 %v6375
      %10328 = vmatprep.subr.bf16.mxu0 %v6384
      %10329 = vmatpush1.bf16.msra.mxu0 %v6383
      %10330 = vmatprep.subr.bf16.mxu0 %v6392
      %10331 = vmatpush1.bf16.msra.mxu0 %v6391
      %10332 = vmatprep.subr.bf16.mxu0 %v6400
      %10333 = vmatpush1.bf16.msra.mxu0 %v6399
      %10334 = vmatprep.subr.bf16.mxu0 %v6408
      %10335 = vmatpush1.bf16.msra.mxu0 %v6407
      %10336 = vmatprep.subr.bf16.mxu0 %v6416
      %10337 = vmatpush1.bf16.msra.mxu0 %v6415
      %10338 = vmatprep.subr.bf16.mxu0 %v6424
      %10339 = vmatpush1.bf16.msra.mxu0 %v6423
      %10340 = vmatprep.subr.bf16.mxu0 %v6432
      %10341 = vmatpush1.bf16.msra.mxu0 %v6431
      %10342 = vmatprep.subr.bf16.mxu0 %v6440
      %10343 = vmatpush1.bf16.msra.mxu0 %v6439
      %10344 = vmatprep.subr.bf16.mxu0 %v6448
      %10345 = vmatpush1.bf16.msra.mxu0 %v6447
      %10346 = vmatprep.subr.bf16.mxu0 %v6456
      %10347 = vmatpush1.bf16.msra.mxu0 %v6455
      %10348 = vmatprep.subr.bf16.mxu0 %v6464
      %10349 = vmatpush1.bf16.msra.mxu0 %v6463
      %10350 = vmatprep.subr.bf16.mxu0 %v6472
      %10351 = vmatpush1.bf16.msra.mxu0 %v6471
      %10352 = vmatprep.subr.bf16.mxu0 %v6480
      %10353 = vmatpush1.bf16.msra.mxu0 %v6479
      %10354 = vmatprep.subr.bf16.mxu0 %v6488
      %10355 = vmatpush1.bf16.msra.mxu0 %v6487
      %10356 = vmatprep.mubr.bf16.mxu0 %v9052
      %10357 = vmatmul.mubr.bf16.gmra.mrb[0].mxu0 %v9051
      %v10358 = vpop.f32.mrb[0].mxu0
      %v10359 = vadd.f32 %v10318, %v10358
      %v10360 = vpop.f32.mrb[0].mxu0
      %v10361 = vadd.f32 %v10320, %v10360
      %v10362 = vpop.f32.mrb[0].mxu0
      %v10363 = vpop.f32.mrb[0].mxu0
      %10364 = vdwg.mxu0
      %v10365 = vmul.f32 %v9037, %v9867
      %v10366 = vmul.f32 %v9038, %v9869
      %v10367 = vmul.f32 %v9039, %v10031
      %v10368 = vmul.f32 %v9040, %v10033
      %v10369 = vmul.f32 %v9041, %v10195
      %v10370 = vmul.f32 %v9042, %v10197
      %v10371 = vmul.f32 %v9043, %v10359
      %v10372 = vmul.f32 %v9044, %v10361
      %v10373 = vsel %vm1125, %v10365, 0.0
      %v10374 = vsel %vm1125, %v10366, 0.0
      %v10375 = vadd.f32 %v10373, %v10374
      %v10376 = vsel %vm1125, %v10367, 0.0
      %v10377 = vadd.f32 %v10375, %v10376
      %v10378 = vsel %vm1125, %v10368, 0.0
      %v10379 = vadd.f32 %v10377, %v10378
      %v10380 = vsel %vm1125, %v10369, 0.0
      %v10381 = vadd.f32 %v10379, %v10380
      %v10382 = vsel %vm1125, %v10370, 0.0
      %v10383 = vadd.f32 %v10381, %v10382
      %v10384 = vsel %vm1125, %v10371, 0.0
      %v10385 = vadd.f32 %v10383, %v10384
      %v10386 = vsel %vm1125, %v10372, 0.0
      %v10387 = vadd.f32 %v10385, %v10386
      %10388 = vadd.xlane.f32.xlu0 %v10387
      %v10389 = vpop.xlane.xlu0 %10388
      %v10390 = vmul.f32 %v10389, %v9035
      %v10391 = vmul.f32 %v9867, %v9867
      %v10392 = vmul.f32 %v9869, %v9869
      %v10393 = vmul.f32 %v10031, %v10031
      %v10394 = vmul.f32 %v10033, %v10033
      %v10395 = vmul.f32 %v10195, %v10195
      %v10396 = vmul.f32 %v10197, %v10197
      %v10397 = vmul.f32 %v10359, %v10359
      %v10398 = vmul.f32 %v10361, %v10361
      %v10399 = vsel %vm1125, %v10391, 0.0
      %v10400 = vsel %vm1125, %v10392, 0.0
      %v10401 = vadd.f32 %v10399, %v10400
      %v10402 = vsel %vm1125, %v10393, 0.0
      %v10403 = vadd.f32 %v10401, %v10402
      %v10404 = vsel %vm1125, %v10394, 0.0
      %v10405 = vadd.f32 %v10403, %v10404
      %v10406 = vsel %vm1125, %v10395, 0.0
      %v10407 = vadd.f32 %v10405, %v10406
      %v10408 = vsel %vm1125, %v10396, 0.0
      %v10409 = vadd.f32 %v10407, %v10408
      %v10410 = vsel %vm1125, %v10397, 0.0
      %v10411 = vadd.f32 %v10409, %v10410
      %v10412 = vsel %vm1125, %v10398, 0.0
      %v10413 = vadd.f32 %v10411, %v10412
      %10414 = vadd.xlane.f32.xlu0 %v10413
      %v10415 = vpop.xlane.xlu0 %10414
      %v10416 = vrcp.pop %v10415
      %v10417 = vmul.f32 %v9867, %v10416
      %v10418 = vmul.f32 %v9869, %v10416
      %v10419 = vmul.f32 %v10031, %v10416
      %v10420 = vmul.f32 %v10033, %v10416
      %v10421 = vmul.f32 %v10195, %v10416
      %v10422 = vmul.f32 %v10197, %v10416
      %v10423 = vmul.f32 %v10359, %v10416
      %v10424 = vmul.f32 %v10361, %v10416
      %v10425 = vpack.c.bf16 %v10417, %v10417
      %v10426 = vpack.c.bf16 %v10418, %v10418
      %v10427 = vpack.c.bf16 %v10419, %v10419
      %v10428 = vpack.c.bf16 %v10420, %v10420
      %v10429 = vpack.c.bf16 %v10421, %v10421
      %v10430 = vpack.c.bf16 %v10422, %v10422
      %v10431 = vpack.c.bf16 %v10423, %v10423
      %v10432 = vpack.c.bf16 %v10424, %v10424
      %10433 = vmatprep.subr.bf16.mxu0 %v2762
      %10434 = vmatpush1.bf16.msra.mxu0 %v2761
      %10435 = vmatprep.subr.bf16.mxu0 %v2770
      %10436 = vmatpush1.bf16.msra.mxu0 %v2769
      %10437 = vmatprep.subr.bf16.mxu0 %v2778
      %10438 = vmatpush1.bf16.msra.mxu0 %v2777
      %10439 = vmatprep.subr.bf16.mxu0 %v2786
      %10440 = vmatpush1.bf16.msra.mxu0 %v2785
      %10441 = vmatprep.subr.bf16.mxu0 %v2794
      %10442 = vmatpush1.bf16.msra.mxu0 %v2793
      %10443 = vmatprep.subr.bf16.mxu0 %v2802
      %10444 = vmatpush1.bf16.msra.mxu0 %v2801
      %10445 = vmatprep.subr.bf16.mxu0 %v2810
      %10446 = vmatpush1.bf16.msra.mxu0 %v2809
      %10447 = vmatprep.subr.bf16.mxu0 %v2818
      %10448 = vmatpush1.bf16.msra.mxu0 %v2817
      %10449 = vmatprep.subr.bf16.mxu0 %v2826
      %10450 = vmatpush1.bf16.msra.mxu0 %v2825
      %10451 = vmatprep.subr.bf16.mxu0 %v2834
      %10452 = vmatpush1.bf16.msra.mxu0 %v2833
      %10453 = vmatprep.subr.bf16.mxu0 %v2842
      %10454 = vmatpush1.bf16.msra.mxu0 %v2841
      %10455 = vmatprep.subr.bf16.mxu0 %v2850
      %10456 = vmatpush1.bf16.msra.mxu0 %v2849
      %10457 = vmatprep.subr.bf16.mxu0 %v2858
      %10458 = vmatpush1.bf16.msra.mxu0 %v2857
      %10459 = vmatprep.subr.bf16.mxu0 %v2866
      %10460 = vmatpush1.bf16.msra.mxu0 %v2865
      %10461 = vmatprep.subr.bf16.mxu0 %v2874
      %10462 = vmatpush1.bf16.msra.mxu0 %v2873
      %10463 = vmatprep.subr.bf16.mxu0 %v2882
      %10464 = vmatpush1.bf16.msra.mxu0 %v2881
      %10465 = vmatprep.mubr.bf16.mxu0 %v10426
      %10466 = vmatmul.mubr.bf16.gmra.mrb[0].mxu0 %v10425
      %v10467 = vpop.f32.mrb[0].mxu0
      %v10468 = vadd.f32 0.0, %v10467
      %v10469 = vpop.f32.mrb[0].mxu0
      %v10470 = vadd.f32 0.0, %v10469
      %v10471 = vpop.f32.mrb[0].mxu0
      %v10472 = vpop.f32.mrb[0].mxu0
      %10473 = vdwg.mxu0
      %10474 = vmatprep.subr.bf16.mxu0 %v2890
      %10475 = vmatpush1.bf16.msra.mxu0 %v2889
      %10476 = vmatprep.subr.bf16.mxu0 %v2898
      %10477 = vmatpush1.bf16.msra.mxu0 %v2897
      %10478 = vmatprep.subr.bf16.mxu0 %v2906
      %10479 = vmatpush1.bf16.msra.mxu0 %v2905
      %10480 = vmatprep.subr.bf16.mxu0 %v2914
      %10481 = vmatpush1.bf16.msra.mxu0 %v2913
      %10482 = vmatprep.subr.bf16.mxu0 %v2922
      %10483 = vmatpush1.bf16.msra.mxu0 %v2921
      %10484 = vmatprep.subr.bf16.mxu0 %v2930
      %10485 = vmatpush1.bf16.msra.mxu0 %v2929
      %10486 = vmatprep.subr.bf16.mxu0 %v2938
      %10487 = vmatpush1.bf16.msra.mxu0 %v2937
      %10488 = vmatprep.subr.bf16.mxu0 %v2946
      %10489 = vmatpush1.bf16.msra.mxu0 %v2945
      %10490 = vmatprep.subr.bf16.mxu0 %v2954
      %10491 = vmatpush1.bf16.msra.mxu0 %v2953
      %10492 = vmatprep.subr.bf16.mxu0 %v2962
      %10493 = vmatpush1.bf16.msra.mxu0 %v2961
      %10494 = vmatprep.subr.bf16.mxu0 %v2970
      %10495 = vmatpush1.bf16.msra.mxu0 %v2969
      %10496 = vmatprep.subr.bf16.mxu0 %v2978
      %10497 = vmatpush1.bf16.msra.mxu0 %v2977
      %10498 = vmatprep.subr.bf16.mxu0 %v2986
      %10499 = vmatpush1.bf16.msra.mxu0 %v2985
      %10500 = vmatprep.subr.bf16.mxu0 %v2994
      %10501 = vmatpush1.bf16.msra.mxu0 %v2993
      %10502 = vmatprep.subr.bf16.mxu0 %v3002
      %10503 = vmatpush1.bf16.msra.mxu0 %v3001
      %10504 = vmatprep.subr.bf16.mxu0 %v3010
      %10505 = vmatpush1.bf16.msra.mxu0 %v3009
      %10506 = vmatprep.mubr.bf16.mxu0 %v10428
      %10507 = vmatmul.mubr.bf16.gmra.mrb[0].mxu0 %v10427
      %v10508 = vpop.f32.mrb[0].mxu0
      %v10509 = vadd.f32 %v10468, %v10508
      %v10510 = vpop.f32.mrb[0].mxu0
      %v10511 = vadd.f32 %v10470, %v10510
      %v10512 = vpop.f32.mrb[0].mxu0
      %v10513 = vpop.f32.mrb[0].mxu0
      %10514 = vdwg.mxu0
      %10515 = vmatprep.subr.bf16.mxu0 %v3018
      %10516 = vmatpush1.bf16.msra.mxu0 %v3017
      %10517 = vmatprep.subr.bf16.mxu0 %v3026
      %10518 = vmatpush1.bf16.msra.mxu0 %v3025
      %10519 = vmatprep.subr.bf16.mxu0 %v3034
      %10520 = vmatpush1.bf16.msra.mxu0 %v3033
      %10521 = vmatprep.subr.bf16.mxu0 %v3042
      %10522 = vmatpush1.bf16.msra.mxu0 %v3041
      %10523 = vmatprep.subr.bf16.mxu0 %v3050
      %10524 = vmatpush1.bf16.msra.mxu0 %v3049
      %10525 = vmatprep.subr.bf16.mxu0 %v3058
      %10526 = vmatpush1.bf16.msra.mxu0 %v3057
      %10527 = vmatprep.subr.bf16.mxu0 %v3066
      %10528 = vmatpush1.bf16.msra.mxu0 %v3065
      %10529 = vmatprep.subr.bf16.mxu0 %v3074
      %10530 = vmatpush1.bf16.msra.mxu0 %v3073
      %10531 = vmatprep.subr.bf16.mxu0 %v3082
      %10532 = vmatpush1.bf16.msra.mxu0 %v3081
      %10533 = vmatprep.subr.bf16.mxu0 %v3090
      %10534 = vmatpush1.bf16.msra.mxu0 %v3089
      %10535 = vmatprep.subr.bf16.mxu0 %v3098
      %10536 = vmatpush1.bf16.msra.mxu0 %v3097
      %10537 = vmatprep.subr.bf16.mxu0 %v3106
      %10538 = vmatpush1.bf16.msra.mxu0 %v3105
      %10539 = vmatprep.subr.bf16.mxu0 %v3114
      %10540 = vmatpush1.bf16.msra.mxu0 %v3113
      %10541 = vmatprep.subr.bf16.mxu0 %v3122
      %10542 = vmatpush1.bf16.msra.mxu0 %v3121
      %10543 = vmatprep.subr.bf16.mxu0 %v3130
      %10544 = vmatpush1.bf16.msra.mxu0 %v3129
      %10545 = vmatprep.subr.bf16.mxu0 %v3138
      %10546 = vmatpush1.bf16.msra.mxu0 %v3137
      %10547 = vmatprep.mubr.bf16.mxu0 %v10430
      %10548 = vmatmul.mubr.bf16.gmra.mrb[0].mxu0 %v10429
      %v10549 = vpop.f32.mrb[0].mxu0
      %v10550 = vadd.f32 %v10509, %v10549
      %v10551 = vpop.f32.mrb[0].mxu0
      %v10552 = vadd.f32 %v10511, %v10551
      %v10553 = vpop.f32.mrb[0].mxu0
      %v10554 = vpop.f32.mrb[0].mxu0
      %10555 = vdwg.mxu0
      %10556 = vmatprep.subr.bf16.mxu0 %v3146
      %10557 = vmatpush1.bf16.msra.mxu0 %v3145
      %10558 = vmatprep.subr.bf16.mxu0 %v3154
      %10559 = vmatpush1.bf16.msra.mxu0 %v3153
      %10560 = vmatprep.subr.bf16.mxu0 %v3162
      %10561 = vmatpush1.bf16.msra.mxu0 %v3161
      %10562 = vmatprep.subr.bf16.mxu0 %v3170
      %10563 = vmatpush1.bf16.msra.mxu0 %v3169
      %10564 = vmatprep.subr.bf16.mxu0 %v3178
      %10565 = vmatpush1.bf16.msra.mxu0 %v3177
      %10566 = vmatprep.subr.bf16.mxu0 %v3186
      %10567 = vmatpush1.bf16.msra.mxu0 %v3185
      %10568 = vmatprep.subr.bf16.mxu0 %v3194
      %10569 = vmatpush1.bf16.msra.mxu0 %v3193
      %10570 = vmatprep.subr.bf16.mxu0 %v3202
      %10571 = vmatpush1.bf16.msra.mxu0 %v3201
      %10572 = vmatprep.subr.bf16.mxu0 %v3210
      %10573 = vmatpush1.bf16.msra.mxu0 %v3209
      %10574 = vmatprep.subr.bf16.mxu0 %v3218
      %10575 = vmatpush1.bf16.msra.mxu0 %v3217
      %10576 = vmatprep.subr.bf16.mxu0 %v3226
      %10577 = vmatpush1.bf16.msra.mxu0 %v3225
      %10578 = vmatprep.subr.bf16.mxu0 %v3234
      %10579 = vmatpush1.bf16.msra.mxu0 %v3233
      %10580 = vmatprep.subr.bf16.mxu0 %v3242
      %10581 = vmatpush1.bf16.msra.mxu0 %v3241
      %10582 = vmatprep.subr.bf16.mxu0 %v3250
      %10583 = vmatpush1.bf16.msra.mxu0 %v3249
      %10584 = vmatprep.subr.bf16.mxu0 %v3258
      %10585 = vmatpush1.bf16.msra.mxu0 %v3257
      %10586 = vmatprep.subr.bf16.mxu0 %v3266
      %10587 = vmatpush1.bf16.msra.mxu0 %v3265
      %10588 = vmatprep.mubr.bf16.mxu0 %v10432
      %10589 = vmatmul.mubr.bf16.gmra.mrb[0].mxu0 %v10431
      %v10590 = vpop.f32.mrb[0].mxu0
      %v10591 = vadd.f32 %v10550, %v10590
      %v10592 = vpop.f32.mrb[0].mxu0
      %v10593 = vadd.f32 %v10552, %v10592
      %v10594 = vpop.f32.mrb[0].mxu0
      %v10595 = vpop.f32.mrb[0].mxu0
      %10596 = vdwg.mxu0
      %10597 = vmatprep.subr.bf16.mxu0 %v2764
      %10598 = vmatpush1.bf16.msra.mxu0 %v2763
      %10599 = vmatprep.subr.bf16.mxu0 %v2772
      %10600 = vmatpush1.bf16.msra.mxu0 %v2771
      %10601 = vmatprep.subr.bf16.mxu0 %v2780
      %10602 = vmatpush1.bf16.msra.mxu0 %v2779
      %10603 = vmatprep.subr.bf16.mxu0 %v2788
      %10604 = vmatpush1.bf16.msra.mxu0 %v2787
      %10605 = vmatprep.subr.bf16.mxu0 %v2796
      %10606 = vmatpush1.bf16.msra.mxu0 %v2795
      %10607 = vmatprep.subr.bf16.mxu0 %v2804
      %10608 = vmatpush1.bf16.msra.mxu0 %v2803
      %10609 = vmatprep.subr.bf16.mxu0 %v2812
      %10610 = vmatpush1.bf16.msra.mxu0 %v2811
      %10611 = vmatprep.subr.bf16.mxu0 %v2820
      %10612 = vmatpush1.bf16.msra.mxu0 %v2819
      %10613 = vmatprep.subr.bf16.mxu0 %v2828
      %10614 = vmatpush1.bf16.msra.mxu0 %v2827
      %10615 = vmatprep.subr.bf16.mxu0 %v2836
      %10616 = vmatpush1.bf16.msra.mxu0 %v2835
      %10617 = vmatprep.subr.bf16.mxu0 %v2844
      %10618 = vmatpush1.bf16.msra.mxu0 %v2843
      %10619 = vmatprep.subr.bf16.mxu0 %v2852
      %10620 = vmatpush1.bf16.msra.mxu0 %v2851
      %10621 = vmatprep.subr.bf16.mxu0 %v2860
      %10622 = vmatpush1.bf16.msra.mxu0 %v2859
      %10623 = vmatprep.subr.bf16.mxu0 %v2868
      %10624 = vmatpush1.bf16.msra.mxu0 %v2867
      %10625 = vmatprep.subr.bf16.mxu0 %v2876
      %10626 = vmatpush1.bf16.msra.mxu0 %v2875
      %10627 = vmatprep.subr.bf16.mxu0 %v2884
      %10628 = vmatpush1.bf16.msra.mxu0 %v2883
      %10629 = vmatprep.mubr.bf16.mxu0 %v10426
      %10630 = vmatmul.mubr.bf16.gmra.mrb[0].mxu0 %v10425
      %v10631 = vpop.f32.mrb[0].mxu0
      %v10632 = vadd.f32 0.0, %v10631
      %v10633 = vpop.f32.mrb[0].mxu0
      %v10634 = vadd.f32 0.0, %v10633
      %v10635 = vpop.f32.mrb[0].mxu0
      %v10636 = vpop.f32.mrb[0].mxu0
      %10637 = vdwg.mxu0
      %10638 = vmatprep.subr.bf16.mxu0 %v2892
      %10639 = vmatpush1.bf16.msra.mxu0 %v2891
      %10640 = vmatprep.subr.bf16.mxu0 %v2900
      %10641 = vmatpush1.bf16.msra.mxu0 %v2899
      %10642 = vmatprep.subr.bf16.mxu0 %v2908
      %10643 = vmatpush1.bf16.msra.mxu0 %v2907
      %10644 = vmatprep.subr.bf16.mxu0 %v2916
      %10645 = vmatpush1.bf16.msra.mxu0 %v2915
      %10646 = vmatprep.subr.bf16.mxu0 %v2924
      %10647 = vmatpush1.bf16.msra.mxu0 %v2923
      %10648 = vmatprep.subr.bf16.mxu0 %v2932
      %10649 = vmatpush1.bf16.msra.mxu0 %v2931
      %10650 = vmatprep.subr.bf16.mxu0 %v2940
      %10651 = vmatpush1.bf16.msra.mxu0 %v2939
      %10652 = vmatprep.subr.bf16.mxu0 %v2948
      %10653 = vmatpush1.bf16.msra.mxu0 %v2947
      %10654 = vmatprep.subr.bf16.mxu0 %v2956
      %10655 = vmatpush1.bf16.msra.mxu0 %v2955
      %10656 = vmatprep.subr.bf16.mxu0 %v2964
      %10657 = vmatpush1.bf16.msra.mxu0 %v2963
      %10658 = vmatprep.subr.bf16.mxu0 %v2972
      %10659 = vmatpush1.bf16.msra.mxu0 %v2971
      %10660 = vmatprep.subr.bf16.mxu0 %v2980
      %10661 = vmatpush1.bf16.msra.mxu0 %v2979
      %10662 = vmatprep.subr.bf16.mxu0 %v2988
      %10663 = vmatpush1.bf16.msra.mxu0 %v2987
      %10664 = vmatprep.subr.bf16.mxu0 %v2996
      %10665 = vmatpush1.bf16.msra.mxu0 %v2995
      %10666 = vmatprep.subr.bf16.mxu0 %v3004
      %10667 = vmatpush1.bf16.msra.mxu0 %v3003
      %10668 = vmatprep.subr.bf16.mxu0 %v3012
      %10669 = vmatpush1.bf16.msra.mxu0 %v3011
      %10670 = vmatprep.mubr.bf16.mxu0 %v10428
      %10671 = vmatmul.mubr.bf16.gmra.mrb[0].mxu0 %v10427
      %v10672 = vpop.f32.mrb[0].mxu0
      %v10673 = vadd.f32 %v10632, %v10672
      %v10674 = vpop.f32.mrb[0].mxu0
      %v10675 = vadd.f32 %v10634, %v10674
      %v10676 = vpop.f32.mrb[0].mxu0
      %v10677 = vpop.f32.mrb[0].mxu0
      %10678 = vdwg.mxu0
      %10679 = vmatprep.subr.bf16.mxu0 %v3020
      %10680 = vmatpush1.bf16.msra.mxu0 %v3019
      %10681 = vmatprep.subr.bf16.mxu0 %v3028
      %10682 = vmatpush1.bf16.msra.mxu0 %v3027
      %10683 = vmatprep.subr.bf16.mxu0 %v3036
      %10684 = vmatpush1.bf16.msra.mxu0 %v3035
      %10685 = vmatprep.subr.bf16.mxu0 %v3044
      %10686 = vmatpush1.bf16.msra.mxu0 %v3043
      %10687 = vmatprep.subr.bf16.mxu0 %v3052
      %10688 = vmatpush1.bf16.msra.mxu0 %v3051
      %10689 = vmatprep.subr.bf16.mxu0 %v3060
      %10690 = vmatpush1.bf16.msra.mxu0 %v3059
      %10691 = vmatprep.subr.bf16.mxu0 %v3068
      %10692 = vmatpush1.bf16.msra.mxu0 %v3067
      %10693 = vmatprep.subr.bf16.mxu0 %v3076
      %10694 = vmatpush1.bf16.msra.mxu0 %v3075
      %10695 = vmatprep.subr.bf16.mxu0 %v3084
      %10696 = vmatpush1.bf16.msra.mxu0 %v3083
      %10697 = vmatprep.subr.bf16.mxu0 %v3092
      %10698 = vmatpush1.bf16.msra.mxu0 %v3091
      %10699 = vmatprep.subr.bf16.mxu0 %v3100
      %10700 = vmatpush1.bf16.msra.mxu0 %v3099
      %10701 = vmatprep.subr.bf16.mxu0 %v3108
      %10702 = vmatpush1.bf16.msra.mxu0 %v3107
      %10703 = vmatprep.subr.bf16.mxu0 %v3116
      %10704 = vmatpush1.bf16.msra.mxu0 %v3115
      %10705 = vmatprep.subr.bf16.mxu0 %v3124
      %10706 = vmatpush1.bf16.msra.mxu0 %v3123
      %10707 = vmatprep.subr.bf16.mxu0 %v3132
      %10708 = vmatpush1.bf16.msra.mxu0 %v3131
      %10709 = vmatprep.subr.bf16.mxu0 %v3140
      %10710 = vmatpush1.bf16.msra.mxu0 %v3139
      %10711 = vmatprep.mubr.bf16.mxu0 %v10430
      %10712 = vmatmul.mubr.bf16.gmra.mrb[0].mxu0 %v10429
      %v10713 = vpop.f32.mrb[0].mxu0
      %v10714 = vadd.f32 %v10673, %v10713
      %v10715 = vpop.f32.mrb[0].mxu0
      %v10716 = vadd.f32 %v10675, %v10715
      %v10717 = vpop.f32.mrb[0].mxu0
      %v10718 = vpop.f32.mrb[0].mxu0
      %10719 = vdwg.mxu0
      %10720 = vmatprep.subr.bf16.mxu0 %v3148
      %10721 = vmatpush1.bf16.msra.mxu0 %v3147
      %10722 = vmatprep.subr.bf16.mxu0 %v3156
      %10723 = vmatpush1.bf16.msra.mxu0 %v3155
      %10724 = vmatprep.subr.bf16.mxu0 %v3164
      %10725 = vmatpush1.bf16.msra.mxu0 %v3163
      %10726 = vmatprep.subr.bf16.mxu0 %v3172
      %10727 = vmatpush1.bf16.msra.mxu0 %v3171
      %10728 = vmatprep.subr.bf16.mxu0 %v3180
      %10729 = vmatpush1.bf16.msra.mxu0 %v3179
      %10730 = vmatprep.subr.bf16.mxu0 %v3188
      %10731 = vmatpush1.bf16.msra.mxu0 %v3187
      %10732 = vmatprep.subr.bf16.mxu0 %v3196
      %10733 = vmatpush1.bf16.msra.mxu0 %v3195
      %10734 = vmatprep.subr.bf16.mxu0 %v3204
      %10735 = vmatpush1.bf16.msra.mxu0 %v3203
      %10736 = vmatprep.subr.bf16.mxu0 %v3212
      %10737 = vmatpush1.bf16.msra.mxu0 %v3211
      %10738 = vmatprep.subr.bf16.mxu0 %v3220
      %10739 = vmatpush1.bf16.msra.mxu0 %v3219
      %10740 = vmatprep.subr.bf16.mxu0 %v3228
      %10741 = vmatpush1.bf16.msra.mxu0 %v3227
      %10742 = vmatprep.subr.bf16.mxu0 %v3236
      %10743 = vmatpush1.bf16.msra.mxu0 %v3235
      %10744 = vmatprep.subr.bf16.mxu0 %v3244
      %10745 = vmatpush1.bf16.msra.mxu0 %v3243
      %10746 = vmatprep.subr.bf16.mxu0 %v3252
      %10747 = vmatpush1.bf16.msra.mxu0 %v3251
      %10748 = vmatprep.subr.bf16.mxu0 %v3260
      %10749 = vmatpush1.bf16.msra.mxu0 %v3259
      %10750 = vmatprep.subr.bf16.mxu0 %v3268
      %10751 = vmatpush1.bf16.msra.mxu0 %v3267
      %10752 = vmatprep.mubr.bf16.mxu0 %v10432
      %10753 = vmatmul.mubr.bf16.gmra.mrb[0].mxu0 %v10431
      %v10754 = vpop.f32.mrb[0].mxu0
      %v10755 = vadd.f32 %v10714, %v10754
      %v10756 = vpop.f32.mrb[0].mxu0
      %v10757 = vadd.f32 %v10716, %v10756
      %v10758 = vpop.f32.mrb[0].mxu0
      %v10759 = vpop.f32.mrb[0].mxu0
      %10760 = vdwg.mxu0
      %10761 = vmatprep.subr.bf16.mxu0 %v2766
      %10762 = vmatpush1.bf16.msra.mxu0 %v2765
      %10763 = vmatprep.subr.bf16.mxu0 %v2774
      %10764 = vmatpush1.bf16.msra.mxu0 %v2773
      %10765 = vmatprep.subr.bf16.mxu0 %v2782
      %10766 = vmatpush1.bf16.msra.mxu0 %v2781
      %10767 = vmatprep.subr.bf16.mxu0 %v2790
      %10768 = vmatpush1.bf16.msra.mxu0 %v2789
      %10769 = vmatprep.subr.bf16.mxu0 %v2798
      %10770 = vmatpush1.bf16.msra.mxu0 %v2797
      %10771 = vmatprep.subr.bf16.mxu0 %v2806
      %10772 = vmatpush1.bf16.msra.mxu0 %v2805
      %10773 = vmatprep.subr.bf16.mxu0 %v2814
      %10774 = vmatpush1.bf16.msra.mxu0 %v2813
      %10775 = vmatprep.subr.bf16.mxu0 %v2822
      %10776 = vmatpush1.bf16.msra.mxu0 %v2821
      %10777 = vmatprep.subr.bf16.mxu0 %v2830
      %10778 = vmatpush1.bf16.msra.mxu0 %v2829
      %10779 = vmatprep.subr.bf16.mxu0 %v2838
      %10780 = vmatpush1.bf16.msra.mxu0 %v2837
      %10781 = vmatprep.subr.bf16.mxu0 %v2846
      %10782 = vmatpush1.bf16.msra.mxu0 %v2845
      %10783 = vmatprep.subr.bf16.mxu0 %v2854
      %10784 = vmatpush1.bf16.msra.mxu0 %v2853
      %10785 = vmatprep.subr.bf16.mxu0 %v2862
      %10786 = vmatpush1.bf16.msra.mxu0 %v2861
      %10787 = vmatprep.subr.bf16.mxu0 %v2870
      %10788 = vmatpush1.bf16.msra.mxu0 %v2869
      %10789 = vmatprep.subr.bf16.mxu0 %v2878
      %10790 = vmatpush1.bf16.msra.mxu0 %v2877
      %10791 = vmatprep.subr.bf16.mxu0 %v2886
      %10792 = vmatpush1.bf16.msra.mxu0 %v2885
      %10793 = vmatprep.mubr.bf16.mxu0 %v10426
      %10794 = vmatmul.mubr.bf16.gmra.mrb[0].mxu0 %v10425
      %v10795 = vpop.f32.mrb[0].mxu0
      %v10796 = vadd.f32 0.0, %v10795
      %v10797 = vpop.f32.mrb[0].mxu0
      %v10798 = vadd.f32 0.0, %v10797
      %v10799 = vpop.f32.mrb[0].mxu0
      %v10800 = vpop.f32.mrb[0].mxu0
      %10801 = vdwg.mxu0
      %10802 = vmatprep.subr.bf16.mxu0 %v2894
      %10803 = vmatpush1.bf16.msra.mxu0 %v2893
      %10804 = vmatprep.subr.bf16.mxu0 %v2902
      %10805 = vmatpush1.bf16.msra.mxu0 %v2901
      %10806 = vmatprep.subr.bf16.mxu0 %v2910
      %10807 = vmatpush1.bf16.msra.mxu0 %v2909
      %10808 = vmatprep.subr.bf16.mxu0 %v2918
      %10809 = vmatpush1.bf16.msra.mxu0 %v2917
      %10810 = vmatprep.subr.bf16.mxu0 %v2926
      %10811 = vmatpush1.bf16.msra.mxu0 %v2925
      %10812 = vmatprep.subr.bf16.mxu0 %v2934
      %10813 = vmatpush1.bf16.msra.mxu0 %v2933
      %10814 = vmatprep.subr.bf16.mxu0 %v2942
      %10815 = vmatpush1.bf16.msra.mxu0 %v2941
      %10816 = vmatprep.subr.bf16.mxu0 %v2950
      %10817 = vmatpush1.bf16.msra.mxu0 %v2949
      %10818 = vmatprep.subr.bf16.mxu0 %v2958
      %10819 = vmatpush1.bf16.msra.mxu0 %v2957
      %10820 = vmatprep.subr.bf16.mxu0 %v2966
      %10821 = vmatpush1.bf16.msra.mxu0 %v2965
      %10822 = vmatprep.subr.bf16.mxu0 %v2974
      %10823 = vmatpush1.bf16.msra.mxu0 %v2973
      %10824 = vmatprep.subr.bf16.mxu0 %v2982
      %10825 = vmatpush1.bf16.msra.mxu0 %v2981
      %10826 = vmatprep.subr.bf16.mxu0 %v2990
      %10827 = vmatpush1.bf16.msra.mxu0 %v2989
      %10828 = vmatprep.subr.bf16.mxu0 %v2998
      %10829 = vmatpush1.bf16.msra.mxu0 %v2997
      %10830 = vmatprep.subr.bf16.mxu0 %v3006
      %10831 = vmatpush1.bf16.msra.mxu0 %v3005
      %10832 = vmatprep.subr.bf16.mxu0 %v3014
      %10833 = vmatpush1.bf16.msra.mxu0 %v3013
      %10834 = vmatprep.mubr.bf16.mxu0 %v10428
      %10835 = vmatmul.mubr.bf16.gmra.mrb[0].mxu0 %v10427
      %v10836 = vpop.f32.mrb[0].mxu0
      %v10837 = vadd.f32 %v10796, %v10836
      %v10838 = vpop.f32.mrb[0].mxu0
      %v10839 = vadd.f32 %v10798, %v10838
      %v10840 = vpop.f32.mrb[0].mxu0
      %v10841 = vpop.f32.mrb[0].mxu0
      %10842 = vdwg.mxu0
      %10843 = vmatprep.subr.bf16.mxu0 %v3022
      %10844 = vmatpush1.bf16.msra.mxu0 %v3021
      %10845 = vmatprep.subr.bf16.mxu0 %v3030
      %10846 = vmatpush1.bf16.msra.mxu0 %v3029
      %10847 = vmatprep.subr.bf16.mxu0 %v3038
      %10848 = vmatpush1.bf16.msra.mxu0 %v3037
      %10849 = vmatprep.subr.bf16.mxu0 %v3046
      %10850 = vmatpush1.bf16.msra.mxu0 %v3045
      %10851 = vmatprep.subr.bf16.mxu0 %v3054
      %10852 = vmatpush1.bf16.msra.mxu0 %v3053
      %10853 = vmatprep.subr.bf16.mxu0 %v3062
      %10854 = vmatpush1.bf16.msra.mxu0 %v3061
      %10855 = vmatprep.subr.bf16.mxu0 %v3070
      %10856 = vmatpush1.bf16.msra.mxu0 %v3069
      %10857 = vmatprep.subr.bf16.mxu0 %v3078
      %10858 = vmatpush1.bf16.msra.mxu0 %v3077
      %10859 = vmatprep.subr.bf16.mxu0 %v3086
      %10860 = vmatpush1.bf16.msra.mxu0 %v3085
      %10861 = vmatprep.subr.bf16.mxu0 %v3094
      %10862 = vmatpush1.bf16.msra.mxu0 %v3093
      %10863 = vmatprep.subr.bf16.mxu0 %v3102
      %10864 = vmatpush1.bf16.msra.mxu0 %v3101
      %10865 = vmatprep.subr.bf16.mxu0 %v3110
      %10866 = vmatpush1.bf16.msra.mxu0 %v3109
      %10867 = vmatprep.subr.bf16.mxu0 %v3118
      %10868 = vmatpush1.bf16.msra.mxu0 %v3117
      %10869 = vmatprep.subr.bf16.mxu0 %v3126
      %10870 = vmatpush1.bf16.msra.mxu0 %v3125
      %10871 = vmatprep.subr.bf16.mxu0 %v3134
      %10872 = vmatpush1.bf16.msra.mxu0 %v3133
      %10873 = vmatprep.subr.bf16.mxu0 %v3142
      %10874 = vmatpush1.bf16.msra.mxu0 %v3141
      %10875 = vmatprep.mubr.bf16.mxu0 %v10430
      %10876 = vmatmul.mubr.bf16.gmra.mrb[0].mxu0 %v10429
      %v10877 = vpop.f32.mrb[0].mxu0
      %v10878 = vadd.f32 %v10837, %v10877
      %v10879 = vpop.f32.mrb[0].mxu0
      %v10880 = vadd.f32 %v10839, %v10879
      %v10881 = vpop.f32.mrb[0].mxu0
      %v10882 = vpop.f32.mrb[0].mxu0
      %10883 = vdwg.mxu0
      %10884 = vmatprep.subr.bf16.mxu0 %v3150
      %10885 = vmatpush1.bf16.msra.mxu0 %v3149
      %10886 = vmatprep.subr.bf16.mxu0 %v3158
      %10887 = vmatpush1.bf16.msra.mxu0 %v3157
      %10888 = vmatprep.subr.bf16.mxu0 %v3166
      %10889 = vmatpush1.bf16.msra.mxu0 %v3165
      %10890 = vmatprep.subr.bf16.mxu0 %v3174
      %10891 = vmatpush1.bf16.msra.mxu0 %v3173
      %10892 = vmatprep.subr.bf16.mxu0 %v3182
      %10893 = vmatpush1.bf16.msra.mxu0 %v3181
      %10894 = vmatprep.subr.bf16.mxu0 %v3190
      %10895 = vmatpush1.bf16.msra.mxu0 %v3189
      %10896 = vmatprep.subr.bf16.mxu0 %v3198
      %10897 = vmatpush1.bf16.msra.mxu0 %v3197
      %10898 = vmatprep.subr.bf16.mxu0 %v3206
      %10899 = vmatpush1.bf16.msra.mxu0 %v3205
      %10900 = vmatprep.subr.bf16.mxu0 %v3214
      %10901 = vmatpush1.bf16.msra.mxu0 %v3213
      %10902 = vmatprep.subr.bf16.mxu0 %v3222
      %10903 = vmatpush1.bf16.msra.mxu0 %v3221
      %10904 = vmatprep.subr.bf16.mxu0 %v3230
      %10905 = vmatpush1.bf16.msra.mxu0 %v3229
      %10906 = vmatprep.subr.bf16.mxu0 %v3238
      %10907 = vmatpush1.bf16.msra.mxu0 %v3237
      %10908 = vmatprep.subr.bf16.mxu0 %v3246
      %10909 = vmatpush1.bf16.msra.mxu0 %v3245
      %10910 = vmatprep.subr.bf16.mxu0 %v3254
      %10911 = vmatpush1.bf16.msra.mxu0 %v3253
      %10912 = vmatprep.subr.bf16.mxu0 %v3262
      %10913 = vmatpush1.bf16.msra.mxu0 %v3261
      %10914 = vmatprep.subr.bf16.mxu0 %v3270
      %10915 = vmatpush1.bf16.msra.mxu0 %v3269
      %10916 = vmatprep.mubr.bf16.mxu0 %v10432
      %10917 = vmatmul.mubr.bf16.gmra.mrb[0].mxu0 %v10431
      %v10918 = vpop.f32.mrb[0].mxu0
      %v10919 = vadd.f32 %v10878, %v10918
      %v10920 = vpop.f32.mrb[0].mxu0
      %v10921 = vadd.f32 %v10880, %v10920
      %v10922 = vpop.f32.mrb[0].mxu0
      %v10923 = vpop.f32.mrb[0].mxu0
      %10924 = vdwg.mxu0
      %10925 = vmatprep.subr.bf16.mxu0 %v2768
      %10926 = vmatpush1.bf16.msra.mxu0 %v2767
      %10927 = vmatprep.subr.bf16.mxu0 %v2776
      %10928 = vmatpush1.bf16.msra.mxu0 %v2775
      %10929 = vmatprep.subr.bf16.mxu0 %v2784
      %10930 = vmatpush1.bf16.msra.mxu0 %v2783
      %10931 = vmatprep.subr.bf16.mxu0 %v2792
      %10932 = vmatpush1.bf16.msra.mxu0 %v2791
      %10933 = vmatprep.subr.bf16.mxu0 %v2800
      %10934 = vmatpush1.bf16.msra.mxu0 %v2799
      %10935 = vmatprep.subr.bf16.mxu0 %v2808
      %10936 = vmatpush1.bf16.msra.mxu0 %v2807
      %10937 = vmatprep.subr.bf16.mxu0 %v2816
      %10938 = vmatpush1.bf16.msra.mxu0 %v2815
      %10939 = vmatprep.subr.bf16.mxu0 %v2824
      %10940 = vmatpush1.bf16.msra.mxu0 %v2823
      %10941 = vmatprep.subr.bf16.mxu0 %v2832
      %10942 = vmatpush1.bf16.msra.mxu0 %v2831
      %10943 = vmatprep.subr.bf16.mxu0 %v2840
      %10944 = vmatpush1.bf16.msra.mxu0 %v2839
      %10945 = vmatprep.subr.bf16.mxu0 %v2848
      %10946 = vmatpush1.bf16.msra.mxu0 %v2847
      %10947 = vmatprep.subr.bf16.mxu0 %v2856
      %10948 = vmatpush1.bf16.msra.mxu0 %v2855
      %10949 = vmatprep.subr.bf16.mxu0 %v2864
      %10950 = vmatpush1.bf16.msra.mxu0 %v2863
      %10951 = vmatprep.subr.bf16.mxu0 %v2872
      %10952 = vmatpush1.bf16.msra.mxu0 %v2871
      %10953 = vmatprep.subr.bf16.mxu0 %v2880
      %10954 = vmatpush1.bf16.msra.mxu0 %v2879
      %10955 = vmatprep.subr.bf16.mxu0 %v2888
      %10956 = vmatpush1.bf16.msra.mxu0 %v2887
      %10957 = vmatprep.mubr.bf16.mxu0 %v10426
      %10958 = vmatmul.mubr.bf16.gmra.mrb[0].mxu0 %v10425
      %v10959 = vpop.f32.mrb[0].mxu0
      %v10960 = vadd.f32 0.0, %v10959
      %v10961 = vpop.f32.mrb[0].mxu0
      %v10962 = vadd.f32 0.0, %v10961
      %v10963 = vpop.f32.mrb[0].mxu0
      %v10964 = vpop.f32.mrb[0].mxu0
      %10965 = vdwg.mxu0
      %10966 = vmatprep.subr.bf16.mxu0 %v2896
      %10967 = vmatpush1.bf16.msra.mxu0 %v2895
      %10968 = vmatprep.subr.bf16.mxu0 %v2904
      %10969 = vmatpush1.bf16.msra.mxu0 %v2903
      %10970 = vmatprep.subr.bf16.mxu0 %v2912
      %10971 = vmatpush1.bf16.msra.mxu0 %v2911
      %10972 = vmatprep.subr.bf16.mxu0 %v2920
      %10973 = vmatpush1.bf16.msra.mxu0 %v2919
      %10974 = vmatprep.subr.bf16.mxu0 %v2928
      %10975 = vmatpush1.bf16.msra.mxu0 %v2927
      %10976 = vmatprep.subr.bf16.mxu0 %v2936
      %10977 = vmatpush1.bf16.msra.mxu0 %v2935
      %10978 = vmatprep.subr.bf16.mxu0 %v2944
      %10979 = vmatpush1.bf16.msra.mxu0 %v2943
      %10980 = vmatprep.subr.bf16.mxu0 %v2952
      %10981 = vmatpush1.bf16.msra.mxu0 %v2951
      %10982 = vmatprep.subr.bf16.mxu0 %v2960
      %10983 = vmatpush1.bf16.msra.mxu0 %v2959
      %10984 = vmatprep.subr.bf16.mxu0 %v2968
      %10985 = vmatpush1.bf16.msra.mxu0 %v2967
      %10986 = vmatprep.subr.bf16.mxu0 %v2976
      %10987 = vmatpush1.bf16.msra.mxu0 %v2975
      %10988 = vmatprep.subr.bf16.mxu0 %v2984
      %10989 = vmatpush1.bf16.msra.mxu0 %v2983
      %10990 = vmatprep.subr.bf16.mxu0 %v2992
      %10991 = vmatpush1.bf16.msra.mxu0 %v2991
      %10992 = vmatprep.subr.bf16.mxu0 %v3000
      %10993 = vmatpush1.bf16.msra.mxu0 %v2999
      %10994 = vmatprep.subr.bf16.mxu0 %v3008
      %10995 = vmatpush1.bf16.msra.mxu0 %v3007
      %10996 = vmatprep.subr.bf16.mxu0 %v3016
      %10997 = vmatpush1.bf16.msra.mxu0 %v3015
      %10998 = vmatprep.mubr.bf16.mxu0 %v10428
      %10999 = vmatmul.mubr.bf16.gmra.mrb[0].mxu0 %v10427
      %v11000 = vpop.f32.mrb[0].mxu0
      %v11001 = vadd.f32 %v10960, %v11000
      %v11002 = vpop.f32.mrb[0].mxu0
      %v11003 = vadd.f32 %v10962, %v11002
      %v11004 = vpop.f32.mrb[0].mxu0
      %v11005 = vpop.f32.mrb[0].mxu0
      %11006 = vdwg.mxu0
      %11007 = vmatprep.subr.bf16.mxu0 %v3024
      %11008 = vmatpush1.bf16.msra.mxu0 %v3023
      %11009 = vmatprep.subr.bf16.mxu0 %v3032
      %11010 = vmatpush1.bf16.msra.mxu0 %v3031
      %11011 = vmatprep.subr.bf16.mxu0 %v3040
      %11012 = vmatpush1.bf16.msra.mxu0 %v3039
      %11013 = vmatprep.subr.bf16.mxu0 %v3048
      %11014 = vmatpush1.bf16.msra.mxu0 %v3047
      %11015 = vmatprep.subr.bf16.mxu0 %v3056
      %11016 = vmatpush1.bf16.msra.mxu0 %v3055
      %11017 = vmatprep.subr.bf16.mxu0 %v3064
      %11018 = vmatpush1.bf16.msra.mxu0 %v3063
      %11019 = vmatprep.subr.bf16.mxu0 %v3072
      %11020 = vmatpush1.bf16.msra.mxu0 %v3071
      %11021 = vmatprep.subr.bf16.mxu0 %v3080
      %11022 = vmatpush1.bf16.msra.mxu0 %v3079
      %11023 = vmatprep.subr.bf16.mxu0 %v3088
      %11024 = vmatpush1.bf16.msra.mxu0 %v3087
      %11025 = vmatprep.subr.bf16.mxu0 %v3096
      %11026 = vmatpush1.bf16.msra.mxu0 %v3095
      %11027 = vmatprep.subr.bf16.mxu0 %v3104
      %11028 = vmatpush1.bf16.msra.mxu0 %v3103
      %11029 = vmatprep.subr.bf16.mxu0 %v3112
      %11030 = vmatpush1.bf16.msra.mxu0 %v3111
      %11031 = vmatprep.subr.bf16.mxu0 %v3120
      %11032 = vmatpush1.bf16.msra.mxu0 %v3119
      %11033 = vmatprep.subr.bf16.mxu0 %v3128
      %11034 = vmatpush1.bf16.msra.mxu0 %v3127
      %11035 = vmatprep.subr.bf16.mxu0 %v3136
      %11036 = vmatpush1.bf16.msra.mxu0 %v3135
      %11037 = vmatprep.subr.bf16.mxu0 %v3144
      %11038 = vmatpush1.bf16.msra.mxu0 %v3143
      %11039 = vmatprep.mubr.bf16.mxu0 %v10430
      %11040 = vmatmul.mubr.bf16.gmra.mrb[0].mxu0 %v10429
      %v11041 = vpop.f32.mrb[0].mxu0
      %v11042 = vadd.f32 %v11001, %v11041
      %v11043 = vpop.f32.mrb[0].mxu0
      %v11044 = vadd.f32 %v11003, %v11043
      %v11045 = vpop.f32.mrb[0].mxu0
      %v11046 = vpop.f32.mrb[0].mxu0
      %11047 = vdwg.mxu0
      %11048 = vmatprep.subr.bf16.mxu0 %v3152
      %11049 = vmatpush1.bf16.msra.mxu0 %v3151
      %11050 = vmatprep.subr.bf16.mxu0 %v3160
      %11051 = vmatpush1.bf16.msra.mxu0 %v3159
      %11052 = vmatprep.subr.bf16.mxu0 %v3168
      %11053 = vmatpush1.bf16.msra.mxu0 %v3167
      %11054 = vmatprep.subr.bf16.mxu0 %v3176
      %11055 = vmatpush1.bf16.msra.mxu0 %v3175
      %11056 = vmatprep.subr.bf16.mxu0 %v3184
      %11057 = vmatpush1.bf16.msra.mxu0 %v3183
      %11058 = vmatprep.subr.bf16.mxu0 %v3192
      %11059 = vmatpush1.bf16.msra.mxu0 %v3191
      %11060 = vmatprep.subr.bf16.mxu0 %v3200
      %11061 = vmatpush1.bf16.msra.mxu0 %v3199
      %11062 = vmatprep.subr.bf16.mxu0 %v3208
      %11063 = vmatpush1.bf16.msra.mxu0 %v3207
      %11064 = vmatprep.subr.bf16.mxu0 %v3216
      %11065 = vmatpush1.bf16.msra.mxu0 %v3215
      %11066 = vmatprep.subr.bf16.mxu0 %v3224
      %11067 = vmatpush1.bf16.msra.mxu0 %v3223
      %11068 = vmatprep.subr.bf16.mxu0 %v3232
      %11069 = vmatpush1.bf16.msra.mxu0 %v3231
      %11070 = vmatprep.subr.bf16.mxu0 %v3240
      %11071 = vmatpush1.bf16.msra.mxu0 %v3239
      %11072 = vmatprep.subr.bf16.mxu0 %v3248
      %11073 = vmatpush1.bf16.msra.mxu0 %v3247
      %11074 = vmatprep.subr.bf16.mxu0 %v3256
      %11075 = vmatpush1.bf16.msra.mxu0 %v3255
      %11076 = vmatprep.subr.bf16.mxu0 %v3264
      %11077 = vmatpush1.bf16.msra.mxu0 %v3263
      %11078 = vmatprep.subr.bf16.mxu0 %v3272
      %11079 = vmatpush1.bf16.msra.mxu0 %v3271
      %11080 = vmatprep.mubr.bf16.mxu0 %v10432
      %11081 = vmatmul.mubr.bf16.gmra.mrb[0].mxu0 %v10431
      %v11082 = vpop.f32.mrb[0].mxu0
      %v11083 = vadd.f32 %v11042, %v11082
      %v11084 = vpop.f32.mrb[0].mxu0
      %v11085 = vadd.f32 %v11044, %v11084
      %v11086 = vpop.f32.mrb[0].mxu0
      %v11087 = vpop.f32.mrb[0].mxu0
      %11088 = vdwg.mxu0
      %11089 = vmatprep.subr.bf16.mxu0 %v5978
      %11090 = vmatpush1.bf16.msra.mxu0 %v5977
      %11091 = vmatprep.subr.bf16.mxu0 %v5986
      %11092 = vmatpush1.bf16.msra.mxu0 %v5985
      %11093 = vmatprep.subr.bf16.mxu0 %v5994
      %11094 = vmatpush1.bf16.msra.mxu0 %v5993
      %11095 = vmatprep.subr.bf16.mxu0 %v6002
      %11096 = vmatpush1.bf16.msra.mxu0 %v6001
      %11097 = vmatprep.subr.bf16.mxu0 %v6010
      %11098 = vmatpush1.bf16.msra.mxu0 %v6009
      %11099 = vmatprep.subr.bf16.mxu0 %v6018
      %11100 = vmatpush1.bf16.msra.mxu0 %v6017
      %11101 = vmatprep.subr.bf16.mxu0 %v6026
      %11102 = vmatpush1.bf16.msra.mxu0 %v6025
      %11103 = vmatprep.subr.bf16.mxu0 %v6034
      %11104 = vmatpush1.bf16.msra.mxu0 %v6033
      %11105 = vmatprep.subr.bf16.mxu0 %v6042
      %11106 = vmatpush1.bf16.msra.mxu0 %v6041
      %11107 = vmatprep.subr.bf16.mxu0 %v6050
      %11108 = vmatpush1.bf16.msra.mxu0 %v6049
      %11109 = vmatprep.subr.bf16.mxu0 %v6058
      %11110 = vmatpush1.bf16.msra.mxu0 %v6057
      %11111 = vmatprep.subr.bf16.mxu0 %v6066
      %11112 = vmatpush1.bf16.msra.mxu0 %v6065
      %11113 = vmatprep.subr.bf16.mxu0 %v6074
      %11114 = vmatpush1.bf16.msra.mxu0 %v6073
      %11115 = vmatprep.subr.bf16.mxu0 %v6082
      %11116 = vmatpush1.bf16.msra.mxu0 %v6081
      %11117 = vmatprep.subr.bf16.mxu0 %v6090
      %11118 = vmatpush1.bf16.msra.mxu0 %v6089
      %11119 = vmatprep.subr.bf16.mxu0 %v6098
      %11120 = vmatpush1.bf16.msra.mxu0 %v6097
      %11121 = vmatprep.mubr.bf16.mxu0 %v10426
      %11122 = vmatmul.mubr.bf16.gmra.mrb[0].mxu0 %v10425
      %v11123 = vpop.f32.mrb[0].mxu0
      %v11124 = vadd.f32 %v10591, %v11123
      %v11125 = vpop.f32.mrb[0].mxu0
      %v11126 = vadd.f32 %v10593, %v11125
      %v11127 = vpop.f32.mrb[0].mxu0
      %v11128 = vpop.f32.mrb[0].mxu0
      %11129 = vdwg.mxu0
      %11130 = vmatprep.subr.bf16.mxu0 %v6106
      %11131 = vmatpush1.bf16.msra.mxu0 %v6105
      %11132 = vmatprep.subr.bf16.mxu0 %v6114
      %11133 = vmatpush1.bf16.msra.mxu0 %v6113
      %11134 = vmatprep.subr.bf16.mxu0 %v6122
      %11135 = vmatpush1.bf16.msra.mxu0 %v6121
      %11136 = vmatprep.subr.bf16.mxu0 %v6130
      %11137 = vmatpush1.bf16.msra.mxu0 %v6129
      %11138 = vmatprep.subr.bf16.mxu0 %v6138
      %11139 = vmatpush1.bf16.msra.mxu0 %v6137
      %11140 = vmatprep.subr.bf16.mxu0 %v6146
      %11141 = vmatpush1.bf16.msra.mxu0 %v6145
      %11142 = vmatprep.subr.bf16.mxu0 %v6154
      %11143 = vmatpush1.bf16.msra.mxu0 %v6153
      %11144 = vmatprep.subr.bf16.mxu0 %v6162
      %11145 = vmatpush1.bf16.msra.mxu0 %v6161
      %11146 = vmatprep.subr.bf16.mxu0 %v6170
      %11147 = vmatpush1.bf16.msra.mxu0 %v6169
      %11148 = vmatprep.subr.bf16.mxu0 %v6178
      %11149 = vmatpush1.bf16.msra.mxu0 %v6177
      %11150 = vmatprep.subr.bf16.mxu0 %v6186
      %11151 = vmatpush1.bf16.msra.mxu0 %v6185
      %11152 = vmatprep.subr.bf16.mxu0 %v6194
      %11153 = vmatpush1.bf16.msra.mxu0 %v6193
      %11154 = vmatprep.subr.bf16.mxu0 %v6202
      %11155 = vmatpush1.bf16.msra.mxu0 %v6201
      %11156 = vmatprep.subr.bf16.mxu0 %v6210
      %11157 = vmatpush1.bf16.msra.mxu0 %v6209
      %11158 = vmatprep.subr.bf16.mxu0 %v6218
      %11159 = vmatpush1.bf16.msra.mxu0 %v6217
      %11160 = vmatprep.subr.bf16.mxu0 %v6226
      %11161 = vmatpush1.bf16.msra.mxu0 %v6225
      %11162 = vmatprep.mubr.bf16.mxu0 %v10428
      %11163 = vmatmul.mubr.bf16.gmra.mrb[0].mxu0 %v10427
      %v11164 = vpop.f32.mrb[0].mxu0
      %v11165 = vadd.f32 %v11124, %v11164
      %v11166 = vpop.f32.mrb[0].mxu0
      %v11167 = vadd.f32 %v11126, %v11166
      %v11168 = vpop.f32.mrb[0].mxu0
      %v11169 = vpop.f32.mrb[0].mxu0
      %11170 = vdwg.mxu0
      %11171 = vmatprep.subr.bf16.mxu0 %v6234
      %11172 = vmatpush1.bf16.msra.mxu0 %v6233
      %11173 = vmatprep.subr.bf16.mxu0 %v6242
      %11174 = vmatpush1.bf16.msra.mxu0 %v6241
      %11175 = vmatprep.subr.bf16.mxu0 %v6250
      %11176 = vmatpush1.bf16.msra.mxu0 %v6249
      %11177 = vmatprep.subr.bf16.mxu0 %v6258
      %11178 = vmatpush1.bf16.msra.mxu0 %v6257
      %11179 = vmatprep.subr.bf16.mxu0 %v6266
      %11180 = vmatpush1.bf16.msra.mxu0 %v6265
      %11181 = vmatprep.subr.bf16.mxu0 %v6274
      %11182 = vmatpush1.bf16.msra.mxu0 %v6273
      %11183 = vmatprep.subr.bf16.mxu0 %v6282
      %11184 = vmatpush1.bf16.msra.mxu0 %v6281
      %11185 = vmatprep.subr.bf16.mxu0 %v6290
      %11186 = vmatpush1.bf16.msra.mxu0 %v6289
      %11187 = vmatprep.subr.bf16.mxu0 %v6298
      %11188 = vmatpush1.bf16.msra.mxu0 %v6297
      %11189 = vmatprep.subr.bf16.mxu0 %v6306
      %11190 = vmatpush1.bf16.msra.mxu0 %v6305
      %11191 = vmatprep.subr.bf16.mxu0 %v6314
      %11192 = vmatpush1.bf16.msra.mxu0 %v6313
      %11193 = vmatprep.subr.bf16.mxu0 %v6322
      %11194 = vmatpush1.bf16.msra.mxu0 %v6321
      %11195 = vmatprep.subr.bf16.mxu0 %v6330
      %11196 = vmatpush1.bf16.msra.mxu0 %v6329
      %11197 = vmatprep.subr.bf16.mxu0 %v6338
      %11198 = vmatpush1.bf16.msra.mxu0 %v6337
      %11199 = vmatprep.subr.bf16.mxu0 %v6346
      %11200 = vmatpush1.bf16.msra.mxu0 %v6345
      %11201 = vmatprep.subr.bf16.mxu0 %v6354
      %11202 = vmatpush1.bf16.msra.mxu0 %v6353
      %11203 = vmatprep.mubr.bf16.mxu0 %v10430
      %11204 = vmatmul.mubr.bf16.gmra.mrb[0].mxu0 %v10429
      %v11205 = vpop.f32.mrb[0].mxu0
      %v11206 = vadd.f32 %v11165, %v11205
      %v11207 = vpop.f32.mrb[0].mxu0
      %v11208 = vadd.f32 %v11167, %v11207
      %v11209 = vpop.f32.mrb[0].mxu0
      %v11210 = vpop.f32.mrb[0].mxu0
      %11211 = vdwg.mxu0
      %11212 = vmatprep.subr.bf16.mxu0 %v6362
      %11213 = vmatpush1.bf16.msra.mxu0 %v6361
      %11214 = vmatprep.subr.bf16.mxu0 %v6370
      %11215 = vmatpush1.bf16.msra.mxu0 %v6369
      %11216 = vmatprep.subr.bf16.mxu0 %v6378
      %11217 = vmatpush1.bf16.msra.mxu0 %v6377
      %11218 = vmatprep.subr.bf16.mxu0 %v6386
      %11219 = vmatpush1.bf16.msra.mxu0 %v6385
      %11220 = vmatprep.subr.bf16.mxu0 %v6394
      %11221 = vmatpush1.bf16.msra.mxu0 %v6393
      %11222 = vmatprep.subr.bf16.mxu0 %v6402
      %11223 = vmatpush1.bf16.msra.mxu0 %v6401
      %11224 = vmatprep.subr.bf16.mxu0 %v6410
      %11225 = vmatpush1.bf16.msra.mxu0 %v6409
      %11226 = vmatprep.subr.bf16.mxu0 %v6418
      %11227 = vmatpush1.bf16.msra.mxu0 %v6417
      %11228 = vmatprep.subr.bf16.mxu0 %v6426
      %11229 = vmatpush1.bf16.msra.mxu0 %v6425
      %11230 = vmatprep.subr.bf16.mxu0 %v6434
      %11231 = vmatpush1.bf16.msra.mxu0 %v6433
      %11232 = vmatprep.subr.bf16.mxu0 %v6442
      %11233 = vmatpush1.bf16.msra.mxu0 %v6441
      %11234 = vmatprep.subr.bf16.mxu0 %v6450
      %11235 = vmatpush1.bf16.msra.mxu0 %v6449
      %11236 = vmatprep.subr.bf16.mxu0 %v6458
      %11237 = vmatpush1.bf16.msra.mxu0 %v6457
      %11238 = vmatprep.subr.bf16.mxu0 %v6466
      %11239 = vmatpush1.bf16.msra.mxu0 %v6465
      %11240 = vmatprep.subr.bf16.mxu0 %v6474
      %11241 = vmatpush1.bf16.msra.mxu0 %v6473
      %11242 = vmatprep.subr.bf16.mxu0 %v6482
      %11243 = vmatpush1.bf16.msra.mxu0 %v6481
      %11244 = vmatprep.mubr.bf16.mxu0 %v10432
      %11245 = vmatmul.mubr.bf16.gmra.mrb[0].mxu0 %v10431
      %v11246 = vpop.f32.mrb[0].mxu0
      %v11247 = vadd.f32 %v11206, %v11246
      %v11248 = vpop.f32.mrb[0].mxu0
      %v11249 = vadd.f32 %v11208, %v11248
      %v11250 = vpop.f32.mrb[0].mxu0
      %v11251 = vpop.f32.mrb[0].mxu0
      %11252 = vdwg.mxu0
      %11253 = vmatprep.subr.bf16.mxu0 %v5980
      %11254 = vmatpush1.bf16.msra.mxu0 %v5979
      %11255 = vmatprep.subr.bf16.mxu0 %v5988
      %11256 = vmatpush1.bf16.msra.mxu0 %v5987
      %11257 = vmatprep.subr.bf16.mxu0 %v5996
      %11258 = vmatpush1.bf16.msra.mxu0 %v5995
      %11259 = vmatprep.subr.bf16.mxu0 %v6004
      %11260 = vmatpush1.bf16.msra.mxu0 %v6003
      %11261 = vmatprep.subr.bf16.mxu0 %v6012
      %11262 = vmatpush1.bf16.msra.mxu0 %v6011
      %11263 = vmatprep.subr.bf16.mxu0 %v6020
      %11264 = vmatpush1.bf16.msra.mxu0 %v6019
      %11265 = vmatprep.subr.bf16.mxu0 %v6028
      %11266 = vmatpush1.bf16.msra.mxu0 %v6027
      %11267 = vmatprep.subr.bf16.mxu0 %v6036
      %11268 = vmatpush1.bf16.msra.mxu0 %v6035
      %11269 = vmatprep.subr.bf16.mxu0 %v6044
      %11270 = vmatpush1.bf16.msra.mxu0 %v6043
      %11271 = vmatprep.subr.bf16.mxu0 %v6052
      %11272 = vmatpush1.bf16.msra.mxu0 %v6051
      %11273 = vmatprep.subr.bf16.mxu0 %v6060
      %11274 = vmatpush1.bf16.msra.mxu0 %v6059
      %11275 = vmatprep.subr.bf16.mxu0 %v6068
      %11276 = vmatpush1.bf16.msra.mxu0 %v6067
      %11277 = vmatprep.subr.bf16.mxu0 %v6076
      %11278 = vmatpush1.bf16.msra.mxu0 %v6075
      %11279 = vmatprep.subr.bf16.mxu0 %v6084
      %11280 = vmatpush1.bf16.msra.mxu0 %v6083
      %11281 = vmatprep.subr.bf16.mxu0 %v6092
      %11282 = vmatpush1.bf16.msra.mxu0 %v6091
      %11283 = vmatprep.subr.bf16.mxu0 %v6100
      %11284 = vmatpush1.bf16.msra.mxu0 %v6099
      %11285 = vmatprep.mubr.bf16.mxu0 %v10426
      %11286 = vmatmul.mubr.bf16.gmra.mrb[0].mxu0 %v10425
      %v11287 = vpop.f32.mrb[0].mxu0
      %v11288 = vadd.f32 %v10755, %v11287
      %v11289 = vpop.f32.mrb[0].mxu0
      %v11290 = vadd.f32 %v10757, %v11289
      %v11291 = vpop.f32.mrb[0].mxu0
      %v11292 = vpop.f32.mrb[0].mxu0
      %11293 = vdwg.mxu0
      %11294 = vmatprep.subr.bf16.mxu0 %v6108
      %11295 = vmatpush1.bf16.msra.mxu0 %v6107
      %11296 = vmatprep.subr.bf16.mxu0 %v6116
      %11297 = vmatpush1.bf16.msra.mxu0 %v6115
      %11298 = vmatprep.subr.bf16.mxu0 %v6124
      %11299 = vmatpush1.bf16.msra.mxu0 %v6123
      %11300 = vmatprep.subr.bf16.mxu0 %v6132
      %11301 = vmatpush1.bf16.msra.mxu0 %v6131
      %11302 = vmatprep.subr.bf16.mxu0 %v6140
      %11303 = vmatpush1.bf16.msra.mxu0 %v6139
      %11304 = vmatprep.subr.bf16.mxu0 %v6148
      %11305 = vmatpush1.bf16.msra.mxu0 %v6147
      %11306 = vmatprep.subr.bf16.mxu0 %v6156
      %11307 = vmatpush1.bf16.msra.mxu0 %v6155
      %11308 = vmatprep.subr.bf16.mxu0 %v6164
      %11309 = vmatpush1.bf16.msra.mxu0 %v6163
      %11310 = vmatprep.subr.bf16.mxu0 %v6172
      %11311 = vmatpush1.bf16.msra.mxu0 %v6171
      %11312 = vmatprep.subr.bf16.mxu0 %v6180
      %11313 = vmatpush1.bf16.msra.mxu0 %v6179
      %11314 = vmatprep.subr.bf16.mxu0 %v6188
      %11315 = vmatpush1.bf16.msra.mxu0 %v6187
      %11316 = vmatprep.subr.bf16.mxu0 %v6196
      %11317 = vmatpush1.bf16.msra.mxu0 %v6195
      %11318 = vmatprep.subr.bf16.mxu0 %v6204
      %11319 = vmatpush1.bf16.msra.mxu0 %v6203
      %11320 = vmatprep.subr.bf16.mxu0 %v6212
      %11321 = vmatpush1.bf16.msra.mxu0 %v6211
      %11322 = vmatprep.subr.bf16.mxu0 %v6220
      %11323 = vmatpush1.bf16.msra.mxu0 %v6219
      %11324 = vmatprep.subr.bf16.mxu0 %v6228
      %11325 = vmatpush1.bf16.msra.mxu0 %v6227
      %11326 = vmatprep.mubr.bf16.mxu0 %v10428
      %11327 = vmatmul.mubr.bf16.gmra.mrb[0].mxu0 %v10427
      %v11328 = vpop.f32.mrb[0].mxu0
      %v11329 = vadd.f32 %v11288, %v11328
      %v11330 = vpop.f32.mrb[0].mxu0
      %v11331 = vadd.f32 %v11290, %v11330
      %v11332 = vpop.f32.mrb[0].mxu0
      %v11333 = vpop.f32.mrb[0].mxu0
      %11334 = vdwg.mxu0
      %11335 = vmatprep.subr.bf16.mxu0 %v6236
      %11336 = vmatpush1.bf16.msra.mxu0 %v6235
      %11337 = vmatprep.subr.bf16.mxu0 %v6244
      %11338 = vmatpush1.bf16.msra.mxu0 %v6243
      %11339 = vmatprep.subr.bf16.mxu0 %v6252
      %11340 = vmatpush1.bf16.msra.mxu0 %v6251
      %11341 = vmatprep.subr.bf16.mxu0 %v6260
      %11342 = vmatpush1.bf16.msra.mxu0 %v6259
      %11343 = vmatprep.subr.bf16.mxu0 %v6268
      %11344 = vmatpush1.bf16.msra.mxu0 %v6267
      %11345 = vmatprep.subr.bf16.mxu0 %v6276
      %11346 = vmatpush1.bf16.msra.mxu0 %v6275
      %11347 = vmatprep.subr.bf16.mxu0 %v6284
      %11348 = vmatpush1.bf16.msra.mxu0 %v6283
      %11349 = vmatprep.subr.bf16.mxu0 %v6292
      %11350 = vmatpush1.bf16.msra.mxu0 %v6291
      %11351 = vmatprep.subr.bf16.mxu0 %v6300
      %11352 = vmatpush1.bf16.msra.mxu0 %v6299
      %11353 = vmatprep.subr.bf16.mxu0 %v6308
      %11354 = vmatpush1.bf16.msra.mxu0 %v6307
      %11355 = vmatprep.subr.bf16.mxu0 %v6316
      %11356 = vmatpush1.bf16.msra.mxu0 %v6315
      %11357 = vmatprep.subr.bf16.mxu0 %v6324
      %11358 = vmatpush1.bf16.msra.mxu0 %v6323
      %11359 = vmatprep.subr.bf16.mxu0 %v6332
      %11360 = vmatpush1.bf16.msra.mxu0 %v6331
      %11361 = vmatprep.subr.bf16.mxu0 %v6340
      %11362 = vmatpush1.bf16.msra.mxu0 %v6339
      %11363 = vmatprep.subr.bf16.mxu0 %v6348
      %11364 = vmatpush1.bf16.msra.mxu0 %v6347
      %11365 = vmatprep.subr.bf16.mxu0 %v6356
      %11366 = vmatpush1.bf16.msra.mxu0 %v6355
      %11367 = vmatprep.mubr.bf16.mxu0 %v10430
      %11368 = vmatmul.mubr.bf16.gmra.mrb[0].mxu0 %v10429
      %v11369 = vpop.f32.mrb[0].mxu0
      %v11370 = vadd.f32 %v11329, %v11369
      %v11371 = vpop.f32.mrb[0].mxu0
      %v11372 = vadd.f32 %v11331, %v11371
      %v11373 = vpop.f32.mrb[0].mxu0
      %v11374 = vpop.f32.mrb[0].mxu0
      %11375 = vdwg.mxu0
      %11376 = vmatprep.subr.bf16.mxu0 %v6364
      %11377 = vmatpush1.bf16.msra.mxu0 %v6363
      %11378 = vmatprep.subr.bf16.mxu0 %v6372
      %11379 = vmatpush1.bf16.msra.mxu0 %v6371
      %11380 = vmatprep.subr.bf16.mxu0 %v6380
      %11381 = vmatpush1.bf16.msra.mxu0 %v6379
      %11382 = vmatprep.subr.bf16.mxu0 %v6388
      %11383 = vmatpush1.bf16.msra.mxu0 %v6387
      %11384 = vmatprep.subr.bf16.mxu0 %v6396
      %11385 = vmatpush1.bf16.msra.mxu0 %v6395
      %11386 = vmatprep.subr.bf16.mxu0 %v6404
      %11387 = vmatpush1.bf16.msra.mxu0 %v6403
      %11388 = vmatprep.subr.bf16.mxu0 %v6412
      %11389 = vmatpush1.bf16.msra.mxu0 %v6411
      %11390 = vmatprep.subr.bf16.mxu0 %v6420
      %11391 = vmatpush1.bf16.msra.mxu0 %v6419
      %11392 = vmatprep.subr.bf16.mxu0 %v6428
      %11393 = vmatpush1.bf16.msra.mxu0 %v6427
      %11394 = vmatprep.subr.bf16.mxu0 %v6436
      %11395 = vmatpush1.bf16.msra.mxu0 %v6435
      %11396 = vmatprep.subr.bf16.mxu0 %v6444
      %11397 = vmatpush1.bf16.msra.mxu0 %v6443
      %11398 = vmatprep.subr.bf16.mxu0 %v6452
      %11399 = vmatpush1.bf16.msra.mxu0 %v6451
      %11400 = vmatprep.subr.bf16.mxu0 %v6460
      %11401 = vmatpush1.bf16.msra.mxu0 %v6459
      %11402 = vmatprep.subr.bf16.mxu0 %v6468
      %11403 = vmatpush1.bf16.msra.mxu0 %v6467
      %11404 = vmatprep.subr.bf16.mxu0 %v6476
      %11405 = vmatpush1.bf16.msra.mxu0 %v6475
      %11406 = vmatprep.subr.bf16.mxu0 %v6484
      %11407 = vmatpush1.bf16.msra.mxu0 %v6483
      %11408 = vmatprep.mubr.bf16.mxu0 %v10432
      %11409 = vmatmul.mubr.bf16.gmra.mrb[0].mxu0 %v10431
      %v11410 = vpop.f32.mrb[0].mxu0
      %v11411 = vadd.f32 %v11370, %v11410
      %v11412 = vpop.f32.mrb[0].mxu0
      %v11413 = vadd.f32 %v11372, %v11412
      %v11414 = vpop.f32.mrb[0].mxu0
      %v11415 = vpop.f32.mrb[0].mxu0
      %11416 = vdwg.mxu0
      %11417 = vmatprep.subr.bf16.mxu0 %v5982
      %11418 = vmatpush1.bf16.msra.mxu0 %v5981
      %11419 = vmatprep.subr.bf16.mxu0 %v5990
      %11420 = vmatpush1.bf16.msra.mxu0 %v5989
      %11421 = vmatprep.subr.bf16.mxu0 %v5998
      %11422 = vmatpush1.bf16.msra.mxu0 %v5997
      %11423 = vmatprep.subr.bf16.mxu0 %v6006
      %11424 = vmatpush1.bf16.msra.mxu0 %v6005
      %11425 = vmatprep.subr.bf16.mxu0 %v6014
      %11426 = vmatpush1.bf16.msra.mxu0 %v6013
      %11427 = vmatprep.subr.bf16.mxu0 %v6022
      %11428 = vmatpush1.bf16.msra.mxu0 %v6021
      %11429 = vmatprep.subr.bf16.mxu0 %v6030
      %11430 = vmatpush1.bf16.msra.mxu0 %v6029
      %11431 = vmatprep.subr.bf16.mxu0 %v6038
      %11432 = vmatpush1.bf16.msra.mxu0 %v6037
      %11433 = vmatprep.subr.bf16.mxu0 %v6046
      %11434 = vmatpush1.bf16.msra.mxu0 %v6045
      %11435 = vmatprep.subr.bf16.mxu0 %v6054
      %11436 = vmatpush1.bf16.msra.mxu0 %v6053
      %11437 = vmatprep.subr.bf16.mxu0 %v6062
      %11438 = vmatpush1.bf16.msra.mxu0 %v6061
      %11439 = vmatprep.subr.bf16.mxu0 %v6070
      %11440 = vmatpush1.bf16.msra.mxu0 %v6069
      %11441 = vmatprep.subr.bf16.mxu0 %v6078
      %11442 = vmatpush1.bf16.msra.mxu0 %v6077
      %11443 = vmatprep.subr.bf16.mxu0 %v6086
      %11444 = vmatpush1.bf16.msra.mxu0 %v6085
      %11445 = vmatprep.subr.bf16.mxu0 %v6094
      %11446 = vmatpush1.bf16.msra.mxu0 %v6093
      %11447 = vmatprep.subr.bf16.mxu0 %v6102
      %11448 = vmatpush1.bf16.msra.mxu0 %v6101
      %11449 = vmatprep.mubr.bf16.mxu0 %v10426
      %11450 = vmatmul.mubr.bf16.gmra.mrb[0].mxu0 %v10425
      %v11451 = vpop.f32.mrb[0].mxu0
      %v11452 = vadd.f32 %v10919, %v11451
      %v11453 = vpop.f32.mrb[0].mxu0
      %v11454 = vadd.f32 %v10921, %v11453
      %v11455 = vpop.f32.mrb[0].mxu0
      %v11456 = vpop.f32.mrb[0].mxu0
      %11457 = vdwg.mxu0
      %11458 = vmatprep.subr.bf16.mxu0 %v6110
      %11459 = vmatpush1.bf16.msra.mxu0 %v6109
      %11460 = vmatprep.subr.bf16.mxu0 %v6118
      %11461 = vmatpush1.bf16.msra.mxu0 %v6117
      %11462 = vmatprep.subr.bf16.mxu0 %v6126
      %11463 = vmatpush1.bf16.msra.mxu0 %v6125
      %11464 = vmatprep.subr.bf16.mxu0 %v6134
      %11465 = vmatpush1.bf16.msra.mxu0 %v6133
      %11466 = vmatprep.subr.bf16.mxu0 %v6142
      %11467 = vmatpush1.bf16.msra.mxu0 %v6141
      %11468 = vmatprep.subr.bf16.mxu0 %v6150
      %11469 = vmatpush1.bf16.msra.mxu0 %v6149
      %11470 = vmatprep.subr.bf16.mxu0 %v6158
      %11471 = vmatpush1.bf16.msra.mxu0 %v6157
      %11472 = vmatprep.subr.bf16.mxu0 %v6166
      %11473 = vmatpush1.bf16.msra.mxu0 %v6165
      %11474 = vmatprep.subr.bf16.mxu0 %v6174
      %11475 = vmatpush1.bf16.msra.mxu0 %v6173
      %11476 = vmatprep.subr.bf16.mxu0 %v6182
      %11477 = vmatpush1.bf16.msra.mxu0 %v6181
      %11478 = vmatprep.subr.bf16.mxu0 %v6190
      %11479 = vmatpush1.bf16.msra.mxu0 %v6189
      %11480 = vmatprep.subr.bf16.mxu0 %v6198
      %11481 = vmatpush1.bf16.msra.mxu0 %v6197
      %11482 = vmatprep.subr.bf16.mxu0 %v6206
      %11483 = vmatpush1.bf16.msra.mxu0 %v6205
      %11484 = vmatprep.subr.bf16.mxu0 %v6214
      %11485 = vmatpush1.bf16.msra.mxu0 %v6213
      %11486 = vmatprep.subr.bf16.mxu0 %v6222
      %11487 = vmatpush1.bf16.msra.mxu0 %v6221
      %11488 = vmatprep.subr.bf16.mxu0 %v6230
      %11489 = vmatpush1.bf16.msra.mxu0 %v6229
      %11490 = vmatprep.mubr.bf16.mxu0 %v10428
      %11491 = vmatmul.mubr.bf16.gmra.mrb[0].mxu0 %v10427
      %v11492 = vpop.f32.mrb[0].mxu0
      %v11493 = vadd.f32 %v11452, %v11492
      %v11494 = vpop.f32.mrb[0].mxu0
      %v11495 = vadd.f32 %v11454, %v11494
      %v11496 = vpop.f32.mrb[0].mxu0
      %v11497 = vpop.f32.mrb[0].mxu0
      %11498 = vdwg.mxu0
      %11499 = vmatprep.subr.bf16.mxu0 %v6238
      %11500 = vmatpush1.bf16.msra.mxu0 %v6237
      %11501 = vmatprep.subr.bf16.mxu0 %v6246
      %11502 = vmatpush1.bf16.msra.mxu0 %v6245
      %11503 = vmatprep.subr.bf16.mxu0 %v6254
      %11504 = vmatpush1.bf16.msra.mxu0 %v6253
      %11505 = vmatprep.subr.bf16.mxu0 %v6262
      %11506 = vmatpush1.bf16.msra.mxu0 %v6261
      %11507 = vmatprep.subr.bf16.mxu0 %v6270
      %11508 = vmatpush1.bf16.msra.mxu0 %v6269
      %11509 = vmatprep.subr.bf16.mxu0 %v6278
      %11510 = vmatpush1.bf16.msra.mxu0 %v6277
      %11511 = vmatprep.subr.bf16.mxu0 %v6286
      %11512 = vmatpush1.bf16.msra.mxu0 %v6285
      %11513 = vmatprep.subr.bf16.mxu0 %v6294
      %11514 = vmatpush1.bf16.msra.mxu0 %v6293
      %11515 = vmatprep.subr.bf16.mxu0 %v6302
      %11516 = vmatpush1.bf16.msra.mxu0 %v6301
      %11517 = vmatprep.subr.bf16.mxu0 %v6310
      %11518 = vmatpush1.bf16.msra.mxu0 %v6309
      %11519 = vmatprep.subr.bf16.mxu0 %v6318
      %11520 = vmatpush1.bf16.msra.mxu0 %v6317
      %11521 = vmatprep.subr.bf16.mxu0 %v6326
      %11522 = vmatpush1.bf16.msra.mxu0 %v6325
      %11523 = vmatprep.subr.bf16.mxu0 %v6334
      %11524 = vmatpush1.bf16.msra.mxu0 %v6333
      %11525 = vmatprep.subr.bf16.mxu0 %v6342
      %11526 = vmatpush1.bf16.msra.mxu0 %v6341
      %11527 = vmatprep.subr.bf16.mxu0 %v6350
      %11528 = vmatpush1.bf16.msra.mxu0 %v6349
      %11529 = vmatprep.subr.bf16.mxu0 %v6358
      %11530 = vmatpush1.bf16.msra.mxu0 %v6357
      %11531 = vmatprep.mubr.bf16.mxu0 %v10430
      %11532 = vmatmul.mubr.bf16.gmra.mrb[0].mxu0 %v10429
      %v11533 = vpop.f32.mrb[0].mxu0
      %v11534 = vadd.f32 %v11493, %v11533
      %v11535 = vpop.f32.mrb[0].mxu0
      %v11536 = vadd.f32 %v11495, %v11535
      %v11537 = vpop.f32.mrb[0].mxu0
      %v11538 = vpop.f32.mrb[0].mxu0
      %11539 = vdwg.mxu0
      %11540 = vmatprep.subr.bf16.mxu0 %v6366
      %11541 = vmatpush1.bf16.msra.mxu0 %v6365
      %11542 = vmatprep.subr.bf16.mxu0 %v6374
      %11543 = vmatpush1.bf16.msra.mxu0 %v6373
      %11544 = vmatprep.subr.bf16.mxu0 %v6382
      %11545 = vmatpush1.bf16.msra.mxu0 %v6381
      %11546 = vmatprep.subr.bf16.mxu0 %v6390
      %11547 = vmatpush1.bf16.msra.mxu0 %v6389
      %11548 = vmatprep.subr.bf16.mxu0 %v6398
      %11549 = vmatpush1.bf16.msra.mxu0 %v6397
      %11550 = vmatprep.subr.bf16.mxu0 %v6406
      %11551 = vmatpush1.bf16.msra.mxu0 %v6405
      %11552 = vmatprep.subr.bf16.mxu0 %v6414
      %11553 = vmatpush1.bf16.msra.mxu0 %v6413
      %11554 = vmatprep.subr.bf16.mxu0 %v6422
      %11555 = vmatpush1.bf16.msra.mxu0 %v6421
      %11556 = vmatprep.subr.bf16.mxu0 %v6430
      %11557 = vmatpush1.bf16.msra.mxu0 %v6429
      %11558 = vmatprep.subr.bf16.mxu0 %v6438
      %11559 = vmatpush1.bf16.msra.mxu0 %v6437
      %11560 = vmatprep.subr.bf16.mxu0 %v6446
      %11561 = vmatpush1.bf16.msra.mxu0 %v6445
      %11562 = vmatprep.subr.bf16.mxu0 %v6454
      %11563 = vmatpush1.bf16.msra.mxu0 %v6453
      %11564 = vmatprep.subr.bf16.mxu0 %v6462
      %11565 = vmatpush1.bf16.msra.mxu0 %v6461
      %11566 = vmatprep.subr.bf16.mxu0 %v6470
      %11567 = vmatpush1.bf16.msra.mxu0 %v6469
      %11568 = vmatprep.subr.bf16.mxu0 %v6478
      %11569 = vmatpush1.bf16.msra.mxu0 %v6477
      %11570 = vmatprep.subr.bf16.mxu0 %v6486
      %11571 = vmatpush1.bf16.msra.mxu0 %v6485
      %11572 = vmatprep.mubr.bf16.mxu0 %v10432
      %11573 = vmatmul.mubr.bf16.gmra.mrb[0].mxu0 %v10431
      %v11574 = vpop.f32.mrb[0].mxu0
      %v11575 = vadd.f32 %v11534, %v11574
      %v11576 = vpop.f32.mrb[0].mxu0
      %v11577 = vadd.f32 %v11536, %v11576
      %v11578 = vpop.f32.mrb[0].mxu0
      %v11579 = vpop.f32.mrb[0].mxu0
      %11580 = vdwg.mxu0
      %11581 = vmatprep.subr.bf16.mxu0 %v5984
      %11582 = vmatpush1.bf16.msra.mxu0 %v5983
      %11583 = vmatprep.subr.bf16.mxu0 %v5992
      %11584 = vmatpush1.bf16.msra.mxu0 %v5991
      %11585 = vmatprep.subr.bf16.mxu0 %v6000
      %11586 = vmatpush1.bf16.msra.mxu0 %v5999
      %11587 = vmatprep.subr.bf16.mxu0 %v6008
      %11588 = vmatpush1.bf16.msra.mxu0 %v6007
      %11589 = vmatprep.subr.bf16.mxu0 %v6016
      %11590 = vmatpush1.bf16.msra.mxu0 %v6015
      %11591 = vmatprep.subr.bf16.mxu0 %v6024
      %11592 = vmatpush1.bf16.msra.mxu0 %v6023
      %11593 = vmatprep.subr.bf16.mxu0 %v6032
      %11594 = vmatpush1.bf16.msra.mxu0 %v6031
      %11595 = vmatprep.subr.bf16.mxu0 %v6040
      %11596 = vmatpush1.bf16.msra.mxu0 %v6039
      %11597 = vmatprep.subr.bf16.mxu0 %v6048
      %11598 = vmatpush1.bf16.msra.mxu0 %v6047
      %11599 = vmatprep.subr.bf16.mxu0 %v6056
      %11600 = vmatpush1.bf16.msra.mxu0 %v6055
      %11601 = vmatprep.subr.bf16.mxu0 %v6064
      %11602 = vmatpush1.bf16.msra.mxu0 %v6063
      %11603 = vmatprep.subr.bf16.mxu0 %v6072
      %11604 = vmatpush1.bf16.msra.mxu0 %v6071
      %11605 = vmatprep.subr.bf16.mxu0 %v6080
      %11606 = vmatpush1.bf16.msra.mxu0 %v6079
      %11607 = vmatprep.subr.bf16.mxu0 %v6088
      %11608 = vmatpush1.bf16.msra.mxu0 %v6087
      %11609 = vmatprep.subr.bf16.mxu0 %v6096
      %11610 = vmatpush1.bf16.msra.mxu0 %v6095
      %11611 = vmatprep.subr.bf16.mxu0 %v6104
      %11612 = vmatpush1.bf16.msra.mxu0 %v6103
      %11613 = vmatprep.mubr.bf16.mxu0 %v10426
      %11614 = vmatmul.mubr.bf16.gmra.mrb[0].mxu0 %v10425
      %v11615 = vpop.f32.mrb[0].mxu0
      %v11616 = vadd.f32 %v11083, %v11615
      %v11617 = vpop.f32.mrb[0].mxu0
      %v11618 = vadd.f32 %v11085, %v11617
      %v11619 = vpop.f32.mrb[0].mxu0
      %v11620 = vpop.f32.mrb[0].mxu0
      %11621 = vdwg.mxu0
      %11622 = vmatprep.subr.bf16.mxu0 %v6112
      %11623 = vmatpush1.bf16.msra.mxu0 %v6111
      %11624 = vmatprep.subr.bf16.mxu0 %v6120
      %11625 = vmatpush1.bf16.msra.mxu0 %v6119
      %11626 = vmatprep.subr.bf16.mxu0 %v6128
      %11627 = vmatpush1.bf16.msra.mxu0 %v6127
      %11628 = vmatprep.subr.bf16.mxu0 %v6136
      %11629 = vmatpush1.bf16.msra.mxu0 %v6135
      %11630 = vmatprep.subr.bf16.mxu0 %v6144
      %11631 = vmatpush1.bf16.msra.mxu0 %v6143
      %11632 = vmatprep.subr.bf16.mxu0 %v6152
      %11633 = vmatpush1.bf16.msra.mxu0 %v6151
      %11634 = vmatprep.subr.bf16.mxu0 %v6160
      %11635 = vmatpush1.bf16.msra.mxu0 %v6159
      %11636 = vmatprep.subr.bf16.mxu0 %v6168
      %11637 = vmatpush1.bf16.msra.mxu0 %v6167
      %11638 = vmatprep.subr.bf16.mxu0 %v6176
      %11639 = vmatpush1.bf16.msra.mxu0 %v6175
      %11640 = vmatprep.subr.bf16.mxu0 %v6184
      %11641 = vmatpush1.bf16.msra.mxu0 %v6183
      %11642 = vmatprep.subr.bf16.mxu0 %v6192
      %11643 = vmatpush1.bf16.msra.mxu0 %v6191
      %11644 = vmatprep.subr.bf16.mxu0 %v6200
      %11645 = vmatpush1.bf16.msra.mxu0 %v6199
      %11646 = vmatprep.subr.bf16.mxu0 %v6208
      %11647 = vmatpush1.bf16.msra.mxu0 %v6207
      %11648 = vmatprep.subr.bf16.mxu0 %v6216
      %11649 = vmatpush1.bf16.msra.mxu0 %v6215
      %11650 = vmatprep.subr.bf16.mxu0 %v6224
      %11651 = vmatpush1.bf16.msra.mxu0 %v6223
      %11652 = vmatprep.subr.bf16.mxu0 %v6232
      %11653 = vmatpush1.bf16.msra.mxu0 %v6231
      %11654 = vmatprep.mubr.bf16.mxu0 %v10428
      %11655 = vmatmul.mubr.bf16.gmra.mrb[0].mxu0 %v10427
      %v11656 = vpop.f32.mrb[0].mxu0
      %v11657 = vadd.f32 %v11616, %v11656
      %v11658 = vpop.f32.mrb[0].mxu0
      %v11659 = vadd.f32 %v11618, %v11658
      %v11660 = vpop.f32.mrb[0].mxu0
      %v11661 = vpop.f32.mrb[0].mxu0
      %11662 = vdwg.mxu0
      %11663 = vmatprep.subr.bf16.mxu0 %v6240
      %11664 = vmatpush1.bf16.msra.mxu0 %v6239
      %11665 = vmatprep.subr.bf16.mxu0 %v6248
      %11666 = vmatpush1.bf16.msra.mxu0 %v6247
      %11667 = vmatprep.subr.bf16.mxu0 %v6256
      %11668 = vmatpush1.bf16.msra.mxu0 %v6255
      %11669 = vmatprep.subr.bf16.mxu0 %v6264
      %11670 = vmatpush1.bf16.msra.mxu0 %v6263
      %11671 = vmatprep.subr.bf16.mxu0 %v6272
      %11672 = vmatpush1.bf16.msra.mxu0 %v6271
      %11673 = vmatprep.subr.bf16.mxu0 %v6280
      %11674 = vmatpush1.bf16.msra.mxu0 %v6279
      %11675 = vmatprep.subr.bf16.mxu0 %v6288
      %11676 = vmatpush1.bf16.msra.mxu0 %v6287
      %11677 = vmatprep.subr.bf16.mxu0 %v6296
      %11678 = vmatpush1.bf16.msra.mxu0 %v6295
      %11679 = vmatprep.subr.bf16.mxu0 %v6304
      %11680 = vmatpush1.bf16.msra.mxu0 %v6303
      %11681 = vmatprep.subr.bf16.mxu0 %v6312
      %11682 = vmatpush1.bf16.msra.mxu0 %v6311
      %11683 = vmatprep.subr.bf16.mxu0 %v6320
      %11684 = vmatpush1.bf16.msra.mxu0 %v6319
      %11685 = vmatprep.subr.bf16.mxu0 %v6328
      %11686 = vmatpush1.bf16.msra.mxu0 %v6327
      %11687 = vmatprep.subr.bf16.mxu0 %v6336
      %11688 = vmatpush1.bf16.msra.mxu0 %v6335
      %11689 = vmatprep.subr.bf16.mxu0 %v6344
      %11690 = vmatpush1.bf16.msra.mxu0 %v6343
      %11691 = vmatprep.subr.bf16.mxu0 %v6352
      %11692 = vmatpush1.bf16.msra.mxu0 %v6351
      %11693 = vmatprep.subr.bf16.mxu0 %v6360
      %11694 = vmatpush1.bf16.msra.mxu0 %v6359
      %11695 = vmatprep.mubr.bf16.mxu0 %v10430
      %11696 = vmatmul.mubr.bf16.gmra.mrb[0].mxu0 %v10429
      %v11697 = vpop.f32.mrb[0].mxu0
      %v11698 = vadd.f32 %v11657, %v11697
      %v11699 = vpop.f32.mrb[0].mxu0
      %v11700 = vadd.f32 %v11659, %v11699
      %v11701 = vpop.f32.mrb[0].mxu0
      %v11702 = vpop.f32.mrb[0].mxu0
      %11703 = vdwg.mxu0
      %11704 = vmatprep.subr.bf16.mxu0 %v6368
      %11705 = vmatpush1.bf16.msra.mxu0 %v6367
      %11706 = vmatprep.subr.bf16.mxu0 %v6376
      %11707 = vmatpush1.bf16.msra.mxu0 %v6375
      %11708 = vmatprep.subr.bf16.mxu0 %v6384
      %11709 = vmatpush1.bf16.msra.mxu0 %v6383
      %11710 = vmatprep.subr.bf16.mxu0 %v6392
      %11711 = vmatpush1.bf16.msra.mxu0 %v6391
      %11712 = vmatprep.subr.bf16.mxu0 %v6400
      %11713 = vmatpush1.bf16.msra.mxu0 %v6399
      %11714 = vmatprep.subr.bf16.mxu0 %v6408
      %11715 = vmatpush1.bf16.msra.mxu0 %v6407
      %11716 = vmatprep.subr.bf16.mxu0 %v6416
      %11717 = vmatpush1.bf16.msra.mxu0 %v6415
      %11718 = vmatprep.subr.bf16.mxu0 %v6424
      %11719 = vmatpush1.bf16.msra.mxu0 %v6423
      %11720 = vmatprep.subr.bf16.mxu0 %v6432
      %11721 = vmatpush1.bf16.msra.mxu0 %v6431
      %11722 = vmatprep.subr.bf16.mxu0 %v6440
      %11723 = vmatpush1.bf16.msra.mxu0 %v6439
      %11724 = vmatprep.subr.bf16.mxu0 %v6448
      %11725 = vmatpush1.bf16.msra.mxu0 %v6447
      %11726 = vmatprep.subr.bf16.mxu0 %v6456
      %11727 = vmatpush1.bf16.msra.mxu0 %v6455
      %11728 = vmatprep.subr.bf16.mxu0 %v6464
      %11729 = vmatpush1.bf16.msra.mxu0 %v6463
      %11730 = vmatprep.subr.bf16.mxu0 %v6472
      %11731 = vmatpush1.bf16.msra.mxu0 %v6471
      %11732 = vmatprep.subr.bf16.mxu0 %v6480
      %11733 = vmatpush1.bf16.msra.mxu0 %v6479
      %11734 = vmatprep.subr.bf16.mxu0 %v6488
      %11735 = vmatpush1.bf16.msra.mxu0 %v6487
      %11736 = vmatprep.mubr.bf16.mxu0 %v10432
      %11737 = vmatmul.mubr.bf16.gmra.mrb[0].mxu0 %v10431
      %v11738 = vpop.f32.mrb[0].mxu0
      %v11739 = vadd.f32 %v11698, %v11738
      %v11740 = vpop.f32.mrb[0].mxu0
      %v11741 = vadd.f32 %v11700, %v11740
      %v11742 = vpop.f32.mrb[0].mxu0
      %v11743 = vpop.f32.mrb[0].mxu0
      %11744 = vdwg.mxu0
      %v11745 = vmul.f32 %v10417, %v11247
      %v11746 = vmul.f32 %v10418, %v11249
      %v11747 = vmul.f32 %v10419, %v11411
      %v11748 = vmul.f32 %v10420, %v11413
      %v11749 = vmul.f32 %v10421, %v11575
      %v11750 = vmul.f32 %v10422, %v11577
      %v11751 = vmul.f32 %v10423, %v11739
      %v11752 = vmul.f32 %v10424, %v11741
      %v11753 = vsel %vm1125, %v11745, 0.0
      %v11754 = vsel %vm1125, %v11746, 0.0
      %v11755 = vadd.f32 %v11753, %v11754
      %v11756 = vsel %vm1125, %v11747, 0.0
      %v11757 = vadd.f32 %v11755, %v11756
      %v11758 = vsel %vm1125, %v11748, 0.0
      %v11759 = vadd.f32 %v11757, %v11758
      %v11760 = vsel %vm1125, %v11749, 0.0
      %v11761 = vadd.f32 %v11759, %v11760
      %v11762 = vsel %vm1125, %v11750, 0.0
      %v11763 = vadd.f32 %v11761, %v11762
      %v11764 = vsel %vm1125, %v11751, 0.0
      %v11765 = vadd.f32 %v11763, %v11764
      %v11766 = vsel %vm1125, %v11752, 0.0
      %v11767 = vadd.f32 %v11765, %v11766
      %11768 = vadd.xlane.f32.xlu0 %v11767
      %v11769 = vpop.xlane.xlu0 %11768
      %v11770 = vmul.f32 %v11769, %v10415
      %v11771 = vmul.f32 %v11247, %v11247
      %v11772 = vmul.f32 %v11249, %v11249
      %v11773 = vmul.f32 %v11411, %v11411
      %v11774 = vmul.f32 %v11413, %v11413
      %v11775 = vmul.f32 %v11575, %v11575
      %v11776 = vmul.f32 %v11577, %v11577
      %v11777 = vmul.f32 %v11739, %v11739
      %v11778 = vmul.f32 %v11741, %v11741
      %v11779 = vsel %vm1125, %v11771, 0.0
      %v11780 = vsel %vm1125, %v11772, 0.0
      %v11781 = vadd.f32 %v11779, %v11780
      %v11782 = vsel %vm1125, %v11773, 0.0
      %v11783 = vadd.f32 %v11781, %v11782
      %v11784 = vsel %vm1125, %v11774, 0.0
      %v11785 = vadd.f32 %v11783, %v11784
      %v11786 = vsel %vm1125, %v11775, 0.0
      %v11787 = vadd.f32 %v11785, %v11786
      %v11788 = vsel %vm1125, %v11776, 0.0
      %v11789 = vadd.f32 %v11787, %v11788
      %v11790 = vsel %vm1125, %v11777, 0.0
      %v11791 = vadd.f32 %v11789, %v11790
      %v11792 = vsel %vm1125, %v11778, 0.0
      %v11793 = vadd.f32 %v11791, %v11792
      %11794 = vadd.xlane.f32.xlu0 %v11793
      %v11795 = vpop.xlane.xlu0 %11794
      %v11796 = vrcp.pop %v11795
      %v11797 = vmul.f32 %v11247, %v11796
      %v11798 = vmul.f32 %v11249, %v11796
      %v11799 = vmul.f32 %v11411, %v11796
      %v11800 = vmul.f32 %v11413, %v11796
      %v11801 = vmul.f32 %v11575, %v11796
      %v11802 = vmul.f32 %v11577, %v11796
      %v11803 = vmul.f32 %v11739, %v11796
      %v11804 = vmul.f32 %v11741, %v11796
      %v11805 = vsub.f32 %v11770, %v10390
      %v11806 = vmul.f32 %v11805, %v11805
      %vm11807 = vcmask 1024
      %v11808 = vsel %vm11807, %v11806, 0.0
      %11809 = vadd.xlane.f32.xlu0 %v11808
      %v11810 = vpop.xlane.xlu0 %11809
      %v11811 = vrot.slane %v11810, 4
      %v11812 = vadd.f32 %v11810, %v11811
      %v11813 = vrot.slane %v11812, 2
      %v11814 = vadd.f32 %v11812, %v11813
      %v11815 = vrot.slane %v11814, 1
      %v11816 = vadd.f32 %v11814, %v11815
      %s11817 = vtos %v11816
      %s11818 = sadd.s32 %s1200, 4
    $region30: #{tpu_custom_call.1} parent=1 // loop_footer
      _
    $region31: #{tpu_custom_call.1} parent=1 // loop_footer_branch
      %1199 = sbr.rel target = $region27
    $region32: #{tpu_custom_call.1} parent=1 // loop_exit
      _
    %vm11819 = vcmask 1024
    %11820 = vst.msk [vmem:[%s3] sm:$0x3] %vm11819, %v1209
    // Predicated region
    $region33: #{tpu_custom_call.1} parent=1 // pred_check
      _
    $region34: #{tpu_custom_call.1} parent=1 // pred_check_branch
      %11822 = sbr.rel (0) target = $region36
    $region35: #{tpu_custom_call.1} parent=1 // pred_region
      _
    $region36: #{tpu_custom_call.1} parent=1 // pred_fallthru
      _
    // Predicated region
    $region37: #{tpu_custom_call.1} parent=1 // pred_check
      _
    $region38: #{tpu_custom_call.1} parent=1 // pred_check_branch
      %11824 = sbr.rel (0) target = $region40
    $region39: #{tpu_custom_call.1} parent=1 // pred_region
      _
    $region40: #{tpu_custom_call.1} parent=1 // pred_fallthru
      _
    %11825 = vsyncpa [#allocation3], 1
    %11826 = vsyncpa [#allocation5], 1

</llo_original>
